<compile_context>
chip_gen: v7x
topology: tpu7x:2x2x1
jax: 0.10.0
libtpu: 0.0.40
codegen_flags: <defaults>
</compile_context>

<pallas_src>
import functools
import math

import jax
import jax.numpy as jnp
from jax.experimental import pallas as pl
from jax.experimental.pallas import tpu as pltpu


_LOG_EPS = math.log(1e-6)                  # log(0 + 1e-6): additive term for masked positions
_LOG_ONE_PLUS_EPS = math.log(1.0 + 1e-6)   # log(1 + 1e-6): additive term for kept positions
_TT = 128                                  # time-tile width for the 1x1 conv kernels


# ---------------------------------------------------------------------------
# 1x1 conv kernels (gridded over 128-frame time tiles, "parallel")
# ---------------------------------------------------------------------------
def _in_conv_kernel(w_ref, b_ref, x_ref, o_ref, *, L):
    """Stage input 1x1 conv on one time tile; frames >= L (true length) are zeroed so
    the padded tail behaves exactly like Conv1d zero padding downstream."""
    tt = x_ref.shape[1]
    col = pl.program_id(0) * tt + jax.lax.broadcasted_iota(jnp.int32, (1, tt), 1)
    lm = (col < L).astype(jnp.float32)
    y = jnp.dot(w_ref[...], x_ref[...].astype(jnp.bfloat16),
                preferred_element_type=jnp.float32) + b_ref[...]
    o_ref[...] = y * lm


def _dec_in_conv_kernel(w_ref, b_ref, x_ref, mask_ref, o_ref, *, L):
    """Decoder input on one time tile: softmax(prev logits, channel) * mask -> 1x1 conv
    -> zero tail (frames >= L)."""
    tt = x_ref.shape[1]
    x = x_ref[...]
    xm = jnp.max(x, axis=0, keepdims=True)
    e = jnp.exp(x - xm)
    soft = e * pl.reciprocal(jnp.sum(e, axis=0, keepdims=True), approx=True)
    soft = soft * mask_ref[...]
    col = pl.program_id(0) * tt + jax.lax.broadcasted_iota(jnp.int32, (1, tt), 1)
    lm = (col < L).astype(jnp.float32)
    y = jnp.dot(w_ref[...], soft.astype(jnp.bfloat16),
                preferred_element_type=jnp.float32) + b_ref[...]
    o_ref[...] = y * lm


def _out_conv_kernel(w_ref, b_ref, x_ref, mask_ref, o_ref):
    """Stage output 1x1 conv fused with the output mask (one time tile)."""
    y = jnp.dot(w_ref[...], x_ref[...].astype(jnp.bfloat16),
                preferred_element_type=jnp.float32) + b_ref[...]
    o_ref[...] = y * mask_ref[...]


def _conv_compiler_params():
    return pltpu.CompilerParams(dimension_semantics=("parallel",),
                                vmem_limit_bytes=32 * 1024 * 1024)


def in_conv(w, b, x, L):
    cin, Lp = x.shape
    cout = w.shape[0]
    return pl.pallas_call(
        functools.partial(_in_conv_kernel, L=L),
        grid=(Lp // _TT,),
        in_specs=[pl.BlockSpec((cout, cin), lambda t: (0, 0)),
                  pl.BlockSpec((cout, 1), lambda t: (0, 0)),
                  pl.BlockSpec((cin, _TT), lambda t: (0, t))],
        out_specs=pl.BlockSpec((cout, _TT), lambda t: (0, t)),
        out_shape=jax.ShapeDtypeStruct((cout, Lp), jnp.float32),
        compiler_params=_conv_compiler_params(),
    )(w, b, x)


def dec_in_conv(w, b, prev_out, pmask, L):
    cin, Lp = prev_out.shape
    cout = w.shape[0]
    return pl.pallas_call(
        functools.partial(_dec_in_conv_kernel, L=L),
        grid=(Lp // _TT,),
        in_specs=[pl.BlockSpec((cout, cin), lambda t: (0, 0)),
                  pl.BlockSpec((cout, 1), lambda t: (0, 0)),
                  pl.BlockSpec((cin, _TT), lambda t: (0, t)),
                  pl.BlockSpec((1, _TT), lambda t: (0, t))],
        out_specs=pl.BlockSpec((cout, _TT), lambda t: (0, t)),
        out_shape=jax.ShapeDtypeStruct((cout, Lp), jnp.float32),
        compiler_params=_conv_compiler_params(),
    )(w, b, prev_out, pmask)


def out_conv(w, b, x, pmask):
    cin, Lp = x.shape
    cout = w.shape[0]
    return pl.pallas_call(
        _out_conv_kernel,
        grid=(Lp // _TT,),
        in_specs=[pl.BlockSpec((cout, cin), lambda t: (0, 0)),
                  pl.BlockSpec((cout, 1), lambda t: (0, 0)),
                  pl.BlockSpec((cin, _TT), lambda t: (0, t)),
                  pl.BlockSpec((1, _TT), lambda t: (0, t))],
        out_specs=pl.BlockSpec((cout, _TT), lambda t: (0, t)),
        out_shape=jax.ShapeDtypeStruct((cout, Lp), jnp.float32),
        compiler_params=_conv_compiler_params(),
    )(w, b, x, pmask)


# ---------------------------------------------------------------------------
# Fused per-stage AttModule stack: one pallas_call, grid over layers ("arbitrary"),
# feature resident in VMEM scratch, per-layer weights selected by the index_map.
# ---------------------------------------------------------------------------
def _make_stage_kernel(*, L, alpha, use_f, qk_dim, v_dim, num_layers, eps=1e-5):
    def kernel(*refs):
        if use_f:
            (x_ref, f_ref, mask_ref, ffw_ref, ffb_ref, qkw_ref, qkb_ref,
             vw_ref, vb_ref, cow_ref, cob_ref, pw_ref, pb_ref,
             o_ref, feat_ref) = refs
        else:
            (x_ref, mask_ref, ffw_ref, ffb_ref, qkvw_ref, qkvb_ref,
             cow_ref, cob_ref, pw_ref, pb_ref,
             o_ref, feat_ref) = refs

        l = pl.program_id(0)
        C, Lp = feat_ref.shape
        dil = jnp.left_shift(jnp.int32(1), l)          # dilation / attention block = 2**layer
        half = jnp.right_shift(dil, 1)

        @pl.when(l == 0)
        def _init():                                   # stage input -> resident feature
            feat_ref[...] = x_ref[...]

        x = feat_ref[...]
        pmask = mask_ref[...]                          # (1, Lp) 0/1, zeros past valid frames

        col1 = jax.lax.broadcasted_iota(jnp.int32, (1, Lp), 1)
        lm = (col1 < L).astype(jnp.float32)            # frames < true (unpadded) length

        # ---- dilated 3-tap conv + ReLU: one stacked matmul, +-d shifts on the XLU ---
        taps = jnp.dot(ffw_ref[...], x.astype(jnp.bfloat16),
                       preferred_element_type=jnp.float32)            # (3C, Lp)
        lag = pltpu.roll(taps[:C, :], dil, 1)          # [:, t] <- taps0[:, t - d]
        lag = jnp.where(col1 >= dil, lag, 0.0)         # zero-pad (matches Conv1d padding=d)
        lead = pltpu.roll(taps[2 * C:, :], Lp - dil, 1)    # [:, t] <- taps2[:, t + d]
        lead = jnp.where(col1 < Lp - dil, lead, 0.0)
        ff = jnp.maximum(taps[C:2 * C, :] + lag + lead + ffb_ref[...], 0.0)

        # ---- InstanceNorm1d over the first L frames only (biased var, eps=1e-5) -----
        inv_len = 1.0 / L
        mean = jnp.sum(ff * lm, axis=1, keepdims=True) * inv_len
        cen = ff - mean
        var = jnp.sum(cen * cen * lm, axis=1, keepdims=True) * inv_len
        xn = cen * jax.lax.rsqrt(var + eps)
        xnb = xn.astype(jnp.bfloat16)

        # ---- Q/K(/V) projections (1/sqrt(c1) pre-folded into Q weights + bias) ------
        if use_f:
            qk = (jnp.dot(qkw_ref[...], xnb, preferred_element_type=jnp.float32)
                  + qkb_ref[...])
            q = qk[:qk_dim, :]
            k = qk[qk_dim:, :] * lm                    # zero K past L == reference zero pad
            v_in = (f_ref[...] * pmask).astype(jnp.bfloat16)   # decoder cross-attn value
            v = (jnp.dot(vw_ref[...], v_in, preferred_element_type=jnp.float32)
                 + vb_ref[...]) * lm
        else:
            qkv = (jnp.dot(qkvw_ref[...], xnb, preferred_element_type=jnp.float32)
                   + qkvb_ref[...])
            q = qkv[:qk_dim, :]
            k = qkv[qk_dim:2 * qk_dim, :] * lm
            v = qkv[2 * qk_dim:, :] * lm

        # ---- sliding-window attention as a dense banded (Lp, Lp) softmax ------------
        row = jax.lax.broadcasted_iota(jnp.int32, (Lp, Lp), 0)
        col = jax.lax.broadcasted_iota(jnp.int32, (Lp, Lp), 1)
        energy = jax.lax.dot_general(q.astype(jnp.bfloat16), k.astype(jnp.bfloat16),
                                     (((0,), (0,)), ((), ())),
                                     preferred_element_type=jnp.float32)   # (Lq, Lk)
        blk0 = row - (row & (dil - 1))                 # start of the query's dil-block
        in_window = (col >= blk0 - half) & (col < blk0 + dil + half)
        band = (col >= row - half) & (col < row + dil - half)   # reference window_mask
        keep = band & (pmask > 0.0)
        logits = jnp.where(in_window,
                           energy + jnp.where(keep, _LOG_ONE_PLUS_EPS, _LOG_EPS),
                           -1e30)
        rowmax = jnp.max(logits, axis=1, keepdims=True)
        p = jnp.exp(logits - rowmax)
        denom = jnp.sum(p, axis=1, keepdims=True)
        # The reference left-pads K with bl//2 zero columns; for the first block those
        # contribute exp(log 1e-6) each to the softmax denominator.  Reproduce it.
        rowc = jax.lax.broadcasted_iota(jnp.int32, (Lp, 1), 0)
        denom = denom + (jnp.where(rowc < dil, half.astype(jnp.float32), 0.0)
                         * jnp.exp(_LOG_EPS - rowmax))
        att = p * pl.reciprocal(denom, approx=True) * keep.astype(jnp.float32)
        #   att_out[c, t] = sum_j v[c, j] * att[t, j]   (dot_general, no transpose)
        att_out = jax.lax.dot_general(v.astype(jnp.bfloat16), att.astype(jnp.bfloat16),
                                      (((1,), (1,)), ((), ())),
                                      preferred_element_type=jnp.float32)  # (v_dim, Lq)

        # ---- conv_out(relu)*mask, alpha residual, 1x1 projection, final residual ----
        att_out = (jnp.dot(cow_ref[...], jnp.maximum(att_out, 0.0).astype(jnp.bfloat16),
                           preferred_element_type=jnp.float32) + cob_ref[...])
        out = alpha * (att_out * pmask) + ff
        out = (jnp.dot(pw_ref[...], out.astype(jnp.bfloat16),
                       preferred_element_type=jnp.float32) + pb_ref[...])
        new_feat = (x + out) * pmask
        feat_ref[...] = new_feat

        @pl.when(l == num_layers - 1)
        def _finalize():
            o_ref[...] = new_feat

    return kernel


def stage_layers(sp, feat0, pmask, L, alpha, use_f, f=None):
    C, Lp = feat0.shape
    nl = sp['ff_w'].shape[0]
    v_dim = sp['co_w'].shape[2]
    if use_f:
        qk_dim = sp['qk_w'].shape[1] // 2
    else:
        qk_dim = (sp['qkv_w'].shape[1] - v_dim) // 2
    assert (1 << (nl - 1)) <= Lp, "largest attention window must fit the padded length"

    def whole(shape):
        return pl.BlockSpec(shape, lambda l: (0, 0))

    def per_layer(arr):
        return pl.BlockSpec((None,) + arr.shape[1:], lambda l: (l, 0, 0))

    if use_f:
        weights = (sp['ff_w'], sp['ff_b'], sp['qk_w'], sp['qk_b'], sp['v_w'], sp['v_b'],
                   sp['co_w'], sp['co_b'], sp['proj_w'], sp['proj_b'])
        operands = (feat0, f, pmask) + weights
        in_specs = ([whole((C, Lp)), whole((C, Lp)), whole((1, Lp))]
                    + [per_layer(w) for w in weights])
    else:
        weights = (sp['ff_w'], sp['ff_b'], sp['qkv_w'], sp['qkv_b'],
                   sp['co_w'], sp['co_b'], sp['proj_w'], sp['proj_b'])
        operands = (feat0, pmask) + weights
        in_specs = ([whole((C, Lp)), whole((1, Lp))]
                    + [per_layer(w) for w in weights])

    flops = 2 * nl * Lp * (3 * C * C + (2 * qk_dim + v_dim) * C
                           + (qk_dim + v_dim) * Lp + C * v_dim + C * C)
    transcendentals = nl * (Lp * Lp + 3 * Lp)
    bytes_accessed = (4 * (3 if use_f else 2) * C * Lp + 4 * Lp
                      + sum(int(w.size) * w.dtype.itemsize for w in weights))

    kernel = _make_stage_kernel(L=L, alpha=alpha, use_f=use_f, qk_dim=qk_dim,
                                v_dim=v_dim, num_layers=nl)
    return pl.pallas_call(
        kernel,
        grid=(nl,),
        in_specs=in_specs,
        out_specs=pl.BlockSpec((C, Lp), lambda l: (0, 0)),
        out_shape=jax.ShapeDtypeStruct((C, Lp), jnp.float32),
        scratch_shapes=[pltpu.VMEM((C, Lp), jnp.float32)],
        compiler_params=pltpu.CompilerParams(
            dimension_semantics=("arbitrary",),
            vmem_limit_bytes=32 * 1024 * 1024),
        cost_estimate=pl.CostEstimate(flops=flops, transcendentals=transcendentals,
                                      bytes_accessed=bytes_accessed),
    )(*operands)


# ---------------------------------------------------------------------------
# Model glue -- everything stays lane-dense (C, Lp)
# ---------------------------------------------------------------------------
def encoder_forward(p, x, pmask, L):
    feature = in_conv(p['in_w'], p['in_b'], x, L)
    feature = stage_layers(p, feature, pmask, L, alpha=1.0, use_f=False)
    out = out_conv(p['out_w'], p['out_b'], feature, pmask)
    return out, feature


def decoder_forward(p, prev_out, fencoder, pmask, alpha, L):
    feature = dec_in_conv(p['in_w'], p['in_b'], prev_out, pmask, L)
    feature = stage_layers(p, feature, pmask, L, alpha=alpha, use_f=True, f=fencoder)
    out = out_conv(p['out_w'], p['out_b'], feature, pmask)
    return out, feature


def model_forward(params, inputs, masks):
    # inputs: (1, input_dim, L)   masks: (1, num_classes, L)   (batch must be 1)
    assert inputs.shape[0] == 1, "ASFormer sliding attention requires batch == 1"
    L = inputs.shape[2]
    Lp = ((L + 127) // 128) * 128                # lane-dense temporal padding, done ONCE
    x = jnp.pad(inputs[0], ((0, 0), (0, Lp - L)))
    pmask = jnp.pad(masks[0, 0:1, :], ((0, 0), (0, Lp - L)))

    outputs = []
    out, feature = encoder_forward(params['enc'], x, pmask, L)
    outputs.append(out[None, :, :L])
    for s, dp in enumerate(params['dec']):
        alpha = math.exp(-3.0 * s)               # exponential_descrease(s)
        out, feature = decoder_forward(dp, out, feature, pmask, alpha, L)
        outputs.append(out[None, :, :L])
    return outputs, feature[None, :, :L]


# ---------------------------------------------------------------------------
# Deterministic parameter init (PyTorch layout) + packing into kernel layout
# ---------------------------------------------------------------------------
def init_params(key, input_dim, num_f_maps, num_classes,
                enc_layers, dec_layers, dec_repeat, r1, r2):
    keys = iter(jax.random.split(key, 4096))

    def w(shape, scale=0.05):
        return jax.random.normal(next(keys), shape, jnp.float32) * scale

    def conv_p(cout, cin):
        return w((cout, cin)), w((cout,))

    qk_dim = num_f_maps // r1
    v_dim = num_f_maps // r2

    def layer_p():
        qw, qb = conv_p(qk_dim, num_f_maps)
        kw, kb = conv_p(qk_dim, num_f_maps)
        vw, vb = conv_p(v_dim, num_f_maps)
        cow, cob = conv_p(num_f_maps, v_dim)
        pw, pb = conv_p(num_f_maps, num_f_maps)
        return dict(ff_w=w((3, num_f_maps, num_f_maps)), ff_b=w((num_f_maps,)),
                    q_w=qw, q_b=qb, k_w=kw, k_b=kb, v_w=vw, v_b=vb,
                    co_w=cow, co_b=cob, proj_w=pw, proj_b=pb)

    enc_in_w, enc_in_b = conv_p(num_f_maps, input_dim)
    enc_out_w, enc_out_b = conv_p(num_classes, num_f_maps)
    enc = dict(in_w=enc_in_w, in_b=enc_in_b, out_w=enc_out_w, out_b=enc_out_b,
               layers=[layer_p() for _ in range(enc_layers)])

    decs = []
    for _ in range(dec_repeat):
        d_in_w, d_in_b = conv_p(num_f_maps, num_classes)
        d_out_w, d_out_b = conv_p(num_classes, num_f_maps)
        decs.append(dict(in_w=d_in_w, in_b=d_in_b, out_w=d_out_w, out_b=d_out_b,
                         layers=[layer_p() for _ in range(dec_layers)]))
    return dict(enc=enc, dec=decs)


def pack_params(params):
    """Kernel-ready weights: per-layer arrays stacked along a leading layer axis,
    3 conv taps row-stacked, Q/K (and V for the encoder) stacked with the 1/sqrt(c1)
    attention scale folded into Q, matmul weights cast to bf16, biases as fp32 columns."""
    def pack_stage(sp, stack_v_with_qk):
        ffw, ffb, qkw, qkb, vw, vb, cow, cob, pw, pb = ([] for _ in range(10))
        for lp in sp['layers']:
            qk_dim = lp['q_w'].shape[0]
            scale = 1.0 / math.sqrt(qk_dim)
            ffw.append(jnp.concatenate([lp['ff_w'][0], lp['ff_w'][1], lp['ff_w'][2]], axis=0))
            ffb.append(lp['ff_b'][:, None])
            qws, qbs = lp['q_w'] * scale, lp['q_b'] * scale
            if stack_v_with_qk:
                qkw.append(jnp.concatenate([qws, lp['k_w'], lp['v_w']], axis=0))
                qkb.append(jnp.concatenate([qbs, lp['k_b'], lp['v_b']], axis=0)[:, None])
            else:
                qkw.append(jnp.concatenate([qws, lp['k_w']], axis=0))
                qkb.append(jnp.concatenate([qbs, lp['k_b']], axis=0)[:, None])
                vw.append(lp['v_w'])
                vb.append(lp['v_b'][:, None])
            cow.append(lp['co_w']); cob.append(lp['co_b'][:, None])
            pw.append(lp['proj_w']); pb.append(lp['proj_b'][:, None])

        packed = dict(in_w=sp['in_w'].astype(jnp.bfloat16), in_b=sp['in_b'][:, None],
                      out_w=sp['out_w'].astype(jnp.bfloat16), out_b=sp['out_b'][:, None],
                      ff_w=jnp.stack(ffw).astype(jnp.bfloat16), ff_b=jnp.stack(ffb),
                      co_w=jnp.stack(cow).astype(jnp.bfloat16), co_b=jnp.stack(cob),
                      proj_w=jnp.stack(pw).astype(jnp.bfloat16), proj_b=jnp.stack(pb))
        if stack_v_with_qk:
            packed['qkv_w'] = jnp.stack(qkw).astype(jnp.bfloat16)
            packed['qkv_b'] = jnp.stack(qkb)
        else:
            packed['qk_w'] = jnp.stack(qkw).astype(jnp.bfloat16)
            packed['qk_b'] = jnp.stack(qkb)
            packed['v_w'] = jnp.stack(vw).astype(jnp.bfloat16)
            packed['v_b'] = jnp.stack(vb)
        return packed

    return dict(enc=pack_stage(params['enc'], True),
                dec=[pack_stage(dp, False) for dp in params['dec']])


if __name__ == "__main__":
    # Small, structurally faithful config (full model: 40 enc layers, 2048-dim input,
    # 64 maps, 40 classes).
    input_dim = 32
    num_f_maps = 16
    num_classes = 8
    enc_layers = 4          # dilations / attention windows 1, 2, 4, 8
    dec_layers = 3          # dilations / attention windows 1, 2, 4
    dec_repeat = 2
    r1 = r2 = 2
    L = 44                  # not a multiple of 128 -> exercises the padded-tail path
    L_valid = 40            # last frames masked out

    key = jax.random.PRNGKey(0)
    k_par, k_in = jax.random.split(key)
    params = pack_params(init_params(k_par, input_dim, num_f_maps, num_classes,
                                     enc_layers, dec_layers, dec_repeat, r1, r2))

    inputs = jax.random.normal(k_in, (1, input_dim, L), jnp.float32)
    mask_row = (jnp.arange(L) < L_valid).astype(jnp.float32)
    masks = jnp.broadcast_to(mask_row[None, None, :], (1, num_classes, L))

    fwd = jax.jit(model_forward)
    outputs, feature = fwd(params, inputs, masks)
    for o in outputs:
        jax.block_until_ready(o)
    feature = jax.block_until_ready(feature)

    assert len(outputs) == 1 + dec_repeat
    assert outputs[0].shape == (1, num_classes, L)
    assert feature.shape == (1, num_f_maps, L)
    assert all(bool(jnp.all(jnp.isfinite(o))) for o in outputs)
    assert bool(jnp.all(jnp.isfinite(feature)))
    print("KERNEL_OK")
</pallas_src>

<mosaic_0001>
module attributes {stable_mosaic.version = 11 : i64} {
  func.func @_in_conv_kernel(%arg0: i32, %arg1: memref<16x32xbf16, #tpu.memory_space<vmem>>, %arg2: memref<16x1xf32, #tpu.memory_space<vmem>>, %arg3: memref<32x128xf32, #tpu.memory_space<vmem>>, %arg4: memref<16x128xf32, #tpu.memory_space<vmem>>) attributes {dimension_semantics = [#tpu.dimension_semantics<parallel>], iteration_bounds = array<i64: 1>, scalar_prefetch = 0 : i64, scratch_operands = 0 : i64, tpu.core_type = #tpu.core_type<tc>, window_params = [{pipeline_mode = #tpu.pipeline_mode<synchronous>, transform_indices = @transform_0, window_bounds = array<i64: 16, 32>}, {pipeline_mode = #tpu.pipeline_mode<synchronous>, transform_indices = @transform_1, window_bounds = array<i64: 16, 1>}, {transform_indices = @transform_2, window_bounds = array<i64: 32, 128>}, {transform_indices = @transform_3, window_bounds = array<i64: 16, 128>}]} {
    %c128_i32 = arith.constant 128 : i32
    %0 = arith.muli %arg0, %c128_i32 : i32
    %1 = tpu.iota {dimensions = array<i32: 1>} : vector<1x128xi32>
    %2 = vector.broadcast %0 : i32 to vector<1x128xi32>
    %3 = arith.addi %2, %1 : vector<1x128xi32>
    %c44_i32 = arith.constant 44 : i32
    %4 = vector.broadcast %c44_i32 : i32 to vector<1x128xi32>
    %5 = arith.cmpi slt, %3, %4 : vector<1x128xi32>
    %6 = arith.extui %5 : vector<1x128xi1> to vector<1x128xi32>
    %7 = arith.sitofp %6 : vector<1x128xi32> to vector<1x128xf32>
    %c0 = arith.constant 0 : index
    %c0_0 = arith.constant 0 : index
    %8 = vector.load %arg1[%c0, %c0_0] : memref<16x32xbf16, #tpu.memory_space<vmem>>, vector<16x32xbf16>
    %c0_1 = arith.constant 0 : index
    %c0_2 = arith.constant 0 : index
    %9 = vector.load %arg3[%c0_1, %c0_2] : memref<32x128xf32, #tpu.memory_space<vmem>>, vector<32x128xf32>
    %10 = arith.truncf %9 : vector<32x128xf32> to vector<32x128xbf16>
    %cst = arith.constant dense<0.000000e+00> : vector<16x128xf32>
    %11 = tpu.matmul %8, %10, %cst {dimension_numbers = #tpu.dot_dimension_numbers<[1], [0], [0], [1], [0, 0, 1, 1], [], []>} : vector<16x32xbf16>, vector<32x128xbf16>, vector<16x128xf32> -> vector<16x128xf32>
    %c0_3 = arith.constant 0 : index
    %c0_4 = arith.constant 0 : index
    %12 = vector.load %arg2[%c0_3, %c0_4] : memref<16x1xf32, #tpu.memory_space<vmem>>, vector<16x1xf32>
    %13 = vector.broadcast %12 : vector<16x1xf32> to vector<16x128xf32>
    %14 = arith.addf %11, %13 : vector<16x128xf32>
    %15 = vector.broadcast %7 : vector<1x128xf32> to vector<16x128xf32>
    %16 = arith.mulf %14, %15 : vector<16x128xf32>
    %c0_5 = arith.constant 0 : index
    %c0_6 = arith.constant 0 : index
    %17 = vector.load %arg4[%c0_5, %c0_6] : memref<16x128xf32, #tpu.memory_space<vmem>>, vector<16x128xf32>
    tpu.vector_store %arg4[%c0_5, %c0_6], %16 {strides = array<i32>} : memref<16x128xf32, #tpu.memory_space<vmem>>, vector<16x128xf32>,
    return
  }
  func.func @transform_0(%arg0: i32) -> (i32, i32) {
    %c0_i32 = arith.constant 0 : i32
    %c0_i32_0 = arith.constant 0 : i32
    %c0_i32_1 = arith.constant 0 : i32
    return %c0_i32, %c0_i32_0 : i32, i32
  }
  func.func @transform_1(%arg0: i32) -> (i32, i32) {
    %c0_i32 = arith.constant 0 : i32
    %c0_i32_0 = arith.constant 0 : i32
    %c0_i32_1 = arith.constant 0 : i32
    return %c0_i32, %c0_i32_0 : i32, i32
  }
  func.func @transform_2(%arg0: i32) -> (i32, i32) {
    %c0_i32 = arith.constant 0 : i32
    %c0_i32_0 = arith.constant 0 : i32
    return %c0_i32, %arg0 : i32, i32
  }
  func.func @transform_3(%arg0: i32) -> (i32, i32) {
    %c0_i32 = arith.constant 0 : i32
    %c0_i32_0 = arith.constant 0 : i32
    return %c0_i32, %arg0 : i32, i32
  }
}

module attributes {stable_mosaic.version = 11 : i64} {
  func.func @_out_conv_kernel(%arg0: i32, %arg1: memref<8x16xbf16, #tpu.memory_space<vmem>>, %arg2: memref<8x1xf32, #tpu.memory_space<vmem>>, %arg3: memref<16x128xf32, #tpu.memory_space<vmem>>, %arg4: memref<1x128xf32, #tpu.memory_space<vmem>>, %arg5: memref<8x128xf32, #tpu.memory_space<vmem>>) attributes {dimension_semantics = [#tpu.dimension_semantics<parallel>], iteration_bounds = array<i64: 1>, scalar_prefetch = 0 : i64, scratch_operands = 0 : i64, tpu.core_type = #tpu.core_type<tc>, window_params = [{pipeline_mode = #tpu.pipeline_mode<synchronous>, transform_indices = @transform_0, window_bounds = array<i64: 8, 16>}, {pipeline_mode = #tpu.pipeline_mode<synchronous>, transform_indices = @transform_1, window_bounds = array<i64: 8, 1>}, {transform_indices = @transform_2, window_bounds = array<i64: 16, 128>}, {transform_indices = @transform_3, window_bounds = array<i64: 1, 128>}, {transform_indices = @transform_4, window_bounds = array<i64: 8, 128>}]} {
    %c0 = arith.constant 0 : index
    %c0_0 = arith.constant 0 : index
    %0 = vector.load %arg1[%c0, %c0_0] : memref<8x16xbf16, #tpu.memory_space<vmem>>, vector<8x16xbf16>
    %c0_1 = arith.constant 0 : index
    %c0_2 = arith.constant 0 : index
    %1 = vector.load %arg3[%c0_1, %c0_2] : memref<16x128xf32, #tpu.memory_space<vmem>>, vector<16x128xf32>
    %2 = arith.truncf %1 : vector<16x128xf32> to vector<16x128xbf16>
    %cst = arith.constant dense<0.000000e+00> : vector<8x128xf32>
    %3 = tpu.matmul %0, %2, %cst {dimension_numbers = #tpu.dot_dimension_numbers<[1], [0], [0], [1], [0, 0, 1, 1], [], []>} : vector<8x16xbf16>, vector<16x128xbf16>, vector<8x128xf32> -> vector<8x128xf32>
    %c0_3 = arith.constant 0 : index
    %c0_4 = arith.constant 0 : index
    %4 = vector.load %arg2[%c0_3, %c0_4] : memref<8x1xf32, #tpu.memory_space<vmem>>, vector<8x1xf32>
    %5 = vector.broadcast %4 : vector<8x1xf32> to vector<8x128xf32>
    %6 = arith.addf %3, %5 : vector<8x128xf32>
    %c0_5 = arith.constant 0 : index
    %c0_6 = arith.constant 0 : index
    %7 = vector.load %arg4[%c0_5, %c0_6] : memref<1x128xf32, #tpu.memory_space<vmem>>, vector<1x128xf32>
    %8 = vector.broadcast %7 : vector<1x128xf32> to vector<8x128xf32>
    %9 = arith.mulf %6, %8 : vector<8x128xf32>
    %c0_7 = arith.constant 0 : index
    %c0_8 = arith.constant 0 : index
    %10 = vector.load %arg5[%c0_7, %c0_8] : memref<8x128xf32, #tpu.memory_space<vmem>>, vector<8x128xf32>
    tpu.vector_store %arg5[%c0_7, %c0_8], %9 {strides = array<i32>} : memref<8x128xf32, #tpu.memory_space<vmem>>, vector<8x128xf32>,
    return
  }
  func.func @transform_0(%arg0: i32) -> (i32, i32) {
    %c0_i32 = arith.constant 0 : i32
    %c0_i32_0 = arith.constant 0 : i32
    %c0_i32_1 = arith.constant 0 : i32
    return %c0_i32, %c0_i32_0 : i32, i32
  }
  func.func @transform_1(%arg0: i32) -> (i32, i32) {
    %c0_i32 = arith.constant 0 : i32
    %c0_i32_0 = arith.constant 0 : i32
    %c0_i32_1 = arith.constant 0 : i32
    return %c0_i32, %c0_i32_0 : i32, i32
  }
  func.func @transform_2(%arg0: i32) -> (i32, i32) {
    %c0_i32 = arith.constant 0 : i32
    %c0_i32_0 = arith.constant 0 : i32
    return %c0_i32, %arg0 : i32, i32
  }
  func.func @transform_3(%arg0: i32) -> (i32, i32) {
    %c0_i32 = arith.constant 0 : i32
    %c0_i32_0 = arith.constant 0 : i32
    return %c0_i32, %arg0 : i32, i32
  }
  func.func @transform_4(%arg0: i32) -> (i32, i32) {
    %c0_i32 = arith.constant 0 : i32
    %c0_i32_0 = arith.constant 0 : i32
    return %c0_i32, %arg0 : i32, i32
  }
}

module attributes {stable_mosaic.version = 11 : i64} {
  func.func @kernel(%arg0: i32, %arg1: memref<16x128xf32, #tpu.memory_space<vmem>>, %arg2: memref<1x128xf32, #tpu.memory_space<vmem>>, %arg3: memref<1x48x16xbf16, #tpu.memory_space<vmem>>, %arg4: memref<1x16x1xf32, #tpu.memory_space<vmem>>, %arg5: memref<1x24x16xbf16, #tpu.memory_space<vmem>>, %arg6: memref<1x24x1xf32, #tpu.memory_space<vmem>>, %arg7: memref<1x16x8xbf16, #tpu.memory_space<vmem>>, %arg8: memref<1x16x1xf32, #tpu.memory_space<vmem>>, %arg9: memref<1x16x16xbf16, #tpu.memory_space<vmem>>, %arg10: memref<1x16x1xf32, #tpu.memory_space<vmem>>, %arg11: memref<16x128xf32, #tpu.memory_space<vmem>>, %arg12: memref<16x128xf32, #tpu.memory_space<vmem>>) attributes {dimension_semantics = [#tpu.dimension_semantics<arbitrary>], iteration_bounds = array<i64: 4>, scalar_prefetch = 0 : i64, scratch_operands = 1 : i64, tpu.core_type = #tpu.core_type<tc>, window_params = [{pipeline_mode = #tpu.pipeline_mode<synchronous>, transform_indices = @transform_0, window_bounds = array<i64: 16, 128>}, {pipeline_mode = #tpu.pipeline_mode<synchronous>, transform_indices = @transform_1, window_bounds = array<i64: 1, 128>}, {transform_indices = @transform_2, window_bounds = array<i64: 1, 48, 16>}, {transform_indices = @transform_3, window_bounds = array<i64: 1, 16, 1>}, {transform_indices = @transform_4, window_bounds = array<i64: 1, 24, 16>}, {transform_indices = @transform_5, window_bounds = array<i64: 1, 24, 1>}, {transform_indices = @transform_6, window_bounds = array<i64: 1, 16, 8>}, {transform_indices = @transform_7, window_bounds = array<i64: 1, 16, 1>}, {transform_indices = @transform_8, window_bounds = array<i64: 1, 16, 16>}, {transform_indices = @transform_9, window_bounds = array<i64: 1, 16, 1>}, {pipeline_mode = #tpu.pipeline_mode<synchronous>, transform_indices = @transform_10, window_bounds = array<i64: 16, 128>}]} {
    %c1_i32 = arith.constant 1 : i32
    %0 = arith.shli %c1_i32, %arg0 : i32
    %c1_i32_0 = arith.constant 1 : i32
    %1 = arith.shrsi %0, %c1_i32_0 : i32
    %c0_i32 = arith.constant 0 : i32
    %2 = arith.cmpi eq, %arg0, %c0_i32 : i32
    %3 = arith.extui %2 : i1 to i32
    %c0_i32_1 = arith.constant 0 : i32
    %4 = arith.cmpi ne, %3, %c0_i32_1 : i32
    scf.if %4 {
      %c0_57 = arith.constant 0 : index
      %c0_58 = arith.constant 0 : index
      %173 = vector.load %arg1[%c0_57, %c0_58] : memref<16x128xf32, #tpu.memory_space<vmem>>, vector<16x128xf32>
      %c0_59 = arith.constant 0 : index
      %c0_60 = arith.constant 0 : index
      %174 = vector.load %arg12[%c0_59, %c0_60] : memref<16x128xf32, #tpu.memory_space<vmem>>, vector<16x128xf32>
      tpu.vector_store %arg12[%c0_59, %c0_60], %173 {strides = array<i32>} : memref<16x128xf32, #tpu.memory_space<vmem>>, vector<16x128xf32>,
    } else {
    }
    %c0 = arith.constant 0 : index
    %c0_2 = arith.constant 0 : index
    %5 = vector.load %arg12[%c0, %c0_2] : memref<16x128xf32, #tpu.memory_space<vmem>>, vector<16x128xf32>
    %c0_3 = arith.constant 0 : index
    %c0_4 = arith.constant 0 : index
    %6 = vector.load %arg2[%c0_3, %c0_4] : memref<1x128xf32, #tpu.memory_space<vmem>>, vector<1x128xf32>
    %7 = tpu.iota {dimensions = array<i32: 1>} : vector<1x128xi32>
    %c44_i32 = arith.constant 44 : i32
    %8 = vector.broadcast %c44_i32 : i32 to vector<1x128xi32>
    %9 = arith.cmpi slt, %7, %8 : vector<1x128xi32>
    %10 = arith.extui %9 : vector<1x128xi1> to vector<1x128xi32>
    %11 = arith.sitofp %10 : vector<1x128xi32> to vector<1x128xf32>
    %c0_5 = arith.constant 0 : index
    %c0_6 = arith.constant 0 : index
    %c0_7 = arith.constant 0 : index
    %12 = vector.load %arg3[%c0_5, %c0_6, %c0_7] : memref<1x48x16xbf16, #tpu.memory_space<vmem>>, vector<1x48x16xbf16>
    %13 = vector.shape_cast %12 : vector<1x48x16xbf16> to vector<48x16xbf16>
    %14 = arith.truncf %5 : vector<16x128xf32> to vector<16x128xbf16>
    %cst = arith.constant dense<0.000000e+00> : vector<48x128xf32>
    %15 = tpu.matmul %13, %14, %cst {dimension_numbers = #tpu.dot_dimension_numbers<[1], [0], [0], [1], [0, 0, 1, 1], [], []>} : vector<48x16xbf16>, vector<16x128xbf16>, vector<48x128xf32> -> vector<48x128xf32>
    %16 = vector.extract_strided_slice %15 {offsets = [0, 0], sizes = [16, 128], strides = [1, 1]} : vector<48x128xf32> to vector<16x128xf32>
    %17 = tpu.dynamic_rotate %16 by %0 dim 1 : vector<16x128xf32>, i32 -> vector<16x128xf32>
    %18 = vector.broadcast %0 : i32 to vector<1x128xi32>
    %19 = arith.cmpi sge, %7, %18 : vector<1x128xi32>
    %cst_8 = arith.constant 0.000000e+00 : f32
    %20 = vector.shape_cast %19 : vector<1x128xi1> to vector<1x128xi1>
    %21 = vector.broadcast %20 : vector<1x128xi1> to vector<16x128xi1>
    %22 = vector.broadcast %cst_8 : f32 to vector<16x128xf32>
    %23 = arith.select %21, %17, %22 : vector<16x128xi1>, vector<16x128xf32>
    %24 = vector.extract_strided_slice %15 {offsets = [32, 0], sizes = [16, 128], strides = [1, 1]} : vector<48x128xf32> to vector<16x128xf32>
    %c128_i32 = arith.constant 128 : i32
    %25 = arith.subi %c128_i32, %0 : i32
    %26 = tpu.dynamic_rotate %24 by %25 dim 1 : vector<16x128xf32>, i32 -> vector<16x128xf32>
    %c128_i32_9 = arith.constant 128 : i32
    %27 = arith.subi %c128_i32_9, %0 : i32
    %28 = vector.broadcast %27 : i32 to vector<1x128xi32>
    %29 = arith.cmpi slt, %7, %28 : vector<1x128xi32>
    %cst_10 = arith.constant 0.000000e+00 : f32
    %30 = vector.shape_cast %29 : vector<1x128xi1> to vector<1x128xi1>
    %31 = vector.broadcast %30 : vector<1x128xi1> to vector<16x128xi1>
    %32 = vector.broadcast %cst_10 : f32 to vector<16x128xf32>
    %33 = arith.select %31, %26, %32 : vector<16x128xi1>, vector<16x128xf32>
    %34 = vector.extract_strided_slice %15 {offsets = [16, 0], sizes = [16, 128], strides = [1, 1]} : vector<48x128xf32> to vector<16x128xf32>
    %35 = arith.addf %34, %23 : vector<16x128xf32>
    %36 = arith.addf %35, %33 : vector<16x128xf32>
    %c0_11 = arith.constant 0 : index
    %c0_12 = arith.constant 0 : index
    %c0_13 = arith.constant 0 : index
    %37 = vector.load %arg4[%c0_11, %c0_12, %c0_13] : memref<1x16x1xf32, #tpu.memory_space<vmem>>, vector<1x16x1xf32>
    %38 = vector.shape_cast %37 : vector<1x16x1xf32> to vector<16x1xf32>
    %39 = vector.broadcast %38 : vector<16x1xf32> to vector<16x128xf32>
    %40 = arith.addf %36, %39 : vector<16x128xf32>
    %cst_14 = arith.constant 0.000000e+00 : f32
    %41 = vector.broadcast %cst_14 : f32 to vector<16x128xf32>
    %42 = arith.maximumf %40, %41 : vector<16x128xf32>
    %43 = vector.broadcast %11 : vector<1x128xf32> to vector<16x128xf32>
    %44 = arith.mulf %42, %43 : vector<16x128xf32>
    %cst_15 = arith.constant dense<0.000000e+00> : vector<16xf32>
    %45 = vector.multi_reduction <add>, %44, %cst_15 [1] : vector<16x128xf32> to vector<16xf32>
    %46 = vector.shape_cast %45 : vector<16xf32> to vector<16x1xf32>
    %cst_16 = arith.constant 0.0227272734 : f32
    %47 = vector.broadcast %cst_16 : f32 to vector<16x1xf32>
    %48 = arith.mulf %46, %47 : vector<16x1xf32>
    %49 = vector.broadcast %48 : vector<16x1xf32> to vector<16x128xf32>
    %50 = arith.subf %42, %49 : vector<16x128xf32>
    %51 = arith.mulf %50, %50 : vector<16x128xf32>
    %52 = vector.broadcast %11 : vector<1x128xf32> to vector<16x128xf32>
    %53 = arith.mulf %51, %52 : vector<16x128xf32>
    %cst_17 = arith.constant dense<0.000000e+00> : vector<16xf32>
    %54 = vector.multi_reduction <add>, %53, %cst_17 [1] : vector<16x128xf32> to vector<16xf32>
    %55 = vector.shape_cast %54 : vector<16xf32> to vector<16x1xf32>
    %cst_18 = arith.constant 0.0227272734 : f32
    %56 = vector.broadcast %cst_18 : f32 to vector<16x1xf32>
    %57 = arith.mulf %55, %56 : vector<16x1xf32>
    %cst_19 = arith.constant 9.99999974E-6 : f32
    %58 = vector.broadcast %cst_19 : f32 to vector<16x1xf32>
    %59 = arith.addf %57, %58 : vector<16x1xf32>
    %60 = math.rsqrt %59 : vector<16x1xf32>
    %61 = vector.broadcast %60 : vector<16x1xf32> to vector<16x128xf32>
    %62 = arith.mulf %50, %61 : vector<16x128xf32>
    %63 = arith.truncf %62 : vector<16x128xf32> to vector<16x128xbf16>
    %c0_20 = arith.constant 0 : index
    %c0_21 = arith.constant 0 : index
    %c0_22 = arith.constant 0 : index
    %64 = vector.load %arg5[%c0_20, %c0_21, %c0_22] : memref<1x24x16xbf16, #tpu.memory_space<vmem>>, vector<1x24x16xbf16>
    %65 = vector.shape_cast %64 : vector<1x24x16xbf16> to vector<24x16xbf16>
    %cst_23 = arith.constant dense<0.000000e+00> : vector<24x128xf32>
    %66 = tpu.matmul %65, %63, %cst_23 {dimension_numbers = #tpu.dot_dimension_numbers<[1], [0], [0], [1], [0, 0, 1, 1], [], []>} : vector<24x16xbf16>, vector<16x128xbf16>, vector<24x128xf32> -> vector<24x128xf32>
    %c0_24 = arith.constant 0 : index
    %c0_25 = arith.constant 0 : index
    %c0_26 = arith.constant 0 : index
    %67 = vector.load %arg6[%c0_24, %c0_25, %c0_26] : memref<1x24x1xf32, #tpu.memory_space<vmem>>, vector<1x24x1xf32>
    %68 = vector.shape_cast %67 : vector<1x24x1xf32> to vector<24x1xf32>
    %69 = vector.broadcast %68 : vector<24x1xf32> to vector<24x128xf32>
    %70 = arith.addf %66, %69 : vector<24x128xf32>
    %71 = vector.extract_strided_slice %70 {offsets = [0, 0], sizes = [8, 128], strides = [1, 1]} : vector<24x128xf32> to vector<8x128xf32>
    %72 = vector.extract_strided_slice %70 {offsets = [8, 0], sizes = [8, 128], strides = [1, 1]} : vector<24x128xf32> to vector<8x128xf32>
    %73 = vector.broadcast %11 : vector<1x128xf32> to vector<8x128xf32>
    %74 = arith.mulf %72, %73 : vector<8x128xf32>
    %75 = vector.extract_strided_slice %70 {offsets = [16, 0], sizes = [8, 128], strides = [1, 1]} : vector<24x128xf32> to vector<8x128xf32>
    %76 = vector.broadcast %11 : vector<1x128xf32> to vector<8x128xf32>
    %77 = arith.mulf %75, %76 : vector<8x128xf32>
    %78 = tpu.iota {dimensions = array<i32: 0>} : vector<128x128xi32>
    %79 = tpu.iota {dimensions = array<i32: 1>} : vector<128x128xi32>
    %80 = arith.truncf %71 : vector<8x128xf32> to vector<8x128xbf16>
    %81 = arith.truncf %74 : vector<8x128xf32> to vector<8x128xbf16>
    %cst_27 = arith.constant dense<0.000000e+00> : vector<128x128xf32>
    %82 = tpu.matmul %80, %81, %cst_27 {dimension_numbers = #tpu.dot_dimension_numbers<[0], [0], [1], [1], [0, 1, 1, 1], [], []>} : vector<8x128xbf16>, vector<8x128xbf16>, vector<128x128xf32> -> vector<128x128xf32>
    %c1_i32_28 = arith.constant 1 : i32
    %83 = arith.subi %0, %c1_i32_28 : i32
    %84 = vector.broadcast %83 : i32 to vector<128x128xi32>
    %85 = arith.andi %78, %84 : vector<128x128xi32>
    %86 = arith.subi %78, %85 : vector<128x128xi32>
    %87 = vector.broadcast %1 : i32 to vector<128x128xi32>
    %88 = arith.subi %86, %87 : vector<128x128xi32>
    %89 = arith.cmpi sge, %79, %88 : vector<128x128xi32>
    %90 = vector.broadcast %0 : i32 to vector<128x128xi32>
    %91 = arith.addi %86, %90 : vector<128x128xi32>
    %92 = vector.broadcast %1 : i32 to vector<128x128xi32>
    %93 = arith.addi %91, %92 : vector<128x128xi32>
    %94 = arith.cmpi slt, %79, %93 : vector<128x128xi32>
    %95 = arith.andi %89, %94 : vector<128x128xi1>
    %96 = vector.broadcast %1 : i32 to vector<128x128xi32>
    %97 = arith.subi %78, %96 : vector<128x128xi32>
    %98 = arith.cmpi sge, %79, %97 : vector<128x128xi32>
    %99 = vector.broadcast %0 : i32 to vector<128x128xi32>
    %100 = arith.addi %78, %99 : vector<128x128xi32>
    %101 = vector.broadcast %1 : i32 to vector<128x128xi32>
    %102 = arith.subi %100, %101 : vector<128x128xi32>
    %103 = arith.cmpi slt, %79, %102 : vector<128x128xi32>
    %104 = arith.andi %98, %103 : vector<128x128xi1>
    %cst_29 = arith.constant 0.000000e+00 : f32
    %105 = vector.broadcast %cst_29 : f32 to vector<1x128xf32>
    %106 = arith.cmpf ogt, %6, %105 : vector<1x128xf32>
    %107 = vector.broadcast %106 : vector<1x128xi1> to vector<128x128xi1>
    %108 = arith.andi %104, %107 : vector<128x128xi1>
    %cst_30 = arith.constant 9.99999543E-7 : f32
    %cst_31 = arith.constant -13.8155107 : f32
    %109 = vector.broadcast %cst_30 : f32 to vector<128x128xf32>
    %110 = vector.broadcast %cst_31 : f32 to vector<128x128xf32>
    %111 = arith.select %108, %109, %110 : vector<128x128xi1>, vector<128x128xf32>
    %112 = arith.addf %82, %111 : vector<128x128xf32>
    %cst_32 = arith.constant -1.000000e+30 : f32
    %113 = vector.broadcast %cst_32 : f32 to vector<128x128xf32>
    %114 = arith.select %95, %112, %113 : vector<128x128xi1>, vector<128x128xf32>
    %cst_33 = arith.constant dense<0xFF800000> : vector<128xf32>
    %115 = vector.multi_reduction <maximumf>, %114, %cst_33 [1] : vector<128x128xf32> to vector<128xf32>
    %116 = vector.shape_cast %115 : vector<128xf32> to vector<128x1xf32>
    %117 = vector.broadcast %116 : vector<128x1xf32> to vector<128x128xf32>
    %118 = arith.subf %114, %117 : vector<128x128xf32>
    %119 = math.exp %118 : vector<128x128xf32>
    %cst_34 = arith.constant dense<0.000000e+00> : vector<128xf32>
    %120 = vector.multi_reduction <add>, %119, %cst_34 [1] : vector<128x128xf32> to vector<128xf32>
    %121 = vector.shape_cast %120 : vector<128xf32> to vector<128x1xf32>
    %122 = tpu.iota {dimensions = array<i32: 0>} : vector<128x1xi32>
    %123 = vector.broadcast %0 : i32 to vector<128x1xi32>
    %124 = arith.cmpi slt, %122, %123 : vector<128x1xi32>
    %125 = arith.sitofp %1 : i32 to f32
    %cst_35 = arith.constant 0.000000e+00 : f32
    %126 = vector.broadcast %125 : f32 to vector<128x1xf32>
    %127 = vector.broadcast %cst_35 : f32 to vector<128x1xf32>
    %128 = arith.select %124, %126, %127 : vector<128x1xi1>, vector<128x1xf32>
    %cst_36 = arith.constant -13.8155107 : f32
    %129 = vector.broadcast %cst_36 : f32 to vector<128x1xf32>
    %130 = arith.subf %129, %116 : vector<128x1xf32>
    %131 = math.exp %130 : vector<128x1xf32>
    %132 = arith.mulf %128, %131 : vector<128x1xf32>
    %133 = arith.addf %121, %132 : vector<128x1xf32>
    %134 = tpu.reciprocal %133 {approx = true} : vector<128x1xf32> -> vector<128x1xf32>
    %135 = vector.broadcast %134 : vector<128x1xf32> to vector<128x128xf32>
    %136 = arith.mulf %119, %135 : vector<128x128xf32>
    %137 = arith.extui %108 : vector<128x128xi1> to vector<128x128xi32>
    %138 = arith.sitofp %137 : vector<128x128xi32> to vector<128x128xf32>
    %139 = arith.mulf %136, %138 : vector<128x128xf32>
    %140 = arith.truncf %77 : vector<8x128xf32> to vector<8x128xbf16>
    %141 = arith.truncf %139 : vector<128x128xf32> to vector<128x128xbf16>
    %cst_37 = arith.constant dense<0.000000e+00> : vector<8x128xf32>
    %142 = tpu.matmul %140, %141, %cst_37 {dimension_numbers = #tpu.dot_dimension_numbers<[1], [1], [0], [0], [0, 0, 1, 0], [], []>} : vector<8x128xbf16>, vector<128x128xbf16>, vector<8x128xf32> -> vector<8x128xf32>
    %c0_38 = arith.constant 0 : index
    %c0_39 = arith.constant 0 : index
    %c0_40 = arith.constant 0 : index
    %143 = vector.load %arg7[%c0_38, %c0_39, %c0_40] : memref<1x16x8xbf16, #tpu.memory_space<vmem>>, vector<1x16x8xbf16>
    %144 = vector.shape_cast %143 : vector<1x16x8xbf16> to vector<16x8xbf16>
    %cst_41 = arith.constant 0.000000e+00 : f32
    %145 = vector.broadcast %cst_41 : f32 to vector<8x128xf32>
    %146 = arith.maximumf %142, %145 : vector<8x128xf32>
    %147 = arith.truncf %146 : vector<8x128xf32> to vector<8x128xbf16>
    %cst_42 = arith.constant dense<0.000000e+00> : vector<16x128xf32>
    %148 = tpu.matmul %144, %147, %cst_42 {dimension_numbers = #tpu.dot_dimension_numbers<[1], [0], [0], [1], [0, 0, 1, 1], [], []>} : vector<16x8xbf16>, vector<8x128xbf16>, vector<16x128xf32> -> vector<16x128xf32>
    %c0_43 = arith.constant 0 : index
    %c0_44 = arith.constant 0 : index
    %c0_45 = arith.constant 0 : index
    %149 = vector.load %arg8[%c0_43, %c0_44, %c0_45] : memref<1x16x1xf32, #tpu.memory_space<vmem>>, vector<1x16x1xf32>
    %150 = vector.shape_cast %149 : vector<1x16x1xf32> to vector<16x1xf32>
    %151 = vector.broadcast %150 : vector<16x1xf32> to vector<16x128xf32>
    %152 = arith.addf %148, %151 : vector<16x128xf32>
    %153 = vector.broadcast %6 : vector<1x128xf32> to vector<16x128xf32>
    %154 = arith.mulf %152, %153 : vector<16x128xf32>
    %cst_46 = arith.constant 1.000000e+00 : f32
    %155 = vector.broadcast %cst_46 : f32 to vector<16x128xf32>
    %156 = arith.mulf %155, %154 : vector<16x128xf32>
    %157 = arith.addf %156, %42 : vector<16x128xf32>
    %c0_47 = arith.constant 0 : index
    %c0_48 = arith.constant 0 : index
    %c0_49 = arith.constant 0 : index
    %158 = vector.load %arg9[%c0_47, %c0_48, %c0_49] : memref<1x16x16xbf16, #tpu.memory_space<vmem>>, vector<1x16x16xbf16>
    %159 = vector.shape_cast %158 : vector<1x16x16xbf16> to vector<16x16xbf16>
    %160 = arith.truncf %157 : vector<16x128xf32> to vector<16x128xbf16>
    %cst_50 = arith.constant dense<0.000000e+00> : vector<16x128xf32>
    %161 = tpu.matmul %159, %160, %cst_50 {dimension_numbers = #tpu.dot_dimension_numbers<[1], [0], [0], [1], [0, 0, 1, 1], [], []>} : vector<16x16xbf16>, vector<16x128xbf16>, vector<16x128xf32> -> vector<16x128xf32>
    %c0_51 = arith.constant 0 : index
    %c0_52 = arith.constant 0 : index
    %c0_53 = arith.constant 0 : index
    %162 = vector.load %arg10[%c0_51, %c0_52, %c0_53] : memref<1x16x1xf32, #tpu.memory_space<vmem>>, vector<1x16x1xf32>
    %163 = vector.shape_cast %162 : vector<1x16x1xf32> to vector<16x1xf32>
    %164 = vector.broadcast %163 : vector<16x1xf32> to vector<16x128xf32>
    %165 = arith.addf %161, %164 : vector<16x128xf32>
    %166 = arith.addf %5, %165 : vector<16x128xf32>
    %167 = vector.broadcast %6 : vector<1x128xf32> to vector<16x128xf32>
    %168 = arith.mulf %166, %167 : vector<16x128xf32>
    %c0_54 = arith.constant 0 : index
    %c0_55 = arith.constant 0 : index
    %169 = vector.load %arg12[%c0_54, %c0_55] : memref<16x128xf32, #tpu.memory_space<vmem>>, vector<16x128xf32>
    tpu.vector_store %arg12[%c0_54, %c0_55], %168 {strides = array<i32>} : memref<16x128xf32, #tpu.memory_space<vmem>>, vector<16x128xf32>,
    %c3_i32 = arith.constant 3 : i32
    %170 = arith.cmpi eq, %arg0, %c3_i32 : i32
    %171 = arith.extui %170 : i1 to i32
    %c0_i32_56 = arith.constant 0 : i32
    %172 = arith.cmpi ne, %171, %c0_i32_56 : i32
    scf.if %172 {
      %c0_57 = arith.constant 0 : index
      %c0_58 = arith.constant 0 : index
      %173 = vector.load %arg11[%c0_57, %c0_58] : memref<16x128xf32, #tpu.memory_space<vmem>>, vector<16x128xf32>
      tpu.vector_store %arg11[%c0_57, %c0_58], %168 {strides = array<i32>} : memref<16x128xf32, #tpu.memory_space<vmem>>, vector<16x128xf32>,
    } else {
    }
    return
  }
  func.func @transform_0(%arg0: i32) -> (i32, i32) {
    %c0_i32 = arith.constant 0 : i32
    %c0_i32_0 = arith.constant 0 : i32
    %c0_i32_1 = arith.constant 0 : i32
    return %c0_i32, %c0_i32_0 : i32, i32
  }
  func.func @transform_1(%arg0: i32) -> (i32, i32) {
    %c0_i32 = arith.constant 0 : i32
    %c0_i32_0 = arith.constant 0 : i32
    %c0_i32_1 = arith.constant 0 : i32
    return %c0_i32, %c0_i32_0 : i32, i32
  }
  func.func @transform_2(%arg0: i32) -> (i32, i32, i32) {
    %c0_i32 = arith.constant 0 : i32
    %c0_i32_0 = arith.constant 0 : i32
    %c0_i32_1 = arith.constant 0 : i32
    return %arg0, %c0_i32, %c0_i32_0 : i32, i32, i32
  }
  func.func @transform_3(%arg0: i32) -> (i32, i32, i32) {
    %c0_i32 = arith.constant 0 : i32
    %c0_i32_0 = arith.constant 0 : i32
    %c0_i32_1 = arith.constant 0 : i32
    return %arg0, %c0_i32, %c0_i32_0 : i32, i32, i32
  }
  func.func @transform_4(%arg0: i32) -> (i32, i32, i32) {
    %c0_i32 = arith.constant 0 : i32
    %c0_i32_0 = arith.constant 0 : i32
    %c0_i32_1 = arith.constant 0 : i32
    return %arg0, %c0_i32, %c0_i32_0 : i32, i32, i32
  }
  func.func @transform_5(%arg0: i32) -> (i32, i32, i32) {
    %c0_i32 = arith.constant 0 : i32
    %c0_i32_0 = arith.constant 0 : i32
    %c0_i32_1 = arith.constant 0 : i32
    return %arg0, %c0_i32, %c0_i32_0 : i32, i32, i32
  }
  func.func @transform_6(%arg0: i32) -> (i32, i32, i32) {
    %c0_i32 = arith.constant 0 : i32
    %c0_i32_0 = arith.constant 0 : i32
    %c0_i32_1 = arith.constant 0 : i32
    return %arg0, %c0_i32, %c0_i32_0 : i32, i32, i32
  }
  func.func @transform_7(%arg0: i32) -> (i32, i32, i32) {
    %c0_i32 = arith.constant 0 : i32
    %c0_i32_0 = arith.constant 0 : i32
    %c0_i32_1 = arith.constant 0 : i32
    return %arg0, %c0_i32, %c0_i32_0 : i32, i32, i32
  }
  func.func @transform_8(%arg0: i32) -> (i32, i32, i32) {
    %c0_i32 = arith.constant 0 : i32
    %c0_i32_0 = arith.constant 0 : i32
    %c0_i32_1 = arith.constant 0 : i32
    return %arg0, %c0_i32, %c0_i32_0 : i32, i32, i32
  }
  func.func @transform_9(%arg0: i32) -> (i32, i32, i32) {
    %c0_i32 = arith.constant 0 : i32
    %c0_i32_0 = arith.constant 0 : i32
    %c0_i32_1 = arith.constant 0 : i32
    return %arg0, %c0_i32, %c0_i32_0 : i32, i32, i32
  }
  func.func @transform_10(%arg0: i32) -> (i32, i32) {
    %c0_i32 = arith.constant 0 : i32
    %c0_i32_0 = arith.constant 0 : i32
    %c0_i32_1 = arith.constant 0 : i32
    return %c0_i32, %c0_i32_0 : i32, i32
  }
}

module attributes {stable_mosaic.version = 11 : i64} {
  func.func @_dec_in_conv_kernel(%arg0: i32, %arg1: memref<16x8xbf16, #tpu.memory_space<vmem>>, %arg2: memref<16x1xf32, #tpu.memory_space<vmem>>, %arg3: memref<8x128xf32, #tpu.memory_space<vmem>>, %arg4: memref<1x128xf32, #tpu.memory_space<vmem>>, %arg5: memref<16x128xf32, #tpu.memory_space<vmem>>) attributes {dimension_semantics = [#tpu.dimension_semantics<parallel>], iteration_bounds = array<i64: 1>, scalar_prefetch = 0 : i64, scratch_operands = 0 : i64, tpu.core_type = #tpu.core_type<tc>, window_params = [{pipeline_mode = #tpu.pipeline_mode<synchronous>, transform_indices = @transform_0, window_bounds = array<i64: 16, 8>}, {pipeline_mode = #tpu.pipeline_mode<synchronous>, transform_indices = @transform_1, window_bounds = array<i64: 16, 1>}, {transform_indices = @transform_2, window_bounds = array<i64: 8, 128>}, {transform_indices = @transform_3, window_bounds = array<i64: 1, 128>}, {transform_indices = @transform_4, window_bounds = array<i64: 16, 128>}]} {
    %c0 = arith.constant 0 : index
    %c0_0 = arith.constant 0 : index
    %0 = vector.load %arg3[%c0, %c0_0] : memref<8x128xf32, #tpu.memory_space<vmem>>, vector<8x128xf32>
    %cst = arith.constant dense<0xFF800000> : vector<128xf32>
    %1 = vector.multi_reduction <maximumf>, %0, %cst [0] : vector<8x128xf32> to vector<128xf32>
    %2 = vector.shape_cast %1 : vector<128xf32> to vector<1x128xf32>
    %3 = vector.broadcast %2 : vector<1x128xf32> to vector<8x128xf32>
    %4 = arith.subf %0, %3 : vector<8x128xf32>
    %5 = math.exp %4 : vector<8x128xf32>
    %cst_1 = arith.constant dense<0.000000e+00> : vector<128xf32>
    %6 = vector.multi_reduction <add>, %5, %cst_1 [0] : vector<8x128xf32> to vector<128xf32>
    %7 = vector.shape_cast %6 : vector<128xf32> to vector<1x128xf32>
    %8 = tpu.reciprocal %7 {approx = true} : vector<1x128xf32> -> vector<1x128xf32>
    %9 = vector.broadcast %8 : vector<1x128xf32> to vector<8x128xf32>
    %10 = arith.mulf %5, %9 : vector<8x128xf32>
    %c0_2 = arith.constant 0 : index
    %c0_3 = arith.constant 0 : index
    %11 = vector.load %arg4[%c0_2, %c0_3] : memref<1x128xf32, #tpu.memory_space<vmem>>, vector<1x128xf32>
    %12 = vector.broadcast %11 : vector<1x128xf32> to vector<8x128xf32>
    %13 = arith.mulf %10, %12 : vector<8x128xf32>
    %c128_i32 = arith.constant 128 : i32
    %14 = arith.muli %arg0, %c128_i32 : i32
    %15 = tpu.iota {dimensions = array<i32: 1>} : vector<1x128xi32>
    %16 = vector.broadcast %14 : i32 to vector<1x128xi32>
    %17 = arith.addi %16, %15 : vector<1x128xi32>
    %c44_i32 = arith.constant 44 : i32
    %18 = vector.broadcast %c44_i32 : i32 to vector<1x128xi32>
    %19 = arith.cmpi slt, %17, %18 : vector<1x128xi32>
    %20 = arith.extui %19 : vector<1x128xi1> to vector<1x128xi32>
    %21 = arith.sitofp %20 : vector<1x128xi32> to vector<1x128xf32>
    %c0_4 = arith.constant 0 : index
    %c0_5 = arith.constant 0 : index
    %22 = vector.load %arg1[%c0_4, %c0_5] : memref<16x8xbf16, #tpu.memory_space<vmem>>, vector<16x8xbf16>
    %23 = arith.truncf %13 : vector<8x128xf32> to vector<8x128xbf16>
    %cst_6 = arith.constant dense<0.000000e+00> : vector<16x128xf32>
    %24 = tpu.matmul %22, %23, %cst_6 {dimension_numbers = #tpu.dot_dimension_numbers<[1], [0], [0], [1], [0, 0, 1, 1], [], []>} : vector<16x8xbf16>, vector<8x128xbf16>, vector<16x128xf32> -> vector<16x128xf32>
    %c0_7 = arith.constant 0 : index
    %c0_8 = arith.constant 0 : index
    %25 = vector.load %arg2[%c0_7, %c0_8] : memref<16x1xf32, #tpu.memory_space<vmem>>, vector<16x1xf32>
    %26 = vector.broadcast %25 : vector<16x1xf32> to vector<16x128xf32>
    %27 = arith.addf %24, %26 : vector<16x128xf32>
    %28 = vector.broadcast %21 : vector<1x128xf32> to vector<16x128xf32>
    %29 = arith.mulf %27, %28 : vector<16x128xf32>
    %c0_9 = arith.constant 0 : index
    %c0_10 = arith.constant 0 : index
    %30 = vector.load %arg5[%c0_9, %c0_10] : memref<16x128xf32, #tpu.memory_space<vmem>>, vector<16x128xf32>
    tpu.vector_store %arg5[%c0_9, %c0_10], %29 {strides = array<i32>} : memref<16x128xf32, #tpu.memory_space<vmem>>, vector<16x128xf32>,
    return
  }
  func.func @transform_0(%arg0: i32) -> (i32, i32) {
    %c0_i32 = arith.constant 0 : i32
    %c0_i32_0 = arith.constant 0 : i32
    %c0_i32_1 = arith.constant 0 : i32
    return %c0_i32, %c0_i32_0 : i32, i32
  }
  func.func @transform_1(%arg0: i32) -> (i32, i32) {
    %c0_i32 = arith.constant 0 : i32
    %c0_i32_0 = arith.constant 0 : i32
    %c0_i32_1 = arith.constant 0 : i32
    return %c0_i32, %c0_i32_0 : i32, i32
  }
  func.func @transform_2(%arg0: i32) -> (i32, i32) {
    %c0_i32 = arith.constant 0 : i32
    %c0_i32_0 = arith.constant 0 : i32
    return %c0_i32, %arg0 : i32, i32
  }
  func.func @transform_3(%arg0: i32) -> (i32, i32) {
    %c0_i32 = arith.constant 0 : i32
    %c0_i32_0 = arith.constant 0 : i32
    return %c0_i32, %arg0 : i32, i32
  }
  func.func @transform_4(%arg0: i32) -> (i32, i32) {
    %c0_i32 = arith.constant 0 : i32
    %c0_i32_0 = arith.constant 0 : i32
    return %c0_i32, %arg0 : i32, i32
  }
}

module attributes {stable_mosaic.version = 11 : i64} {
  func.func @kernel(%arg0: i32, %arg1: memref<16x128xf32, #tpu.memory_space<vmem>>, %arg2: memref<16x128xf32, #tpu.memory_space<vmem>>, %arg3: memref<1x128xf32, #tpu.memory_space<vmem>>, %arg4: memref<1x48x16xbf16, #tpu.memory_space<vmem>>, %arg5: memref<1x16x1xf32, #tpu.memory_space<vmem>>, %arg6: memref<1x16x16xbf16, #tpu.memory_space<vmem>>, %arg7: memref<1x16x1xf32, #tpu.memory_space<vmem>>, %arg8: memref<1x8x16xbf16, #tpu.memory_space<vmem>>, %arg9: memref<1x8x1xf32, #tpu.memory_space<vmem>>, %arg10: memref<1x16x8xbf16, #tpu.memory_space<vmem>>, %arg11: memref<1x16x1xf32, #tpu.memory_space<vmem>>, %arg12: memref<1x16x16xbf16, #tpu.memory_space<vmem>>, %arg13: memref<1x16x1xf32, #tpu.memory_space<vmem>>, %arg14: memref<16x128xf32, #tpu.memory_space<vmem>>, %arg15: memref<16x128xf32, #tpu.memory_space<vmem>>) attributes {dimension_semantics = [#tpu.dimension_semantics<arbitrary>], iteration_bounds = array<i64: 3>, scalar_prefetch = 0 : i64, scratch_operands = 1 : i64, tpu.core_type = #tpu.core_type<tc>, window_params = [{pipeline_mode = #tpu.pipeline_mode<synchronous>, transform_indices = @transform_0, window_bounds = array<i64: 16, 128>}, {pipeline_mode = #tpu.pipeline_mode<synchronous>, transform_indices = @transform_1, window_bounds = array<i64: 16, 128>}, {pipeline_mode = #tpu.pipeline_mode<synchronous>, transform_indices = @transform_2, window_bounds = array<i64: 1, 128>}, {transform_indices = @transform_3, window_bounds = array<i64: 1, 48, 16>}, {transform_indices = @transform_4, window_bounds = array<i64: 1, 16, 1>}, {transform_indices = @transform_5, window_bounds = array<i64: 1, 16, 16>}, {transform_indices = @transform_6, window_bounds = array<i64: 1, 16, 1>}, {transform_indices = @transform_7, window_bounds = array<i64: 1, 8, 16>}, {transform_indices = @transform_8, window_bounds = array<i64: 1, 8, 1>}, {transform_indices = @transform_9, window_bounds = array<i64: 1, 16, 8>}, {transform_indices = @transform_10, window_bounds = array<i64: 1, 16, 1>}, {transform_indices = @transform_11, window_bounds = array<i64: 1, 16, 16>}, {transform_indices = @transform_12, window_bounds = array<i64: 1, 16, 1>}, {pipeline_mode = #tpu.pipeline_mode<synchronous>, transform_indices = @transform_13, window_bounds = array<i64: 16, 128>}]} {
    %c1_i32 = arith.constant 1 : i32
    %0 = arith.shli %c1_i32, %arg0 : i32
    %c1_i32_0 = arith.constant 1 : i32
    %1 = arith.shrsi %0, %c1_i32_0 : i32
    %c0_i32 = arith.constant 0 : i32
    %2 = arith.cmpi eq, %arg0, %c0_i32 : i32
    %3 = arith.extui %2 : i1 to i32
    %c0_i32_1 = arith.constant 0 : i32
    %4 = arith.cmpi ne, %3, %c0_i32_1 : i32
    scf.if %4 {
      %c0_66 = arith.constant 0 : index
      %c0_67 = arith.constant 0 : index
      %183 = vector.load %arg1[%c0_66, %c0_67] : memref<16x128xf32, #tpu.memory_space<vmem>>, vector<16x128xf32>
      %c0_68 = arith.constant 0 : index
      %c0_69 = arith.constant 0 : index
      %184 = vector.load %arg15[%c0_68, %c0_69] : memref<16x128xf32, #tpu.memory_space<vmem>>, vector<16x128xf32>
      tpu.vector_store %arg15[%c0_68, %c0_69], %183 {strides = array<i32>} : memref<16x128xf32, #tpu.memory_space<vmem>>, vector<16x128xf32>,
    } else {
    }
    %c0 = arith.constant 0 : index
    %c0_2 = arith.constant 0 : index
    %5 = vector.load %arg15[%c0, %c0_2] : memref<16x128xf32, #tpu.memory_space<vmem>>, vector<16x128xf32>
    %c0_3 = arith.constant 0 : index
    %c0_4 = arith.constant 0 : index
    %6 = vector.load %arg3[%c0_3, %c0_4] : memref<1x128xf32, #tpu.memory_space<vmem>>, vector<1x128xf32>
    %7 = tpu.iota {dimensions = array<i32: 1>} : vector<1x128xi32>
    %c44_i32 = arith.constant 44 : i32
    %8 = vector.broadcast %c44_i32 : i32 to vector<1x128xi32>
    %9 = arith.cmpi slt, %7, %8 : vector<1x128xi32>
    %10 = arith.extui %9 : vector<1x128xi1> to vector<1x128xi32>
    %11 = arith.sitofp %10 : vector<1x128xi32> to vector<1x128xf32>
    %c0_5 = arith.constant 0 : index
    %c0_6 = arith.constant 0 : index
    %c0_7 = arith.constant 0 : index
    %12 = vector.load %arg4[%c0_5, %c0_6, %c0_7] : memref<1x48x16xbf16, #tpu.memory_space<vmem>>, vector<1x48x16xbf16>
    %13 = vector.shape_cast %12 : vector<1x48x16xbf16> to vector<48x16xbf16>
    %14 = arith.truncf %5 : vector<16x128xf32> to vector<16x128xbf16>
    %cst = arith.constant dense<0.000000e+00> : vector<48x128xf32>
    %15 = tpu.matmul %13, %14, %cst {dimension_numbers = #tpu.dot_dimension_numbers<[1], [0], [0], [1], [0, 0, 1, 1], [], []>} : vector<48x16xbf16>, vector<16x128xbf16>, vector<48x128xf32> -> vector<48x128xf32>
    %16 = vector.extract_strided_slice %15 {offsets = [0, 0], sizes = [16, 128], strides = [1, 1]} : vector<48x128xf32> to vector<16x128xf32>
    %17 = tpu.dynamic_rotate %16 by %0 dim 1 : vector<16x128xf32>, i32 -> vector<16x128xf32>
    %18 = vector.broadcast %0 : i32 to vector<1x128xi32>
    %19 = arith.cmpi sge, %7, %18 : vector<1x128xi32>
    %cst_8 = arith.constant 0.000000e+00 : f32
    %20 = vector.shape_cast %19 : vector<1x128xi1> to vector<1x128xi1>
    %21 = vector.broadcast %20 : vector<1x128xi1> to vector<16x128xi1>
    %22 = vector.broadcast %cst_8 : f32 to vector<16x128xf32>
    %23 = arith.select %21, %17, %22 : vector<16x128xi1>, vector<16x128xf32>
    %24 = vector.extract_strided_slice %15 {offsets = [32, 0], sizes = [16, 128], strides = [1, 1]} : vector<48x128xf32> to vector<16x128xf32>
    %c128_i32 = arith.constant 128 : i32
    %25 = arith.subi %c128_i32, %0 : i32
    %26 = tpu.dynamic_rotate %24 by %25 dim 1 : vector<16x128xf32>, i32 -> vector<16x128xf32>
    %c128_i32_9 = arith.constant 128 : i32
    %27 = arith.subi %c128_i32_9, %0 : i32
    %28 = vector.broadcast %27 : i32 to vector<1x128xi32>
    %29 = arith.cmpi slt, %7, %28 : vector<1x128xi32>
    %cst_10 = arith.constant 0.000000e+00 : f32
    %30 = vector.shape_cast %29 : vector<1x128xi1> to vector<1x128xi1>
    %31 = vector.broadcast %30 : vector<1x128xi1> to vector<16x128xi1>
    %32 = vector.broadcast %cst_10 : f32 to vector<16x128xf32>
    %33 = arith.select %31, %26, %32 : vector<16x128xi1>, vector<16x128xf32>
    %34 = vector.extract_strided_slice %15 {offsets = [16, 0], sizes = [16, 128], strides = [1, 1]} : vector<48x128xf32> to vector<16x128xf32>
    %35 = arith.addf %34, %23 : vector<16x128xf32>
    %36 = arith.addf %35, %33 : vector<16x128xf32>
    %c0_11 = arith.constant 0 : index
    %c0_12 = arith.constant 0 : index
    %c0_13 = arith.constant 0 : index
    %37 = vector.load %arg5[%c0_11, %c0_12, %c0_13] : memref<1x16x1xf32, #tpu.memory_space<vmem>>, vector<1x16x1xf32>
    %38 = vector.shape_cast %37 : vector<1x16x1xf32> to vector<16x1xf32>
    %39 = vector.broadcast %38 : vector<16x1xf32> to vector<16x128xf32>
    %40 = arith.addf %36, %39 : vector<16x128xf32>
    %cst_14 = arith.constant 0.000000e+00 : f32
    %41 = vector.broadcast %cst_14 : f32 to vector<16x128xf32>
    %42 = arith.maximumf %40, %41 : vector<16x128xf32>
    %43 = vector.broadcast %11 : vector<1x128xf32> to vector<16x128xf32>
    %44 = arith.mulf %42, %43 : vector<16x128xf32>
    %cst_15 = arith.constant dense<0.000000e+00> : vector<16xf32>
    %45 = vector.multi_reduction <add>, %44, %cst_15 [1] : vector<16x128xf32> to vector<16xf32>
    %46 = vector.shape_cast %45 : vector<16xf32> to vector<16x1xf32>
    %cst_16 = arith.constant 0.0227272734 : f32
    %47 = vector.broadcast %cst_16 : f32 to vector<16x1xf32>
    %48 = arith.mulf %46, %47 : vector<16x1xf32>
    %49 = vector.broadcast %48 : vector<16x1xf32> to vector<16x128xf32>
    %50 = arith.subf %42, %49 : vector<16x128xf32>
    %51 = arith.mulf %50, %50 : vector<16x128xf32>
    %52 = vector.broadcast %11 : vector<1x128xf32> to vector<16x128xf32>
    %53 = arith.mulf %51, %52 : vector<16x128xf32>
    %cst_17 = arith.constant dense<0.000000e+00> : vector<16xf32>
    %54 = vector.multi_reduction <add>, %53, %cst_17 [1] : vector<16x128xf32> to vector<16xf32>
    %55 = vector.shape_cast %54 : vector<16xf32> to vector<16x1xf32>
    %cst_18 = arith.constant 0.0227272734 : f32
    %56 = vector.broadcast %cst_18 : f32 to vector<16x1xf32>
    %57 = arith.mulf %55, %56 : vector<16x1xf32>
    %cst_19 = arith.constant 9.99999974E-6 : f32
    %58 = vector.broadcast %cst_19 : f32 to vector<16x1xf32>
    %59 = arith.addf %57, %58 : vector<16x1xf32>
    %60 = math.rsqrt %59 : vector<16x1xf32>
    %61 = vector.broadcast %60 : vector<16x1xf32> to vector<16x128xf32>
    %62 = arith.mulf %50, %61 : vector<16x128xf32>
    %63 = arith.truncf %62 : vector<16x128xf32> to vector<16x128xbf16>
    %c0_20 = arith.constant 0 : index
    %c0_21 = arith.constant 0 : index
    %c0_22 = arith.constant 0 : index
    %64 = vector.load %arg6[%c0_20, %c0_21, %c0_22] : memref<1x16x16xbf16, #tpu.memory_space<vmem>>, vector<1x16x16xbf16>
    %65 = vector.shape_cast %64 : vector<1x16x16xbf16> to vector<16x16xbf16>
    %cst_23 = arith.constant dense<0.000000e+00> : vector<16x128xf32>
    %66 = tpu.matmul %65, %63, %cst_23 {dimension_numbers = #tpu.dot_dimension_numbers<[1], [0], [0], [1], [0, 0, 1, 1], [], []>} : vector<16x16xbf16>, vector<16x128xbf16>, vector<16x128xf32> -> vector<16x128xf32>
    %c0_24 = arith.constant 0 : index
    %c0_25 = arith.constant 0 : index
    %c0_26 = arith.constant 0 : index
    %67 = vector.load %arg7[%c0_24, %c0_25, %c0_26] : memref<1x16x1xf32, #tpu.memory_space<vmem>>, vector<1x16x1xf32>
    %68 = vector.shape_cast %67 : vector<1x16x1xf32> to vector<16x1xf32>
    %69 = vector.broadcast %68 : vector<16x1xf32> to vector<16x128xf32>
    %70 = arith.addf %66, %69 : vector<16x128xf32>
    %71 = vector.extract_strided_slice %70 {offsets = [0, 0], sizes = [8, 128], strides = [1, 1]} : vector<16x128xf32> to vector<8x128xf32>
    %72 = vector.extract_strided_slice %70 {offsets = [8, 0], sizes = [8, 128], strides = [1, 1]} : vector<16x128xf32> to vector<8x128xf32>
    %73 = vector.broadcast %11 : vector<1x128xf32> to vector<8x128xf32>
    %74 = arith.mulf %72, %73 : vector<8x128xf32>
    %c0_27 = arith.constant 0 : index
    %c0_28 = arith.constant 0 : index
    %75 = vector.load %arg2[%c0_27, %c0_28] : memref<16x128xf32, #tpu.memory_space<vmem>>, vector<16x128xf32>
    %76 = vector.broadcast %6 : vector<1x128xf32> to vector<16x128xf32>
    %77 = arith.mulf %75, %76 : vector<16x128xf32>
    %78 = arith.truncf %77 : vector<16x128xf32> to vector<16x128xbf16>
    %c0_29 = arith.constant 0 : index
    %c0_30 = arith.constant 0 : index
    %c0_31 = arith.constant 0 : index
    %79 = vector.load %arg8[%c0_29, %c0_30, %c0_31] : memref<1x8x16xbf16, #tpu.memory_space<vmem>>, vector<1x8x16xbf16>
    %80 = vector.shape_cast %79 : vector<1x8x16xbf16> to vector<8x16xbf16>
    %cst_32 = arith.constant dense<0.000000e+00> : vector<8x128xf32>
    %81 = tpu.matmul %80, %78, %cst_32 {dimension_numbers = #tpu.dot_dimension_numbers<[1], [0], [0], [1], [0, 0, 1, 1], [], []>} : vector<8x16xbf16>, vector<16x128xbf16>, vector<8x128xf32> -> vector<8x128xf32>
    %c0_33 = arith.constant 0 : index
    %c0_34 = arith.constant 0 : index
    %c0_35 = arith.constant 0 : index
    %82 = vector.load %arg9[%c0_33, %c0_34, %c0_35] : memref<1x8x1xf32, #tpu.memory_space<vmem>>, vector<1x8x1xf32>
    %83 = vector.shape_cast %82 : vector<1x8x1xf32> to vector<8x1xf32>
    %84 = vector.broadcast %83 : vector<8x1xf32> to vector<8x128xf32>
    %85 = arith.addf %81, %84 : vector<8x128xf32>
    %86 = vector.broadcast %11 : vector<1x128xf32> to vector<8x128xf32>
    %87 = arith.mulf %85, %86 : vector<8x128xf32>
    %88 = tpu.iota {dimensions = array<i32: 0>} : vector<128x128xi32>
    %89 = tpu.iota {dimensions = array<i32: 1>} : vector<128x128xi32>
    %90 = arith.truncf %71 : vector<8x128xf32> to vector<8x128xbf16>
    %91 = arith.truncf %74 : vector<8x128xf32> to vector<8x128xbf16>
    %cst_36 = arith.constant dense<0.000000e+00> : vector<128x128xf32>
    %92 = tpu.matmul %90, %91, %cst_36 {dimension_numbers = #tpu.dot_dimension_numbers<[0], [0], [1], [1], [0, 1, 1, 1], [], []>} : vector<8x128xbf16>, vector<8x128xbf16>, vector<128x128xf32> -> vector<128x128xf32>
    %c1_i32_37 = arith.constant 1 : i32
    %93 = arith.subi %0, %c1_i32_37 : i32
    %94 = vector.broadcast %93 : i32 to vector<128x128xi32>
    %95 = arith.andi %88, %94 : vector<128x128xi32>
    %96 = arith.subi %88, %95 : vector<128x128xi32>
    %97 = vector.broadcast %1 : i32 to vector<128x128xi32>
    %98 = arith.subi %96, %97 : vector<128x128xi32>
    %99 = arith.cmpi sge, %89, %98 : vector<128x128xi32>
    %100 = vector.broadcast %0 : i32 to vector<128x128xi32>
    %101 = arith.addi %96, %100 : vector<128x128xi32>
    %102 = vector.broadcast %1 : i32 to vector<128x128xi32>
    %103 = arith.addi %101, %102 : vector<128x128xi32>
    %104 = arith.cmpi slt, %89, %103 : vector<128x128xi32>
    %105 = arith.andi %99, %104 : vector<128x128xi1>
    %106 = vector.broadcast %1 : i32 to vector<128x128xi32>
    %107 = arith.subi %88, %106 : vector<128x128xi32>
    %108 = arith.cmpi sge, %89, %107 : vector<128x128xi32>
    %109 = vector.broadcast %0 : i32 to vector<128x128xi32>
    %110 = arith.addi %88, %109 : vector<128x128xi32>
    %111 = vector.broadcast %1 : i32 to vector<128x128xi32>
    %112 = arith.subi %110, %111 : vector<128x128xi32>
    %113 = arith.cmpi slt, %89, %112 : vector<128x128xi32>
    %114 = arith.andi %108, %113 : vector<128x128xi1>
    %cst_38 = arith.constant 0.000000e+00 : f32
    %115 = vector.broadcast %cst_38 : f32 to vector<1x128xf32>
    %116 = arith.cmpf ogt, %6, %115 : vector<1x128xf32>
    %117 = vector.broadcast %116 : vector<1x128xi1> to vector<128x128xi1>
    %118 = arith.andi %114, %117 : vector<128x128xi1>
    %cst_39 = arith.constant 9.99999543E-7 : f32
    %cst_40 = arith.constant -13.8155107 : f32
    %119 = vector.broadcast %cst_39 : f32 to vector<128x128xf32>
    %120 = vector.broadcast %cst_40 : f32 to vector<128x128xf32>
    %121 = arith.select %118, %119, %120 : vector<128x128xi1>, vector<128x128xf32>
    %122 = arith.addf %92, %121 : vector<128x128xf32>
    %cst_41 = arith.constant -1.000000e+30 : f32
    %123 = vector.broadcast %cst_41 : f32 to vector<128x128xf32>
    %124 = arith.select %105, %122, %123 : vector<128x128xi1>, vector<128x128xf32>
    %cst_42 = arith.constant dense<0xFF800000> : vector<128xf32>
    %125 = vector.multi_reduction <maximumf>, %124, %cst_42 [1] : vector<128x128xf32> to vector<128xf32>
    %126 = vector.shape_cast %125 : vector<128xf32> to vector<128x1xf32>
    %127 = vector.broadcast %126 : vector<128x1xf32> to vector<128x128xf32>
    %128 = arith.subf %124, %127 : vector<128x128xf32>
    %129 = math.exp %128 : vector<128x128xf32>
    %cst_43 = arith.constant dense<0.000000e+00> : vector<128xf32>
    %130 = vector.multi_reduction <add>, %129, %cst_43 [1] : vector<128x128xf32> to vector<128xf32>
    %131 = vector.shape_cast %130 : vector<128xf32> to vector<128x1xf32>
    %132 = tpu.iota {dimensions = array<i32: 0>} : vector<128x1xi32>
    %133 = vector.broadcast %0 : i32 to vector<128x1xi32>
    %134 = arith.cmpi slt, %132, %133 : vector<128x1xi32>
    %135 = arith.sitofp %1 : i32 to f32
    %cst_44 = arith.constant 0.000000e+00 : f32
    %136 = vector.broadcast %135 : f32 to vector<128x1xf32>
    %137 = vector.broadcast %cst_44 : f32 to vector<128x1xf32>
    %138 = arith.select %134, %136, %137 : vector<128x1xi1>, vector<128x1xf32>
    %cst_45 = arith.constant -13.8155107 : f32
    %139 = vector.broadcast %cst_45 : f32 to vector<128x1xf32>
    %140 = arith.subf %139, %126 : vector<128x1xf32>
    %141 = math.exp %140 : vector<128x1xf32>
    %142 = arith.mulf %138, %141 : vector<128x1xf32>
    %143 = arith.addf %131, %142 : vector<128x1xf32>
    %144 = tpu.reciprocal %143 {approx = true} : vector<128x1xf32> -> vector<128x1xf32>
    %145 = vector.broadcast %144 : vector<128x1xf32> to vector<128x128xf32>
    %146 = arith.mulf %129, %145 : vector<128x128xf32>
    %147 = arith.extui %118 : vector<128x128xi1> to vector<128x128xi32>
    %148 = arith.sitofp %147 : vector<128x128xi32> to vector<128x128xf32>
    %149 = arith.mulf %146, %148 : vector<128x128xf32>
    %150 = arith.truncf %87 : vector<8x128xf32> to vector<8x128xbf16>
    %151 = arith.truncf %149 : vector<128x128xf32> to vector<128x128xbf16>
    %cst_46 = arith.constant dense<0.000000e+00> : vector<8x128xf32>
    %152 = tpu.matmul %150, %151, %cst_46 {dimension_numbers = #tpu.dot_dimension_numbers<[1], [1], [0], [0], [0, 0, 1, 0], [], []>} : vector<8x128xbf16>, vector<128x128xbf16>, vector<8x128xf32> -> vector<8x128xf32>
    %c0_47 = arith.constant 0 : index
    %c0_48 = arith.constant 0 : index
    %c0_49 = arith.constant 0 : index
    %153 = vector.load %arg10[%c0_47, %c0_48, %c0_49] : memref<1x16x8xbf16, #tpu.memory_space<vmem>>, vector<1x16x8xbf16>
    %154 = vector.shape_cast %153 : vector<1x16x8xbf16> to vector<16x8xbf16>
    %cst_50 = arith.constant 0.000000e+00 : f32
    %155 = vector.broadcast %cst_50 : f32 to vector<8x128xf32>
    %156 = arith.maximumf %152, %155 : vector<8x128xf32>
    %157 = arith.truncf %156 : vector<8x128xf32> to vector<8x128xbf16>
    %cst_51 = arith.constant dense<0.000000e+00> : vector<16x128xf32>
    %158 = tpu.matmul %154, %157, %cst_51 {dimension_numbers = #tpu.dot_dimension_numbers<[1], [0], [0], [1], [0, 0, 1, 1], [], []>} : vector<16x8xbf16>, vector<8x128xbf16>, vector<16x128xf32> -> vector<16x128xf32>
    %c0_52 = arith.constant 0 : index
    %c0_53 = arith.constant 0 : index
    %c0_54 = arith.constant 0 : index
    %159 = vector.load %arg11[%c0_52, %c0_53, %c0_54] : memref<1x16x1xf32, #tpu.memory_space<vmem>>, vector<1x16x1xf32>
    %160 = vector.shape_cast %159 : vector<1x16x1xf32> to vector<16x1xf32>
    %161 = vector.broadcast %160 : vector<16x1xf32> to vector<16x128xf32>
    %162 = arith.addf %158, %161 : vector<16x128xf32>
    %163 = vector.broadcast %6 : vector<1x128xf32> to vector<16x128xf32>
    %164 = arith.mulf %162, %163 : vector<16x128xf32>
    %cst_55 = arith.constant 1.000000e+00 : f32
    %165 = vector.broadcast %cst_55 : f32 to vector<16x128xf32>
    %166 = arith.mulf %165, %164 : vector<16x128xf32>
    %167 = arith.addf %166, %42 : vector<16x128xf32>
    %c0_56 = arith.constant 0 : index
    %c0_57 = arith.constant 0 : index
    %c0_58 = arith.constant 0 : index
    %168 = vector.load %arg12[%c0_56, %c0_57, %c0_58] : memref<1x16x16xbf16, #tpu.memory_space<vmem>>, vector<1x16x16xbf16>
    %169 = vector.shape_cast %168 : vector<1x16x16xbf16> to vector<16x16xbf16>
    %170 = arith.truncf %167 : vector<16x128xf32> to vector<16x128xbf16>
    %cst_59 = arith.constant dense<0.000000e+00> : vector<16x128xf32>
    %171 = tpu.matmul %169, %170, %cst_59 {dimension_numbers = #tpu.dot_dimension_numbers<[1], [0], [0], [1], [0, 0, 1, 1], [], []>} : vector<16x16xbf16>, vector<16x128xbf16>, vector<16x128xf32> -> vector<16x128xf32>
    %c0_60 = arith.constant 0 : index
    %c0_61 = arith.constant 0 : index
    %c0_62 = arith.constant 0 : index
    %172 = vector.load %arg13[%c0_60, %c0_61, %c0_62] : memref<1x16x1xf32, #tpu.memory_space<vmem>>, vector<1x16x1xf32>
    %173 = vector.shape_cast %172 : vector<1x16x1xf32> to vector<16x1xf32>
    %174 = vector.broadcast %173 : vector<16x1xf32> to vector<16x128xf32>
    %175 = arith.addf %171, %174 : vector<16x128xf32>
    %176 = arith.addf %5, %175 : vector<16x128xf32>
    %177 = vector.broadcast %6 : vector<1x128xf32> to vector<16x128xf32>
    %178 = arith.mulf %176, %177 : vector<16x128xf32>
    %c0_63 = arith.constant 0 : index
    %c0_64 = arith.constant 0 : index
    %179 = vector.load %arg15[%c0_63, %c0_64] : memref<16x128xf32, #tpu.memory_space<vmem>>, vector<16x128xf32>
    tpu.vector_store %arg15[%c0_63, %c0_64], %178 {strides = array<i32>} : memref<16x128xf32, #tpu.memory_space<vmem>>, vector<16x128xf32>,
    %c2_i32 = arith.constant 2 : i32
    %180 = arith.cmpi eq, %arg0, %c2_i32 : i32
    %181 = arith.extui %180 : i1 to i32
    %c0_i32_65 = arith.constant 0 : i32
    %182 = arith.cmpi ne, %181, %c0_i32_65 : i32
    scf.if %182 {
      %c0_66 = arith.constant 0 : index
      %c0_67 = arith.constant 0 : index
      %183 = vector.load %arg14[%c0_66, %c0_67] : memref<16x128xf32, #tpu.memory_space<vmem>>, vector<16x128xf32>
      tpu.vector_store %arg14[%c0_66, %c0_67], %178 {strides = array<i32>} : memref<16x128xf32, #tpu.memory_space<vmem>>, vector<16x128xf32>,
    } else {
    }
    return
  }
  func.func @transform_0(%arg0: i32) -> (i32, i32) {
    %c0_i32 = arith.constant 0 : i32
    %c0_i32_0 = arith.constant 0 : i32
    %c0_i32_1 = arith.constant 0 : i32
    return %c0_i32, %c0_i32_0 : i32, i32
  }
  func.func @transform_1(%arg0: i32) -> (i32, i32) {
    %c0_i32 = arith.constant 0 : i32
    %c0_i32_0 = arith.constant 0 : i32
    %c0_i32_1 = arith.constant 0 : i32
    return %c0_i32, %c0_i32_0 : i32, i32
  }
  func.func @transform_2(%arg0: i32) -> (i32, i32) {
    %c0_i32 = arith.constant 0 : i32
    %c0_i32_0 = arith.constant 0 : i32
    %c0_i32_1 = arith.constant 0 : i32
    return %c0_i32, %c0_i32_0 : i32, i32
  }
  func.func @transform_3(%arg0: i32) -> (i32, i32, i32) {
    %c0_i32 = arith.constant 0 : i32
    %c0_i32_0 = arith.constant 0 : i32
    %c0_i32_1 = arith.constant 0 : i32
    return %arg0, %c0_i32, %c0_i32_0 : i32, i32, i32
  }
  func.func @transform_4(%arg0: i32) -> (i32, i32, i32) {
    %c0_i32 = arith.constant 0 : i32
    %c0_i32_0 = arith.constant 0 : i32
    %c0_i32_1 = arith.constant 0 : i32
    return %arg0, %c0_i32, %c0_i32_0 : i32, i32, i32
  }
  func.func @transform_5(%arg0: i32) -> (i32, i32, i32) {
    %c0_i32 = arith.constant 0 : i32
    %c0_i32_0 = arith.constant 0 : i32
    %c0_i32_1 = arith.constant 0 : i32
    return %arg0, %c0_i32, %c0_i32_0 : i32, i32, i32
  }
  func.func @transform_6(%arg0: i32) -> (i32, i32, i32) {
    %c0_i32 = arith.constant 0 : i32
    %c0_i32_0 = arith.constant 0 : i32
    %c0_i32_1 = arith.constant 0 : i32
    return %arg0, %c0_i32, %c0_i32_0 : i32, i32, i32
  }
  func.func @transform_7(%arg0: i32) -> (i32, i32, i32) {
    %c0_i32 = arith.constant 0 : i32
    %c0_i32_0 = arith.constant 0 : i32
    %c0_i32_1 = arith.constant 0 : i32
    return %arg0, %c0_i32, %c0_i32_0 : i32, i32, i32
  }
  func.func @transform_8(%arg0: i32) -> (i32, i32, i32) {
    %c0_i32 = arith.constant 0 : i32
    %c0_i32_0 = arith.constant 0 : i32
    %c0_i32_1 = arith.constant 0 : i32
    return %arg0, %c0_i32, %c0_i32_0 : i32, i32, i32
  }
  func.func @transform_9(%arg0: i32) -> (i32, i32, i32) {
    %c0_i32 = arith.constant 0 : i32
    %c0_i32_0 = arith.constant 0 : i32
    %c0_i32_1 = arith.constant 0 : i32
    return %arg0, %c0_i32, %c0_i32_0 : i32, i32, i32
  }
  func.func @transform_10(%arg0: i32) -> (i32, i32, i32) {
    %c0_i32 = arith.constant 0 : i32
    %c0_i32_0 = arith.constant 0 : i32
    %c0_i32_1 = arith.constant 0 : i32
    return %arg0, %c0_i32, %c0_i32_0 : i32, i32, i32
  }
  func.func @transform_11(%arg0: i32) -> (i32, i32, i32) {
    %c0_i32 = arith.constant 0 : i32
    %c0_i32_0 = arith.constant 0 : i32
    %c0_i32_1 = arith.constant 0 : i32
    return %arg0, %c0_i32, %c0_i32_0 : i32, i32, i32
  }
  func.func @transform_12(%arg0: i32) -> (i32, i32, i32) {
    %c0_i32 = arith.constant 0 : i32
    %c0_i32_0 = arith.constant 0 : i32
    %c0_i32_1 = arith.constant 0 : i32
    return %arg0, %c0_i32, %c0_i32_0 : i32, i32, i32
  }
  func.func @transform_13(%arg0: i32) -> (i32, i32) {
    %c0_i32 = arith.constant 0 : i32
    %c0_i32_0 = arith.constant 0 : i32
    %c0_i32_1 = arith.constant 0 : i32
    return %c0_i32, %c0_i32_0 : i32, i32
  }
}

module attributes {stable_mosaic.version = 11 : i64} {
  func.func @kernel(%arg0: i32, %arg1: memref<16x128xf32, #tpu.memory_space<vmem>>, %arg2: memref<16x128xf32, #tpu.memory_space<vmem>>, %arg3: memref<1x128xf32, #tpu.memory_space<vmem>>, %arg4: memref<1x48x16xbf16, #tpu.memory_space<vmem>>, %arg5: memref<1x16x1xf32, #tpu.memory_space<vmem>>, %arg6: memref<1x16x16xbf16, #tpu.memory_space<vmem>>, %arg7: memref<1x16x1xf32, #tpu.memory_space<vmem>>, %arg8: memref<1x8x16xbf16, #tpu.memory_space<vmem>>, %arg9: memref<1x8x1xf32, #tpu.memory_space<vmem>>, %arg10: memref<1x16x8xbf16, #tpu.memory_space<vmem>>, %arg11: memref<1x16x1xf32, #tpu.memory_space<vmem>>, %arg12: memref<1x16x16xbf16, #tpu.memory_space<vmem>>, %arg13: memref<1x16x1xf32, #tpu.memory_space<vmem>>, %arg14: memref<16x128xf32, #tpu.memory_space<vmem>>, %arg15: memref<16x128xf32, #tpu.memory_space<vmem>>) attributes {dimension_semantics = [#tpu.dimension_semantics<arbitrary>], iteration_bounds = array<i64: 3>, scalar_prefetch = 0 : i64, scratch_operands = 1 : i64, tpu.core_type = #tpu.core_type<tc>, window_params = [{pipeline_mode = #tpu.pipeline_mode<synchronous>, transform_indices = @transform_0, window_bounds = array<i64: 16, 128>}, {pipeline_mode = #tpu.pipeline_mode<synchronous>, transform_indices = @transform_1, window_bounds = array<i64: 16, 128>}, {pipeline_mode = #tpu.pipeline_mode<synchronous>, transform_indices = @transform_2, window_bounds = array<i64: 1, 128>}, {transform_indices = @transform_3, window_bounds = array<i64: 1, 48, 16>}, {transform_indices = @transform_4, window_bounds = array<i64: 1, 16, 1>}, {transform_indices = @transform_5, window_bounds = array<i64: 1, 16, 16>}, {transform_indices = @transform_6, window_bounds = array<i64: 1, 16, 1>}, {transform_indices = @transform_7, window_bounds = array<i64: 1, 8, 16>}, {transform_indices = @transform_8, window_bounds = array<i64: 1, 8, 1>}, {transform_indices = @transform_9, window_bounds = array<i64: 1, 16, 8>}, {transform_indices = @transform_10, window_bounds = array<i64: 1, 16, 1>}, {transform_indices = @transform_11, window_bounds = array<i64: 1, 16, 16>}, {transform_indices = @transform_12, window_bounds = array<i64: 1, 16, 1>}, {pipeline_mode = #tpu.pipeline_mode<synchronous>, transform_indices = @transform_13, window_bounds = array<i64: 16, 128>}]} {
    %c1_i32 = arith.constant 1 : i32
    %0 = arith.shli %c1_i32, %arg0 : i32
    %c1_i32_0 = arith.constant 1 : i32
    %1 = arith.shrsi %0, %c1_i32_0 : i32
    %c0_i32 = arith.constant 0 : i32
    %2 = arith.cmpi eq, %arg0, %c0_i32 : i32
    %3 = arith.extui %2 : i1 to i32
    %c0_i32_1 = arith.constant 0 : i32
    %4 = arith.cmpi ne, %3, %c0_i32_1 : i32
    scf.if %4 {
      %c0_66 = arith.constant 0 : index
      %c0_67 = arith.constant 0 : index
      %183 = vector.load %arg1[%c0_66, %c0_67] : memref<16x128xf32, #tpu.memory_space<vmem>>, vector<16x128xf32>
      %c0_68 = arith.constant 0 : index
      %c0_69 = arith.constant 0 : index
      %184 = vector.load %arg15[%c0_68, %c0_69] : memref<16x128xf32, #tpu.memory_space<vmem>>, vector<16x128xf32>
      tpu.vector_store %arg15[%c0_68, %c0_69], %183 {strides = array<i32>} : memref<16x128xf32, #tpu.memory_space<vmem>>, vector<16x128xf32>,
    } else {
    }
    %c0 = arith.constant 0 : index
    %c0_2 = arith.constant 0 : index
    %5 = vector.load %arg15[%c0, %c0_2] : memref<16x128xf32, #tpu.memory_space<vmem>>, vector<16x128xf32>
    %c0_3 = arith.constant 0 : index
    %c0_4 = arith.constant 0 : index
    %6 = vector.load %arg3[%c0_3, %c0_4] : memref<1x128xf32, #tpu.memory_space<vmem>>, vector<1x128xf32>
    %7 = tpu.iota {dimensions = array<i32: 1>} : vector<1x128xi32>
    %c44_i32 = arith.constant 44 : i32
    %8 = vector.broadcast %c44_i32 : i32 to vector<1x128xi32>
    %9 = arith.cmpi slt, %7, %8 : vector<1x128xi32>
    %10 = arith.extui %9 : vector<1x128xi1> to vector<1x128xi32>
    %11 = arith.sitofp %10 : vector<1x128xi32> to vector<1x128xf32>
    %c0_5 = arith.constant 0 : index
    %c0_6 = arith.constant 0 : index
    %c0_7 = arith.constant 0 : index
    %12 = vector.load %arg4[%c0_5, %c0_6, %c0_7] : memref<1x48x16xbf16, #tpu.memory_space<vmem>>, vector<1x48x16xbf16>
    %13 = vector.shape_cast %12 : vector<1x48x16xbf16> to vector<48x16xbf16>
    %14 = arith.truncf %5 : vector<16x128xf32> to vector<16x128xbf16>
    %cst = arith.constant dense<0.000000e+00> : vector<48x128xf32>
    %15 = tpu.matmul %13, %14, %cst {dimension_numbers = #tpu.dot_dimension_numbers<[1], [0], [0], [1], [0, 0, 1, 1], [], []>} : vector<48x16xbf16>, vector<16x128xbf16>, vector<48x128xf32> -> vector<48x128xf32>
    %16 = vector.extract_strided_slice %15 {offsets = [0, 0], sizes = [16, 128], strides = [1, 1]} : vector<48x128xf32> to vector<16x128xf32>
    %17 = tpu.dynamic_rotate %16 by %0 dim 1 : vector<16x128xf32>, i32 -> vector<16x128xf32>
    %18 = vector.broadcast %0 : i32 to vector<1x128xi32>
    %19 = arith.cmpi sge, %7, %18 : vector<1x128xi32>
    %cst_8 = arith.constant 0.000000e+00 : f32
    %20 = vector.shape_cast %19 : vector<1x128xi1> to vector<1x128xi1>
    %21 = vector.broadcast %20 : vector<1x128xi1> to vector<16x128xi1>
    %22 = vector.broadcast %cst_8 : f32 to vector<16x128xf32>
    %23 = arith.select %21, %17, %22 : vector<16x128xi1>, vector<16x128xf32>
    %24 = vector.extract_strided_slice %15 {offsets = [32, 0], sizes = [16, 128], strides = [1, 1]} : vector<48x128xf32> to vector<16x128xf32>
    %c128_i32 = arith.constant 128 : i32
    %25 = arith.subi %c128_i32, %0 : i32
    %26 = tpu.dynamic_rotate %24 by %25 dim 1 : vector<16x128xf32>, i32 -> vector<16x128xf32>
    %c128_i32_9 = arith.constant 128 : i32
    %27 = arith.subi %c128_i32_9, %0 : i32
    %28 = vector.broadcast %27 : i32 to vector<1x128xi32>
    %29 = arith.cmpi slt, %7, %28 : vector<1x128xi32>
    %cst_10 = arith.constant 0.000000e+00 : f32
    %30 = vector.shape_cast %29 : vector<1x128xi1> to vector<1x128xi1>
    %31 = vector.broadcast %30 : vector<1x128xi1> to vector<16x128xi1>
    %32 = vector.broadcast %cst_10 : f32 to vector<16x128xf32>
    %33 = arith.select %31, %26, %32 : vector<16x128xi1>, vector<16x128xf32>
    %34 = vector.extract_strided_slice %15 {offsets = [16, 0], sizes = [16, 128], strides = [1, 1]} : vector<48x128xf32> to vector<16x128xf32>
    %35 = arith.addf %34, %23 : vector<16x128xf32>
    %36 = arith.addf %35, %33 : vector<16x128xf32>
    %c0_11 = arith.constant 0 : index
    %c0_12 = arith.constant 0 : index
    %c0_13 = arith.constant 0 : index
    %37 = vector.load %arg5[%c0_11, %c0_12, %c0_13] : memref<1x16x1xf32, #tpu.memory_space<vmem>>, vector<1x16x1xf32>
    %38 = vector.shape_cast %37 : vector<1x16x1xf32> to vector<16x1xf32>
    %39 = vector.broadcast %38 : vector<16x1xf32> to vector<16x128xf32>
    %40 = arith.addf %36, %39 : vector<16x128xf32>
    %cst_14 = arith.constant 0.000000e+00 : f32
    %41 = vector.broadcast %cst_14 : f32 to vector<16x128xf32>
    %42 = arith.maximumf %40, %41 : vector<16x128xf32>
    %43 = vector.broadcast %11 : vector<1x128xf32> to vector<16x128xf32>
    %44 = arith.mulf %42, %43 : vector<16x128xf32>
    %cst_15 = arith.constant dense<0.000000e+00> : vector<16xf32>
    %45 = vector.multi_reduction <add>, %44, %cst_15 [1] : vector<16x128xf32> to vector<16xf32>
    %46 = vector.shape_cast %45 : vector<16xf32> to vector<16x1xf32>
    %cst_16 = arith.constant 0.0227272734 : f32
    %47 = vector.broadcast %cst_16 : f32 to vector<16x1xf32>
    %48 = arith.mulf %46, %47 : vector<16x1xf32>
    %49 = vector.broadcast %48 : vector<16x1xf32> to vector<16x128xf32>
    %50 = arith.subf %42, %49 : vector<16x128xf32>
    %51 = arith.mulf %50, %50 : vector<16x128xf32>
    %52 = vector.broadcast %11 : vector<1x128xf32> to vector<16x128xf32>
    %53 = arith.mulf %51, %52 : vector<16x128xf32>
    %cst_17 = arith.constant dense<0.000000e+00> : vector<16xf32>
    %54 = vector.multi_reduction <add>, %53, %cst_17 [1] : vector<16x128xf32> to vector<16xf32>
    %55 = vector.shape_cast %54 : vector<16xf32> to vector<16x1xf32>
    %cst_18 = arith.constant 0.0227272734 : f32
    %56 = vector.broadcast %cst_18 : f32 to vector<16x1xf32>
    %57 = arith.mulf %55, %56 : vector<16x1xf32>
    %cst_19 = arith.constant 9.99999974E-6 : f32
    %58 = vector.broadcast %cst_19 : f32 to vector<16x1xf32>
    %59 = arith.addf %57, %58 : vector<16x1xf32>
    %60 = math.rsqrt %59 : vector<16x1xf32>
    %61 = vector.broadcast %60 : vector<16x1xf32> to vector<16x128xf32>
    %62 = arith.mulf %50, %61 : vector<16x128xf32>
    %63 = arith.truncf %62 : vector<16x128xf32> to vector<16x128xbf16>
    %c0_20 = arith.constant 0 : index
    %c0_21 = arith.constant 0 : index
    %c0_22 = arith.constant 0 : index
    %64 = vector.load %arg6[%c0_20, %c0_21, %c0_22] : memref<1x16x16xbf16, #tpu.memory_space<vmem>>, vector<1x16x16xbf16>
    %65 = vector.shape_cast %64 : vector<1x16x16xbf16> to vector<16x16xbf16>
    %cst_23 = arith.constant dense<0.000000e+00> : vector<16x128xf32>
    %66 = tpu.matmul %65, %63, %cst_23 {dimension_numbers = #tpu.dot_dimension_numbers<[1], [0], [0], [1], [0, 0, 1, 1], [], []>} : vector<16x16xbf16>, vector<16x128xbf16>, vector<16x128xf32> -> vector<16x128xf32>
    %c0_24 = arith.constant 0 : index
    %c0_25 = arith.constant 0 : index
    %c0_26 = arith.constant 0 : index
    %67 = vector.load %arg7[%c0_24, %c0_25, %c0_26] : memref<1x16x1xf32, #tpu.memory_space<vmem>>, vector<1x16x1xf32>
    %68 = vector.shape_cast %67 : vector<1x16x1xf32> to vector<16x1xf32>
    %69 = vector.broadcast %68 : vector<16x1xf32> to vector<16x128xf32>
    %70 = arith.addf %66, %69 : vector<16x128xf32>
    %71 = vector.extract_strided_slice %70 {offsets = [0, 0], sizes = [8, 128], strides = [1, 1]} : vector<16x128xf32> to vector<8x128xf32>
    %72 = vector.extract_strided_slice %70 {offsets = [8, 0], sizes = [8, 128], strides = [1, 1]} : vector<16x128xf32> to vector<8x128xf32>
    %73 = vector.broadcast %11 : vector<1x128xf32> to vector<8x128xf32>
    %74 = arith.mulf %72, %73 : vector<8x128xf32>
    %c0_27 = arith.constant 0 : index
    %c0_28 = arith.constant 0 : index
    %75 = vector.load %arg2[%c0_27, %c0_28] : memref<16x128xf32, #tpu.memory_space<vmem>>, vector<16x128xf32>
    %76 = vector.broadcast %6 : vector<1x128xf32> to vector<16x128xf32>
    %77 = arith.mulf %75, %76 : vector<16x128xf32>
    %78 = arith.truncf %77 : vector<16x128xf32> to vector<16x128xbf16>
    %c0_29 = arith.constant 0 : index
    %c0_30 = arith.constant 0 : index
    %c0_31 = arith.constant 0 : index
    %79 = vector.load %arg8[%c0_29, %c0_30, %c0_31] : memref<1x8x16xbf16, #tpu.memory_space<vmem>>, vector<1x8x16xbf16>
    %80 = vector.shape_cast %79 : vector<1x8x16xbf16> to vector<8x16xbf16>
    %cst_32 = arith.constant dense<0.000000e+00> : vector<8x128xf32>
    %81 = tpu.matmul %80, %78, %cst_32 {dimension_numbers = #tpu.dot_dimension_numbers<[1], [0], [0], [1], [0, 0, 1, 1], [], []>} : vector<8x16xbf16>, vector<16x128xbf16>, vector<8x128xf32> -> vector<8x128xf32>
    %c0_33 = arith.constant 0 : index
    %c0_34 = arith.constant 0 : index
    %c0_35 = arith.constant 0 : index
    %82 = vector.load %arg9[%c0_33, %c0_34, %c0_35] : memref<1x8x1xf32, #tpu.memory_space<vmem>>, vector<1x8x1xf32>
    %83 = vector.shape_cast %82 : vector<1x8x1xf32> to vector<8x1xf32>
    %84 = vector.broadcast %83 : vector<8x1xf32> to vector<8x128xf32>
    %85 = arith.addf %81, %84 : vector<8x128xf32>
    %86 = vector.broadcast %11 : vector<1x128xf32> to vector<8x128xf32>
    %87 = arith.mulf %85, %86 : vector<8x128xf32>
    %88 = tpu.iota {dimensions = array<i32: 0>} : vector<128x128xi32>
    %89 = tpu.iota {dimensions = array<i32: 1>} : vector<128x128xi32>
    %90 = arith.truncf %71 : vector<8x128xf32> to vector<8x128xbf16>
    %91 = arith.truncf %74 : vector<8x128xf32> to vector<8x128xbf16>
    %cst_36 = arith.constant dense<0.000000e+00> : vector<128x128xf32>
    %92 = tpu.matmul %90, %91, %cst_36 {dimension_numbers = #tpu.dot_dimension_numbers<[0], [0], [1], [1], [0, 1, 1, 1], [], []>} : vector<8x128xbf16>, vector<8x128xbf16>, vector<128x128xf32> -> vector<128x128xf32>
    %c1_i32_37 = arith.constant 1 : i32
    %93 = arith.subi %0, %c1_i32_37 : i32
    %94 = vector.broadcast %93 : i32 to vector<128x128xi32>
    %95 = arith.andi %88, %94 : vector<128x128xi32>
    %96 = arith.subi %88, %95 : vector<128x128xi32>
    %97 = vector.broadcast %1 : i32 to vector<128x128xi32>
    %98 = arith.subi %96, %97 : vector<128x128xi32>
    %99 = arith.cmpi sge, %89, %98 : vector<128x128xi32>
    %100 = vector.broadcast %0 : i32 to vector<128x128xi32>
    %101 = arith.addi %96, %100 : vector<128x128xi32>
    %102 = vector.broadcast %1 : i32 to vector<128x128xi32>
    %103 = arith.addi %101, %102 : vector<128x128xi32>
    %104 = arith.cmpi slt, %89, %103 : vector<128x128xi32>
    %105 = arith.andi %99, %104 : vector<128x128xi1>
    %106 = vector.broadcast %1 : i32 to vector<128x128xi32>
    %107 = arith.subi %88, %106 : vector<128x128xi32>
    %108 = arith.cmpi sge, %89, %107 : vector<128x128xi32>
    %109 = vector.broadcast %0 : i32 to vector<128x128xi32>
    %110 = arith.addi %88, %109 : vector<128x128xi32>
    %111 = vector.broadcast %1 : i32 to vector<128x128xi32>
    %112 = arith.subi %110, %111 : vector<128x128xi32>
    %113 = arith.cmpi slt, %89, %112 : vector<128x128xi32>
    %114 = arith.andi %108, %113 : vector<128x128xi1>
    %cst_38 = arith.constant 0.000000e+00 : f32
    %115 = vector.broadcast %cst_38 : f32 to vector<1x128xf32>
    %116 = arith.cmpf ogt, %6, %115 : vector<1x128xf32>
    %117 = vector.broadcast %116 : vector<1x128xi1> to vector<128x128xi1>
    %118 = arith.andi %114, %117 : vector<128x128xi1>
    %cst_39 = arith.constant 9.99999543E-7 : f32
    %cst_40 = arith.constant -13.8155107 : f32
    %119 = vector.broadcast %cst_39 : f32 to vector<128x128xf32>
    %120 = vector.broadcast %cst_40 : f32 to vector<128x128xf32>
    %121 = arith.select %118, %119, %120 : vector<128x128xi1>, vector<128x128xf32>
    %122 = arith.addf %92, %121 : vector<128x128xf32>
    %cst_41 = arith.constant -1.000000e+30 : f32
    %123 = vector.broadcast %cst_41 : f32 to vector<128x128xf32>
    %124 = arith.select %105, %122, %123 : vector<128x128xi1>, vector<128x128xf32>
    %cst_42 = arith.constant dense<0xFF800000> : vector<128xf32>
    %125 = vector.multi_reduction <maximumf>, %124, %cst_42 [1] : vector<128x128xf32> to vector<128xf32>
    %126 = vector.shape_cast %125 : vector<128xf32> to vector<128x1xf32>
    %127 = vector.broadcast %126 : vector<128x1xf32> to vector<128x128xf32>
    %128 = arith.subf %124, %127 : vector<128x128xf32>
    %129 = math.exp %128 : vector<128x128xf32>
    %cst_43 = arith.constant dense<0.000000e+00> : vector<128xf32>
    %130 = vector.multi_reduction <add>, %129, %cst_43 [1] : vector<128x128xf32> to vector<128xf32>
    %131 = vector.shape_cast %130 : vector<128xf32> to vector<128x1xf32>
    %132 = tpu.iota {dimensions = array<i32: 0>} : vector<128x1xi32>
    %133 = vector.broadcast %0 : i32 to vector<128x1xi32>
    %134 = arith.cmpi slt, %132, %133 : vector<128x1xi32>
    %135 = arith.sitofp %1 : i32 to f32
    %cst_44 = arith.constant 0.000000e+00 : f32
    %136 = vector.broadcast %135 : f32 to vector<128x1xf32>
    %137 = vector.broadcast %cst_44 : f32 to vector<128x1xf32>
    %138 = arith.select %134, %136, %137 : vector<128x1xi1>, vector<128x1xf32>
    %cst_45 = arith.constant -13.8155107 : f32
    %139 = vector.broadcast %cst_45 : f32 to vector<128x1xf32>
    %140 = arith.subf %139, %126 : vector<128x1xf32>
    %141 = math.exp %140 : vector<128x1xf32>
    %142 = arith.mulf %138, %141 : vector<128x1xf32>
    %143 = arith.addf %131, %142 : vector<128x1xf32>
    %144 = tpu.reciprocal %143 {approx = true} : vector<128x1xf32> -> vector<128x1xf32>
    %145 = vector.broadcast %144 : vector<128x1xf32> to vector<128x128xf32>
    %146 = arith.mulf %129, %145 : vector<128x128xf32>
    %147 = arith.extui %118 : vector<128x128xi1> to vector<128x128xi32>
    %148 = arith.sitofp %147 : vector<128x128xi32> to vector<128x128xf32>
    %149 = arith.mulf %146, %148 : vector<128x128xf32>
    %150 = arith.truncf %87 : vector<8x128xf32> to vector<8x128xbf16>
    %151 = arith.truncf %149 : vector<128x128xf32> to vector<128x128xbf16>
    %cst_46 = arith.constant dense<0.000000e+00> : vector<8x128xf32>
    %152 = tpu.matmul %150, %151, %cst_46 {dimension_numbers = #tpu.dot_dimension_numbers<[1], [1], [0], [0], [0, 0, 1, 0], [], []>} : vector<8x128xbf16>, vector<128x128xbf16>, vector<8x128xf32> -> vector<8x128xf32>
    %c0_47 = arith.constant 0 : index
    %c0_48 = arith.constant 0 : index
    %c0_49 = arith.constant 0 : index
    %153 = vector.load %arg10[%c0_47, %c0_48, %c0_49] : memref<1x16x8xbf16, #tpu.memory_space<vmem>>, vector<1x16x8xbf16>
    %154 = vector.shape_cast %153 : vector<1x16x8xbf16> to vector<16x8xbf16>
    %cst_50 = arith.constant 0.000000e+00 : f32
    %155 = vector.broadcast %cst_50 : f32 to vector<8x128xf32>
    %156 = arith.maximumf %152, %155 : vector<8x128xf32>
    %157 = arith.truncf %156 : vector<8x128xf32> to vector<8x128xbf16>
    %cst_51 = arith.constant dense<0.000000e+00> : vector<16x128xf32>
    %158 = tpu.matmul %154, %157, %cst_51 {dimension_numbers = #tpu.dot_dimension_numbers<[1], [0], [0], [1], [0, 0, 1, 1], [], []>} : vector<16x8xbf16>, vector<8x128xbf16>, vector<16x128xf32> -> vector<16x128xf32>
    %c0_52 = arith.constant 0 : index
    %c0_53 = arith.constant 0 : index
    %c0_54 = arith.constant 0 : index
    %159 = vector.load %arg11[%c0_52, %c0_53, %c0_54] : memref<1x16x1xf32, #tpu.memory_space<vmem>>, vector<1x16x1xf32>
    %160 = vector.shape_cast %159 : vector<1x16x1xf32> to vector<16x1xf32>
    %161 = vector.broadcast %160 : vector<16x1xf32> to vector<16x128xf32>
    %162 = arith.addf %158, %161 : vector<16x128xf32>
    %163 = vector.broadcast %6 : vector<1x128xf32> to vector<16x128xf32>
    %164 = arith.mulf %162, %163 : vector<16x128xf32>
    %cst_55 = arith.constant 0.0497870669 : f32
    %165 = vector.broadcast %cst_55 : f32 to vector<16x128xf32>
    %166 = arith.mulf %165, %164 : vector<16x128xf32>
    %167 = arith.addf %166, %42 : vector<16x128xf32>
    %c0_56 = arith.constant 0 : index
    %c0_57 = arith.constant 0 : index
    %c0_58 = arith.constant 0 : index
    %168 = vector.load %arg12[%c0_56, %c0_57, %c0_58] : memref<1x16x16xbf16, #tpu.memory_space<vmem>>, vector<1x16x16xbf16>
    %169 = vector.shape_cast %168 : vector<1x16x16xbf16> to vector<16x16xbf16>
    %170 = arith.truncf %167 : vector<16x128xf32> to vector<16x128xbf16>
    %cst_59 = arith.constant dense<0.000000e+00> : vector<16x128xf32>
    %171 = tpu.matmul %169, %170, %cst_59 {dimension_numbers = #tpu.dot_dimension_numbers<[1], [0], [0], [1], [0, 0, 1, 1], [], []>} : vector<16x16xbf16>, vector<16x128xbf16>, vector<16x128xf32> -> vector<16x128xf32>
    %c0_60 = arith.constant 0 : index
    %c0_61 = arith.constant 0 : index
    %c0_62 = arith.constant 0 : index
    %172 = vector.load %arg13[%c0_60, %c0_61, %c0_62] : memref<1x16x1xf32, #tpu.memory_space<vmem>>, vector<1x16x1xf32>
    %173 = vector.shape_cast %172 : vector<1x16x1xf32> to vector<16x1xf32>
    %174 = vector.broadcast %173 : vector<16x1xf32> to vector<16x128xf32>
    %175 = arith.addf %171, %174 : vector<16x128xf32>
    %176 = arith.addf %5, %175 : vector<16x128xf32>
    %177 = vector.broadcast %6 : vector<1x128xf32> to vector<16x128xf32>
    %178 = arith.mulf %176, %177 : vector<16x128xf32>
    %c0_63 = arith.constant 0 : index
    %c0_64 = arith.constant 0 : index
    %179 = vector.load %arg15[%c0_63, %c0_64] : memref<16x128xf32, #tpu.memory_space<vmem>>, vector<16x128xf32>
    tpu.vector_store %arg15[%c0_63, %c0_64], %178 {strides = array<i32>} : memref<16x128xf32, #tpu.memory_space<vmem>>, vector<16x128xf32>,
    %c2_i32 = arith.constant 2 : i32
    %180 = arith.cmpi eq, %arg0, %c2_i32 : i32
    %181 = arith.extui %180 : i1 to i32
    %c0_i32_65 = arith.constant 0 : i32
    %182 = arith.cmpi ne, %181, %c0_i32_65 : i32
    scf.if %182 {
      %c0_66 = arith.constant 0 : index
      %c0_67 = arith.constant 0 : index
      %183 = vector.load %arg14[%c0_66, %c0_67] : memref<16x128xf32, #tpu.memory_space<vmem>>, vector<16x128xf32>
      tpu.vector_store %arg14[%c0_66, %c0_67], %178 {strides = array<i32>} : memref<16x128xf32, #tpu.memory_space<vmem>>, vector<16x128xf32>,
    } else {
    }
    return
  }
  func.func @transform_0(%arg0: i32) -> (i32, i32) {
    %c0_i32 = arith.constant 0 : i32
    %c0_i32_0 = arith.constant 0 : i32
    %c0_i32_1 = arith.constant 0 : i32
    return %c0_i32, %c0_i32_0 : i32, i32
  }
  func.func @transform_1(%arg0: i32) -> (i32, i32) {
    %c0_i32 = arith.constant 0 : i32
    %c0_i32_0 = arith.constant 0 : i32
    %c0_i32_1 = arith.constant 0 : i32
    return %c0_i32, %c0_i32_0 : i32, i32
  }
  func.func @transform_2(%arg0: i32) -> (i32, i32) {
    %c0_i32 = arith.constant 0 : i32
    %c0_i32_0 = arith.constant 0 : i32
    %c0_i32_1 = arith.constant 0 : i32
    return %c0_i32, %c0_i32_0 : i32, i32
  }
  func.func @transform_3(%arg0: i32) -> (i32, i32, i32) {
    %c0_i32 = arith.constant 0 : i32
    %c0_i32_0 = arith.constant 0 : i32
    %c0_i32_1 = arith.constant 0 : i32
    return %arg0, %c0_i32, %c0_i32_0 : i32, i32, i32
  }
  func.func @transform_4(%arg0: i32) -> (i32, i32, i32) {
    %c0_i32 = arith.constant 0 : i32
    %c0_i32_0 = arith.constant 0 : i32
    %c0_i32_1 = arith.constant 0 : i32
    return %arg0, %c0_i32, %c0_i32_0 : i32, i32, i32
  }
  func.func @transform_5(%arg0: i32) -> (i32, i32, i32) {
    %c0_i32 = arith.constant 0 : i32
    %c0_i32_0 = arith.constant 0 : i32
    %c0_i32_1 = arith.constant 0 : i32
    return %arg0, %c0_i32, %c0_i32_0 : i32, i32, i32
  }
  func.func @transform_6(%arg0: i32) -> (i32, i32, i32) {
    %c0_i32 = arith.constant 0 : i32
    %c0_i32_0 = arith.constant 0 : i32
    %c0_i32_1 = arith.constant 0 : i32
    return %arg0, %c0_i32, %c0_i32_0 : i32, i32, i32
  }
  func.func @transform_7(%arg0: i32) -> (i32, i32, i32) {
    %c0_i32 = arith.constant 0 : i32
    %c0_i32_0 = arith.constant 0 : i32
    %c0_i32_1 = arith.constant 0 : i32
    return %arg0, %c0_i32, %c0_i32_0 : i32, i32, i32
  }
  func.func @transform_8(%arg0: i32) -> (i32, i32, i32) {
    %c0_i32 = arith.constant 0 : i32
    %c0_i32_0 = arith.constant 0 : i32
    %c0_i32_1 = arith.constant 0 : i32
    return %arg0, %c0_i32, %c0_i32_0 : i32, i32, i32
  }
  func.func @transform_9(%arg0: i32) -> (i32, i32, i32) {
    %c0_i32 = arith.constant 0 : i32
    %c0_i32_0 = arith.constant 0 : i32
    %c0_i32_1 = arith.constant 0 : i32
    return %arg0, %c0_i32, %c0_i32_0 : i32, i32, i32
  }
  func.func @transform_10(%arg0: i32) -> (i32, i32, i32) {
    %c0_i32 = arith.constant 0 : i32
    %c0_i32_0 = arith.constant 0 : i32
    %c0_i32_1 = arith.constant 0 : i32
    return %arg0, %c0_i32, %c0_i32_0 : i32, i32, i32
  }
  func.func @transform_11(%arg0: i32) -> (i32, i32, i32) {
    %c0_i32 = arith.constant 0 : i32
    %c0_i32_0 = arith.constant 0 : i32
    %c0_i32_1 = arith.constant 0 : i32
    return %arg0, %c0_i32, %c0_i32_0 : i32, i32, i32
  }
  func.func @transform_12(%arg0: i32) -> (i32, i32, i32) {
    %c0_i32 = arith.constant 0 : i32
    %c0_i32_0 = arith.constant 0 : i32
    %c0_i32_1 = arith.constant 0 : i32
    return %arg0, %c0_i32, %c0_i32_0 : i32, i32, i32
  }
  func.func @transform_13(%arg0: i32) -> (i32, i32) {
    %c0_i32 = arith.constant 0 : i32
    %c0_i32_0 = arith.constant 0 : i32
    %c0_i32_1 = arith.constant 0 : i32
    return %c0_i32, %c0_i32_0 : i32, i32
  }
}

</mosaic_0001>

<llo_original>
// kernel: model_forward.11
$region0: #{model_forward.11}
  #allocation0 [shape = 'u32[]', space=smem, size = 0x4, offset = 0x4, fixed_abs, tag = 'smem constant byte address 0x4 - core index']
  #allocation1 [shape = 'u32[144,128]{1,0:T(1,128)}', space=vmem, size = 0x12000, scoped, tag = 'internal scratch']
  %s0 = inlined_call_operand.vmem [shape: bf16[8,16], index: 0, kind: input, shape index: {}]
  %s1 = inlined_call_operand.vmem [shape: f32[8,1], index: 1, kind: input, shape index: {}]
  %s2 = inlined_call_operand.vmem [shape: f32[16,128], index: 2, kind: input, shape index: {}]
  %s3 = inlined_call_operand.vmem [shape: f32[1,128], index: 3, kind: input, shape index: {}]
  %s4 = inlined_call_operand.vmem [shape: f32[8,128], index: 4, kind: output, shape index: {}]
  %s5 = sld [smem:[#allocation0]]
  $region26: #{model_forward.11} parent=0
    _
  %s7 = ssub.s32 1, %s5
  %s8 = scalar_select 0, %s7, %s5
  // Predicated region
  $region2: #{model_forward.11} parent=0 // pred_check
    _
  $region3: #{model_forward.11} parent=0 // pred_check_branch
    %10 = sbr.rel (0) target = $region5
  $region4: #{model_forward.11} parent=0 // pred_region
    _
  $region5: #{model_forward.11} parent=0 // pred_fallthru
    _
  // Predicated region
  $region6: #{model_forward.11} parent=0 // pred_check
    _
  $region7: #{model_forward.11} parent=0 // pred_check_branch
    %12 = sbr.rel (0) target = $region9
  $region8: #{model_forward.11} parent=0 // pred_region
    _
  $region9: #{model_forward.11} parent=0 // pred_fallthru
    _
  // Predicated region
  $region10: #{model_forward.11} parent=0 // pred_check
    _
  $region11: #{model_forward.11} parent=0 // pred_check_branch
    %14 = sbr.rel (0) target = $region13
  $region12: #{model_forward.11} parent=0 // pred_region
    _
  $region13: #{model_forward.11} parent=0 // pred_fallthru
    _
  // Predicated region
  $region14: #{model_forward.11} parent=0 // pred_check
    _
  $region15: #{model_forward.11} parent=0 // pred_check_branch
    %16 = sbr.rel (0) target = $region17
  $region16: #{model_forward.11} parent=0 // pred_region
    _
  $region17: #{model_forward.11} parent=0 // pred_fallthru
    _
  %v18 = vld [vmem:[%s0] sm:$0xf]
  %v19 = vld [vmem:[%s2] sm:$0xff]
  %v20 = vld [vmem:[%s2 + $0x8] sm:$0xff]
  %v21 = vpack.c.bf16 %v20, %v19
  %v22 = vld [vmem:[%s1] sm:$0xff]
  %24 = vset.pattern.permute.xlu0 0
  %25 = vperm.xlu0 %24, %v22
  %v26 = vpop.permute.xlu0 %25
  %vm28 = vcmask 130048
  %v30 = vsel %vm28, %v18, 0
  %32 = vmatprep.subr.bf16.mxu0 0
  %33 = vmatpush1.bf16.msra.mxu0 %v21
  %34 = vmatprep.subr.bf16.mxu0 0
  %35 = vmatpush1.bf16.msra.mxu0 0
  %36 = vmatprep.subr.bf16.mxu0 0
  %37 = vmatpush1.bf16.msra.mxu0 0
  %38 = vmatprep.subr.bf16.mxu0 0
  %39 = vmatpush1.bf16.msra.mxu0 0
  %40 = vmatprep.subr.bf16.mxu0 0
  %41 = vmatpush1.bf16.msra.mxu0 0
  %42 = vmatprep.subr.bf16.mxu0 0
  %43 = vmatpush1.bf16.msra.mxu0 0
  %44 = vmatprep.subr.bf16.mxu0 0
  %45 = vmatpush1.bf16.msra.mxu0 0
  %46 = vmatprep.subr.bf16.mxu0 0
  %47 = vmatpush1.bf16.msra.mxu0 0
  %48 = vmatprep.subr.bf16.mxu0 0
  %49 = vmatpush1.bf16.msra.mxu0 0
  %50 = vmatprep.subr.bf16.mxu0 0
  %51 = vmatpush1.bf16.msra.mxu0 0
  %52 = vmatprep.subr.bf16.mxu0 0
  %53 = vmatpush1.bf16.msra.mxu0 0
  %54 = vmatprep.subr.bf16.mxu0 0
  %55 = vmatpush1.bf16.msra.mxu0 0
  %56 = vmatprep.subr.bf16.mxu0 0
  %57 = vmatpush1.bf16.msra.mxu0 0
  %58 = vmatprep.subr.bf16.mxu0 0
  %59 = vmatpush1.bf16.msra.mxu0 0
  %60 = vmatprep.subr.bf16.mxu0 0
  %61 = vmatpush1.bf16.msra.mxu0 0
  %62 = vmatprep.subr.bf16.mxu0 0
  %63 = vmatpush1.bf16.msra.mxu0 0
  %64 = vmatprep.mubr.bf16.mxu0 0
  %65 = vmatmul.mubr.bf16.gmra.mrb[0].mxu0 %v30
  %v66 = vpop.f32.mrb[0].mxu0
  %v67 = vadd.f32 %v26, %v66
  %v68 = vpop.f32.mrb[0].mxu0
  %v69 = vpop.f32.mrb[0].mxu0
  %v70 = vpop.f32.mrb[0].mxu0
  %71 = vdwg.mxu0
  %v72 = vld [vmem:[%s3] sm:$0x1]
  %v74 = vlaneseq
  %v75 = vshrl.u32 %v74, 7
  %v76 = vsub.s32 0, %v75
  %v77 = vrot.slane %v72, %v76
  %v79 = vmul.f32 %v67, %v77
  %80 = vst [vmem:[%s4] sm:$0xff] %v79
  // Predicated region
  $region18: #{model_forward.11} parent=0 // pred_check
    _
  $region19: #{model_forward.11} parent=0 // pred_check_branch
    %82 = sbr.rel (0) target = $region21
  $region20: #{model_forward.11} parent=0 // pred_region
    _
  $region21: #{model_forward.11} parent=0 // pred_fallthru
    _
  // Predicated region
  $region22: #{model_forward.11} parent=0 // pred_check
    _
  $region23: #{model_forward.11} parent=0 // pred_check_branch
    %84 = sbr.rel (0) target = $region25
  $region24: #{model_forward.11} parent=0 // pred_region
    _
  $region25: #{model_forward.11} parent=0 // pred_fallthru
    _

// kernel: model_forward.9
$region0: #{model_forward.9}
  #allocation0 [shape = 'u32[]', space=smem, size = 0x4, offset = 0x4, fixed_abs, tag = 'smem constant byte address 0x4 - core index']
  #allocation1 [shape = 'u32[144,128]{1,0:T(1,128)}', space=vmem, size = 0x12000, scoped, tag = 'internal scratch']
  %s0 = inlined_call_operand.vmem [shape: bf16[16,32], index: 0, kind: input, shape index: {}]
  %s1 = inlined_call_operand.vmem [shape: f32[16,1], index: 1, kind: input, shape index: {}]
  %s2 = inlined_call_operand.vmem [shape: f32[32,128], index: 2, kind: input, shape index: {}]
  %s3 = inlined_call_operand.vmem [shape: f32[16,128], index: 3, kind: output, shape index: {}]
  %s4 = sld [smem:[#allocation0]]
  $region22: #{model_forward.9} parent=0
    _
  %s6 = ssub.s32 1, %s4
  %s7 = scalar_select 0, %s6, %s4
  // Predicated region
  $region2: #{model_forward.9} parent=0 // pred_check
    _
  $region3: #{model_forward.9} parent=0 // pred_check_branch
    %9 = sbr.rel (0) target = $region5
  $region4: #{model_forward.9} parent=0 // pred_region
    _
  $region5: #{model_forward.9} parent=0 // pred_fallthru
    _
  // Predicated region
  $region6: #{model_forward.9} parent=0 // pred_check
    _
  $region7: #{model_forward.9} parent=0 // pred_check_branch
    %11 = sbr.rel (0) target = $region9
  $region8: #{model_forward.9} parent=0 // pred_region
    _
  $region9: #{model_forward.9} parent=0 // pred_fallthru
    _
  // Predicated region
  $region10: #{model_forward.9} parent=0 // pred_check
    _
  $region11: #{model_forward.9} parent=0 // pred_check_branch
    %13 = sbr.rel (0) target = $region13
  $region12: #{model_forward.9} parent=0 // pred_region
    _
  $region13: #{model_forward.9} parent=0 // pred_fallthru
    _
  %s15 = smul.u32 0, 128
  %v16 = vlaneseq
  %v17 = vand.u32 %v16, 127
  %v18 = vstv %s15
  %v19 = vadd.s32 %v18, %v17
  %vm20 = vcmp.lt.s32.totalorder %v19, 44
  %v21 = vsel %vm20, 1, 0
  %v22 = vcvt.s32.f32 %v21
  %v23 = vld [vmem:[%s0] sm:$0xf]
  %v24 = vld [vmem:[%s0 + $0x4] sm:$0xf]
  %v25 = vld [vmem:[%s2] sm:$0xff]
  %v26 = vld [vmem:[%s2 + $0x8] sm:$0xff]
  %v27 = vld [vmem:[%s2 + $0x10] sm:$0xff]
  %v28 = vld [vmem:[%s2 + $0x18] sm:$0xff]
  %v29 = vpack.c.bf16 %v26, %v25
  %v30 = vpack.c.bf16 %v28, %v27
  %v31 = vld [vmem:[%s1] sm:$0xff]
  %v32 = vld [vmem:[%s1 + $0x8] sm:$0xff]
  %34 = vset.pattern.permute.xlu0 0
  %35 = vperm.xlu0 %34, %v31
  %v36 = vpop.permute.xlu0 %35
  %39 = vset.pattern.permute.xlu0 0
  %40 = vperm.xlu0 %39, %v32
  %v41 = vpop.permute.xlu0 %40
  %v45 = vunpack.c.l.b16 %v23
  %v46 = vunpack.c.l.b16 %v24
  %v47 = vpack.c.b16 %v46, %v45
  %vm48 = vcmask 261120
  %v50 = vsel %vm48, %v47, 0
  %52 = vmatprep.subr.bf16.mxu0 0
  %53 = vmatpush1.bf16.msra.mxu0 %v29
  %54 = vmatprep.subr.bf16.mxu0 0
  %55 = vmatpush1.bf16.msra.mxu0 %v30
  %56 = vmatprep.subr.bf16.mxu0 0
  %57 = vmatpush1.bf16.msra.mxu0 0
  %58 = vmatprep.subr.bf16.mxu0 0
  %59 = vmatpush1.bf16.msra.mxu0 0
  %60 = vmatprep.subr.bf16.mxu0 0
  %61 = vmatpush1.bf16.msra.mxu0 0
  %62 = vmatprep.subr.bf16.mxu0 0
  %63 = vmatpush1.bf16.msra.mxu0 0
  %64 = vmatprep.subr.bf16.mxu0 0
  %65 = vmatpush1.bf16.msra.mxu0 0
  %66 = vmatprep.subr.bf16.mxu0 0
  %67 = vmatpush1.bf16.msra.mxu0 0
  %68 = vmatprep.subr.bf16.mxu0 0
  %69 = vmatpush1.bf16.msra.mxu0 0
  %70 = vmatprep.subr.bf16.mxu0 0
  %71 = vmatpush1.bf16.msra.mxu0 0
  %72 = vmatprep.subr.bf16.mxu0 0
  %73 = vmatpush1.bf16.msra.mxu0 0
  %74 = vmatprep.subr.bf16.mxu0 0
  %75 = vmatpush1.bf16.msra.mxu0 0
  %76 = vmatprep.subr.bf16.mxu0 0
  %77 = vmatpush1.bf16.msra.mxu0 0
  %78 = vmatprep.subr.bf16.mxu0 0
  %79 = vmatpush1.bf16.msra.mxu0 0
  %80 = vmatprep.subr.bf16.mxu0 0
  %81 = vmatpush1.bf16.msra.mxu0 0
  %82 = vmatprep.subr.bf16.mxu0 0
  %83 = vmatpush1.bf16.msra.mxu0 0
  %84 = vmatprep.mubr.bf16.mxu0 0
  %85 = vmatmul.mubr.bf16.gmra.mrb[0].mxu0 %v50
  %v86 = vpop.f32.mrb[0].mxu0
  %v87 = vadd.f32 %v36, %v86
  %v88 = vpop.f32.mrb[0].mxu0
  %v89 = vpop.f32.mrb[0].mxu0
  %v90 = vadd.f32 %v41, %v89
  %v91 = vpop.f32.mrb[0].mxu0
  %92 = vdwg.mxu0
  %v93 = vmul.f32 %v87, %v22
  %v94 = vmul.f32 %v90, %v22
  %95 = vst [vmem:[%s3] sm:$0xff] %v93
  %96 = vst [vmem:[%s3 + $0x8] sm:$0xff] %v94
  // Predicated region
  $region14: #{model_forward.9} parent=0 // pred_check
    _
  $region15: #{model_forward.9} parent=0 // pred_check_branch
    %98 = sbr.rel (0) target = $region17
  $region16: #{model_forward.9} parent=0 // pred_region
    _
  $region17: #{model_forward.9} parent=0 // pred_fallthru
    _
  // Predicated region
  $region18: #{model_forward.9} parent=0 // pred_check
    _
  $region19: #{model_forward.9} parent=0 // pred_check_branch
    %100 = sbr.rel (0) target = $region21
  $region20: #{model_forward.9} parent=0 // pred_region
    _
  $region21: #{model_forward.9} parent=0 // pred_fallthru
    _

// kernel: model_forward.12
$region0: #{model_forward.12}
  #allocation0 [shape = 'u32[]', space=smem, size = 0x4, offset = 0x4, fixed_abs, tag = 'smem constant byte address 0x4 - core index']
  #allocation1 [shape = 'u32[144,128]{1,0:T(1,128)}', space=vmem, size = 0x12000, scoped, tag = 'internal scratch']
  %s0 = inlined_call_operand.vmem [shape: bf16[16,8], index: 0, kind: input, shape index: {}]
  %s1 = inlined_call_operand.vmem [shape: f32[16,1], index: 1, kind: input, shape index: {}]
  %s2 = inlined_call_operand.vmem [shape: f32[8,128], index: 2, kind: input, shape index: {}]
  %s3 = inlined_call_operand.vmem [shape: f32[1,128], index: 3, kind: input, shape index: {}]
  %s4 = inlined_call_operand.vmem [shape: f32[16,128], index: 4, kind: output, shape index: {}]
  %s5 = sld [smem:[#allocation0]]
  $region26: #{model_forward.12} parent=0
    _
  %s7 = ssub.s32 1, %s5
  %s8 = scalar_select 0, %s7, %s5
  // Predicated region
  $region2: #{model_forward.12} parent=0 // pred_check
    _
  $region3: #{model_forward.12} parent=0 // pred_check_branch
    %10 = sbr.rel (0) target = $region5
  $region4: #{model_forward.12} parent=0 // pred_region
    _
  $region5: #{model_forward.12} parent=0 // pred_fallthru
    _
  // Predicated region
  $region6: #{model_forward.12} parent=0 // pred_check
    _
  $region7: #{model_forward.12} parent=0 // pred_check_branch
    %12 = sbr.rel (0) target = $region9
  $region8: #{model_forward.12} parent=0 // pred_region
    _
  $region9: #{model_forward.12} parent=0 // pred_fallthru
    _
  // Predicated region
  $region10: #{model_forward.12} parent=0 // pred_check
    _
  $region11: #{model_forward.12} parent=0 // pred_check_branch
    %14 = sbr.rel (0) target = $region13
  $region12: #{model_forward.12} parent=0 // pred_region
    _
  $region13: #{model_forward.12} parent=0 // pred_fallthru
    _
  // Predicated region
  $region14: #{model_forward.12} parent=0 // pred_check
    _
  $region15: #{model_forward.12} parent=0 // pred_check_branch
    %16 = sbr.rel (0) target = $region17
  $region16: #{model_forward.12} parent=0 // pred_region
    _
  $region17: #{model_forward.12} parent=0 // pred_fallthru
    _
  %v18 = vld [vmem:[%s2] sm:$0xff]
  %v19 = vrot.slane %v18, 4
  %v20 = vmax.f32 %v18, %v19
  %v21 = vrot.slane %v20, 2
  %v22 = vmax.f32 %v20, %v21
  %v23 = vrot.slane %v22, 1
  %v24 = vmax.f32 %v22, %v23
  %v25 = vsub.f32 %v18, %v24
  %v26 = vmul.f32 %v25, 1.442695
  %v27 = vpow.pop %v26
  %v28 = vrot.slane %v27, 4
  %v29 = vadd.f32 %v27, %v28
  %v30 = vrot.slane %v29, 2
  %v31 = vadd.f32 %v29, %v30
  %v32 = vrot.slane %v31, 1
  %v33 = vadd.f32 %v31, %v32
  %v34 = vrcp.pop %v33
  %v35 = vmul.f32 %v27, %v34
  %v36 = vld [vmem:[%s3] sm:$0x1]
  %v38 = vlaneseq
  %v39 = vshrl.u32 %v38, 7
  %v40 = vsub.s32 0, %v39
  %v41 = vrot.slane %v36, %v40
  %v43 = vmul.f32 %v35, %v41
  %s44 = smul.u32 0, 128
  %v45 = vlaneseq
  %v46 = vand.u32 %v45, 127
  %v47 = vstv %s44
  %v48 = vadd.s32 %v47, %v46
  %vm49 = vcmp.lt.s32.totalorder %v48, 44
  %v50 = vsel %vm49, 1, 0
  %v51 = vcvt.s32.f32 %v50
  %v52 = vld [vmem:[%s0] sm:$0xf]
  %v53 = vld [vmem:[%s0 + $0x4] sm:$0xf]
  %v54 = vpack.c.bf16 %v43, %v43
  %v55 = vld [vmem:[%s1] sm:$0xff]
  %v56 = vld [vmem:[%s1 + $0x8] sm:$0xff]
  %58 = vset.pattern.permute.xlu0 0
  %59 = vperm.xlu0 %58, %v55
  %v60 = vpop.permute.xlu0 %59
  %63 = vset.pattern.permute.xlu0 0
  %64 = vperm.xlu0 %63, %v56
  %v65 = vpop.permute.xlu0 %64
  %v69 = vunpack.c.l.b16 %v52
  %v70 = vunpack.c.l.b16 %v53
  %v71 = vpack.c.b16 %v70, %v69
  %vm72 = vcmask 64512
  %v74 = vsel %vm72, %v71, 0
  %vm76 = vcmask 1043456
  %v78 = vsel %vm76, %v54, 0
  %80 = vmatprep.subr.bf16.mxu0 0
  %81 = vmatpush1.bf16.msra.mxu0 %v78
  %82 = vmatprep.subr.bf16.mxu0 0
  %83 = vmatpush1.bf16.msra.mxu0 0
  %84 = vmatprep.subr.bf16.mxu0 0
  %85 = vmatpush1.bf16.msra.mxu0 0
  %86 = vmatprep.subr.bf16.mxu0 0
  %87 = vmatpush1.bf16.msra.mxu0 0
  %88 = vmatprep.subr.bf16.mxu0 0
  %89 = vmatpush1.bf16.msra.mxu0 0
  %90 = vmatprep.subr.bf16.mxu0 0
  %91 = vmatpush1.bf16.msra.mxu0 0
  %92 = vmatprep.subr.bf16.mxu0 0
  %93 = vmatpush1.bf16.msra.mxu0 0
  %94 = vmatprep.subr.bf16.mxu0 0
  %95 = vmatpush1.bf16.msra.mxu0 0
  %96 = vmatprep.subr.bf16.mxu0 0
  %97 = vmatpush1.bf16.msra.mxu0 0
  %98 = vmatprep.subr.bf16.mxu0 0
  %99 = vmatpush1.bf16.msra.mxu0 0
  %100 = vmatprep.subr.bf16.mxu0 0
  %101 = vmatpush1.bf16.msra.mxu0 0
  %102 = vmatprep.subr.bf16.mxu0 0
  %103 = vmatpush1.bf16.msra.mxu0 0
  %104 = vmatprep.subr.bf16.mxu0 0
  %105 = vmatpush1.bf16.msra.mxu0 0
  %106 = vmatprep.subr.bf16.mxu0 0
  %107 = vmatpush1.bf16.msra.mxu0 0
  %108 = vmatprep.subr.bf16.mxu0 0
  %109 = vmatpush1.bf16.msra.mxu0 0
  %110 = vmatprep.subr.bf16.mxu0 0
  %111 = vmatpush1.bf16.msra.mxu0 0
  %112 = vmatprep.mubr.bf16.mxu0 0
  %113 = vmatmul.mubr.bf16.gmra.mrb[0].mxu0 %v74
  %v114 = vpop.f32.mrb[0].mxu0
  %v115 = vadd.f32 %v60, %v114
  %v116 = vpop.f32.mrb[0].mxu0
  %v117 = vpop.f32.mrb[0].mxu0
  %v118 = vadd.f32 %v65, %v117
  %v119 = vpop.f32.mrb[0].mxu0
  %120 = vdwg.mxu0
  %v121 = vmul.f32 %v115, %v51
  %v122 = vmul.f32 %v118, %v51
  %123 = vst [vmem:[%s4] sm:$0xff] %v121
  %124 = vst [vmem:[%s4 + $0x8] sm:$0xff] %v122
  // Predicated region
  $region18: #{model_forward.12} parent=0 // pred_check
    _
  $region19: #{model_forward.12} parent=0 // pred_check_branch
    %126 = sbr.rel (0) target = $region21
  $region20: #{model_forward.12} parent=0 // pred_region
    _
  $region21: #{model_forward.12} parent=0 // pred_fallthru
    _
  // Predicated region
  $region22: #{model_forward.12} parent=0 // pred_check
    _
  $region23: #{model_forward.12} parent=0 // pred_check_branch
    %128 = sbr.rel (0) target = $region25
  $region24: #{model_forward.12} parent=0 // pred_region
    _
  $region25: #{model_forward.12} parent=0 // pred_fallthru
    _

// kernel: model_forward.10
$region0: #{model_forward.10}
  #allocation0 [shape = 'u32[]', space=smem, size = 0x4, offset = 0x4, fixed_abs, tag = 'smem constant byte address 0x4 - core index']
  #allocation1 [shape = 'u32[144,128]{1,0:T(1,128)}', space=vmem, size = 0x12000, scoped, tag = 'internal scratch']
  #allocation2 [shape = 'f32[16,128]{1,0:T(8,128)}', space=vmem, size = 0x2000, scoped, tag = 'scratch operand']
  %s0 = inlined_call_operand.vmem [shape: f32[16,128], index: 0, kind: input, shape index: {}]
  %s1 = inlined_call_operand.vmem [shape: f32[1,128], index: 1, kind: input, shape index: {}]
  %s2 = inlined_call_operand.vmem [shape: bf16[4,48,16], index: 2, kind: input, shape index: {}]
  %s3 = inlined_call_operand.vmem [shape: f32[4,16,1], index: 3, kind: input, shape index: {}]
  %s4 = inlined_call_operand.vmem [shape: bf16[4,24,16], index: 4, kind: input, shape index: {}]
  %s5 = inlined_call_operand.vmem [shape: f32[4,24,1], index: 5, kind: input, shape index: {}]
  %s6 = inlined_call_operand.vmem [shape: bf16[4,16,8], index: 6, kind: input, shape index: {}]
  %s7 = inlined_call_operand.vmem [shape: f32[4,16,1], index: 7, kind: input, shape index: {}]
  %s8 = inlined_call_operand.vmem [shape: bf16[4,16,16], index: 8, kind: input, shape index: {}]
  %s9 = inlined_call_operand.vmem [shape: f32[4,16,1], index: 9, kind: input, shape index: {}]
  %s10 = inlined_call_operand.vmem [shape: f32[16,128], index: 10, kind: output, shape index: {}]
  %s11 = sld [smem:[#allocation0]]
  $region81: #{model_forward.10} parent=0
    _
  %s13 = ssub.s32 1, %s11
  %s14 = scalar_select 0, %s13, %s11
  loop: start=0, step=1, limit=6
  $region2: #{model_forward.10} parent=0 // loop_pre_header
    _
  $region3: #{model_forward.10} parent=0 // loop_header
    %s16 = sphi 0, %s20
    %p17 = scmp.ge.s32.totalorder %s16, 6
    %s24 = sphi 0, %s24
    %s26 = sphi 0, %s24
    %s27 = sphi 0, %s26
    %s41 = sphi 0, %s27
    %s45 = sphi 0, %s45
    %s47 = sphi 0, %s45
    %s48 = sphi 0, %s47
    %s62 = sphi 0, %s48
    %s68 = sphi 0, %s70
    %s71 = sphi 0, %s68
    %s72 = sphi 0, %s71
    %s88 = sphi 0, %s72
    %s94 = sphi 0, %s96
    %s97 = sphi 0, %s94
    %s98 = sphi 0, %s97
    %s114 = sphi 0, %s98
    %s120 = sphi 0, %s122
    %s123 = sphi 0, %s120
    %s124 = sphi 0, %s123
    %s140 = sphi 0, %s124
    %s146 = sphi 0, %s148
    %s149 = sphi 0, %s146
    %s150 = sphi 0, %s149
    %s166 = sphi 0, %s150
    %s172 = sphi 0, %s174
    %s175 = sphi 0, %s172
    %s176 = sphi 0, %s175
    %s192 = sphi 0, %s176
    %s198 = sphi 0, %s200
    %s201 = sphi 0, %s198
    %s202 = sphi 0, %s201
    %s218 = sphi 0, %s202
    %s224 = sphi 0, %s226
    %s227 = sphi 0, %s224
    %s228 = sphi 0, %s227
    %s244 = sphi 0, %s228
    %s250 = sphi 0, %s252
    %s253 = sphi 0, %s250
    %s254 = sphi 0, %s253
    %s270 = sphi 0, %s254
    %s274 = sphi 0, %s274
    %s276 = sphi 0, %s274
    %s277 = sphi 0, %s276
    %s291 = sphi 0, %s277
  $region4: #{model_forward.10} parent=0 // loop_header_branch
    %19 = sbr.rel (%p17) target = $region8
  $region5: #{model_forward.10} parent=0 // loop_body
    %s21 = ssub.s32 %s16, 1
    %s22 = ssub.s32 %s16, 2
    %s23 = sadd.s32 %s16, 1
    %s25 = sadd.s32 %s24, 1
    %p28 = scmp.eq.s32.totalorder %s16, 3
    %p29 = scmp.ne.s32.totalorder %s24, %s26
    %p30 = scmp.eq.s32.totalorder %s16, 0
    %p31 = por %p29, %p30
    %p32 = scmp.ne.s32.totalorder %s24, %s26
    %p33 = scmp.eq.s32.totalorder %s21, 3
    %p34 = por %p32, %p33
    %p35 = scmp.ne.s32.totalorder %s26, %s27
    %p36 = scmp.eq.s32.totalorder %s21, 0
    %p37 = por %p35, %p36
    %p38 = scmp.ne.s32.totalorder %s26, %s27
    %p39 = scmp.eq.s32.totalorder %s22, 3
    %p40 = por %p38, %p39
    %p42 = scmp.ne.s32.totalorder %s27, %s41
    %p43 = scmp.eq.s32.totalorder %s22, 0
    %p44 = por %p42, %p43
    %s46 = sadd.s32 %s45, 1
    %p49 = scmp.eq.s32.totalorder %s16, 3
    %p50 = scmp.ne.s32.totalorder %s45, %s47
    %p51 = scmp.eq.s32.totalorder %s16, 0
    %p52 = por %p50, %p51
    %p53 = scmp.ne.s32.totalorder %s45, %s47
    %p54 = scmp.eq.s32.totalorder %s21, 3
    %p55 = por %p53, %p54
    %p56 = scmp.ne.s32.totalorder %s47, %s48
    %p57 = scmp.eq.s32.totalorder %s21, 0
    %p58 = por %p56, %p57
    %p59 = scmp.ne.s32.totalorder %s47, %s48
    %p60 = scmp.eq.s32.totalorder %s22, 3
    %p61 = por %p59, %p60
    %p63 = scmp.ne.s32.totalorder %s48, %s62
    %p64 = scmp.eq.s32.totalorder %s22, 0
    %p65 = por %p63, %p64
    %s66 = ssub.s32 %s16, %s23
    %p67 = scmp.eq.s32.totalorder %s66, 0
    %s69 = sadd.s32 %s68, 1
    %s70 = scalar_select %p67, %s68, %s69
    %p73 = pneg %p67
    %p74 = scmp.eq.s32.totalorder %s16, 3
    %p75 = por %p73, %p74
    %p76 = scmp.ne.s32.totalorder %s68, %s71
    %p77 = scmp.eq.s32.totalorder %s16, 0
    %p78 = por %p76, %p77
    %p79 = scmp.ne.s32.totalorder %s68, %s71
    %p80 = scmp.eq.s32.totalorder %s21, 3
    %p81 = por %p79, %p80
    %p82 = scmp.ne.s32.totalorder %s71, %s72
    %p83 = scmp.eq.s32.totalorder %s21, 0
    %p84 = por %p82, %p83
    %p85 = scmp.ne.s32.totalorder %s71, %s72
    %p86 = scmp.eq.s32.totalorder %s22, 3
    %p87 = por %p85, %p86
    %p89 = scmp.ne.s32.totalorder %s72, %s88
    %p90 = scmp.eq.s32.totalorder %s22, 0
    %p91 = por %p89, %p90
    %s92 = ssub.s32 %s16, %s23
    %p93 = scmp.eq.s32.totalorder %s92, 0
    %s95 = sadd.s32 %s94, 1
    %s96 = scalar_select %p93, %s94, %s95
    %p99 = pneg %p93
    %p100 = scmp.eq.s32.totalorder %s16, 3
    %p101 = por %p99, %p100
    %p102 = scmp.ne.s32.totalorder %s94, %s97
    %p103 = scmp.eq.s32.totalorder %s16, 0
    %p104 = por %p102, %p103
    %p105 = scmp.ne.s32.totalorder %s94, %s97
    %p106 = scmp.eq.s32.totalorder %s21, 3
    %p107 = por %p105, %p106
    %p108 = scmp.ne.s32.totalorder %s97, %s98
    %p109 = scmp.eq.s32.totalorder %s21, 0
    %p110 = por %p108, %p109
    %p111 = scmp.ne.s32.totalorder %s97, %s98
    %p112 = scmp.eq.s32.totalorder %s22, 3
    %p113 = por %p111, %p112
    %p115 = scmp.ne.s32.totalorder %s98, %s114
    %p116 = scmp.eq.s32.totalorder %s22, 0
    %p117 = por %p115, %p116
    %s118 = ssub.s32 %s16, %s23
    %p119 = scmp.eq.s32.totalorder %s118, 0
    %s121 = sadd.s32 %s120, 1
    %s122 = scalar_select %p119, %s120, %s121
    %p125 = pneg %p119
    %p126 = scmp.eq.s32.totalorder %s16, 3
    %p127 = por %p125, %p126
    %p128 = scmp.ne.s32.totalorder %s120, %s123
    %p129 = scmp.eq.s32.totalorder %s16, 0
    %p130 = por %p128, %p129
    %p131 = scmp.ne.s32.totalorder %s120, %s123
    %p132 = scmp.eq.s32.totalorder %s21, 3
    %p133 = por %p131, %p132
    %p134 = scmp.ne.s32.totalorder %s123, %s124
    %p135 = scmp.eq.s32.totalorder %s21, 0
    %p136 = por %p134, %p135
    %p137 = scmp.ne.s32.totalorder %s123, %s124
    %p138 = scmp.eq.s32.totalorder %s22, 3
    %p139 = por %p137, %p138
    %p141 = scmp.ne.s32.totalorder %s124, %s140
    %p142 = scmp.eq.s32.totalorder %s22, 0
    %p143 = por %p141, %p142
    %s144 = ssub.s32 %s16, %s23
    %p145 = scmp.eq.s32.totalorder %s144, 0
    %s147 = sadd.s32 %s146, 1
    %s148 = scalar_select %p145, %s146, %s147
    %p151 = pneg %p145
    %p152 = scmp.eq.s32.totalorder %s16, 3
    %p153 = por %p151, %p152
    %p154 = scmp.ne.s32.totalorder %s146, %s149
    %p155 = scmp.eq.s32.totalorder %s16, 0
    %p156 = por %p154, %p155
    %p157 = scmp.ne.s32.totalorder %s146, %s149
    %p158 = scmp.eq.s32.totalorder %s21, 3
    %p159 = por %p157, %p158
    %p160 = scmp.ne.s32.totalorder %s149, %s150
    %p161 = scmp.eq.s32.totalorder %s21, 0
    %p162 = por %p160, %p161
    %p163 = scmp.ne.s32.totalorder %s149, %s150
    %p164 = scmp.eq.s32.totalorder %s22, 3
    %p165 = por %p163, %p164
    %p167 = scmp.ne.s32.totalorder %s150, %s166
    %p168 = scmp.eq.s32.totalorder %s22, 0
    %p169 = por %p167, %p168
    %s170 = ssub.s32 %s16, %s23
    %p171 = scmp.eq.s32.totalorder %s170, 0
    %s173 = sadd.s32 %s172, 1
    %s174 = scalar_select %p171, %s172, %s173
    %p177 = pneg %p171
    %p178 = scmp.eq.s32.totalorder %s16, 3
    %p179 = por %p177, %p178
    %p180 = scmp.ne.s32.totalorder %s172, %s175
    %p181 = scmp.eq.s32.totalorder %s16, 0
    %p182 = por %p180, %p181
    %p183 = scmp.ne.s32.totalorder %s172, %s175
    %p184 = scmp.eq.s32.totalorder %s21, 3
    %p185 = por %p183, %p184
    %p186 = scmp.ne.s32.totalorder %s175, %s176
    %p187 = scmp.eq.s32.totalorder %s21, 0
    %p188 = por %p186, %p187
    %p189 = scmp.ne.s32.totalorder %s175, %s176
    %p190 = scmp.eq.s32.totalorder %s22, 3
    %p191 = por %p189, %p190
    %p193 = scmp.ne.s32.totalorder %s176, %s192
    %p194 = scmp.eq.s32.totalorder %s22, 0
    %p195 = por %p193, %p194
    %s196 = ssub.s32 %s16, %s23
    %p197 = scmp.eq.s32.totalorder %s196, 0
    %s199 = sadd.s32 %s198, 1
    %s200 = scalar_select %p197, %s198, %s199
    %p203 = pneg %p197
    %p204 = scmp.eq.s32.totalorder %s16, 3
    %p205 = por %p203, %p204
    %p206 = scmp.ne.s32.totalorder %s198, %s201
    %p207 = scmp.eq.s32.totalorder %s16, 0
    %p208 = por %p206, %p207
    %p209 = scmp.ne.s32.totalorder %s198, %s201
    %p210 = scmp.eq.s32.totalorder %s21, 3
    %p211 = por %p209, %p210
    %p212 = scmp.ne.s32.totalorder %s201, %s202
    %p213 = scmp.eq.s32.totalorder %s21, 0
    %p214 = por %p212, %p213
    %p215 = scmp.ne.s32.totalorder %s201, %s202
    %p216 = scmp.eq.s32.totalorder %s22, 3
    %p217 = por %p215, %p216
    %p219 = scmp.ne.s32.totalorder %s202, %s218
    %p220 = scmp.eq.s32.totalorder %s22, 0
    %p221 = por %p219, %p220
    %s222 = ssub.s32 %s16, %s23
    %p223 = scmp.eq.s32.totalorder %s222, 0
    %s225 = sadd.s32 %s224, 1
    %s226 = scalar_select %p223, %s224, %s225
    %p229 = pneg %p223
    %p230 = scmp.eq.s32.totalorder %s16, 3
    %p231 = por %p229, %p230
    %p232 = scmp.ne.s32.totalorder %s224, %s227
    %p233 = scmp.eq.s32.totalorder %s16, 0
    %p234 = por %p232, %p233
    %p235 = scmp.ne.s32.totalorder %s224, %s227
    %p236 = scmp.eq.s32.totalorder %s21, 3
    %p237 = por %p235, %p236
    %p238 = scmp.ne.s32.totalorder %s227, %s228
    %p239 = scmp.eq.s32.totalorder %s21, 0
    %p240 = por %p238, %p239
    %p241 = scmp.ne.s32.totalorder %s227, %s228
    %p242 = scmp.eq.s32.totalorder %s22, 3
    %p243 = por %p241, %p242
    %p245 = scmp.ne.s32.totalorder %s228, %s244
    %p246 = scmp.eq.s32.totalorder %s22, 0
    %p247 = por %p245, %p246
    %s248 = ssub.s32 %s16, %s23
    %p249 = scmp.eq.s32.totalorder %s248, 0
    %s251 = sadd.s32 %s250, 1
    %s252 = scalar_select %p249, %s250, %s251
    %p255 = pneg %p249
    %p256 = scmp.eq.s32.totalorder %s16, 3
    %p257 = por %p255, %p256
    %p258 = scmp.ne.s32.totalorder %s250, %s253
    %p259 = scmp.eq.s32.totalorder %s16, 0
    %p260 = por %p258, %p259
    %p261 = scmp.ne.s32.totalorder %s250, %s253
    %p262 = scmp.eq.s32.totalorder %s21, 3
    %p263 = por %p261, %p262
    %p264 = scmp.ne.s32.totalorder %s253, %s254
    %p265 = scmp.eq.s32.totalorder %s21, 0
    %p266 = por %p264, %p265
    %p267 = scmp.ne.s32.totalorder %s253, %s254
    %p268 = scmp.eq.s32.totalorder %s22, 3
    %p269 = por %p267, %p268
    %p271 = scmp.ne.s32.totalorder %s254, %s270
    %p272 = scmp.eq.s32.totalorder %s22, 0
    %p273 = por %p271, %p272
    %s275 = sadd.s32 %s274, 1
    %p278 = scmp.eq.s32.totalorder %s16, 3
    %p279 = scmp.ne.s32.totalorder %s274, %s276
    %p280 = scmp.eq.s32.totalorder %s16, 0
    %p281 = por %p279, %p280
    %p282 = scmp.ne.s32.totalorder %s274, %s276
    %p283 = scmp.eq.s32.totalorder %s21, 3
    %p284 = por %p282, %p283
    %p285 = scmp.ne.s32.totalorder %s276, %s277
    %p286 = scmp.eq.s32.totalorder %s21, 0
    %p287 = por %p285, %p286
    %p288 = scmp.ne.s32.totalorder %s276, %s277
    %p289 = scmp.eq.s32.totalorder %s22, 3
    %p290 = por %p288, %p289
    %p292 = scmp.ne.s32.totalorder %s277, %s291
    %p293 = scmp.eq.s32.totalorder %s22, 0
    %p294 = por %p292, %p293
    %p295 = scmp.le.s32.totalorder 1, %s16
    %p296 = scmp.lt.s32.totalorder %s16, 5
    %p297 = pnand %p295, %p296
    %p298 = pneg %p297
    // Predicated region
    $region9: #{model_forward.10} parent=5 // pred_check
      _
    $region10: #{model_forward.10} parent=5 // pred_check_branch
      %300 = sbr.rel (%p297) target = $region12
    $region11: #{model_forward.10} parent=5 // pred_region
      %s301 = ssub.s32 %s16, 1
      // Predicated region
      $region13: #{model_forward.10} parent=11 // pred_check
        %p302 = pneg %p37
      $region14: #{model_forward.10} parent=11 // pred_check_branch
        %304 = sbr.rel (%p302) target = $region16
      $region15: #{model_forward.10} parent=11 // pred_region
        _
      $region16: #{model_forward.10} parent=11 // pred_fallthru
        _
      // Predicated region
      $region17: #{model_forward.10} parent=11 // pred_check
        %p305 = pneg %p58
      $region18: #{model_forward.10} parent=11 // pred_check_branch
        %307 = sbr.rel (%p305) target = $region20
      $region19: #{model_forward.10} parent=11 // pred_region
        _
      $region20: #{model_forward.10} parent=11 // pred_fallthru
        _
    $region12: #{model_forward.10} parent=5 // pred_fallthru
      _
    %p308 = scmp.lt.s32.totalorder %s16, 4
    // Predicated region
    $region21: #{model_forward.10} parent=5 // pred_check
      %p309 = pneg %p308
    $region22: #{model_forward.10} parent=5 // pred_check_branch
      %311 = sbr.rel (%p309) target = $region24
    $region23: #{model_forward.10} parent=5 // pred_region
      // Predicated region
      $region25: #{model_forward.10} parent=23 // pred_check
        %p312 = pneg %p78
      $region26: #{model_forward.10} parent=23 // pred_check_branch
        %314 = sbr.rel (%p312) target = $region28
      $region27: #{model_forward.10} parent=23 // pred_region
        %p315 = scmp.lt.s32.totalorder %s16, 3
        %s316 = scalar_select %p315, %s16, 3
        %s317 = smul.addr %s316, 6
        %s318 = smul.addr %s317, 4
        %s319 = scalar_lea.vmem %s2, %s318
      $region28: #{model_forward.10} parent=23 // pred_fallthru
        _
      // Predicated region
      $region29: #{model_forward.10} parent=23 // pred_check
        %p320 = pneg %p104
      $region30: #{model_forward.10} parent=23 // pred_check_branch
        %322 = sbr.rel (%p320) target = $region32
      $region31: #{model_forward.10} parent=23 // pred_region
        %p323 = scmp.lt.s32.totalorder %s16, 3
        %s324 = scalar_select %p323, %s16, 3
        %s325 = smul.addr %s324, 2
        %s326 = smul.addr %s325, 8
        %s327 = scalar_lea.vmem %s3, %s326
      $region32: #{model_forward.10} parent=23 // pred_fallthru
        _
      // Predicated region
      $region33: #{model_forward.10} parent=23 // pred_check
        %p328 = pneg %p130
      $region34: #{model_forward.10} parent=23 // pred_check_branch
        %330 = sbr.rel (%p328) target = $region36
      $region35: #{model_forward.10} parent=23 // pred_region
        %p331 = scmp.lt.s32.totalorder %s16, 3
        %s332 = scalar_select %p331, %s16, 3
        %s333 = smul.addr %s332, 3
        %s334 = smul.addr %s333, 4
        %s335 = scalar_lea.vmem %s4, %s334
      $region36: #{model_forward.10} parent=23 // pred_fallthru
        _
      // Predicated region
      $region37: #{model_forward.10} parent=23 // pred_check
        %p336 = pneg %p156
      $region38: #{model_forward.10} parent=23 // pred_check_branch
        %338 = sbr.rel (%p336) target = $region40
      $region39: #{model_forward.10} parent=23 // pred_region
        %p339 = scmp.lt.s32.totalorder %s16, 3
        %s340 = scalar_select %p339, %s16, 3
        %s341 = smul.addr %s340, 3
        %s342 = smul.addr %s341, 8
        %s343 = scalar_lea.vmem %s5, %s342
      $region40: #{model_forward.10} parent=23 // pred_fallthru
        _
      // Predicated region
      $region41: #{model_forward.10} parent=23 // pred_check
        %p344 = pneg %p182
      $region42: #{model_forward.10} parent=23 // pred_check_branch
        %346 = sbr.rel (%p344) target = $region44
      $region43: #{model_forward.10} parent=23 // pred_region
        %p347 = scmp.lt.s32.totalorder %s16, 3
        %s348 = scalar_select %p347, %s16, 3
        %s349 = smul.addr %s348, 2
        %s350 = smul.addr %s349, 4
        %s351 = scalar_lea.vmem %s6, %s350
      $region44: #{model_forward.10} parent=23 // pred_fallthru
        _
      // Predicated region
      $region45: #{model_forward.10} parent=23 // pred_check
        %p352 = pneg %p208
      $region46: #{model_forward.10} parent=23 // pred_check_branch
        %354 = sbr.rel (%p352) target = $region48
      $region47: #{model_forward.10} parent=23 // pred_region
        %p355 = scmp.lt.s32.totalorder %s16, 3
        %s356 = scalar_select %p355, %s16, 3
        %s357 = smul.addr %s356, 2
        %s358 = smul.addr %s357, 8
        %s359 = scalar_lea.vmem %s7, %s358
      $region48: #{model_forward.10} parent=23 // pred_fallthru
        _
      // Predicated region
      $region49: #{model_forward.10} parent=23 // pred_check
        %p360 = pneg %p234
      $region50: #{model_forward.10} parent=23 // pred_check_branch
        %362 = sbr.rel (%p360) target = $region52
      $region51: #{model_forward.10} parent=23 // pred_region
        %p363 = scmp.lt.s32.totalorder %s16, 3
        %s364 = scalar_select %p363, %s16, 3
        %s365 = smul.addr %s364, 2
        %s366 = smul.addr %s365, 4
        %s367 = scalar_lea.vmem %s8, %s366
      $region52: #{model_forward.10} parent=23 // pred_fallthru
        _
      // Predicated region
      $region53: #{model_forward.10} parent=23 // pred_check
        %p368 = pneg %p260
      $region54: #{model_forward.10} parent=23 // pred_check_branch
        %370 = sbr.rel (%p368) target = $region56
      $region55: #{model_forward.10} parent=23 // pred_region
        %p371 = scmp.lt.s32.totalorder %s16, 3
        %s372 = scalar_select %p371, %s16, 3
        %s373 = smul.addr %s372, 2
        %s374 = smul.addr %s373, 8
        %s375 = scalar_lea.vmem %s9, %s374
      $region56: #{model_forward.10} parent=23 // pred_fallthru
        _
    $region24: #{model_forward.10} parent=5 // pred_fallthru
      _
    %p376 = scmp.le.s32.totalorder 1, %s16
    %p377 = scmp.lt.s32.totalorder %s16, 5
    %p378 = pnand %p376, %p377
    %p379 = pneg %p378
    // Predicated region
    $region57: #{model_forward.10} parent=5 // pred_check
      _
    $region58: #{model_forward.10} parent=5 // pred_check_branch
      %381 = sbr.rel (%p378) target = $region60
    $region59: #{model_forward.10} parent=5 // pred_region
      %s382 = ssub.s32 %s16, 1
      %p383 = pneg %p37
      %p384 = pneg %p34
      %p385 = pneg %p58
      %p386 = pneg %p55
      %p387 = scmp.lt.s32.totalorder %s21, 3
      %s388 = scalar_select %p387, %s21, 3
      %s389 = smul.addr %s388, 6
      %s390 = smul.addr %s389, 4
      %s391 = scalar_lea.vmem %s2, %s390
      %p392 = pneg %p84
      %p393 = pneg %p81
      %p394 = scmp.lt.s32.totalorder %s21, 3
      %s395 = scalar_select %p394, %s21, 3
      %s396 = smul.addr %s395, 2
      %s397 = smul.addr %s396, 8
      %s398 = scalar_lea.vmem %s3, %s397
      %p399 = pneg %p110
      %p400 = pneg %p107
      %p401 = scmp.lt.s32.totalorder %s21, 3
      %s402 = scalar_select %p401, %s21, 3
      %s403 = smul.addr %s402, 3
      %s404 = smul.addr %s403, 4
      %s405 = scalar_lea.vmem %s4, %s404
      %p406 = pneg %p136
      %p407 = pneg %p133
      %p408 = scmp.lt.s32.totalorder %s21, 3
      %s409 = scalar_select %p408, %s21, 3
      %s410 = smul.addr %s409, 3
      %s411 = smul.addr %s410, 8
      %s412 = scalar_lea.vmem %s5, %s411
      %p413 = pneg %p162
      %p414 = pneg %p159
      %p415 = scmp.lt.s32.totalorder %s21, 3
      %s416 = scalar_select %p415, %s21, 3
      %s417 = smul.addr %s416, 2
      %s418 = smul.addr %s417, 4
      %s419 = scalar_lea.vmem %s6, %s418
      %p420 = pneg %p188
      %p421 = pneg %p185
      %p422 = scmp.lt.s32.totalorder %s21, 3
      %s423 = scalar_select %p422, %s21, 3
      %s424 = smul.addr %s423, 2
      %s425 = smul.addr %s424, 8
      %s426 = scalar_lea.vmem %s7, %s425
      %p427 = pneg %p214
      %p428 = pneg %p211
      %p429 = scmp.lt.s32.totalorder %s21, 3
      %s430 = scalar_select %p429, %s21, 3
      %s431 = smul.addr %s430, 2
      %s432 = smul.addr %s431, 4
      %s433 = scalar_lea.vmem %s8, %s432
      %p434 = pneg %p240
      %p435 = pneg %p237
      %p436 = scmp.lt.s32.totalorder %s21, 3
      %s437 = scalar_select %p436, %s21, 3
      %s438 = smul.addr %s437, 2
      %s439 = smul.addr %s438, 8
      %s440 = scalar_lea.vmem %s9, %s439
      %p441 = pneg %p266
      %p442 = pneg %p263
      %p443 = pneg %p287
      %p444 = pneg %p284
      %p445 = scmp.lt.s32.totalorder %s21, 3
      %s446 = scalar_select %p445, %s21, 3
      %s447 = smul.addr %s446, 6
      %s448 = smul.addr %s447, 4
      %s449 = scalar_lea.vmem %s2, %s448
      %p450 = scmp.lt.s32.totalorder %s21, 3
      %s451 = scalar_select %p450, %s21, 3
      %s452 = smul.addr %s451, 2
      %s453 = smul.addr %s452, 8
      %s454 = scalar_lea.vmem %s3, %s453
      %p455 = scmp.lt.s32.totalorder %s21, 3
      %s456 = scalar_select %p455, %s21, 3
      %s457 = smul.addr %s456, 3
      %s458 = smul.addr %s457, 4
      %s459 = scalar_lea.vmem %s4, %s458
      %p460 = scmp.lt.s32.totalorder %s21, 3
      %s461 = scalar_select %p460, %s21, 3
      %s462 = smul.addr %s461, 3
      %s463 = smul.addr %s462, 8
      %s464 = scalar_lea.vmem %s5, %s463
      %p465 = scmp.lt.s32.totalorder %s21, 3
      %s466 = scalar_select %p465, %s21, 3
      %s467 = smul.addr %s466, 2
      %s468 = smul.addr %s467, 4
      %s469 = scalar_lea.vmem %s6, %s468
      %p470 = scmp.lt.s32.totalorder %s21, 3
      %s471 = scalar_select %p470, %s21, 3
      %s472 = smul.addr %s471, 2
      %s473 = smul.addr %s472, 8
      %s474 = scalar_lea.vmem %s7, %s473
      %p475 = scmp.lt.s32.totalorder %s21, 3
      %s476 = scalar_select %p475, %s21, 3
      %s477 = smul.addr %s476, 2
      %s478 = smul.addr %s477, 4
      %s479 = scalar_lea.vmem %s8, %s478
      %p480 = scmp.lt.s32.totalorder %s21, 3
      %s481 = scalar_select %p480, %s21, 3
      %s482 = smul.addr %s481, 2
      %s483 = smul.addr %s482, 8
      %s484 = scalar_lea.vmem %s9, %s483
      %s486 = sshll.u32 1, %s21
      %s487 = sshra.s32 %s486, 1
      %p488 = scmp.eq.s32.totalorder %s21, 0
      // Predicated region
      $region61: #{model_forward.10} parent=59 // pred_check
        %p489 = pneg %p488
      $region62: #{model_forward.10} parent=59 // pred_check_branch
        %491 = sbr.rel (%p489) target = $region64
      $region63: #{model_forward.10} parent=59 // pred_region
        %v492 = vld [vmem:[%s0] sm:$0xff]
        %v493 = vld [vmem:[%s0 + $0x8] sm:$0xff]
        %494 = vst [vmem:[#allocation2] sm:$0xff] %v492
        %495 = vst [vmem:[#allocation2 + $0x8] sm:$0xff] %v493
      $region64: #{model_forward.10} parent=59 // pred_fallthru
        _
      %v496 = vld [vmem:[#allocation2] sm:$0xff]
      %v497 = vld [vmem:[#allocation2 + $0x8] sm:$0xff]
      %v498 = vld [vmem:[%s1] sm:$0x1]
      %v499 = vlaneseq
      %v500 = vand.u32 %v499, 127
      %vm501 = vcmp.lt.s32.totalorder %v500, 44
      %v502 = vsel %vm501, 1, 0
      %v503 = vcvt.s32.f32 %v502
      %v504 = vld [vmem:[%s449] sm:$0xf]
      %v505 = vld [vmem:[%s449 + $0x4] sm:$0xf]
      %v506 = vld [vmem:[%s449 + $0x8] sm:$0xf]
      %v507 = vld [vmem:[%s449 + $0xc] sm:$0xf]
      %v508 = vld [vmem:[%s449 + $0x10] sm:$0xf]
      %v509 = vld [vmem:[%s449 + $0x14] sm:$0xf]
      %v510 = vpack.c.bf16 %v497, %v496
      %v517 = vunpack.c.l.b16 %v504
      %v518 = vunpack.c.l.b16 %v505
      %v519 = vunpack.c.l.b16 %v506
      %v520 = vunpack.c.l.b16 %v507
      %v521 = vunpack.c.l.b16 %v508
      %v522 = vunpack.c.l.b16 %v509
      %v523 = vpack.c.b16 %v518, %v517
      %v524 = vpack.c.b16 %v520, %v519
      %v525 = vpack.c.b16 %v522, %v521
      %vm526 = vcmask 130048
      %v528 = vsel %vm526, %v523, 0
      %v531 = vsel %vm526, %v524, 0
      %v534 = vsel %vm526, %v525, 0
      %536 = vmatprep.subr.bf16.mxu0 0
      %537 = vmatpush1.bf16.msra.mxu0 %v510
      %538 = vmatprep.subr.bf16.mxu0 0
      %539 = vmatpush1.bf16.msra.mxu0 0
      %540 = vmatprep.subr.bf16.mxu0 0
      %541 = vmatpush1.bf16.msra.mxu0 0
      %542 = vmatprep.subr.bf16.mxu0 0
      %543 = vmatpush1.bf16.msra.mxu0 0
      %544 = vmatprep.subr.bf16.mxu0 0
      %545 = vmatpush1.bf16.msra.mxu0 0
      %546 = vmatprep.subr.bf16.mxu0 0
      %547 = vmatpush1.bf16.msra.mxu0 0
      %548 = vmatprep.subr.bf16.mxu0 0
      %549 = vmatpush1.bf16.msra.mxu0 0
      %550 = vmatprep.subr.bf16.mxu0 0
      %551 = vmatpush1.bf16.msra.mxu0 0
      %552 = vmatprep.subr.bf16.mxu0 0
      %553 = vmatpush1.bf16.msra.mxu0 0
      %554 = vmatprep.subr.bf16.mxu0 0
      %555 = vmatpush1.bf16.msra.mxu0 0
      %556 = vmatprep.subr.bf16.mxu0 0
      %557 = vmatpush1.bf16.msra.mxu0 0
      %558 = vmatprep.subr.bf16.mxu0 0
      %559 = vmatpush1.bf16.msra.mxu0 0
      %560 = vmatprep.subr.bf16.mxu0 0
      %561 = vmatpush1.bf16.msra.mxu0 0
      %562 = vmatprep.subr.bf16.mxu0 0
      %563 = vmatpush1.bf16.msra.mxu0 0
      %564 = vmatprep.subr.bf16.mxu0 0
      %565 = vmatpush1.bf16.msra.mxu0 0
      %566 = vmatprep.subr.bf16.mxu0 0
      %567 = vmatpush1.bf16.msra.mxu0 0
      %568 = vmatprep.mubr.bf16.mxu0 0
      %569 = vmatmul.mubr.bf16.gmra.mrb[0].mxu0 %v528
      %v570 = vpop.f32.mrb[0].mxu0
      %v571 = vadd.f32 0.0, %v570
      %v572 = vpop.f32.mrb[0].mxu0
      %v573 = vpop.f32.mrb[0].mxu0
      %v574 = vadd.f32 0.0, %v573
      %v575 = vpop.f32.mrb[0].mxu0
      %576 = vmatprep.mubr.bf16.mxu0 0
      %577 = vmatmul.mubr.bf16.gmra.mrb[0].mxu0 %v531
      %v578 = vpop.f32.mrb[0].mxu0
      %v579 = vadd.f32 0.0, %v578
      %v580 = vpop.f32.mrb[0].mxu0
      %v581 = vpop.f32.mrb[0].mxu0
      %v582 = vadd.f32 0.0, %v581
      %v583 = vpop.f32.mrb[0].mxu0
      %584 = vmatprep.mubr.bf16.mxu0 0
      %585 = vmatmul.mubr.bf16.gmra.mrb[0].mxu0 %v534
      %v586 = vpop.f32.mrb[0].mxu0
      %v587 = vadd.f32 0.0, %v586
      %v588 = vpop.f32.mrb[0].mxu0
      %v589 = vpop.f32.mrb[0].mxu0
      %v590 = vadd.f32 0.0, %v589
      %v591 = vpop.f32.mrb[0].mxu0
      %592 = vdwg.mxu0
      %s593 = sand.u32 %s486, 127
      %s594 = sand.u32 %s593, 127
      %595 = vrot.lane.b32.xlu0 %v571, %s594
      %v596 = vpop.permute.xlu0 %595
      %597 = vrot.lane.b32.xlu0 %v574, %s594
      %v598 = vpop.permute.xlu0 %597
      %v599 = vstv %s486
      %vm600 = vcmp.ge.s32.totalorder %v500, %v599
      %v601 = vsel %vm600, 1, 0
      %vm602 = vcmp.eq.s32.totalorder %v601, 1
      %v603 = vsel %vm602, %v596, 0.0
      %v604 = vsel %vm602, %v598, 0.0
      %s605 = ssub.s32 128, %s486
      %s606 = sand.u32 %s605, 127
      %s607 = sand.u32 %s606, 127
      %608 = vrot.lane.b32.xlu0 %v587, %s607
      %v609 = vpop.permute.xlu0 %608
      %610 = vrot.lane.b32.xlu0 %v590, %s607
      %v611 = vpop.permute.xlu0 %610
      %v612 = vstv %s605
      %vm613 = vcmp.lt.s32.totalorder %v500, %v612
      %v614 = vsel %vm613, 1, 0
      %vm615 = vcmp.eq.s32.totalorder %v614, 1
      %v616 = vsel %vm615, %v609, 0.0
      %v617 = vsel %vm615, %v611, 0.0
      %v618 = vadd.f32 %v579, %v603
      %v619 = vadd.f32 %v582, %v604
      %v620 = vadd.f32 %v618, %v616
      %v621 = vadd.f32 %v619, %v617
      %v622 = vld [vmem:[%s454] sm:$0xff]
      %v623 = vld [vmem:[%s454 + $0x8] sm:$0xff]
      %625 = vset.pattern.permute.xlu0 0
      %626 = vperm.xlu0 %625, %v622
      %v627 = vpop.permute.xlu0 %626
      %630 = vset.pattern.permute.xlu0 0
      %631 = vperm.xlu0 %630, %v623
      %v632 = vpop.permute.xlu0 %631
      %v634 = vadd.f32 %v620, %v627
      %v635 = vadd.f32 %v621, %v632
      %v636 = vmax.f32 %v634, 0.0
      %v637 = vmax.f32 %v635, 0.0
      %v638 = vmul.f32 %v636, %v503
      %v639 = vmul.f32 %v637, %v503
      %640 = vadd.xlane.f32.xlu0 %v638
      %v641 = vpop.xlane.xlu0 %640
      %642 = vadd.xlane.f32.xlu0 %v639
      %v643 = vpop.xlane.xlu0 %642
      %v644 = vmul.f32 %v641, 0.022727273
      %v645 = vmul.f32 %v643, 0.022727273
      %v646 = vsub.f32 %v636, %v644
      %v647 = vsub.f32 %v637, %v645
      %v648 = vmul.f32 %v646, %v646
      %v649 = vmul.f32 %v647, %v647
      %v650 = vmul.f32 %v648, %v503
      %v651 = vmul.f32 %v649, %v503
      %652 = vadd.xlane.f32.xlu0 %v650
      %v653 = vpop.xlane.xlu0 %652
      %654 = vadd.xlane.f32.xlu0 %v651
      %v655 = vpop.xlane.xlu0 %654
      %v656 = vmul.f32 %v653, 0.022727273
      %v657 = vmul.f32 %v655, 0.022727273
      %v658 = vadd.f32 %v656, 1e-05
      %v659 = vadd.f32 %v657, 1e-05
      %v660 = vrsqrt.pop %v658
      %v661 = vrsqrt.pop %v659
      %v662 = vmul.f32 %v646, %v660
      %v663 = vmul.f32 %v647, %v661
      %v664 = vpack.c.bf16 %v663, %v662
      %v665 = vld [vmem:[%s459] sm:$0xf]
      %v666 = vld [vmem:[%s459 + $0x4] sm:$0xf]
      %v667 = vld [vmem:[%s459 + $0x8] sm:$0xf]
      %v668 = vld [vmem:[%s464] sm:$0xff]
      %v669 = vld [vmem:[%s464 + $0x8] sm:$0xff]
      %v670 = vld [vmem:[%s464 + $0x10] sm:$0xff]
      %672 = vset.pattern.permute.xlu0 0
      %673 = vperm.xlu0 %672, %v668
      %v674 = vpop.permute.xlu0 %673
      %677 = vset.pattern.permute.xlu0 0
      %678 = vperm.xlu0 %677, %v669
      %v679 = vpop.permute.xlu0 %678
      %682 = vset.pattern.permute.xlu0 0
      %683 = vperm.xlu0 %682, %v670
      %v684 = vpop.permute.xlu0 %683
      %v689 = vunpack.c.l.b16 %v665
      %v690 = vunpack.c.l.b16 %v666
      %v691 = vunpack.c.l.b16 %v667
      %v692 = vpack.c.b16 %v690, %v689
      %v693 = vpack.c.b16 %v691, %v691
      %v695 = vsel %vm526, %v692, 0
      %v698 = vsel %vm526, %v693, 0
      %700 = vmatprep.subr.bf16.mxu0 0
      %701 = vmatpush1.bf16.msra.mxu0 %v664
      %702 = vmatprep.subr.bf16.mxu0 0
      %703 = vmatpush1.bf16.msra.mxu0 0
      %704 = vmatprep.subr.bf16.mxu0 0
      %705 = vmatpush1.bf16.msra.mxu0 0
      %706 = vmatprep.subr.bf16.mxu0 0
      %707 = vmatpush1.bf16.msra.mxu0 0
      %708 = vmatprep.subr.bf16.mxu0 0
      %709 = vmatpush1.bf16.msra.mxu0 0
      %710 = vmatprep.subr.bf16.mxu0 0
      %711 = vmatpush1.bf16.msra.mxu0 0
      %712 = vmatprep.subr.bf16.mxu0 0
      %713 = vmatpush1.bf16.msra.mxu0 0
      %714 = vmatprep.subr.bf16.mxu0 0
      %715 = vmatpush1.bf16.msra.mxu0 0
      %716 = vmatprep.subr.bf16.mxu0 0
      %717 = vmatpush1.bf16.msra.mxu0 0
      %718 = vmatprep.subr.bf16.mxu0 0
      %719 = vmatpush1.bf16.msra.mxu0 0
      %720 = vmatprep.subr.bf16.mxu0 0
      %721 = vmatpush1.bf16.msra.mxu0 0
      %722 = vmatprep.subr.bf16.mxu0 0
      %723 = vmatpush1.bf16.msra.mxu0 0
      %724 = vmatprep.subr.bf16.mxu0 0
      %725 = vmatpush1.bf16.msra.mxu0 0
      %726 = vmatprep.subr.bf16.mxu0 0
      %727 = vmatpush1.bf16.msra.mxu0 0
      %728 = vmatprep.subr.bf16.mxu0 0
      %729 = vmatpush1.bf16.msra.mxu0 0
      %730 = vmatprep.subr.bf16.mxu0 0
      %731 = vmatpush1.bf16.msra.mxu0 0
      %732 = vmatprep.mubr.bf16.mxu0 0
      %733 = vmatmul.mubr.bf16.gmra.mrb[0].mxu0 %v695
      %v734 = vpop.f32.mrb[0].mxu0
      %v735 = vadd.f32 %v674, %v734
      %v736 = vpop.f32.mrb[0].mxu0
      %v737 = vpop.f32.mrb[0].mxu0
      %v738 = vadd.f32 %v679, %v737
      %v739 = vpop.f32.mrb[0].mxu0
      %740 = vmatprep.mubr.bf16.mxu0 0
      %741 = vmatmul.mubr.bf16.gmra.mrb[0].mxu0 %v698
      %v742 = vpop.f32.mrb[0].mxu0
      %v743 = vadd.f32 %v684, %v742
      %v744 = vpop.f32.mrb[0].mxu0
      %v745 = vpop.f32.mrb[0].mxu0
      %v746 = vpop.f32.mrb[0].mxu0
      %747 = vdwg.mxu0
      %v748 = vmul.f32 %v738, %v503
      %v749 = vmul.f32 %v743, %v503
      %v750 = vlaneseq
      %v751 = vshrl.u32 %v750, 7
      %v752 = vadd.s32 %v751, 8
      %v753 = vadd.s32 %v751, 16
      %v754 = vadd.s32 %v751, 24
      %v755 = vadd.s32 %v751, 32
      %v756 = vadd.s32 %v751, 40
      %v757 = vadd.s32 %v751, 48
      %v758 = vadd.s32 %v751, 56
      %v759 = vadd.s32 %v751, 64
      %v760 = vadd.s32 %v751, 72
      %v761 = vadd.s32 %v751, 80
      %v762 = vadd.s32 %v751, 88
      %v763 = vadd.s32 %v751, 96
      %v764 = vadd.s32 %v751, 104
      %v765 = vadd.s32 %v751, 112
      %v766 = vadd.s32 %v751, 120
      %v767 = vpack.c.bf16 %v735, %v735
      %v768 = vpack.c.bf16 %v748, %v748
      %s769 = ssub.s32 %s486, 1
      %v770 = vstv %s769
      %v771 = vand.u32 %v751, %v770
      %v772 = vand.u32 %v752, %v770
      %v773 = vand.u32 %v753, %v770
      %v774 = vand.u32 %v754, %v770
      %v775 = vand.u32 %v755, %v770
      %v776 = vand.u32 %v756, %v770
      %v777 = vand.u32 %v757, %v770
      %v778 = vand.u32 %v758, %v770
      %v779 = vand.u32 %v759, %v770
      %v780 = vand.u32 %v760, %v770
      %v781 = vand.u32 %v761, %v770
      %v782 = vand.u32 %v762, %v770
      %v783 = vand.u32 %v763, %v770
      %v784 = vand.u32 %v764, %v770
      %v785 = vand.u32 %v765, %v770
      %v786 = vand.u32 %v766, %v770
      %v787 = vsub.s32 %v751, %v771
      %v788 = vsub.s32 %v752, %v772
      %v789 = vsub.s32 %v753, %v773
      %v790 = vsub.s32 %v754, %v774
      %v791 = vsub.s32 %v755, %v775
      %v792 = vsub.s32 %v756, %v776
      %v793 = vsub.s32 %v757, %v777
      %v794 = vsub.s32 %v758, %v778
      %v795 = vsub.s32 %v759, %v779
      %v796 = vsub.s32 %v760, %v780
      %v797 = vsub.s32 %v761, %v781
      %v798 = vsub.s32 %v762, %v782
      %v799 = vsub.s32 %v763, %v783
      %v800 = vsub.s32 %v764, %v784
      %v801 = vsub.s32 %v765, %v785
      %v802 = vsub.s32 %v766, %v786
      %v803 = vstv %s487
      %v804 = vsub.s32 %v787, %v803
      %v805 = vsub.s32 %v788, %v803
      %v806 = vsub.s32 %v789, %v803
      %v807 = vsub.s32 %v790, %v803
      %v808 = vsub.s32 %v791, %v803
      %v809 = vsub.s32 %v792, %v803
      %v810 = vsub.s32 %v793, %v803
      %v811 = vsub.s32 %v794, %v803
      %v812 = vsub.s32 %v795, %v803
      %v813 = vsub.s32 %v796, %v803
      %v814 = vsub.s32 %v797, %v803
      %v815 = vsub.s32 %v798, %v803
      %v816 = vsub.s32 %v799, %v803
      %v817 = vsub.s32 %v800, %v803
      %v818 = vsub.s32 %v801, %v803
      %v819 = vsub.s32 %v802, %v803
      %vm820 = vcmp.ge.s32.totalorder %v500, %v804
      %vm821 = vcmp.ge.s32.totalorder %v500, %v805
      %vm822 = vcmp.ge.s32.totalorder %v500, %v806
      %vm823 = vcmp.ge.s32.totalorder %v500, %v807
      %vm824 = vcmp.ge.s32.totalorder %v500, %v808
      %vm825 = vcmp.ge.s32.totalorder %v500, %v809
      %vm826 = vcmp.ge.s32.totalorder %v500, %v810
      %vm827 = vcmp.ge.s32.totalorder %v500, %v811
      %vm828 = vcmp.ge.s32.totalorder %v500, %v812
      %vm829 = vcmp.ge.s32.totalorder %v500, %v813
      %vm830 = vcmp.ge.s32.totalorder %v500, %v814
      %vm831 = vcmp.ge.s32.totalorder %v500, %v815
      %vm832 = vcmp.ge.s32.totalorder %v500, %v816
      %vm833 = vcmp.ge.s32.totalorder %v500, %v817
      %vm834 = vcmp.ge.s32.totalorder %v500, %v818
      %vm835 = vcmp.ge.s32.totalorder %v500, %v819
      %v836 = vadd.s32 %v787, %v599
      %v837 = vadd.s32 %v788, %v599
      %v838 = vadd.s32 %v789, %v599
      %v839 = vadd.s32 %v790, %v599
      %v840 = vadd.s32 %v791, %v599
      %v841 = vadd.s32 %v792, %v599
      %v842 = vadd.s32 %v793, %v599
      %v843 = vadd.s32 %v794, %v599
      %v844 = vadd.s32 %v795, %v599
      %v845 = vadd.s32 %v796, %v599
      %v846 = vadd.s32 %v797, %v599
      %v847 = vadd.s32 %v798, %v599
      %v848 = vadd.s32 %v799, %v599
      %v849 = vadd.s32 %v800, %v599
      %v850 = vadd.s32 %v801, %v599
      %v851 = vadd.s32 %v802, %v599
      %v852 = vadd.s32 %v836, %v803
      %v853 = vadd.s32 %v837, %v803
      %v854 = vadd.s32 %v838, %v803
      %v855 = vadd.s32 %v839, %v803
      %v856 = vadd.s32 %v840, %v803
      %v857 = vadd.s32 %v841, %v803
      %v858 = vadd.s32 %v842, %v803
      %v859 = vadd.s32 %v843, %v803
      %v860 = vadd.s32 %v844, %v803
      %v861 = vadd.s32 %v845, %v803
      %v862 = vadd.s32 %v846, %v803
      %v863 = vadd.s32 %v847, %v803
      %v864 = vadd.s32 %v848, %v803
      %v865 = vadd.s32 %v849, %v803
      %v866 = vadd.s32 %v850, %v803
      %v867 = vadd.s32 %v851, %v803
      %vm868 = vcmp.lt.s32.totalorder %v500, %v852
      %vm869 = vcmp.lt.s32.totalorder %v500, %v853
      %vm870 = vcmp.lt.s32.totalorder %v500, %v854
      %vm871 = vcmp.lt.s32.totalorder %v500, %v855
      %vm872 = vcmp.lt.s32.totalorder %v500, %v856
      %vm873 = vcmp.lt.s32.totalorder %v500, %v857
      %vm874 = vcmp.lt.s32.totalorder %v500, %v858
      %vm875 = vcmp.lt.s32.totalorder %v500, %v859
      %vm876 = vcmp.lt.s32.totalorder %v500, %v860
      %vm877 = vcmp.lt.s32.totalorder %v500, %v861
      %vm878 = vcmp.lt.s32.totalorder %v500, %v862
      %vm879 = vcmp.lt.s32.totalorder %v500, %v863
      %vm880 = vcmp.lt.s32.totalorder %v500, %v864
      %vm881 = vcmp.lt.s32.totalorder %v500, %v865
      %vm882 = vcmp.lt.s32.totalorder %v500, %v866
      %vm883 = vcmp.lt.s32.totalorder %v500, %v867
      %vm884 = vmand %vm820, %vm868
      %vm885 = vmand %vm821, %vm869
      %vm886 = vmand %vm822, %vm870
      %vm887 = vmand %vm823, %vm871
      %vm888 = vmand %vm824, %vm872
      %vm889 = vmand %vm825, %vm873
      %vm890 = vmand %vm826, %vm874
      %vm891 = vmand %vm827, %vm875
      %vm892 = vmand %vm828, %vm876
      %vm893 = vmand %vm829, %vm877
      %vm894 = vmand %vm830, %vm878
      %vm895 = vmand %vm831, %vm879
      %vm896 = vmand %vm832, %vm880
      %vm897 = vmand %vm833, %vm881
      %vm898 = vmand %vm834, %vm882
      %vm899 = vmand %vm835, %vm883
      %v900 = vsub.s32 %v751, %v803
      %v901 = vsub.s32 %v752, %v803
      %v902 = vsub.s32 %v753, %v803
      %v903 = vsub.s32 %v754, %v803
      %v904 = vsub.s32 %v755, %v803
      %v905 = vsub.s32 %v756, %v803
      %v906 = vsub.s32 %v757, %v803
      %v907 = vsub.s32 %v758, %v803
      %v908 = vsub.s32 %v759, %v803
      %v909 = vsub.s32 %v760, %v803
      %v910 = vsub.s32 %v761, %v803
      %v911 = vsub.s32 %v762, %v803
      %v912 = vsub.s32 %v763, %v803
      %v913 = vsub.s32 %v764, %v803
      %v914 = vsub.s32 %v765, %v803
      %v915 = vsub.s32 %v766, %v803
      %vm916 = vcmp.ge.s32.totalorder %v500, %v900
      %vm917 = vcmp.ge.s32.totalorder %v500, %v901
      %vm918 = vcmp.ge.s32.totalorder %v500, %v902
      %vm919 = vcmp.ge.s32.totalorder %v500, %v903
      %vm920 = vcmp.ge.s32.totalorder %v500, %v904
      %vm921 = vcmp.ge.s32.totalorder %v500, %v905
      %vm922 = vcmp.ge.s32.totalorder %v500, %v906
      %vm923 = vcmp.ge.s32.totalorder %v500, %v907
      %vm924 = vcmp.ge.s32.totalorder %v500, %v908
      %vm925 = vcmp.ge.s32.totalorder %v500, %v909
      %vm926 = vcmp.ge.s32.totalorder %v500, %v910
      %vm927 = vcmp.ge.s32.totalorder %v500, %v911
      %vm928 = vcmp.ge.s32.totalorder %v500, %v912
      %vm929 = vcmp.ge.s32.totalorder %v500, %v913
      %vm930 = vcmp.ge.s32.totalorder %v500, %v914
      %vm931 = vcmp.ge.s32.totalorder %v500, %v915
      %v932 = vadd.s32 %v751, %v599
      %v933 = vadd.s32 %v752, %v599
      %v934 = vadd.s32 %v753, %v599
      %v935 = vadd.s32 %v754, %v599
      %v936 = vadd.s32 %v755, %v599
      %v937 = vadd.s32 %v756, %v599
      %v938 = vadd.s32 %v757, %v599
      %v939 = vadd.s32 %v758, %v599
      %v940 = vadd.s32 %v759, %v599
      %v941 = vadd.s32 %v760, %v599
      %v942 = vadd.s32 %v761, %v599
      %v943 = vadd.s32 %v762, %v599
      %v944 = vadd.s32 %v763, %v599
      %v945 = vadd.s32 %v764, %v599
      %v946 = vadd.s32 %v765, %v599
      %v947 = vadd.s32 %v766, %v599
      %v948 = vsub.s32 %v932, %v803
      %v949 = vsub.s32 %v933, %v803
      %v950 = vsub.s32 %v934, %v803
      %v951 = vsub.s32 %v935, %v803
      %v952 = vsub.s32 %v936, %v803
      %v953 = vsub.s32 %v937, %v803
      %v954 = vsub.s32 %v938, %v803
      %v955 = vsub.s32 %v939, %v803
      %v956 = vsub.s32 %v940, %v803
      %v957 = vsub.s32 %v941, %v803
      %v958 = vsub.s32 %v942, %v803
      %v959 = vsub.s32 %v943, %v803
      %v960 = vsub.s32 %v944, %v803
      %v961 = vsub.s32 %v945, %v803
      %v962 = vsub.s32 %v946, %v803
      %v963 = vsub.s32 %v947, %v803
      %vm964 = vcmp.lt.s32.totalorder %v500, %v948
      %vm965 = vcmp.lt.s32.totalorder %v500, %v949
      %vm966 = vcmp.lt.s32.totalorder %v500, %v950
      %vm967 = vcmp.lt.s32.totalorder %v500, %v951
      %vm968 = vcmp.lt.s32.totalorder %v500, %v952
      %vm969 = vcmp.lt.s32.totalorder %v500, %v953
      %vm970 = vcmp.lt.s32.totalorder %v500, %v954
      %vm971 = vcmp.lt.s32.totalorder %v500, %v955
      %vm972 = vcmp.lt.s32.totalorder %v500, %v956
      %vm973 = vcmp.lt.s32.totalorder %v500, %v957
      %vm974 = vcmp.lt.s32.totalorder %v500, %v958
      %vm975 = vcmp.lt.s32.totalorder %v500, %v959
      %vm976 = vcmp.lt.s32.totalorder %v500, %v960
      %vm977 = vcmp.lt.s32.totalorder %v500, %v961
      %vm978 = vcmp.lt.s32.totalorder %v500, %v962
      %vm979 = vcmp.lt.s32.totalorder %v500, %v963
      %vm980 = vmand %vm916, %vm964
      %vm981 = vmand %vm917, %vm965
      %vm982 = vmand %vm918, %vm966
      %vm983 = vmand %vm919, %vm967
      %vm984 = vmand %vm920, %vm968
      %vm985 = vmand %vm921, %vm969
      %vm986 = vmand %vm922, %vm970
      %vm987 = vmand %vm923, %vm971
      %vm988 = vmand %vm924, %vm972
      %vm989 = vmand %vm925, %vm973
      %vm990 = vmand %vm926, %vm974
      %vm991 = vmand %vm927, %vm975
      %vm992 = vmand %vm928, %vm976
      %vm993 = vmand %vm929, %vm977
      %vm994 = vmand %vm930, %vm978
      %vm995 = vmand %vm931, %vm979
      %vm996 = vcmp.gt.f32.partialorder %v498, 0.0
      %v997 = vsel %vm996, 1, 0
      %v998 = vlaneseq
      %v999 = vshrl.u32 %v998, 7
      %v1000 = vsub.s32 0, %v999
      %v1001 = vrot.slane %v997, %v1000
      %vm1002 = vcmp.eq.s32.totalorder %v1001, 1
      %vm1003 = vmand %vm980, %vm1002
      %vm1004 = vmand %vm981, %vm1002
      %vm1005 = vmand %vm982, %vm1002
      %vm1006 = vmand %vm983, %vm1002
      %vm1007 = vmand %vm984, %vm1002
      %vm1008 = vmand %vm985, %vm1002
      %vm1009 = vmand %vm986, %vm1002
      %vm1010 = vmand %vm987, %vm1002
      %vm1011 = vmand %vm988, %vm1002
      %vm1012 = vmand %vm989, %vm1002
      %vm1013 = vmand %vm990, %vm1002
      %vm1014 = vmand %vm991, %vm1002
      %vm1015 = vmand %vm992, %vm1002
      %vm1016 = vmand %vm993, %vm1002
      %vm1017 = vmand %vm994, %vm1002
      %vm1018 = vmand %vm995, %vm1002
      %v1019 = vsel %vm1003, 9.999995e-07, -13.815511
      %v1020 = vsel %vm1004, 9.999995e-07, -13.815511
      %v1021 = vsel %vm1005, 9.999995e-07, -13.815511
      %v1022 = vsel %vm1006, 9.999995e-07, -13.815511
      %v1023 = vsel %vm1007, 9.999995e-07, -13.815511
      %v1024 = vsel %vm1008, 9.999995e-07, -13.815511
      %v1025 = vsel %vm1009, 9.999995e-07, -13.815511
      %v1026 = vsel %vm1010, 9.999995e-07, -13.815511
      %v1027 = vsel %vm1011, 9.999995e-07, -13.815511
      %v1028 = vsel %vm1012, 9.999995e-07, -13.815511
      %v1029 = vsel %vm1013, 9.999995e-07, -13.815511
      %v1030 = vsel %vm1014, 9.999995e-07, -13.815511
      %v1031 = vsel %vm1015, 9.999995e-07, -13.815511
      %v1032 = vsel %vm1016, 9.999995e-07, -13.815511
      %v1033 = vsel %vm1017, 9.999995e-07, -13.815511
      %v1034 = vsel %vm1018, 9.999995e-07, -13.815511
      %1035 = vxpose.xlu0.c.b16.start [1/8] %v767, 128
      %1036 = vxpose.xlu0.c.b16.cont [2/8] 0, 128
      %1037 = vxpose.xlu0.c.b16.cont [3/8] 0, 128
      %1038 = vxpose.xlu0.c.b16.cont [4/8] 0, 128
      %1039 = vxpose.xlu0.c.b16.cont [5/8] 0, 128
      %1040 = vxpose.xlu0.c.b16.cont [6/8] 0, 128
      %1041 = vxpose.xlu0.c.b16.cont [7/8] 0, 128
      %1042 = vxpose.xlu0.c.b16.end [8/8] 0, 128
      %v1043 = vpop.trf.xlu0
      %v1044 = vpop.trf.xlu0
      %v1045 = vpop.trf.xlu0
      %v1046 = vpop.trf.xlu0
      %v1047 = vpop.trf.xlu0
      %v1048 = vpop.trf.xlu0
      %v1049 = vpop.trf.xlu0
      %v1050 = vpop.trf.xlu0
      %vm1051 = vcmask 64512
      %v1053 = vsel %vm1051, %v1043, 0
      %v1056 = vsel %vm1051, %v1044, 0
      %v1059 = vsel %vm1051, %v1045, 0
      %v1062 = vsel %vm1051, %v1046, 0
      %v1065 = vsel %vm1051, %v1047, 0
      %v1068 = vsel %vm1051, %v1048, 0
      %v1071 = vsel %vm1051, %v1049, 0
      %v1074 = vsel %vm1051, %v1050, 0
      %vm1076 = vcmask 1043456
      %v1078 = vsel %vm1076, %v768, 0
      %1080 = vmatprep.subr.bf16.mxu0 0
      %1081 = vmatpush1.bf16.msra.mxu0 %v1078
      %1082 = vmatprep.subr.bf16.mxu0 0
      %1083 = vmatpush1.bf16.msra.mxu0 0
      %1084 = vmatprep.subr.bf16.mxu0 0
      %1085 = vmatpush1.bf16.msra.mxu0 0
      %1086 = vmatprep.subr.bf16.mxu0 0
      %1087 = vmatpush1.bf16.msra.mxu0 0
      %1088 = vmatprep.subr.bf16.mxu0 0
      %1089 = vmatpush1.bf16.msra.mxu0 0
      %1090 = vmatprep.subr.bf16.mxu0 0
      %1091 = vmatpush1.bf16.msra.mxu0 0
      %1092 = vmatprep.subr.bf16.mxu0 0
      %1093 = vmatpush1.bf16.msra.mxu0 0
      %1094 = vmatprep.subr.bf16.mxu0 0
      %1095 = vmatpush1.bf16.msra.mxu0 0
      %1096 = vmatprep.subr.bf16.mxu0 0
      %1097 = vmatpush1.bf16.msra.mxu0 0
      %1098 = vmatprep.subr.bf16.mxu0 0
      %1099 = vmatpush1.bf16.msra.mxu0 0
      %1100 = vmatprep.subr.bf16.mxu0 0
      %1101 = vmatpush1.bf16.msra.mxu0 0
      %1102 = vmatprep.subr.bf16.mxu0 0
      %1103 = vmatpush1.bf16.msra.mxu0 0
      %1104 = vmatprep.subr.bf16.mxu0 0
      %1105 = vmatpush1.bf16.msra.mxu0 0
      %1106 = vmatprep.subr.bf16.mxu0 0
      %1107 = vmatpush1.bf16.msra.mxu0 0
      %1108 = vmatprep.subr.bf16.mxu0 0
      %1109 = vmatpush1.bf16.msra.mxu0 0
      %1110 = vmatprep.subr.bf16.mxu0 0
      %1111 = vmatpush1.bf16.msra.mxu0 0
      %1112 = vmatprep.mubr.bf16.mxu0 0
      %1113 = vmatmul.mubr.bf16.gmra.mrb[0].mxu0 %v1053
      %v1114 = vpop.f32.mrb[0].mxu0
      %v1115 = vadd.f32 %v1019, %v1114
      %v1116 = vpop.f32.mrb[0].mxu0
      %v1117 = vpop.f32.mrb[0].mxu0
      %v1118 = vadd.f32 %v1020, %v1117
      %v1119 = vpop.f32.mrb[0].mxu0
      %1120 = vmatprep.mubr.bf16.mxu0 0
      %1121 = vmatmul.mubr.bf16.gmra.mrb[0].mxu0 %v1056
      %v1122 = vpop.f32.mrb[0].mxu0
      %v1123 = vadd.f32 %v1021, %v1122
      %v1124 = vpop.f32.mrb[0].mxu0
      %v1125 = vpop.f32.mrb[0].mxu0
      %v1126 = vadd.f32 %v1022, %v1125
      %v1127 = vpop.f32.mrb[0].mxu0
      %1128 = vmatprep.mubr.bf16.mxu0 0
      %1129 = vmatmul.mubr.bf16.gmra.mrb[0].mxu0 %v1059
      %v1130 = vpop.f32.mrb[0].mxu0
      %v1131 = vadd.f32 %v1023, %v1130
      %v1132 = vpop.f32.mrb[0].mxu0
      %v1133 = vpop.f32.mrb[0].mxu0
      %v1134 = vadd.f32 %v1024, %v1133
      %v1135 = vpop.f32.mrb[0].mxu0
      %1136 = vmatprep.mubr.bf16.mxu0 0
      %1137 = vmatmul.mubr.bf16.gmra.mrb[0].mxu0 %v1062
      %v1138 = vpop.f32.mrb[0].mxu0
      %v1139 = vadd.f32 %v1025, %v1138
      %v1140 = vpop.f32.mrb[0].mxu0
      %v1141 = vpop.f32.mrb[0].mxu0
      %v1142 = vadd.f32 %v1026, %v1141
      %v1143 = vpop.f32.mrb[0].mxu0
      %1144 = vmatprep.mubr.bf16.mxu0 0
      %1145 = vmatmul.mubr.bf16.gmra.mrb[0].mxu0 %v1065
      %v1146 = vpop.f32.mrb[0].mxu0
      %v1147 = vadd.f32 %v1027, %v1146
      %v1148 = vpop.f32.mrb[0].mxu0
      %v1149 = vpop.f32.mrb[0].mxu0
      %v1150 = vadd.f32 %v1028, %v1149
      %v1151 = vpop.f32.mrb[0].mxu0
      %1152 = vmatprep.mubr.bf16.mxu0 0
      %1153 = vmatmul.mubr.bf16.gmra.mrb[0].mxu0 %v1068
      %v1154 = vpop.f32.mrb[0].mxu0
      %v1155 = vadd.f32 %v1029, %v1154
      %v1156 = vpop.f32.mrb[0].mxu0
      %v1157 = vpop.f32.mrb[0].mxu0
      %v1158 = vadd.f32 %v1030, %v1157
      %v1159 = vpop.f32.mrb[0].mxu0
      %1160 = vmatprep.mubr.bf16.mxu0 0
      %1161 = vmatmul.mubr.bf16.gmra.mrb[0].mxu0 %v1071
      %v1162 = vpop.f32.mrb[0].mxu0
      %v1163 = vadd.f32 %v1031, %v1162
      %v1164 = vpop.f32.mrb[0].mxu0
      %v1165 = vpop.f32.mrb[0].mxu0
      %v1166 = vadd.f32 %v1032, %v1165
      %v1167 = vpop.f32.mrb[0].mxu0
      %1168 = vmatprep.mubr.bf16.mxu0 0
      %1169 = vmatmul.mubr.bf16.gmra.mrb[0].mxu0 %v1074
      %v1170 = vpop.f32.mrb[0].mxu0
      %v1171 = vadd.f32 %v1033, %v1170
      %v1172 = vpop.f32.mrb[0].mxu0
      %v1173 = vpop.f32.mrb[0].mxu0
      %v1174 = vadd.f32 %v1034, %v1173
      %v1175 = vpop.f32.mrb[0].mxu0
      %1176 = vdwg.mxu0
      %v1177 = vsel %vm884, %v1115, -1e+30
      %v1178 = vsel %vm885, %v1118, -1e+30
      %v1179 = vsel %vm886, %v1123, -1e+30
      %v1180 = vsel %vm887, %v1126, -1e+30
      %v1181 = vsel %vm888, %v1131, -1e+30
      %v1182 = vsel %vm889, %v1134, -1e+30
      %v1183 = vsel %vm890, %v1139, -1e+30
      %v1184 = vsel %vm891, %v1142, -1e+30
      %v1185 = vsel %vm892, %v1147, -1e+30
      %v1186 = vsel %vm893, %v1150, -1e+30
      %v1187 = vsel %vm894, %v1155, -1e+30
      %v1188 = vsel %vm895, %v1158, -1e+30
      %v1189 = vsel %vm896, %v1163, -1e+30
      %v1190 = vsel %vm897, %v1166, -1e+30
      %v1191 = vsel %vm898, %v1171, -1e+30
      %v1192 = vsel %vm899, %v1174, -1e+30
      %1193 = vmax.xlane.f32.xlu0 %v1177
      %v1194 = vpop.xlane.xlu0 %1193
      %1195 = vmax.xlane.f32.xlu0 %v1178
      %v1196 = vpop.xlane.xlu0 %1195
      %1197 = vmax.xlane.f32.xlu0 %v1179
      %v1198 = vpop.xlane.xlu0 %1197
      %1199 = vmax.xlane.f32.xlu0 %v1180
      %v1200 = vpop.xlane.xlu0 %1199
      %1201 = vmax.xlane.f32.xlu0 %v1181
      %v1202 = vpop.xlane.xlu0 %1201
      %1203 = vmax.xlane.f32.xlu0 %v1182
      %v1204 = vpop.xlane.xlu0 %1203
      %1205 = vmax.xlane.f32.xlu0 %v1183
      %v1206 = vpop.xlane.xlu0 %1205
      %1207 = vmax.xlane.f32.xlu0 %v1184
      %v1208 = vpop.xlane.xlu0 %1207
      %1209 = vmax.xlane.f32.xlu0 %v1185
      %v1210 = vpop.xlane.xlu0 %1209
      %1211 = vmax.xlane.f32.xlu0 %v1186
      %v1212 = vpop.xlane.xlu0 %1211
      %1213 = vmax.xlane.f32.xlu0 %v1187
      %v1214 = vpop.xlane.xlu0 %1213
      %1215 = vmax.xlane.f32.xlu0 %v1188
      %v1216 = vpop.xlane.xlu0 %1215
      %1217 = vmax.xlane.f32.xlu0 %v1189
      %v1218 = vpop.xlane.xlu0 %1217
      %1219 = vmax.xlane.f32.xlu0 %v1190
      %v1220 = vpop.xlane.xlu0 %1219
      %1221 = vmax.xlane.f32.xlu0 %v1191
      %v1222 = vpop.xlane.xlu0 %1221
      %1223 = vmax.xlane.f32.xlu0 %v1192
      %v1224 = vpop.xlane.xlu0 %1223
      %v1225 = vsub.f32 %v1177, %v1194
      %v1226 = vsub.f32 %v1178, %v1196
      %v1227 = vsub.f32 %v1179, %v1198
      %v1228 = vsub.f32 %v1180, %v1200
      %v1229 = vsub.f32 %v1181, %v1202
      %v1230 = vsub.f32 %v1182, %v1204
      %v1231 = vsub.f32 %v1183, %v1206
      %v1232 = vsub.f32 %v1184, %v1208
      %v1233 = vsub.f32 %v1185, %v1210
      %v1234 = vsub.f32 %v1186, %v1212
      %v1235 = vsub.f32 %v1187, %v1214
      %v1236 = vsub.f32 %v1188, %v1216
      %v1237 = vsub.f32 %v1189, %v1218
      %v1238 = vsub.f32 %v1190, %v1220
      %v1239 = vsub.f32 %v1191, %v1222
      %v1240 = vsub.f32 %v1192, %v1224
      %v1241 = vmul.f32 %v1225, 1.442695
      %v1242 = vpow.pop %v1241
      %v1243 = vmul.f32 %v1226, 1.442695
      %v1244 = vpow.pop %v1243
      %v1245 = vmul.f32 %v1227, 1.442695
      %v1246 = vpow.pop %v1245
      %v1247 = vmul.f32 %v1228, 1.442695
      %v1248 = vpow.pop %v1247
      %v1249 = vmul.f32 %v1229, 1.442695
      %v1250 = vpow.pop %v1249
      %v1251 = vmul.f32 %v1230, 1.442695
      %v1252 = vpow.pop %v1251
      %v1253 = vmul.f32 %v1231, 1.442695
      %v1254 = vpow.pop %v1253
      %v1255 = vmul.f32 %v1232, 1.442695
      %v1256 = vpow.pop %v1255
      %v1257 = vmul.f32 %v1233, 1.442695
      %v1258 = vpow.pop %v1257
      %v1259 = vmul.f32 %v1234, 1.442695
      %v1260 = vpow.pop %v1259
      %v1261 = vmul.f32 %v1235, 1.442695
      %v1262 = vpow.pop %v1261
      %v1263 = vmul.f32 %v1236, 1.442695
      %v1264 = vpow.pop %v1263
      %v1265 = vmul.f32 %v1237, 1.442695
      %v1266 = vpow.pop %v1265
      %v1267 = vmul.f32 %v1238, 1.442695
      %v1268 = vpow.pop %v1267
      %v1269 = vmul.f32 %v1239, 1.442695
      %v1270 = vpow.pop %v1269
      %v1271 = vmul.f32 %v1240, 1.442695
      %v1272 = vpow.pop %v1271
      %1273 = vadd.xlane.f32.xlu0 %v1242
      %v1274 = vpop.xlane.xlu0 %1273
      %1275 = vadd.xlane.f32.xlu0 %v1244
      %v1276 = vpop.xlane.xlu0 %1275
      %1277 = vadd.xlane.f32.xlu0 %v1246
      %v1278 = vpop.xlane.xlu0 %1277
      %1279 = vadd.xlane.f32.xlu0 %v1248
      %v1280 = vpop.xlane.xlu0 %1279
      %1281 = vadd.xlane.f32.xlu0 %v1250
      %v1282 = vpop.xlane.xlu0 %1281
      %1283 = vadd.xlane.f32.xlu0 %v1252
      %v1284 = vpop.xlane.xlu0 %1283
      %1285 = vadd.xlane.f32.xlu0 %v1254
      %v1286 = vpop.xlane.xlu0 %1285
      %1287 = vadd.xlane.f32.xlu0 %v1256
      %v1288 = vpop.xlane.xlu0 %1287
      %1289 = vadd.xlane.f32.xlu0 %v1258
      %v1290 = vpop.xlane.xlu0 %1289
      %1291 = vadd.xlane.f32.xlu0 %v1260
      %v1292 = vpop.xlane.xlu0 %1291
      %1293 = vadd.xlane.f32.xlu0 %v1262
      %v1294 = vpop.xlane.xlu0 %1293
      %1295 = vadd.xlane.f32.xlu0 %v1264
      %v1296 = vpop.xlane.xlu0 %1295
      %1297 = vadd.xlane.f32.xlu0 %v1266
      %v1298 = vpop.xlane.xlu0 %1297
      %1299 = vadd.xlane.f32.xlu0 %v1268
      %v1300 = vpop.xlane.xlu0 %1299
      %1301 = vadd.xlane.f32.xlu0 %v1270
      %v1302 = vpop.xlane.xlu0 %1301
      %1303 = vadd.xlane.f32.xlu0 %v1272
      %v1304 = vpop.xlane.xlu0 %1303
      %vm1305 = vcmp.lt.s32.totalorder %v751, %v599
      %vm1306 = vcmp.lt.s32.totalorder %v752, %v599
      %vm1307 = vcmp.lt.s32.totalorder %v753, %v599
      %vm1308 = vcmp.lt.s32.totalorder %v754, %v599
      %vm1309 = vcmp.lt.s32.totalorder %v755, %v599
      %vm1310 = vcmp.lt.s32.totalorder %v756, %v599
      %vm1311 = vcmp.lt.s32.totalorder %v757, %v599
      %vm1312 = vcmp.lt.s32.totalorder %v758, %v599
      %vm1313 = vcmp.lt.s32.totalorder %v759, %v599
      %vm1314 = vcmp.lt.s32.totalorder %v760, %v599
      %vm1315 = vcmp.lt.s32.totalorder %v761, %v599
      %vm1316 = vcmp.lt.s32.totalorder %v762, %v599
      %vm1317 = vcmp.lt.s32.totalorder %v763, %v599
      %vm1318 = vcmp.lt.s32.totalorder %v764, %v599
      %vm1319 = vcmp.lt.s32.totalorder %v765, %v599
      %vm1320 = vcmp.lt.s32.totalorder %v766, %v599
      %s1321 = scvt.s32.f32 %s487
      %v1322 = vstv %s1321
      %v1323 = vsel %vm1305, %v1322, 0.0
      %v1324 = vsel %vm1306, %v1322, 0.0
      %v1325 = vsel %vm1307, %v1322, 0.0
      %v1326 = vsel %vm1308, %v1322, 0.0
      %v1327 = vsel %vm1309, %v1322, 0.0
      %v1328 = vsel %vm1310, %v1322, 0.0
      %v1329 = vsel %vm1311, %v1322, 0.0
      %v1330 = vsel %vm1312, %v1322, 0.0
      %v1331 = vsel %vm1313, %v1322, 0.0
      %v1332 = vsel %vm1314, %v1322, 0.0
      %v1333 = vsel %vm1315, %v1322, 0.0
      %v1334 = vsel %vm1316, %v1322, 0.0
      %v1335 = vsel %vm1317, %v1322, 0.0
      %v1336 = vsel %vm1318, %v1322, 0.0
      %v1337 = vsel %vm1319, %v1322, 0.0
      %v1338 = vsel %vm1320, %v1322, 0.0
      %v1339 = vsub.f32 -13.815511, %v1194
      %v1340 = vsub.f32 -13.815511, %v1196
      %v1341 = vsub.f32 -13.815511, %v1198
      %v1342 = vsub.f32 -13.815511, %v1200
      %v1343 = vsub.f32 -13.815511, %v1202
      %v1344 = vsub.f32 -13.815511, %v1204
      %v1345 = vsub.f32 -13.815511, %v1206
      %v1346 = vsub.f32 -13.815511, %v1208
      %v1347 = vsub.f32 -13.815511, %v1210
      %v1348 = vsub.f32 -13.815511, %v1212
      %v1349 = vsub.f32 -13.815511, %v1214
      %v1350 = vsub.f32 -13.815511, %v1216
      %v1351 = vsub.f32 -13.815511, %v1218
      %v1352 = vsub.f32 -13.815511, %v1220
      %v1353 = vsub.f32 -13.815511, %v1222
      %v1354 = vsub.f32 -13.815511, %v1224
      %v1355 = vmul.f32 %v1339, 1.442695
      %v1356 = vpow.pop %v1355
      %v1357 = vmul.f32 %v1340, 1.442695
      %v1358 = vpow.pop %v1357
      %v1359 = vmul.f32 %v1341, 1.442695
      %v1360 = vpow.pop %v1359
      %v1361 = vmul.f32 %v1342, 1.442695
      %v1362 = vpow.pop %v1361
      %v1363 = vmul.f32 %v1343, 1.442695
      %v1364 = vpow.pop %v1363
      %v1365 = vmul.f32 %v1344, 1.442695
      %v1366 = vpow.pop %v1365
      %v1367 = vmul.f32 %v1345, 1.442695
      %v1368 = vpow.pop %v1367
      %v1369 = vmul.f32 %v1346, 1.442695
      %v1370 = vpow.pop %v1369
      %v1371 = vmul.f32 %v1347, 1.442695
      %v1372 = vpow.pop %v1371
      %v1373 = vmul.f32 %v1348, 1.442695
      %v1374 = vpow.pop %v1373
      %v1375 = vmul.f32 %v1349, 1.442695
      %v1376 = vpow.pop %v1375
      %v1377 = vmul.f32 %v1350, 1.442695
      %v1378 = vpow.pop %v1377
      %v1379 = vmul.f32 %v1351, 1.442695
      %v1380 = vpow.pop %v1379
      %v1381 = vmul.f32 %v1352, 1.442695
      %v1382 = vpow.pop %v1381
      %v1383 = vmul.f32 %v1353, 1.442695
      %v1384 = vpow.pop %v1383
      %v1385 = vmul.f32 %v1354, 1.442695
      %v1386 = vpow.pop %v1385
      %v1387 = vmul.f32 %v1323, %v1356
      %v1388 = vmul.f32 %v1324, %v1358
      %v1389 = vmul.f32 %v1325, %v1360
      %v1390 = vmul.f32 %v1326, %v1362
      %v1391 = vmul.f32 %v1327, %v1364
      %v1392 = vmul.f32 %v1328, %v1366
      %v1393 = vmul.f32 %v1329, %v1368
      %v1394 = vmul.f32 %v1330, %v1370
      %v1395 = vmul.f32 %v1331, %v1372
      %v1396 = vmul.f32 %v1332, %v1374
      %v1397 = vmul.f32 %v1333, %v1376
      %v1398 = vmul.f32 %v1334, %v1378
      %v1399 = vmul.f32 %v1335, %v1380
      %v1400 = vmul.f32 %v1336, %v1382
      %v1401 = vmul.f32 %v1337, %v1384
      %v1402 = vmul.f32 %v1338, %v1386
      %v1403 = vadd.f32 %v1274, %v1387
      %v1404 = vadd.f32 %v1276, %v1388
      %v1405 = vadd.f32 %v1278, %v1389
      %v1406 = vadd.f32 %v1280, %v1390
      %v1407 = vadd.f32 %v1282, %v1391
      %v1408 = vadd.f32 %v1284, %v1392
      %v1409 = vadd.f32 %v1286, %v1393
      %v1410 = vadd.f32 %v1288, %v1394
      %v1411 = vadd.f32 %v1290, %v1395
      %v1412 = vadd.f32 %v1292, %v1396
      %v1413 = vadd.f32 %v1294, %v1397
      %v1414 = vadd.f32 %v1296, %v1398
      %v1415 = vadd.f32 %v1298, %v1399
      %v1416 = vadd.f32 %v1300, %v1400
      %v1417 = vadd.f32 %v1302, %v1401
      %v1418 = vadd.f32 %v1304, %v1402
      %v1419 = vrcp.pop %v1403
      %v1420 = vrcp.pop %v1404
      %v1421 = vrcp.pop %v1405
      %v1422 = vrcp.pop %v1406
      %v1423 = vrcp.pop %v1407
      %v1424 = vrcp.pop %v1408
      %v1425 = vrcp.pop %v1409
      %v1426 = vrcp.pop %v1410
      %v1427 = vrcp.pop %v1411
      %v1428 = vrcp.pop %v1412
      %v1429 = vrcp.pop %v1413
      %v1430 = vrcp.pop %v1414
      %v1431 = vrcp.pop %v1415
      %v1432 = vrcp.pop %v1416
      %v1433 = vrcp.pop %v1417
      %v1434 = vrcp.pop %v1418
      %v1435 = vmul.f32 %v1242, %v1419
      %v1436 = vmul.f32 %v1244, %v1420
      %v1437 = vmul.f32 %v1246, %v1421
      %v1438 = vmul.f32 %v1248, %v1422
      %v1439 = vmul.f32 %v1250, %v1423
      %v1440 = vmul.f32 %v1252, %v1424
      %v1441 = vmul.f32 %v1254, %v1425
      %v1442 = vmul.f32 %v1256, %v1426
      %v1443 = vmul.f32 %v1258, %v1427
      %v1444 = vmul.f32 %v1260, %v1428
      %v1445 = vmul.f32 %v1262, %v1429
      %v1446 = vmul.f32 %v1264, %v1430
      %v1447 = vmul.f32 %v1266, %v1431
      %v1448 = vmul.f32 %v1268, %v1432
      %v1449 = vmul.f32 %v1270, %v1433
      %v1450 = vmul.f32 %v1272, %v1434
      %v1451 = vsel %vm1003, 1, 0
      %v1452 = vsel %vm1004, 1, 0
      %v1453 = vsel %vm1005, 1, 0
      %v1454 = vsel %vm1006, 1, 0
      %v1455 = vsel %vm1007, 1, 0
      %v1456 = vsel %vm1008, 1, 0
      %v1457 = vsel %vm1009, 1, 0
      %v1458 = vsel %vm1010, 1, 0
      %v1459 = vsel %vm1011, 1, 0
      %v1460 = vsel %vm1012, 1, 0
      %v1461 = vsel %vm1013, 1, 0
      %v1462 = vsel %vm1014, 1, 0
      %v1463 = vsel %vm1015, 1, 0
      %v1464 = vsel %vm1016, 1, 0
      %v1465 = vsel %vm1017, 1, 0
      %v1466 = vsel %vm1018, 1, 0
      %v1467 = vcvt.s32.f32 %v1451
      %v1468 = vcvt.s32.f32 %v1452
      %v1469 = vcvt.s32.f32 %v1453
      %v1470 = vcvt.s32.f32 %v1454
      %v1471 = vcvt.s32.f32 %v1455
      %v1472 = vcvt.s32.f32 %v1456
      %v1473 = vcvt.s32.f32 %v1457
      %v1474 = vcvt.s32.f32 %v1458
      %v1475 = vcvt.s32.f32 %v1459
      %v1476 = vcvt.s32.f32 %v1460
      %v1477 = vcvt.s32.f32 %v1461
      %v1478 = vcvt.s32.f32 %v1462
      %v1479 = vcvt.s32.f32 %v1463
      %v1480 = vcvt.s32.f32 %v1464
      %v1481 = vcvt.s32.f32 %v1465
      %v1482 = vcvt.s32.f32 %v1466
      %v1483 = vmul.f32 %v1435, %v1467
      %v1484 = vmul.f32 %v1436, %v1468
      %v1485 = vmul.f32 %v1437, %v1469
      %v1486 = vmul.f32 %v1438, %v1470
      %v1487 = vmul.f32 %v1439, %v1471
      %v1488 = vmul.f32 %v1440, %v1472
      %v1489 = vmul.f32 %v1441, %v1473
      %v1490 = vmul.f32 %v1442, %v1474
      %v1491 = vmul.f32 %v1443, %v1475
      %v1492 = vmul.f32 %v1444, %v1476
      %v1493 = vmul.f32 %v1445, %v1477
      %v1494 = vmul.f32 %v1446, %v1478
      %v1495 = vmul.f32 %v1447, %v1479
      %v1496 = vmul.f32 %v1448, %v1480
      %v1497 = vmul.f32 %v1449, %v1481
      %v1498 = vmul.f32 %v1450, %v1482
      %v1499 = vpack.c.bf16 %v749, %v749
      %v1500 = vpack.c.bf16 %v1484, %v1483
      %v1501 = vpack.c.bf16 %v1486, %v1485
      %v1502 = vpack.c.bf16 %v1488, %v1487
      %v1503 = vpack.c.bf16 %v1490, %v1489
      %v1504 = vpack.c.bf16 %v1492, %v1491
      %v1505 = vpack.c.bf16 %v1494, %v1493
      %v1506 = vpack.c.bf16 %v1496, %v1495
      %v1507 = vpack.c.bf16 %v1498, %v1497
      %1508 = vmatprep.subr.bf16.mxu0 0
      %1509 = vmatpush1.bf16.xpose.msra.mxu0 %v1500
      %1510 = vmatprep.subr.bf16.mxu0 0
      %1511 = vmatpush1.bf16.xpose.msra.mxu0 %v1501
      %1512 = vmatprep.subr.bf16.mxu0 0
      %1513 = vmatpush1.bf16.xpose.msra.mxu0 %v1502
      %1514 = vmatprep.subr.bf16.mxu0 0
      %1515 = vmatpush1.bf16.xpose.msra.mxu0 %v1503
      %1516 = vmatprep.subr.bf16.mxu0 0
      %1517 = vmatpush1.bf16.xpose.msra.mxu0 %v1504
      %1518 = vmatprep.subr.bf16.mxu0 0
      %1519 = vmatpush1.bf16.xpose.msra.mxu0 %v1505
      %1520 = vmatprep.subr.bf16.mxu0 0
      %1521 = vmatpush1.bf16.xpose.msra.mxu0 %v1506
      %1522 = vmatprep.subr.bf16.mxu0 0
      %1523 = vmatpush1.bf16.xpose.msra.mxu0 %v1507
      %1524 = vmatprep.subr.bf16.mxu0 0
      %1525 = vmatpush1.bf16.xpose.msra.mxu0 0
      %1526 = vmatprep.subr.bf16.mxu0 0
      %1527 = vmatpush1.bf16.xpose.msra.mxu0 0
      %1528 = vmatprep.subr.bf16.mxu0 0
      %1529 = vmatpush1.bf16.xpose.msra.mxu0 0
      %1530 = vmatprep.subr.bf16.mxu0 0
      %1531 = vmatpush1.bf16.xpose.msra.mxu0 0
      %1532 = vmatprep.subr.bf16.mxu0 0
      %1533 = vmatpush1.bf16.xpose.msra.mxu0 0
      %1534 = vmatprep.subr.bf16.mxu0 0
      %1535 = vmatpush1.bf16.xpose.msra.mxu0 0
      %1536 = vmatprep.subr.bf16.mxu0 0
      %1537 = vmatpush1.bf16.xpose.msra.mxu0 0
      %1538 = vmatprep.subr.bf16.mxu0 0
      %1539 = vmatpush1.bf16.xpose.msra.mxu0 0
      %1540 = vmatprep.mubr.bf16.mxu0 0
      %1541 = vmatmul.mubr.bf16.gmra.mrb[0].mxu0 %v1499
      %v1542 = vpop.f32.mrb[0].mxu0
      %v1543 = vadd.f32 0.0, %v1542
      %v1544 = vpop.f32.mrb[0].mxu0
      %v1545 = vpop.f32.mrb[0].mxu0
      %v1546 = vpop.f32.mrb[0].mxu0
      %1547 = vdwg.mxu0
      %v1548 = vld [vmem:[%s469] sm:$0xf]
      %v1549 = vld [vmem:[%s469 + $0x4] sm:$0xf]
      %v1550 = vmax.f32 %v1543, 0.0
      %v1551 = vpack.c.bf16 %v1550, %v1550
      %v1552 = vld [vmem:[%s474] sm:$0xff]
      %v1553 = vld [vmem:[%s474 + $0x8] sm:$0xff]
      %1555 = vset.pattern.permute.xlu0 0
      %1556 = vperm.xlu0 %1555, %v1552
      %v1557 = vpop.permute.xlu0 %1556
      %1560 = vset.pattern.permute.xlu0 0
      %1561 = vperm.xlu0 %1560, %v1553
      %v1562 = vpop.permute.xlu0 %1561
      %v1566 = vunpack.c.l.b16 %v1548
      %v1567 = vunpack.c.l.b16 %v1549
      %v1568 = vpack.c.b16 %v1567, %v1566
      %v1570 = vsel %vm1051, %v1568, 0
      %v1573 = vsel %vm1076, %v1551, 0
      %1575 = vmatprep.subr.bf16.mxu0 0
      %1576 = vmatpush1.bf16.msra.mxu0 %v1573
      %1577 = vmatprep.subr.bf16.mxu0 0
      %1578 = vmatpush1.bf16.msra.mxu0 0
      %1579 = vmatprep.subr.bf16.mxu0 0
      %1580 = vmatpush1.bf16.msra.mxu0 0
      %1581 = vmatprep.subr.bf16.mxu0 0
      %1582 = vmatpush1.bf16.msra.mxu0 0
      %1583 = vmatprep.subr.bf16.mxu0 0
      %1584 = vmatpush1.bf16.msra.mxu0 0
      %1585 = vmatprep.subr.bf16.mxu0 0
      %1586 = vmatpush1.bf16.msra.mxu0 0
      %1587 = vmatprep.subr.bf16.mxu0 0
      %1588 = vmatpush1.bf16.msra.mxu0 0
      %1589 = vmatprep.subr.bf16.mxu0 0
      %1590 = vmatpush1.bf16.msra.mxu0 0
      %1591 = vmatprep.subr.bf16.mxu0 0
      %1592 = vmatpush1.bf16.msra.mxu0 0
      %1593 = vmatprep.subr.bf16.mxu0 0
      %1594 = vmatpush1.bf16.msra.mxu0 0
      %1595 = vmatprep.subr.bf16.mxu0 0
      %1596 = vmatpush1.bf16.msra.mxu0 0
      %1597 = vmatprep.subr.bf16.mxu0 0
      %1598 = vmatpush1.bf16.msra.mxu0 0
      %1599 = vmatprep.subr.bf16.mxu0 0
      %1600 = vmatpush1.bf16.msra.mxu0 0
      %1601 = vmatprep.subr.bf16.mxu0 0
      %1602 = vmatpush1.bf16.msra.mxu0 0
      %1603 = vmatprep.subr.bf16.mxu0 0
      %1604 = vmatpush1.bf16.msra.mxu0 0
      %1605 = vmatprep.subr.bf16.mxu0 0
      %1606 = vmatpush1.bf16.msra.mxu0 0
      %1607 = vmatprep.mubr.bf16.mxu0 0
      %1608 = vmatmul.mubr.bf16.gmra.mrb[0].mxu0 %v1570
      %v1609 = vpop.f32.mrb[0].mxu0
      %v1610 = vadd.f32 %v1557, %v1609
      %v1611 = vpop.f32.mrb[0].mxu0
      %v1612 = vpop.f32.mrb[0].mxu0
      %v1613 = vadd.f32 %v1562, %v1612
      %v1614 = vpop.f32.mrb[0].mxu0
      %1615 = vdwg.mxu0
      %v1617 = vlaneseq
      %v1618 = vshrl.u32 %v1617, 7
      %v1619 = vsub.s32 0, %v1618
      %v1620 = vrot.slane %v498, %v1619
      %v1622 = vmul.f32 %v1610, %v1620
      %v1623 = vmul.f32 %v1613, %v1620
      %v1624 = vadd.f32 %v1622, %v636
      %v1625 = vadd.f32 %v1623, %v637
      %v1626 = vld [vmem:[%s479] sm:$0xf]
      %v1627 = vld [vmem:[%s479 + $0x4] sm:$0xf]
      %v1628 = vpack.c.bf16 %v1625, %v1624
      %v1629 = vld [vmem:[%s484] sm:$0xff]
      %v1630 = vld [vmem:[%s484 + $0x8] sm:$0xff]
      %1632 = vset.pattern.permute.xlu0 0
      %1633 = vperm.xlu0 %1632, %v1629
      %v1634 = vpop.permute.xlu0 %1633
      %1637 = vset.pattern.permute.xlu0 0
      %1638 = vperm.xlu0 %1637, %v1630
      %v1639 = vpop.permute.xlu0 %1638
      %v1643 = vunpack.c.l.b16 %v1626
      %v1644 = vunpack.c.l.b16 %v1627
      %v1645 = vpack.c.b16 %v1644, %v1643
      %v1647 = vsel %vm526, %v1645, 0
      %1649 = vmatprep.subr.bf16.mxu0 0
      %1650 = vmatpush1.bf16.msra.mxu0 %v1628
      %1651 = vmatprep.subr.bf16.mxu0 0
      %1652 = vmatpush1.bf16.msra.mxu0 0
      %1653 = vmatprep.subr.bf16.mxu0 0
      %1654 = vmatpush1.bf16.msra.mxu0 0
      %1655 = vmatprep.subr.bf16.mxu0 0
      %1656 = vmatpush1.bf16.msra.mxu0 0
      %1657 = vmatprep.subr.bf16.mxu0 0
      %1658 = vmatpush1.bf16.msra.mxu0 0
      %1659 = vmatprep.subr.bf16.mxu0 0
      %1660 = vmatpush1.bf16.msra.mxu0 0
      %1661 = vmatprep.subr.bf16.mxu0 0
      %1662 = vmatpush1.bf16.msra.mxu0 0
      %1663 = vmatprep.subr.bf16.mxu0 0
      %1664 = vmatpush1.bf16.msra.mxu0 0
      %1665 = vmatprep.subr.bf16.mxu0 0
      %1666 = vmatpush1.bf16.msra.mxu0 0
      %1667 = vmatprep.subr.bf16.mxu0 0
      %1668 = vmatpush1.bf16.msra.mxu0 0
      %1669 = vmatprep.subr.bf16.mxu0 0
      %1670 = vmatpush1.bf16.msra.mxu0 0
      %1671 = vmatprep.subr.bf16.mxu0 0
      %1672 = vmatpush1.bf16.msra.mxu0 0
      %1673 = vmatprep.subr.bf16.mxu0 0
      %1674 = vmatpush1.bf16.msra.mxu0 0
      %1675 = vmatprep.subr.bf16.mxu0 0
      %1676 = vmatpush1.bf16.msra.mxu0 0
      %1677 = vmatprep.subr.bf16.mxu0 0
      %1678 = vmatpush1.bf16.msra.mxu0 0
      %1679 = vmatprep.subr.bf16.mxu0 0
      %1680 = vmatpush1.bf16.msra.mxu0 0
      %1681 = vmatprep.mubr.bf16.mxu0 0
      %1682 = vmatmul.mubr.bf16.gmra.mrb[0].mxu0 %v1647
      %v1683 = vpop.f32.mrb[0].mxu0
      %v1684 = vadd.f32 %v1634, %v1683
      %v1685 = vpop.f32.mrb[0].mxu0
      %v1686 = vpop.f32.mrb[0].mxu0
      %v1687 = vadd.f32 %v1639, %v1686
      %v1688 = vpop.f32.mrb[0].mxu0
      %1689 = vdwg.mxu0
      %v1690 = vadd.f32 %v496, %v1684
      %v1691 = vadd.f32 %v497, %v1687
      %v1692 = vmul.f32 %v1690, %v1620
      %v1693 = vmul.f32 %v1691, %v1620
      %1694 = vst [vmem:[#allocation2] sm:$0xff] %v1692
      %1695 = vst [vmem:[#allocation2 + $0x8] sm:$0xff] %v1693
      %p1696 = scmp.eq.s32.totalorder %s21, 3
      // Predicated region
      $region65: #{model_forward.10} parent=59 // pred_check
        %p1697 = pneg %p1696
      $region66: #{model_forward.10} parent=59 // pred_check_branch
        %1699 = sbr.rel (%p1697) target = $region68
      $region67: #{model_forward.10} parent=59 // pred_region
        %1700 = vst [vmem:[%s10] sm:$0xff] %v1692
        %1701 = vst [vmem:[%s10 + $0x8] sm:$0xff] %v1693
      $region68: #{model_forward.10} parent=59 // pred_fallthru
        _
      // Predicated region
      $region69: #{model_forward.10} parent=59 // pred_check
        %p1702 = pneg %p284
      $region70: #{model_forward.10} parent=59 // pred_check_branch
        %1704 = sbr.rel (%p1702) target = $region72
      $region71: #{model_forward.10} parent=59 // pred_region
        _
      $region72: #{model_forward.10} parent=59 // pred_fallthru
        _
      // Predicated region
      $region73: #{model_forward.10} parent=59 // pred_check
        %p1705 = pneg %p284
      $region74: #{model_forward.10} parent=59 // pred_check_branch
        %1707 = sbr.rel (%p1705) target = $region76
      $region75: #{model_forward.10} parent=59 // pred_region
        _
      $region76: #{model_forward.10} parent=59 // pred_fallthru
        _
    $region60: #{model_forward.10} parent=5 // pred_fallthru
      _
    %p1708 = scmp.le.s32.totalorder 2, %s16
    // Predicated region
    $region77: #{model_forward.10} parent=5 // pred_check
      %p1709 = pneg %p1708
    $region78: #{model_forward.10} parent=5 // pred_check_branch
      %1711 = sbr.rel (%p1709) target = $region80
    $region79: #{model_forward.10} parent=5 // pred_region
      %s1712 = ssub.s32 %s16, 2
    $region80: #{model_forward.10} parent=5 // pred_fallthru
      _
  $region6: #{model_forward.10} parent=0 // loop_footer
    %s20 = sadd.s32 1, %s16
  $region7: #{model_forward.10} parent=0 // loop_footer_branch
    %15 = sbr.rel target = $region3
  $region8: #{model_forward.10} parent=0 // loop_exit
    _

// kernel: model_forward.13
$region0: #{model_forward.13}
  #allocation0 [shape = 'u32[]', space=smem, size = 0x4, offset = 0x4, fixed_abs, tag = 'smem constant byte address 0x4 - core index']
  #allocation1 [shape = 'u32[144,128]{1,0:T(1,128)}', space=vmem, size = 0x12000, scoped, tag = 'internal scratch']
  #allocation2 [shape = 'f32[16,128]{1,0:T(8,128)}', space=vmem, size = 0x2000, scoped, tag = 'scratch operand']
  %s0 = inlined_call_operand.vmem [shape: f32[16,128], index: 0, kind: input, shape index: {}]
  %s1 = inlined_call_operand.vmem [shape: f32[16,128], index: 1, kind: input, shape index: {}]
  %s2 = inlined_call_operand.vmem [shape: f32[1,128], index: 2, kind: input, shape index: {}]
  %s3 = inlined_call_operand.vmem [shape: bf16[3,48,16], index: 3, kind: input, shape index: {}]
  %s4 = inlined_call_operand.vmem [shape: f32[3,16,1], index: 4, kind: input, shape index: {}]
  %s5 = inlined_call_operand.vmem [shape: bf16[3,16,16], index: 5, kind: input, shape index: {}]
  %s6 = inlined_call_operand.vmem [shape: f32[3,16,1], index: 6, kind: input, shape index: {}]
  %s7 = inlined_call_operand.vmem [shape: bf16[3,8,16], index: 7, kind: input, shape index: {}]
  %s8 = inlined_call_operand.vmem [shape: f32[3,8,1], index: 8, kind: input, shape index: {}]
  %s9 = inlined_call_operand.vmem [shape: bf16[3,16,8], index: 9, kind: input, shape index: {}]
  %s10 = inlined_call_operand.vmem [shape: f32[3,16,1], index: 10, kind: input, shape index: {}]
  %s11 = inlined_call_operand.vmem [shape: bf16[3,16,16], index: 11, kind: input, shape index: {}]
  %s12 = inlined_call_operand.vmem [shape: f32[3,16,1], index: 12, kind: input, shape index: {}]
  %s13 = inlined_call_operand.vmem [shape: f32[16,128], index: 13, kind: output, shape index: {}]
  %s14 = sld [smem:[#allocation0]]
  $region93: #{model_forward.13} parent=0
    _
  %s16 = ssub.s32 1, %s14
  %s17 = scalar_select 0, %s16, %s14
  loop: start=0, step=1, limit=5
  $region2: #{model_forward.13} parent=0 // loop_pre_header
    _
  $region3: #{model_forward.13} parent=0 // loop_header
    %s19 = sphi 0, %s23
    %p20 = scmp.ge.s32.totalorder %s19, 5
    %s27 = sphi 0, %s27
    %s29 = sphi 0, %s27
    %s30 = sphi 0, %s29
    %s44 = sphi 0, %s30
    %s48 = sphi 0, %s48
    %s50 = sphi 0, %s48
    %s51 = sphi 0, %s50
    %s65 = sphi 0, %s51
    %s69 = sphi 0, %s69
    %s71 = sphi 0, %s69
    %s72 = sphi 0, %s71
    %s86 = sphi 0, %s72
    %s92 = sphi 0, %s94
    %s95 = sphi 0, %s92
    %s96 = sphi 0, %s95
    %s112 = sphi 0, %s96
    %s118 = sphi 0, %s120
    %s121 = sphi 0, %s118
    %s122 = sphi 0, %s121
    %s138 = sphi 0, %s122
    %s144 = sphi 0, %s146
    %s147 = sphi 0, %s144
    %s148 = sphi 0, %s147
    %s164 = sphi 0, %s148
    %s170 = sphi 0, %s172
    %s173 = sphi 0, %s170
    %s174 = sphi 0, %s173
    %s190 = sphi 0, %s174
    %s196 = sphi 0, %s198
    %s199 = sphi 0, %s196
    %s200 = sphi 0, %s199
    %s216 = sphi 0, %s200
    %s222 = sphi 0, %s224
    %s225 = sphi 0, %s222
    %s226 = sphi 0, %s225
    %s242 = sphi 0, %s226
    %s248 = sphi 0, %s250
    %s251 = sphi 0, %s248
    %s252 = sphi 0, %s251
    %s268 = sphi 0, %s252
    %s274 = sphi 0, %s276
    %s277 = sphi 0, %s274
    %s278 = sphi 0, %s277
    %s294 = sphi 0, %s278
    %s300 = sphi 0, %s302
    %s303 = sphi 0, %s300
    %s304 = sphi 0, %s303
    %s320 = sphi 0, %s304
    %s326 = sphi 0, %s328
    %s329 = sphi 0, %s326
    %s330 = sphi 0, %s329
    %s346 = sphi 0, %s330
    %s350 = sphi 0, %s350
    %s352 = sphi 0, %s350
    %s353 = sphi 0, %s352
    %s367 = sphi 0, %s353
  $region4: #{model_forward.13} parent=0 // loop_header_branch
    %22 = sbr.rel (%p20) target = $region8
  $region5: #{model_forward.13} parent=0 // loop_body
    %s24 = ssub.s32 %s19, 1
    %s25 = ssub.s32 %s19, 2
    %s26 = sadd.s32 %s19, 1
    %s28 = sadd.s32 %s27, 1
    %p31 = scmp.eq.s32.totalorder %s19, 2
    %p32 = scmp.ne.s32.totalorder %s27, %s29
    %p33 = scmp.eq.s32.totalorder %s19, 0
    %p34 = por %p32, %p33
    %p35 = scmp.ne.s32.totalorder %s27, %s29
    %p36 = scmp.eq.s32.totalorder %s24, 2
    %p37 = por %p35, %p36
    %p38 = scmp.ne.s32.totalorder %s29, %s30
    %p39 = scmp.eq.s32.totalorder %s24, 0
    %p40 = por %p38, %p39
    %p41 = scmp.ne.s32.totalorder %s29, %s30
    %p42 = scmp.eq.s32.totalorder %s25, 2
    %p43 = por %p41, %p42
    %p45 = scmp.ne.s32.totalorder %s30, %s44
    %p46 = scmp.eq.s32.totalorder %s25, 0
    %p47 = por %p45, %p46
    %s49 = sadd.s32 %s48, 1
    %p52 = scmp.eq.s32.totalorder %s19, 2
    %p53 = scmp.ne.s32.totalorder %s48, %s50
    %p54 = scmp.eq.s32.totalorder %s19, 0
    %p55 = por %p53, %p54
    %p56 = scmp.ne.s32.totalorder %s48, %s50
    %p57 = scmp.eq.s32.totalorder %s24, 2
    %p58 = por %p56, %p57
    %p59 = scmp.ne.s32.totalorder %s50, %s51
    %p60 = scmp.eq.s32.totalorder %s24, 0
    %p61 = por %p59, %p60
    %p62 = scmp.ne.s32.totalorder %s50, %s51
    %p63 = scmp.eq.s32.totalorder %s25, 2
    %p64 = por %p62, %p63
    %p66 = scmp.ne.s32.totalorder %s51, %s65
    %p67 = scmp.eq.s32.totalorder %s25, 0
    %p68 = por %p66, %p67
    %s70 = sadd.s32 %s69, 1
    %p73 = scmp.eq.s32.totalorder %s19, 2
    %p74 = scmp.ne.s32.totalorder %s69, %s71
    %p75 = scmp.eq.s32.totalorder %s19, 0
    %p76 = por %p74, %p75
    %p77 = scmp.ne.s32.totalorder %s69, %s71
    %p78 = scmp.eq.s32.totalorder %s24, 2
    %p79 = por %p77, %p78
    %p80 = scmp.ne.s32.totalorder %s71, %s72
    %p81 = scmp.eq.s32.totalorder %s24, 0
    %p82 = por %p80, %p81
    %p83 = scmp.ne.s32.totalorder %s71, %s72
    %p84 = scmp.eq.s32.totalorder %s25, 2
    %p85 = por %p83, %p84
    %p87 = scmp.ne.s32.totalorder %s72, %s86
    %p88 = scmp.eq.s32.totalorder %s25, 0
    %p89 = por %p87, %p88
    %s90 = ssub.s32 %s19, %s26
    %p91 = scmp.eq.s32.totalorder %s90, 0
    %s93 = sadd.s32 %s92, 1
    %s94 = scalar_select %p91, %s92, %s93
    %p97 = pneg %p91
    %p98 = scmp.eq.s32.totalorder %s19, 2
    %p99 = por %p97, %p98
    %p100 = scmp.ne.s32.totalorder %s92, %s95
    %p101 = scmp.eq.s32.totalorder %s19, 0
    %p102 = por %p100, %p101
    %p103 = scmp.ne.s32.totalorder %s92, %s95
    %p104 = scmp.eq.s32.totalorder %s24, 2
    %p105 = por %p103, %p104
    %p106 = scmp.ne.s32.totalorder %s95, %s96
    %p107 = scmp.eq.s32.totalorder %s24, 0
    %p108 = por %p106, %p107
    %p109 = scmp.ne.s32.totalorder %s95, %s96
    %p110 = scmp.eq.s32.totalorder %s25, 2
    %p111 = por %p109, %p110
    %p113 = scmp.ne.s32.totalorder %s96, %s112
    %p114 = scmp.eq.s32.totalorder %s25, 0
    %p115 = por %p113, %p114
    %s116 = ssub.s32 %s19, %s26
    %p117 = scmp.eq.s32.totalorder %s116, 0
    %s119 = sadd.s32 %s118, 1
    %s120 = scalar_select %p117, %s118, %s119
    %p123 = pneg %p117
    %p124 = scmp.eq.s32.totalorder %s19, 2
    %p125 = por %p123, %p124
    %p126 = scmp.ne.s32.totalorder %s118, %s121
    %p127 = scmp.eq.s32.totalorder %s19, 0
    %p128 = por %p126, %p127
    %p129 = scmp.ne.s32.totalorder %s118, %s121
    %p130 = scmp.eq.s32.totalorder %s24, 2
    %p131 = por %p129, %p130
    %p132 = scmp.ne.s32.totalorder %s121, %s122
    %p133 = scmp.eq.s32.totalorder %s24, 0
    %p134 = por %p132, %p133
    %p135 = scmp.ne.s32.totalorder %s121, %s122
    %p136 = scmp.eq.s32.totalorder %s25, 2
    %p137 = por %p135, %p136
    %p139 = scmp.ne.s32.totalorder %s122, %s138
    %p140 = scmp.eq.s32.totalorder %s25, 0
    %p141 = por %p139, %p140
    %s142 = ssub.s32 %s19, %s26
    %p143 = scmp.eq.s32.totalorder %s142, 0
    %s145 = sadd.s32 %s144, 1
    %s146 = scalar_select %p143, %s144, %s145
    %p149 = pneg %p143
    %p150 = scmp.eq.s32.totalorder %s19, 2
    %p151 = por %p149, %p150
    %p152 = scmp.ne.s32.totalorder %s144, %s147
    %p153 = scmp.eq.s32.totalorder %s19, 0
    %p154 = por %p152, %p153
    %p155 = scmp.ne.s32.totalorder %s144, %s147
    %p156 = scmp.eq.s32.totalorder %s24, 2
    %p157 = por %p155, %p156
    %p158 = scmp.ne.s32.totalorder %s147, %s148
    %p159 = scmp.eq.s32.totalorder %s24, 0
    %p160 = por %p158, %p159
    %p161 = scmp.ne.s32.totalorder %s147, %s148
    %p162 = scmp.eq.s32.totalorder %s25, 2
    %p163 = por %p161, %p162
    %p165 = scmp.ne.s32.totalorder %s148, %s164
    %p166 = scmp.eq.s32.totalorder %s25, 0
    %p167 = por %p165, %p166
    %s168 = ssub.s32 %s19, %s26
    %p169 = scmp.eq.s32.totalorder %s168, 0
    %s171 = sadd.s32 %s170, 1
    %s172 = scalar_select %p169, %s170, %s171
    %p175 = pneg %p169
    %p176 = scmp.eq.s32.totalorder %s19, 2
    %p177 = por %p175, %p176
    %p178 = scmp.ne.s32.totalorder %s170, %s173
    %p179 = scmp.eq.s32.totalorder %s19, 0
    %p180 = por %p178, %p179
    %p181 = scmp.ne.s32.totalorder %s170, %s173
    %p182 = scmp.eq.s32.totalorder %s24, 2
    %p183 = por %p181, %p182
    %p184 = scmp.ne.s32.totalorder %s173, %s174
    %p185 = scmp.eq.s32.totalorder %s24, 0
    %p186 = por %p184, %p185
    %p187 = scmp.ne.s32.totalorder %s173, %s174
    %p188 = scmp.eq.s32.totalorder %s25, 2
    %p189 = por %p187, %p188
    %p191 = scmp.ne.s32.totalorder %s174, %s190
    %p192 = scmp.eq.s32.totalorder %s25, 0
    %p193 = por %p191, %p192
    %s194 = ssub.s32 %s19, %s26
    %p195 = scmp.eq.s32.totalorder %s194, 0
    %s197 = sadd.s32 %s196, 1
    %s198 = scalar_select %p195, %s196, %s197
    %p201 = pneg %p195
    %p202 = scmp.eq.s32.totalorder %s19, 2
    %p203 = por %p201, %p202
    %p204 = scmp.ne.s32.totalorder %s196, %s199
    %p205 = scmp.eq.s32.totalorder %s19, 0
    %p206 = por %p204, %p205
    %p207 = scmp.ne.s32.totalorder %s196, %s199
    %p208 = scmp.eq.s32.totalorder %s24, 2
    %p209 = por %p207, %p208
    %p210 = scmp.ne.s32.totalorder %s199, %s200
    %p211 = scmp.eq.s32.totalorder %s24, 0
    %p212 = por %p210, %p211
    %p213 = scmp.ne.s32.totalorder %s199, %s200
    %p214 = scmp.eq.s32.totalorder %s25, 2
    %p215 = por %p213, %p214
    %p217 = scmp.ne.s32.totalorder %s200, %s216
    %p218 = scmp.eq.s32.totalorder %s25, 0
    %p219 = por %p217, %p218
    %s220 = ssub.s32 %s19, %s26
    %p221 = scmp.eq.s32.totalorder %s220, 0
    %s223 = sadd.s32 %s222, 1
    %s224 = scalar_select %p221, %s222, %s223
    %p227 = pneg %p221
    %p228 = scmp.eq.s32.totalorder %s19, 2
    %p229 = por %p227, %p228
    %p230 = scmp.ne.s32.totalorder %s222, %s225
    %p231 = scmp.eq.s32.totalorder %s19, 0
    %p232 = por %p230, %p231
    %p233 = scmp.ne.s32.totalorder %s222, %s225
    %p234 = scmp.eq.s32.totalorder %s24, 2
    %p235 = por %p233, %p234
    %p236 = scmp.ne.s32.totalorder %s225, %s226
    %p237 = scmp.eq.s32.totalorder %s24, 0
    %p238 = por %p236, %p237
    %p239 = scmp.ne.s32.totalorder %s225, %s226
    %p240 = scmp.eq.s32.totalorder %s25, 2
    %p241 = por %p239, %p240
    %p243 = scmp.ne.s32.totalorder %s226, %s242
    %p244 = scmp.eq.s32.totalorder %s25, 0
    %p245 = por %p243, %p244
    %s246 = ssub.s32 %s19, %s26
    %p247 = scmp.eq.s32.totalorder %s246, 0
    %s249 = sadd.s32 %s248, 1
    %s250 = scalar_select %p247, %s248, %s249
    %p253 = pneg %p247
    %p254 = scmp.eq.s32.totalorder %s19, 2
    %p255 = por %p253, %p254
    %p256 = scmp.ne.s32.totalorder %s248, %s251
    %p257 = scmp.eq.s32.totalorder %s19, 0
    %p258 = por %p256, %p257
    %p259 = scmp.ne.s32.totalorder %s248, %s251
    %p260 = scmp.eq.s32.totalorder %s24, 2
    %p261 = por %p259, %p260
    %p262 = scmp.ne.s32.totalorder %s251, %s252
    %p263 = scmp.eq.s32.totalorder %s24, 0
    %p264 = por %p262, %p263
    %p265 = scmp.ne.s32.totalorder %s251, %s252
    %p266 = scmp.eq.s32.totalorder %s25, 2
    %p267 = por %p265, %p266
    %p269 = scmp.ne.s32.totalorder %s252, %s268
    %p270 = scmp.eq.s32.totalorder %s25, 0
    %p271 = por %p269, %p270
    %s272 = ssub.s32 %s19, %s26
    %p273 = scmp.eq.s32.totalorder %s272, 0
    %s275 = sadd.s32 %s274, 1
    %s276 = scalar_select %p273, %s274, %s275
    %p279 = pneg %p273
    %p280 = scmp.eq.s32.totalorder %s19, 2
    %p281 = por %p279, %p280
    %p282 = scmp.ne.s32.totalorder %s274, %s277
    %p283 = scmp.eq.s32.totalorder %s19, 0
    %p284 = por %p282, %p283
    %p285 = scmp.ne.s32.totalorder %s274, %s277
    %p286 = scmp.eq.s32.totalorder %s24, 2
    %p287 = por %p285, %p286
    %p288 = scmp.ne.s32.totalorder %s277, %s278
    %p289 = scmp.eq.s32.totalorder %s24, 0
    %p290 = por %p288, %p289
    %p291 = scmp.ne.s32.totalorder %s277, %s278
    %p292 = scmp.eq.s32.totalorder %s25, 2
    %p293 = por %p291, %p292
    %p295 = scmp.ne.s32.totalorder %s278, %s294
    %p296 = scmp.eq.s32.totalorder %s25, 0
    %p297 = por %p295, %p296
    %s298 = ssub.s32 %s19, %s26
    %p299 = scmp.eq.s32.totalorder %s298, 0
    %s301 = sadd.s32 %s300, 1
    %s302 = scalar_select %p299, %s300, %s301
    %p305 = pneg %p299
    %p306 = scmp.eq.s32.totalorder %s19, 2
    %p307 = por %p305, %p306
    %p308 = scmp.ne.s32.totalorder %s300, %s303
    %p309 = scmp.eq.s32.totalorder %s19, 0
    %p310 = por %p308, %p309
    %p311 = scmp.ne.s32.totalorder %s300, %s303
    %p312 = scmp.eq.s32.totalorder %s24, 2
    %p313 = por %p311, %p312
    %p314 = scmp.ne.s32.totalorder %s303, %s304
    %p315 = scmp.eq.s32.totalorder %s24, 0
    %p316 = por %p314, %p315
    %p317 = scmp.ne.s32.totalorder %s303, %s304
    %p318 = scmp.eq.s32.totalorder %s25, 2
    %p319 = por %p317, %p318
    %p321 = scmp.ne.s32.totalorder %s304, %s320
    %p322 = scmp.eq.s32.totalorder %s25, 0
    %p323 = por %p321, %p322
    %s324 = ssub.s32 %s19, %s26
    %p325 = scmp.eq.s32.totalorder %s324, 0
    %s327 = sadd.s32 %s326, 1
    %s328 = scalar_select %p325, %s326, %s327
    %p331 = pneg %p325
    %p332 = scmp.eq.s32.totalorder %s19, 2
    %p333 = por %p331, %p332
    %p334 = scmp.ne.s32.totalorder %s326, %s329
    %p335 = scmp.eq.s32.totalorder %s19, 0
    %p336 = por %p334, %p335
    %p337 = scmp.ne.s32.totalorder %s326, %s329
    %p338 = scmp.eq.s32.totalorder %s24, 2
    %p339 = por %p337, %p338
    %p340 = scmp.ne.s32.totalorder %s329, %s330
    %p341 = scmp.eq.s32.totalorder %s24, 0
    %p342 = por %p340, %p341
    %p343 = scmp.ne.s32.totalorder %s329, %s330
    %p344 = scmp.eq.s32.totalorder %s25, 2
    %p345 = por %p343, %p344
    %p347 = scmp.ne.s32.totalorder %s330, %s346
    %p348 = scmp.eq.s32.totalorder %s25, 0
    %p349 = por %p347, %p348
    %s351 = sadd.s32 %s350, 1
    %p354 = scmp.eq.s32.totalorder %s19, 2
    %p355 = scmp.ne.s32.totalorder %s350, %s352
    %p356 = scmp.eq.s32.totalorder %s19, 0
    %p357 = por %p355, %p356
    %p358 = scmp.ne.s32.totalorder %s350, %s352
    %p359 = scmp.eq.s32.totalorder %s24, 2
    %p360 = por %p358, %p359
    %p361 = scmp.ne.s32.totalorder %s352, %s353
    %p362 = scmp.eq.s32.totalorder %s24, 0
    %p363 = por %p361, %p362
    %p364 = scmp.ne.s32.totalorder %s352, %s353
    %p365 = scmp.eq.s32.totalorder %s25, 2
    %p366 = por %p364, %p365
    %p368 = scmp.ne.s32.totalorder %s353, %s367
    %p369 = scmp.eq.s32.totalorder %s25, 0
    %p370 = por %p368, %p369
    %p371 = scmp.le.s32.totalorder 1, %s19
    %p372 = scmp.lt.s32.totalorder %s19, 4
    %p373 = pnand %p371, %p372
    %p374 = pneg %p373
    // Predicated region
    $region9: #{model_forward.13} parent=5 // pred_check
      _
    $region10: #{model_forward.13} parent=5 // pred_check_branch
      %376 = sbr.rel (%p373) target = $region12
    $region11: #{model_forward.13} parent=5 // pred_region
      %s377 = ssub.s32 %s19, 1
      // Predicated region
      $region13: #{model_forward.13} parent=11 // pred_check
        %p378 = pneg %p40
      $region14: #{model_forward.13} parent=11 // pred_check_branch
        %380 = sbr.rel (%p378) target = $region16
      $region15: #{model_forward.13} parent=11 // pred_region
        _
      $region16: #{model_forward.13} parent=11 // pred_fallthru
        _
      // Predicated region
      $region17: #{model_forward.13} parent=11 // pred_check
        %p381 = pneg %p61
      $region18: #{model_forward.13} parent=11 // pred_check_branch
        %383 = sbr.rel (%p381) target = $region20
      $region19: #{model_forward.13} parent=11 // pred_region
        _
      $region20: #{model_forward.13} parent=11 // pred_fallthru
        _
      // Predicated region
      $region21: #{model_forward.13} parent=11 // pred_check
        %p384 = pneg %p82
      $region22: #{model_forward.13} parent=11 // pred_check_branch
        %386 = sbr.rel (%p384) target = $region24
      $region23: #{model_forward.13} parent=11 // pred_region
        _
      $region24: #{model_forward.13} parent=11 // pred_fallthru
        _
    $region12: #{model_forward.13} parent=5 // pred_fallthru
      _
    %p387 = scmp.lt.s32.totalorder %s19, 3
    // Predicated region
    $region25: #{model_forward.13} parent=5 // pred_check
      %p388 = pneg %p387
    $region26: #{model_forward.13} parent=5 // pred_check_branch
      %390 = sbr.rel (%p388) target = $region28
    $region27: #{model_forward.13} parent=5 // pred_region
      // Predicated region
      $region29: #{model_forward.13} parent=27 // pred_check
        %p391 = pneg %p102
      $region30: #{model_forward.13} parent=27 // pred_check_branch
        %393 = sbr.rel (%p391) target = $region32
      $region31: #{model_forward.13} parent=27 // pred_region
        %p394 = scmp.lt.s32.totalorder %s19, 2
        %s395 = scalar_select %p394, %s19, 2
        %s396 = smul.addr %s395, 6
        %s397 = smul.addr %s396, 4
        %s398 = scalar_lea.vmem %s3, %s397
      $region32: #{model_forward.13} parent=27 // pred_fallthru
        _
      // Predicated region
      $region33: #{model_forward.13} parent=27 // pred_check
        %p399 = pneg %p128
      $region34: #{model_forward.13} parent=27 // pred_check_branch
        %401 = sbr.rel (%p399) target = $region36
      $region35: #{model_forward.13} parent=27 // pred_region
        %p402 = scmp.lt.s32.totalorder %s19, 2
        %s403 = scalar_select %p402, %s19, 2
        %s404 = smul.addr %s403, 2
        %s405 = smul.addr %s404, 8
        %s406 = scalar_lea.vmem %s4, %s405
      $region36: #{model_forward.13} parent=27 // pred_fallthru
        _
      // Predicated region
      $region37: #{model_forward.13} parent=27 // pred_check
        %p407 = pneg %p154
      $region38: #{model_forward.13} parent=27 // pred_check_branch
        %409 = sbr.rel (%p407) target = $region40
      $region39: #{model_forward.13} parent=27 // pred_region
        %p410 = scmp.lt.s32.totalorder %s19, 2
        %s411 = scalar_select %p410, %s19, 2
        %s412 = smul.addr %s411, 2
        %s413 = smul.addr %s412, 4
        %s414 = scalar_lea.vmem %s5, %s413
      $region40: #{model_forward.13} parent=27 // pred_fallthru
        _
      // Predicated region
      $region41: #{model_forward.13} parent=27 // pred_check
        %p415 = pneg %p180
      $region42: #{model_forward.13} parent=27 // pred_check_branch
        %417 = sbr.rel (%p415) target = $region44
      $region43: #{model_forward.13} parent=27 // pred_region
        %p418 = scmp.lt.s32.totalorder %s19, 2
        %s419 = scalar_select %p418, %s19, 2
        %s420 = smul.addr %s419, 2
        %s421 = smul.addr %s420, 8
        %s422 = scalar_lea.vmem %s6, %s421
      $region44: #{model_forward.13} parent=27 // pred_fallthru
        _
      // Predicated region
      $region45: #{model_forward.13} parent=27 // pred_check
        %p423 = pneg %p206
      $region46: #{model_forward.13} parent=27 // pred_check_branch
        %425 = sbr.rel (%p423) target = $region48
      $region47: #{model_forward.13} parent=27 // pred_region
        %p426 = scmp.lt.s32.totalorder %s19, 2
        %s427 = scalar_select %p426, %s19, 2
        %s428 = smul.addr %s427, 4
        %s429 = scalar_lea.vmem %s7, %s428
      $region48: #{model_forward.13} parent=27 // pred_fallthru
        _
      // Predicated region
      $region49: #{model_forward.13} parent=27 // pred_check
        %p430 = pneg %p232
      $region50: #{model_forward.13} parent=27 // pred_check_branch
        %432 = sbr.rel (%p430) target = $region52
      $region51: #{model_forward.13} parent=27 // pred_region
        %p433 = scmp.lt.s32.totalorder %s19, 2
        %s434 = scalar_select %p433, %s19, 2
        %s435 = smul.addr %s434, 8
        %s436 = scalar_lea.vmem %s8, %s435
      $region52: #{model_forward.13} parent=27 // pred_fallthru
        _
      // Predicated region
      $region53: #{model_forward.13} parent=27 // pred_check
        %p437 = pneg %p258
      $region54: #{model_forward.13} parent=27 // pred_check_branch
        %439 = sbr.rel (%p437) target = $region56
      $region55: #{model_forward.13} parent=27 // pred_region
        %p440 = scmp.lt.s32.totalorder %s19, 2
        %s441 = scalar_select %p440, %s19, 2
        %s442 = smul.addr %s441, 2
        %s443 = smul.addr %s442, 4
        %s444 = scalar_lea.vmem %s9, %s443
      $region56: #{model_forward.13} parent=27 // pred_fallthru
        _
      // Predicated region
      $region57: #{model_forward.13} parent=27 // pred_check
        %p445 = pneg %p284
      $region58: #{model_forward.13} parent=27 // pred_check_branch
        %447 = sbr.rel (%p445) target = $region60
      $region59: #{model_forward.13} parent=27 // pred_region
        %p448 = scmp.lt.s32.totalorder %s19, 2
        %s449 = scalar_select %p448, %s19, 2
        %s450 = smul.addr %s449, 2
        %s451 = smul.addr %s450, 8
        %s452 = scalar_lea.vmem %s10, %s451
      $region60: #{model_forward.13} parent=27 // pred_fallthru
        _
      // Predicated region
      $region61: #{model_forward.13} parent=27 // pred_check
        %p453 = pneg %p310
      $region62: #{model_forward.13} parent=27 // pred_check_branch
        %455 = sbr.rel (%p453) target = $region64
      $region63: #{model_forward.13} parent=27 // pred_region
        %p456 = scmp.lt.s32.totalorder %s19, 2
        %s457 = scalar_select %p456, %s19, 2
        %s458 = smul.addr %s457, 2
        %s459 = smul.addr %s458, 4
        %s460 = scalar_lea.vmem %s11, %s459
      $region64: #{model_forward.13} parent=27 // pred_fallthru
        _
      // Predicated region
      $region65: #{model_forward.13} parent=27 // pred_check
        %p461 = pneg %p336
      $region66: #{model_forward.13} parent=27 // pred_check_branch
        %463 = sbr.rel (%p461) target = $region68
      $region67: #{model_forward.13} parent=27 // pred_region
        %p464 = scmp.lt.s32.totalorder %s19, 2
        %s465 = scalar_select %p464, %s19, 2
        %s466 = smul.addr %s465, 2
        %s467 = smul.addr %s466, 8
        %s468 = scalar_lea.vmem %s12, %s467
      $region68: #{model_forward.13} parent=27 // pred_fallthru
        _
    $region28: #{model_forward.13} parent=5 // pred_fallthru
      _
    %p469 = scmp.le.s32.totalorder 1, %s19
    %p470 = scmp.lt.s32.totalorder %s19, 4
    %p471 = pnand %p469, %p470
    %p472 = pneg %p471
    // Predicated region
    $region69: #{model_forward.13} parent=5 // pred_check
      _
    $region70: #{model_forward.13} parent=5 // pred_check_branch
      %474 = sbr.rel (%p471) target = $region72
    $region71: #{model_forward.13} parent=5 // pred_region
      %s475 = ssub.s32 %s19, 1
      %p476 = pneg %p40
      %p477 = pneg %p37
      %p478 = pneg %p61
      %p479 = pneg %p58
      %p480 = pneg %p82
      %p481 = pneg %p79
      %p482 = scmp.lt.s32.totalorder %s24, 2
      %s483 = scalar_select %p482, %s24, 2
      %s484 = smul.addr %s483, 6
      %s485 = smul.addr %s484, 4
      %s486 = scalar_lea.vmem %s3, %s485
      %p487 = pneg %p108
      %p488 = pneg %p105
      %p489 = scmp.lt.s32.totalorder %s24, 2
      %s490 = scalar_select %p489, %s24, 2
      %s491 = smul.addr %s490, 2
      %s492 = smul.addr %s491, 8
      %s493 = scalar_lea.vmem %s4, %s492
      %p494 = pneg %p134
      %p495 = pneg %p131
      %p496 = scmp.lt.s32.totalorder %s24, 2
      %s497 = scalar_select %p496, %s24, 2
      %s498 = smul.addr %s497, 2
      %s499 = smul.addr %s498, 4
      %s500 = scalar_lea.vmem %s5, %s499
      %p501 = pneg %p160
      %p502 = pneg %p157
      %p503 = scmp.lt.s32.totalorder %s24, 2
      %s504 = scalar_select %p503, %s24, 2
      %s505 = smul.addr %s504, 2
      %s506 = smul.addr %s505, 8
      %s507 = scalar_lea.vmem %s6, %s506
      %p508 = pneg %p186
      %p509 = pneg %p183
      %p510 = scmp.lt.s32.totalorder %s24, 2
      %s511 = scalar_select %p510, %s24, 2
      %s512 = smul.addr %s511, 4
      %s513 = scalar_lea.vmem %s7, %s512
      %p514 = pneg %p212
      %p515 = pneg %p209
      %p516 = scmp.lt.s32.totalorder %s24, 2
      %s517 = scalar_select %p516, %s24, 2
      %s518 = smul.addr %s517, 8
      %s519 = scalar_lea.vmem %s8, %s518
      %p520 = pneg %p238
      %p521 = pneg %p235
      %p522 = scmp.lt.s32.totalorder %s24, 2
      %s523 = scalar_select %p522, %s24, 2
      %s524 = smul.addr %s523, 2
      %s525 = smul.addr %s524, 4
      %s526 = scalar_lea.vmem %s9, %s525
      %p527 = pneg %p264
      %p528 = pneg %p261
      %p529 = scmp.lt.s32.totalorder %s24, 2
      %s530 = scalar_select %p529, %s24, 2
      %s531 = smul.addr %s530, 2
      %s532 = smul.addr %s531, 8
      %s533 = scalar_lea.vmem %s10, %s532
      %p534 = pneg %p290
      %p535 = pneg %p287
      %p536 = scmp.lt.s32.totalorder %s24, 2
      %s537 = scalar_select %p536, %s24, 2
      %s538 = smul.addr %s537, 2
      %s539 = smul.addr %s538, 4
      %s540 = scalar_lea.vmem %s11, %s539
      %p541 = pneg %p316
      %p542 = pneg %p313
      %p543 = scmp.lt.s32.totalorder %s24, 2
      %s544 = scalar_select %p543, %s24, 2
      %s545 = smul.addr %s544, 2
      %s546 = smul.addr %s545, 8
      %s547 = scalar_lea.vmem %s12, %s546
      %p548 = pneg %p342
      %p549 = pneg %p339
      %p550 = pneg %p363
      %p551 = pneg %p360
      %p552 = scmp.lt.s32.totalorder %s24, 2
      %s553 = scalar_select %p552, %s24, 2
      %s554 = smul.addr %s553, 6
      %s555 = smul.addr %s554, 4
      %s556 = scalar_lea.vmem %s3, %s555
      %p557 = scmp.lt.s32.totalorder %s24, 2
      %s558 = scalar_select %p557, %s24, 2
      %s559 = smul.addr %s558, 2
      %s560 = smul.addr %s559, 8
      %s561 = scalar_lea.vmem %s4, %s560
      %p562 = scmp.lt.s32.totalorder %s24, 2
      %s563 = scalar_select %p562, %s24, 2
      %s564 = smul.addr %s563, 2
      %s565 = smul.addr %s564, 4
      %s566 = scalar_lea.vmem %s5, %s565
      %p567 = scmp.lt.s32.totalorder %s24, 2
      %s568 = scalar_select %p567, %s24, 2
      %s569 = smul.addr %s568, 2
      %s570 = smul.addr %s569, 8
      %s571 = scalar_lea.vmem %s6, %s570
      %p572 = scmp.lt.s32.totalorder %s24, 2
      %s573 = scalar_select %p572, %s24, 2
      %s574 = smul.addr %s573, 4
      %s575 = scalar_lea.vmem %s7, %s574
      %p576 = scmp.lt.s32.totalorder %s24, 2
      %s577 = scalar_select %p576, %s24, 2
      %s578 = smul.addr %s577, 8
      %s579 = scalar_lea.vmem %s8, %s578
      %p580 = scmp.lt.s32.totalorder %s24, 2
      %s581 = scalar_select %p580, %s24, 2
      %s582 = smul.addr %s581, 2
      %s583 = smul.addr %s582, 4
      %s584 = scalar_lea.vmem %s9, %s583
      %p585 = scmp.lt.s32.totalorder %s24, 2
      %s586 = scalar_select %p585, %s24, 2
      %s587 = smul.addr %s586, 2
      %s588 = smul.addr %s587, 8
      %s589 = scalar_lea.vmem %s10, %s588
      %p590 = scmp.lt.s32.totalorder %s24, 2
      %s591 = scalar_select %p590, %s24, 2
      %s592 = smul.addr %s591, 2
      %s593 = smul.addr %s592, 4
      %s594 = scalar_lea.vmem %s11, %s593
      %p595 = scmp.lt.s32.totalorder %s24, 2
      %s596 = scalar_select %p595, %s24, 2
      %s597 = smul.addr %s596, 2
      %s598 = smul.addr %s597, 8
      %s599 = scalar_lea.vmem %s12, %s598
      %s601 = sshll.u32 1, %s24
      %s602 = sshra.s32 %s601, 1
      %p603 = scmp.eq.s32.totalorder %s24, 0
      // Predicated region
      $region73: #{model_forward.13} parent=71 // pred_check
        %p604 = pneg %p603
      $region74: #{model_forward.13} parent=71 // pred_check_branch
        %606 = sbr.rel (%p604) target = $region76
      $region75: #{model_forward.13} parent=71 // pred_region
        %v607 = vld [vmem:[%s0] sm:$0xff]
        %v608 = vld [vmem:[%s0 + $0x8] sm:$0xff]
        %609 = vst [vmem:[#allocation2] sm:$0xff] %v607
        %610 = vst [vmem:[#allocation2 + $0x8] sm:$0xff] %v608
      $region76: #{model_forward.13} parent=71 // pred_fallthru
        _
      %v611 = vld [vmem:[#allocation2] sm:$0xff]
      %v612 = vld [vmem:[#allocation2 + $0x8] sm:$0xff]
      %v613 = vld [vmem:[%s2] sm:$0x1]
      %v614 = vlaneseq
      %v615 = vand.u32 %v614, 127
      %vm616 = vcmp.lt.s32.totalorder %v615, 44
      %v617 = vsel %vm616, 1, 0
      %v618 = vcvt.s32.f32 %v617
      %v619 = vld [vmem:[%s556] sm:$0xf]
      %v620 = vld [vmem:[%s556 + $0x4] sm:$0xf]
      %v621 = vld [vmem:[%s556 + $0x8] sm:$0xf]
      %v622 = vld [vmem:[%s556 + $0xc] sm:$0xf]
      %v623 = vld [vmem:[%s556 + $0x10] sm:$0xf]
      %v624 = vld [vmem:[%s556 + $0x14] sm:$0xf]
      %v625 = vpack.c.bf16 %v612, %v611
      %v632 = vunpack.c.l.b16 %v619
      %v633 = vunpack.c.l.b16 %v620
      %v634 = vunpack.c.l.b16 %v621
      %v635 = vunpack.c.l.b16 %v622
      %v636 = vunpack.c.l.b16 %v623
      %v637 = vunpack.c.l.b16 %v624
      %v638 = vpack.c.b16 %v633, %v632
      %v639 = vpack.c.b16 %v635, %v634
      %v640 = vpack.c.b16 %v637, %v636
      %vm641 = vcmask 130048
      %v643 = vsel %vm641, %v638, 0
      %v646 = vsel %vm641, %v639, 0
      %v649 = vsel %vm641, %v640, 0
      %651 = vmatprep.subr.bf16.mxu0 0
      %652 = vmatpush1.bf16.msra.mxu0 %v625
      %653 = vmatprep.subr.bf16.mxu0 0
      %654 = vmatpush1.bf16.msra.mxu0 0
      %655 = vmatprep.subr.bf16.mxu0 0
      %656 = vmatpush1.bf16.msra.mxu0 0
      %657 = vmatprep.subr.bf16.mxu0 0
      %658 = vmatpush1.bf16.msra.mxu0 0
      %659 = vmatprep.subr.bf16.mxu0 0
      %660 = vmatpush1.bf16.msra.mxu0 0
      %661 = vmatprep.subr.bf16.mxu0 0
      %662 = vmatpush1.bf16.msra.mxu0 0
      %663 = vmatprep.subr.bf16.mxu0 0
      %664 = vmatpush1.bf16.msra.mxu0 0
      %665 = vmatprep.subr.bf16.mxu0 0
      %666 = vmatpush1.bf16.msra.mxu0 0
      %667 = vmatprep.subr.bf16.mxu0 0
      %668 = vmatpush1.bf16.msra.mxu0 0
      %669 = vmatprep.subr.bf16.mxu0 0
      %670 = vmatpush1.bf16.msra.mxu0 0
      %671 = vmatprep.subr.bf16.mxu0 0
      %672 = vmatpush1.bf16.msra.mxu0 0
      %673 = vmatprep.subr.bf16.mxu0 0
      %674 = vmatpush1.bf16.msra.mxu0 0
      %675 = vmatprep.subr.bf16.mxu0 0
      %676 = vmatpush1.bf16.msra.mxu0 0
      %677 = vmatprep.subr.bf16.mxu0 0
      %678 = vmatpush1.bf16.msra.mxu0 0
      %679 = vmatprep.subr.bf16.mxu0 0
      %680 = vmatpush1.bf16.msra.mxu0 0
      %681 = vmatprep.subr.bf16.mxu0 0
      %682 = vmatpush1.bf16.msra.mxu0 0
      %683 = vmatprep.mubr.bf16.mxu0 0
      %684 = vmatmul.mubr.bf16.gmra.mrb[0].mxu0 %v643
      %v685 = vpop.f32.mrb[0].mxu0
      %v686 = vadd.f32 0.0, %v685
      %v687 = vpop.f32.mrb[0].mxu0
      %v688 = vpop.f32.mrb[0].mxu0
      %v689 = vadd.f32 0.0, %v688
      %v690 = vpop.f32.mrb[0].mxu0
      %691 = vmatprep.mubr.bf16.mxu0 0
      %692 = vmatmul.mubr.bf16.gmra.mrb[0].mxu0 %v646
      %v693 = vpop.f32.mrb[0].mxu0
      %v694 = vadd.f32 0.0, %v693
      %v695 = vpop.f32.mrb[0].mxu0
      %v696 = vpop.f32.mrb[0].mxu0
      %v697 = vadd.f32 0.0, %v696
      %v698 = vpop.f32.mrb[0].mxu0
      %699 = vmatprep.mubr.bf16.mxu0 0
      %700 = vmatmul.mubr.bf16.gmra.mrb[0].mxu0 %v649
      %v701 = vpop.f32.mrb[0].mxu0
      %v702 = vadd.f32 0.0, %v701
      %v703 = vpop.f32.mrb[0].mxu0
      %v704 = vpop.f32.mrb[0].mxu0
      %v705 = vadd.f32 0.0, %v704
      %v706 = vpop.f32.mrb[0].mxu0
      %707 = vdwg.mxu0
      %s708 = sand.u32 %s601, 127
      %s709 = sand.u32 %s708, 127
      %710 = vrot.lane.b32.xlu0 %v686, %s709
      %v711 = vpop.permute.xlu0 %710
      %712 = vrot.lane.b32.xlu0 %v689, %s709
      %v713 = vpop.permute.xlu0 %712
      %v714 = vstv %s601
      %vm715 = vcmp.ge.s32.totalorder %v615, %v714
      %v716 = vsel %vm715, 1, 0
      %vm717 = vcmp.eq.s32.totalorder %v716, 1
      %v718 = vsel %vm717, %v711, 0.0
      %v719 = vsel %vm717, %v713, 0.0
      %s720 = ssub.s32 128, %s601
      %s721 = sand.u32 %s720, 127
      %s722 = sand.u32 %s721, 127
      %723 = vrot.lane.b32.xlu0 %v702, %s722
      %v724 = vpop.permute.xlu0 %723
      %725 = vrot.lane.b32.xlu0 %v705, %s722
      %v726 = vpop.permute.xlu0 %725
      %v727 = vstv %s720
      %vm728 = vcmp.lt.s32.totalorder %v615, %v727
      %v729 = vsel %vm728, 1, 0
      %vm730 = vcmp.eq.s32.totalorder %v729, 1
      %v731 = vsel %vm730, %v724, 0.0
      %v732 = vsel %vm730, %v726, 0.0
      %v733 = vadd.f32 %v694, %v718
      %v734 = vadd.f32 %v697, %v719
      %v735 = vadd.f32 %v733, %v731
      %v736 = vadd.f32 %v734, %v732
      %v737 = vld [vmem:[%s561] sm:$0xff]
      %v738 = vld [vmem:[%s561 + $0x8] sm:$0xff]
      %740 = vset.pattern.permute.xlu0 0
      %741 = vperm.xlu0 %740, %v737
      %v742 = vpop.permute.xlu0 %741
      %745 = vset.pattern.permute.xlu0 0
      %746 = vperm.xlu0 %745, %v738
      %v747 = vpop.permute.xlu0 %746
      %v749 = vadd.f32 %v735, %v742
      %v750 = vadd.f32 %v736, %v747
      %v751 = vmax.f32 %v749, 0.0
      %v752 = vmax.f32 %v750, 0.0
      %v753 = vmul.f32 %v751, %v618
      %v754 = vmul.f32 %v752, %v618
      %755 = vadd.xlane.f32.xlu0 %v753
      %v756 = vpop.xlane.xlu0 %755
      %757 = vadd.xlane.f32.xlu0 %v754
      %v758 = vpop.xlane.xlu0 %757
      %v759 = vmul.f32 %v756, 0.022727273
      %v760 = vmul.f32 %v758, 0.022727273
      %v761 = vsub.f32 %v751, %v759
      %v762 = vsub.f32 %v752, %v760
      %v763 = vmul.f32 %v761, %v761
      %v764 = vmul.f32 %v762, %v762
      %v765 = vmul.f32 %v763, %v618
      %v766 = vmul.f32 %v764, %v618
      %767 = vadd.xlane.f32.xlu0 %v765
      %v768 = vpop.xlane.xlu0 %767
      %769 = vadd.xlane.f32.xlu0 %v766
      %v770 = vpop.xlane.xlu0 %769
      %v771 = vmul.f32 %v768, 0.022727273
      %v772 = vmul.f32 %v770, 0.022727273
      %v773 = vadd.f32 %v771, 1e-05
      %v774 = vadd.f32 %v772, 1e-05
      %v775 = vrsqrt.pop %v773
      %v776 = vrsqrt.pop %v774
      %v777 = vmul.f32 %v761, %v775
      %v778 = vmul.f32 %v762, %v776
      %v779 = vpack.c.bf16 %v778, %v777
      %v780 = vld [vmem:[%s566] sm:$0xf]
      %v781 = vld [vmem:[%s566 + $0x4] sm:$0xf]
      %v782 = vld [vmem:[%s571] sm:$0xff]
      %v783 = vld [vmem:[%s571 + $0x8] sm:$0xff]
      %785 = vset.pattern.permute.xlu0 0
      %786 = vperm.xlu0 %785, %v782
      %v787 = vpop.permute.xlu0 %786
      %790 = vset.pattern.permute.xlu0 0
      %791 = vperm.xlu0 %790, %v783
      %v792 = vpop.permute.xlu0 %791
      %v796 = vunpack.c.l.b16 %v780
      %v797 = vunpack.c.l.b16 %v781
      %v798 = vpack.c.b16 %v797, %v796
      %v800 = vsel %vm641, %v798, 0
      %802 = vmatprep.subr.bf16.mxu0 0
      %803 = vmatpush1.bf16.msra.mxu0 %v779
      %804 = vmatprep.subr.bf16.mxu0 0
      %805 = vmatpush1.bf16.msra.mxu0 0
      %806 = vmatprep.subr.bf16.mxu0 0
      %807 = vmatpush1.bf16.msra.mxu0 0
      %808 = vmatprep.subr.bf16.mxu0 0
      %809 = vmatpush1.bf16.msra.mxu0 0
      %810 = vmatprep.subr.bf16.mxu0 0
      %811 = vmatpush1.bf16.msra.mxu0 0
      %812 = vmatprep.subr.bf16.mxu0 0
      %813 = vmatpush1.bf16.msra.mxu0 0
      %814 = vmatprep.subr.bf16.mxu0 0
      %815 = vmatpush1.bf16.msra.mxu0 0
      %816 = vmatprep.subr.bf16.mxu0 0
      %817 = vmatpush1.bf16.msra.mxu0 0
      %818 = vmatprep.subr.bf16.mxu0 0
      %819 = vmatpush1.bf16.msra.mxu0 0
      %820 = vmatprep.subr.bf16.mxu0 0
      %821 = vmatpush1.bf16.msra.mxu0 0
      %822 = vmatprep.subr.bf16.mxu0 0
      %823 = vmatpush1.bf16.msra.mxu0 0
      %824 = vmatprep.subr.bf16.mxu0 0
      %825 = vmatpush1.bf16.msra.mxu0 0
      %826 = vmatprep.subr.bf16.mxu0 0
      %827 = vmatpush1.bf16.msra.mxu0 0
      %828 = vmatprep.subr.bf16.mxu0 0
      %829 = vmatpush1.bf16.msra.mxu0 0
      %830 = vmatprep.subr.bf16.mxu0 0
      %831 = vmatpush1.bf16.msra.mxu0 0
      %832 = vmatprep.subr.bf16.mxu0 0
      %833 = vmatpush1.bf16.msra.mxu0 0
      %834 = vmatprep.mubr.bf16.mxu0 0
      %835 = vmatmul.mubr.bf16.gmra.mrb[0].mxu0 %v800
      %v836 = vpop.f32.mrb[0].mxu0
      %v837 = vadd.f32 %v787, %v836
      %v838 = vpop.f32.mrb[0].mxu0
      %v839 = vpop.f32.mrb[0].mxu0
      %v840 = vadd.f32 %v792, %v839
      %v841 = vpop.f32.mrb[0].mxu0
      %842 = vdwg.mxu0
      %v843 = vmul.f32 %v840, %v618
      %v844 = vld [vmem:[%s1] sm:$0xff]
      %v845 = vld [vmem:[%s1 + $0x8] sm:$0xff]
      %v847 = vlaneseq
      %v848 = vshrl.u32 %v847, 7
      %v849 = vsub.s32 0, %v848
      %v850 = vrot.slane %v613, %v849
      %v852 = vmul.f32 %v844, %v850
      %v853 = vmul.f32 %v845, %v850
      %v854 = vpack.c.bf16 %v853, %v852
      %v855 = vld [vmem:[%s575] sm:$0xf]
      %v856 = vld [vmem:[%s579] sm:$0xff]
      %858 = vset.pattern.permute.xlu0 0
      %859 = vperm.xlu0 %858, %v856
      %v860 = vpop.permute.xlu0 %859
      %v863 = vsel %vm641, %v855, 0
      %865 = vmatprep.subr.bf16.mxu0 0
      %866 = vmatpush1.bf16.msra.mxu0 %v854
      %867 = vmatprep.subr.bf16.mxu0 0
      %868 = vmatpush1.bf16.msra.mxu0 0
      %869 = vmatprep.subr.bf16.mxu0 0
      %870 = vmatpush1.bf16.msra.mxu0 0
      %871 = vmatprep.subr.bf16.mxu0 0
      %872 = vmatpush1.bf16.msra.mxu0 0
      %873 = vmatprep.subr.bf16.mxu0 0
      %874 = vmatpush1.bf16.msra.mxu0 0
      %875 = vmatprep.subr.bf16.mxu0 0
      %876 = vmatpush1.bf16.msra.mxu0 0
      %877 = vmatprep.subr.bf16.mxu0 0
      %878 = vmatpush1.bf16.msra.mxu0 0
      %879 = vmatprep.subr.bf16.mxu0 0
      %880 = vmatpush1.bf16.msra.mxu0 0
      %881 = vmatprep.subr.bf16.mxu0 0
      %882 = vmatpush1.bf16.msra.mxu0 0
      %883 = vmatprep.subr.bf16.mxu0 0
      %884 = vmatpush1.bf16.msra.mxu0 0
      %885 = vmatprep.subr.bf16.mxu0 0
      %886 = vmatpush1.bf16.msra.mxu0 0
      %887 = vmatprep.subr.bf16.mxu0 0
      %888 = vmatpush1.bf16.msra.mxu0 0
      %889 = vmatprep.subr.bf16.mxu0 0
      %890 = vmatpush1.bf16.msra.mxu0 0
      %891 = vmatprep.subr.bf16.mxu0 0
      %892 = vmatpush1.bf16.msra.mxu0 0
      %893 = vmatprep.subr.bf16.mxu0 0
      %894 = vmatpush1.bf16.msra.mxu0 0
      %895 = vmatprep.subr.bf16.mxu0 0
      %896 = vmatpush1.bf16.msra.mxu0 0
      %897 = vmatprep.mubr.bf16.mxu0 0
      %898 = vmatmul.mubr.bf16.gmra.mrb[0].mxu0 %v863
      %v899 = vpop.f32.mrb[0].mxu0
      %v900 = vadd.f32 %v860, %v899
      %v901 = vpop.f32.mrb[0].mxu0
      %v902 = vpop.f32.mrb[0].mxu0
      %v903 = vpop.f32.mrb[0].mxu0
      %904 = vdwg.mxu0
      %v905 = vmul.f32 %v900, %v618
      %v906 = vlaneseq
      %v907 = vshrl.u32 %v906, 7
      %v908 = vadd.s32 %v907, 8
      %v909 = vadd.s32 %v907, 16
      %v910 = vadd.s32 %v907, 24
      %v911 = vadd.s32 %v907, 32
      %v912 = vadd.s32 %v907, 40
      %v913 = vadd.s32 %v907, 48
      %v914 = vadd.s32 %v907, 56
      %v915 = vadd.s32 %v907, 64
      %v916 = vadd.s32 %v907, 72
      %v917 = vadd.s32 %v907, 80
      %v918 = vadd.s32 %v907, 88
      %v919 = vadd.s32 %v907, 96
      %v920 = vadd.s32 %v907, 104
      %v921 = vadd.s32 %v907, 112
      %v922 = vadd.s32 %v907, 120
      %v923 = vpack.c.bf16 %v837, %v837
      %v924 = vpack.c.bf16 %v843, %v843
      %s925 = ssub.s32 %s601, 1
      %v926 = vstv %s925
      %v927 = vand.u32 %v907, %v926
      %v928 = vand.u32 %v908, %v926
      %v929 = vand.u32 %v909, %v926
      %v930 = vand.u32 %v910, %v926
      %v931 = vand.u32 %v911, %v926
      %v932 = vand.u32 %v912, %v926
      %v933 = vand.u32 %v913, %v926
      %v934 = vand.u32 %v914, %v926
      %v935 = vand.u32 %v915, %v926
      %v936 = vand.u32 %v916, %v926
      %v937 = vand.u32 %v917, %v926
      %v938 = vand.u32 %v918, %v926
      %v939 = vand.u32 %v919, %v926
      %v940 = vand.u32 %v920, %v926
      %v941 = vand.u32 %v921, %v926
      %v942 = vand.u32 %v922, %v926
      %v943 = vsub.s32 %v907, %v927
      %v944 = vsub.s32 %v908, %v928
      %v945 = vsub.s32 %v909, %v929
      %v946 = vsub.s32 %v910, %v930
      %v947 = vsub.s32 %v911, %v931
      %v948 = vsub.s32 %v912, %v932
      %v949 = vsub.s32 %v913, %v933
      %v950 = vsub.s32 %v914, %v934
      %v951 = vsub.s32 %v915, %v935
      %v952 = vsub.s32 %v916, %v936
      %v953 = vsub.s32 %v917, %v937
      %v954 = vsub.s32 %v918, %v938
      %v955 = vsub.s32 %v919, %v939
      %v956 = vsub.s32 %v920, %v940
      %v957 = vsub.s32 %v921, %v941
      %v958 = vsub.s32 %v922, %v942
      %v959 = vstv %s602
      %v960 = vsub.s32 %v943, %v959
      %v961 = vsub.s32 %v944, %v959
      %v962 = vsub.s32 %v945, %v959
      %v963 = vsub.s32 %v946, %v959
      %v964 = vsub.s32 %v947, %v959
      %v965 = vsub.s32 %v948, %v959
      %v966 = vsub.s32 %v949, %v959
      %v967 = vsub.s32 %v950, %v959
      %v968 = vsub.s32 %v951, %v959
      %v969 = vsub.s32 %v952, %v959
      %v970 = vsub.s32 %v953, %v959
      %v971 = vsub.s32 %v954, %v959
      %v972 = vsub.s32 %v955, %v959
      %v973 = vsub.s32 %v956, %v959
      %v974 = vsub.s32 %v957, %v959
      %v975 = vsub.s32 %v958, %v959
      %vm976 = vcmp.ge.s32.totalorder %v615, %v960
      %vm977 = vcmp.ge.s32.totalorder %v615, %v961
      %vm978 = vcmp.ge.s32.totalorder %v615, %v962
      %vm979 = vcmp.ge.s32.totalorder %v615, %v963
      %vm980 = vcmp.ge.s32.totalorder %v615, %v964
      %vm981 = vcmp.ge.s32.totalorder %v615, %v965
      %vm982 = vcmp.ge.s32.totalorder %v615, %v966
      %vm983 = vcmp.ge.s32.totalorder %v615, %v967
      %vm984 = vcmp.ge.s32.totalorder %v615, %v968
      %vm985 = vcmp.ge.s32.totalorder %v615, %v969
      %vm986 = vcmp.ge.s32.totalorder %v615, %v970
      %vm987 = vcmp.ge.s32.totalorder %v615, %v971
      %vm988 = vcmp.ge.s32.totalorder %v615, %v972
      %vm989 = vcmp.ge.s32.totalorder %v615, %v973
      %vm990 = vcmp.ge.s32.totalorder %v615, %v974
      %vm991 = vcmp.ge.s32.totalorder %v615, %v975
      %v992 = vadd.s32 %v943, %v714
      %v993 = vadd.s32 %v944, %v714
      %v994 = vadd.s32 %v945, %v714
      %v995 = vadd.s32 %v946, %v714
      %v996 = vadd.s32 %v947, %v714
      %v997 = vadd.s32 %v948, %v714
      %v998 = vadd.s32 %v949, %v714
      %v999 = vadd.s32 %v950, %v714
      %v1000 = vadd.s32 %v951, %v714
      %v1001 = vadd.s32 %v952, %v714
      %v1002 = vadd.s32 %v953, %v714
      %v1003 = vadd.s32 %v954, %v714
      %v1004 = vadd.s32 %v955, %v714
      %v1005 = vadd.s32 %v956, %v714
      %v1006 = vadd.s32 %v957, %v714
      %v1007 = vadd.s32 %v958, %v714
      %v1008 = vadd.s32 %v992, %v959
      %v1009 = vadd.s32 %v993, %v959
      %v1010 = vadd.s32 %v994, %v959
      %v1011 = vadd.s32 %v995, %v959
      %v1012 = vadd.s32 %v996, %v959
      %v1013 = vadd.s32 %v997, %v959
      %v1014 = vadd.s32 %v998, %v959
      %v1015 = vadd.s32 %v999, %v959
      %v1016 = vadd.s32 %v1000, %v959
      %v1017 = vadd.s32 %v1001, %v959
      %v1018 = vadd.s32 %v1002, %v959
      %v1019 = vadd.s32 %v1003, %v959
      %v1020 = vadd.s32 %v1004, %v959
      %v1021 = vadd.s32 %v1005, %v959
      %v1022 = vadd.s32 %v1006, %v959
      %v1023 = vadd.s32 %v1007, %v959
      %vm1024 = vcmp.lt.s32.totalorder %v615, %v1008
      %vm1025 = vcmp.lt.s32.totalorder %v615, %v1009
      %vm1026 = vcmp.lt.s32.totalorder %v615, %v1010
      %vm1027 = vcmp.lt.s32.totalorder %v615, %v1011
      %vm1028 = vcmp.lt.s32.totalorder %v615, %v1012
      %vm1029 = vcmp.lt.s32.totalorder %v615, %v1013
      %vm1030 = vcmp.lt.s32.totalorder %v615, %v1014
      %vm1031 = vcmp.lt.s32.totalorder %v615, %v1015
      %vm1032 = vcmp.lt.s32.totalorder %v615, %v1016
      %vm1033 = vcmp.lt.s32.totalorder %v615, %v1017
      %vm1034 = vcmp.lt.s32.totalorder %v615, %v1018
      %vm1035 = vcmp.lt.s32.totalorder %v615, %v1019
      %vm1036 = vcmp.lt.s32.totalorder %v615, %v1020
      %vm1037 = vcmp.lt.s32.totalorder %v615, %v1021
      %vm1038 = vcmp.lt.s32.totalorder %v615, %v1022
      %vm1039 = vcmp.lt.s32.totalorder %v615, %v1023
      %vm1040 = vmand %vm976, %vm1024
      %vm1041 = vmand %vm977, %vm1025
      %vm1042 = vmand %vm978, %vm1026
      %vm1043 = vmand %vm979, %vm1027
      %vm1044 = vmand %vm980, %vm1028
      %vm1045 = vmand %vm981, %vm1029
      %vm1046 = vmand %vm982, %vm1030
      %vm1047 = vmand %vm983, %vm1031
      %vm1048 = vmand %vm984, %vm1032
      %vm1049 = vmand %vm985, %vm1033
      %vm1050 = vmand %vm986, %vm1034
      %vm1051 = vmand %vm987, %vm1035
      %vm1052 = vmand %vm988, %vm1036
      %vm1053 = vmand %vm989, %vm1037
      %vm1054 = vmand %vm990, %vm1038
      %vm1055 = vmand %vm991, %vm1039
      %v1056 = vsub.s32 %v907, %v959
      %v1057 = vsub.s32 %v908, %v959
      %v1058 = vsub.s32 %v909, %v959
      %v1059 = vsub.s32 %v910, %v959
      %v1060 = vsub.s32 %v911, %v959
      %v1061 = vsub.s32 %v912, %v959
      %v1062 = vsub.s32 %v913, %v959
      %v1063 = vsub.s32 %v914, %v959
      %v1064 = vsub.s32 %v915, %v959
      %v1065 = vsub.s32 %v916, %v959
      %v1066 = vsub.s32 %v917, %v959
      %v1067 = vsub.s32 %v918, %v959
      %v1068 = vsub.s32 %v919, %v959
      %v1069 = vsub.s32 %v920, %v959
      %v1070 = vsub.s32 %v921, %v959
      %v1071 = vsub.s32 %v922, %v959
      %vm1072 = vcmp.ge.s32.totalorder %v615, %v1056
      %vm1073 = vcmp.ge.s32.totalorder %v615, %v1057
      %vm1074 = vcmp.ge.s32.totalorder %v615, %v1058
      %vm1075 = vcmp.ge.s32.totalorder %v615, %v1059
      %vm1076 = vcmp.ge.s32.totalorder %v615, %v1060
      %vm1077 = vcmp.ge.s32.totalorder %v615, %v1061
      %vm1078 = vcmp.ge.s32.totalorder %v615, %v1062
      %vm1079 = vcmp.ge.s32.totalorder %v615, %v1063
      %vm1080 = vcmp.ge.s32.totalorder %v615, %v1064
      %vm1081 = vcmp.ge.s32.totalorder %v615, %v1065
      %vm1082 = vcmp.ge.s32.totalorder %v615, %v1066
      %vm1083 = vcmp.ge.s32.totalorder %v615, %v1067
      %vm1084 = vcmp.ge.s32.totalorder %v615, %v1068
      %vm1085 = vcmp.ge.s32.totalorder %v615, %v1069
      %vm1086 = vcmp.ge.s32.totalorder %v615, %v1070
      %vm1087 = vcmp.ge.s32.totalorder %v615, %v1071
      %v1088 = vadd.s32 %v907, %v714
      %v1089 = vadd.s32 %v908, %v714
      %v1090 = vadd.s32 %v909, %v714
      %v1091 = vadd.s32 %v910, %v714
      %v1092 = vadd.s32 %v911, %v714
      %v1093 = vadd.s32 %v912, %v714
      %v1094 = vadd.s32 %v913, %v714
      %v1095 = vadd.s32 %v914, %v714
      %v1096 = vadd.s32 %v915, %v714
      %v1097 = vadd.s32 %v916, %v714
      %v1098 = vadd.s32 %v917, %v714
      %v1099 = vadd.s32 %v918, %v714
      %v1100 = vadd.s32 %v919, %v714
      %v1101 = vadd.s32 %v920, %v714
      %v1102 = vadd.s32 %v921, %v714
      %v1103 = vadd.s32 %v922, %v714
      %v1104 = vsub.s32 %v1088, %v959
      %v1105 = vsub.s32 %v1089, %v959
      %v1106 = vsub.s32 %v1090, %v959
      %v1107 = vsub.s32 %v1091, %v959
      %v1108 = vsub.s32 %v1092, %v959
      %v1109 = vsub.s32 %v1093, %v959
      %v1110 = vsub.s32 %v1094, %v959
      %v1111 = vsub.s32 %v1095, %v959
      %v1112 = vsub.s32 %v1096, %v959
      %v1113 = vsub.s32 %v1097, %v959
      %v1114 = vsub.s32 %v1098, %v959
      %v1115 = vsub.s32 %v1099, %v959
      %v1116 = vsub.s32 %v1100, %v959
      %v1117 = vsub.s32 %v1101, %v959
      %v1118 = vsub.s32 %v1102, %v959
      %v1119 = vsub.s32 %v1103, %v959
      %vm1120 = vcmp.lt.s32.totalorder %v615, %v1104
      %vm1121 = vcmp.lt.s32.totalorder %v615, %v1105
      %vm1122 = vcmp.lt.s32.totalorder %v615, %v1106
      %vm1123 = vcmp.lt.s32.totalorder %v615, %v1107
      %vm1124 = vcmp.lt.s32.totalorder %v615, %v1108
      %vm1125 = vcmp.lt.s32.totalorder %v615, %v1109
      %vm1126 = vcmp.lt.s32.totalorder %v615, %v1110
      %vm1127 = vcmp.lt.s32.totalorder %v615, %v1111
      %vm1128 = vcmp.lt.s32.totalorder %v615, %v1112
      %vm1129 = vcmp.lt.s32.totalorder %v615, %v1113
      %vm1130 = vcmp.lt.s32.totalorder %v615, %v1114
      %vm1131 = vcmp.lt.s32.totalorder %v615, %v1115
      %vm1132 = vcmp.lt.s32.totalorder %v615, %v1116
      %vm1133 = vcmp.lt.s32.totalorder %v615, %v1117
      %vm1134 = vcmp.lt.s32.totalorder %v615, %v1118
      %vm1135 = vcmp.lt.s32.totalorder %v615, %v1119
      %vm1136 = vmand %vm1072, %vm1120
      %vm1137 = vmand %vm1073, %vm1121
      %vm1138 = vmand %vm1074, %vm1122
      %vm1139 = vmand %vm1075, %vm1123
      %vm1140 = vmand %vm1076, %vm1124
      %vm1141 = vmand %vm1077, %vm1125
      %vm1142 = vmand %vm1078, %vm1126
      %vm1143 = vmand %vm1079, %vm1127
      %vm1144 = vmand %vm1080, %vm1128
      %vm1145 = vmand %vm1081, %vm1129
      %vm1146 = vmand %vm1082, %vm1130
      %vm1147 = vmand %vm1083, %vm1131
      %vm1148 = vmand %vm1084, %vm1132
      %vm1149 = vmand %vm1085, %vm1133
      %vm1150 = vmand %vm1086, %vm1134
      %vm1151 = vmand %vm1087, %vm1135
      %vm1152 = vcmp.gt.f32.partialorder %v613, 0.0
      %v1153 = vsel %vm1152, 1, 0
      %v1154 = vlaneseq
      %v1155 = vshrl.u32 %v1154, 7
      %v1156 = vsub.s32 0, %v1155
      %v1157 = vrot.slane %v1153, %v1156
      %vm1158 = vcmp.eq.s32.totalorder %v1157, 1
      %vm1159 = vmand %vm1136, %vm1158
      %vm1160 = vmand %vm1137, %vm1158
      %vm1161 = vmand %vm1138, %vm1158
      %vm1162 = vmand %vm1139, %vm1158
      %vm1163 = vmand %vm1140, %vm1158
      %vm1164 = vmand %vm1141, %vm1158
      %vm1165 = vmand %vm1142, %vm1158
      %vm1166 = vmand %vm1143, %vm1158
      %vm1167 = vmand %vm1144, %vm1158
      %vm1168 = vmand %vm1145, %vm1158
      %vm1169 = vmand %vm1146, %vm1158
      %vm1170 = vmand %vm1147, %vm1158
      %vm1171 = vmand %vm1148, %vm1158
      %vm1172 = vmand %vm1149, %vm1158
      %vm1173 = vmand %vm1150, %vm1158
      %vm1174 = vmand %vm1151, %vm1158
      %v1175 = vsel %vm1159, 9.999995e-07, -13.815511
      %v1176 = vsel %vm1160, 9.999995e-07, -13.815511
      %v1177 = vsel %vm1161, 9.999995e-07, -13.815511
      %v1178 = vsel %vm1162, 9.999995e-07, -13.815511
      %v1179 = vsel %vm1163, 9.999995e-07, -13.815511
      %v1180 = vsel %vm1164, 9.999995e-07, -13.815511
      %v1181 = vsel %vm1165, 9.999995e-07, -13.815511
      %v1182 = vsel %vm1166, 9.999995e-07, -13.815511
      %v1183 = vsel %vm1167, 9.999995e-07, -13.815511
      %v1184 = vsel %vm1168, 9.999995e-07, -13.815511
      %v1185 = vsel %vm1169, 9.999995e-07, -13.815511
      %v1186 = vsel %vm1170, 9.999995e-07, -13.815511
      %v1187 = vsel %vm1171, 9.999995e-07, -13.815511
      %v1188 = vsel %vm1172, 9.999995e-07, -13.815511
      %v1189 = vsel %vm1173, 9.999995e-07, -13.815511
      %v1190 = vsel %vm1174, 9.999995e-07, -13.815511
      %1191 = vxpose.xlu0.c.b16.start [1/8] %v923, 128
      %1192 = vxpose.xlu0.c.b16.cont [2/8] 0, 128
      %1193 = vxpose.xlu0.c.b16.cont [3/8] 0, 128
      %1194 = vxpose.xlu0.c.b16.cont [4/8] 0, 128
      %1195 = vxpose.xlu0.c.b16.cont [5/8] 0, 128
      %1196 = vxpose.xlu0.c.b16.cont [6/8] 0, 128
      %1197 = vxpose.xlu0.c.b16.cont [7/8] 0, 128
      %1198 = vxpose.xlu0.c.b16.end [8/8] 0, 128
      %v1199 = vpop.trf.xlu0
      %v1200 = vpop.trf.xlu0
      %v1201 = vpop.trf.xlu0
      %v1202 = vpop.trf.xlu0
      %v1203 = vpop.trf.xlu0
      %v1204 = vpop.trf.xlu0
      %v1205 = vpop.trf.xlu0
      %v1206 = vpop.trf.xlu0
      %vm1207 = vcmask 64512
      %v1209 = vsel %vm1207, %v1199, 0
      %v1212 = vsel %vm1207, %v1200, 0
      %v1215 = vsel %vm1207, %v1201, 0
      %v1218 = vsel %vm1207, %v1202, 0
      %v1221 = vsel %vm1207, %v1203, 0
      %v1224 = vsel %vm1207, %v1204, 0
      %v1227 = vsel %vm1207, %v1205, 0
      %v1230 = vsel %vm1207, %v1206, 0
      %vm1232 = vcmask 1043456
      %v1234 = vsel %vm1232, %v924, 0
      %1236 = vmatprep.subr.bf16.mxu0 0
      %1237 = vmatpush1.bf16.msra.mxu0 %v1234
      %1238 = vmatprep.subr.bf16.mxu0 0
      %1239 = vmatpush1.bf16.msra.mxu0 0
      %1240 = vmatprep.subr.bf16.mxu0 0
      %1241 = vmatpush1.bf16.msra.mxu0 0
      %1242 = vmatprep.subr.bf16.mxu0 0
      %1243 = vmatpush1.bf16.msra.mxu0 0
      %1244 = vmatprep.subr.bf16.mxu0 0
      %1245 = vmatpush1.bf16.msra.mxu0 0
      %1246 = vmatprep.subr.bf16.mxu0 0
      %1247 = vmatpush1.bf16.msra.mxu0 0
      %1248 = vmatprep.subr.bf16.mxu0 0
      %1249 = vmatpush1.bf16.msra.mxu0 0
      %1250 = vmatprep.subr.bf16.mxu0 0
      %1251 = vmatpush1.bf16.msra.mxu0 0
      %1252 = vmatprep.subr.bf16.mxu0 0
      %1253 = vmatpush1.bf16.msra.mxu0 0
      %1254 = vmatprep.subr.bf16.mxu0 0
      %1255 = vmatpush1.bf16.msra.mxu0 0
      %1256 = vmatprep.subr.bf16.mxu0 0
      %1257 = vmatpush1.bf16.msra.mxu0 0
      %1258 = vmatprep.subr.bf16.mxu0 0
      %1259 = vmatpush1.bf16.msra.mxu0 0
      %1260 = vmatprep.subr.bf16.mxu0 0
      %1261 = vmatpush1.bf16.msra.mxu0 0
      %1262 = vmatprep.subr.bf16.mxu0 0
      %1263 = vmatpush1.bf16.msra.mxu0 0
      %1264 = vmatprep.subr.bf16.mxu0 0
      %1265 = vmatpush1.bf16.msra.mxu0 0
      %1266 = vmatprep.subr.bf16.mxu0 0
      %1267 = vmatpush1.bf16.msra.mxu0 0
      %1268 = vmatprep.mubr.bf16.mxu0 0
      %1269 = vmatmul.mubr.bf16.gmra.mrb[0].mxu0 %v1209
      %v1270 = vpop.f32.mrb[0].mxu0
      %v1271 = vadd.f32 %v1175, %v1270
      %v1272 = vpop.f32.mrb[0].mxu0
      %v1273 = vpop.f32.mrb[0].mxu0
      %v1274 = vadd.f32 %v1176, %v1273
      %v1275 = vpop.f32.mrb[0].mxu0
      %1276 = vmatprep.mubr.bf16.mxu0 0
      %1277 = vmatmul.mubr.bf16.gmra.mrb[0].mxu0 %v1212
      %v1278 = vpop.f32.mrb[0].mxu0
      %v1279 = vadd.f32 %v1177, %v1278
      %v1280 = vpop.f32.mrb[0].mxu0
      %v1281 = vpop.f32.mrb[0].mxu0
      %v1282 = vadd.f32 %v1178, %v1281
      %v1283 = vpop.f32.mrb[0].mxu0
      %1284 = vmatprep.mubr.bf16.mxu0 0
      %1285 = vmatmul.mubr.bf16.gmra.mrb[0].mxu0 %v1215
      %v1286 = vpop.f32.mrb[0].mxu0
      %v1287 = vadd.f32 %v1179, %v1286
      %v1288 = vpop.f32.mrb[0].mxu0
      %v1289 = vpop.f32.mrb[0].mxu0
      %v1290 = vadd.f32 %v1180, %v1289
      %v1291 = vpop.f32.mrb[0].mxu0
      %1292 = vmatprep.mubr.bf16.mxu0 0
      %1293 = vmatmul.mubr.bf16.gmra.mrb[0].mxu0 %v1218
      %v1294 = vpop.f32.mrb[0].mxu0
      %v1295 = vadd.f32 %v1181, %v1294
      %v1296 = vpop.f32.mrb[0].mxu0
      %v1297 = vpop.f32.mrb[0].mxu0
      %v1298 = vadd.f32 %v1182, %v1297
      %v1299 = vpop.f32.mrb[0].mxu0
      %1300 = vmatprep.mubr.bf16.mxu0 0
      %1301 = vmatmul.mubr.bf16.gmra.mrb[0].mxu0 %v1221
      %v1302 = vpop.f32.mrb[0].mxu0
      %v1303 = vadd.f32 %v1183, %v1302
      %v1304 = vpop.f32.mrb[0].mxu0
      %v1305 = vpop.f32.mrb[0].mxu0
      %v1306 = vadd.f32 %v1184, %v1305
      %v1307 = vpop.f32.mrb[0].mxu0
      %1308 = vmatprep.mubr.bf16.mxu0 0
      %1309 = vmatmul.mubr.bf16.gmra.mrb[0].mxu0 %v1224
      %v1310 = vpop.f32.mrb[0].mxu0
      %v1311 = vadd.f32 %v1185, %v1310
      %v1312 = vpop.f32.mrb[0].mxu0
      %v1313 = vpop.f32.mrb[0].mxu0
      %v1314 = vadd.f32 %v1186, %v1313
      %v1315 = vpop.f32.mrb[0].mxu0
      %1316 = vmatprep.mubr.bf16.mxu0 0
      %1317 = vmatmul.mubr.bf16.gmra.mrb[0].mxu0 %v1227
      %v1318 = vpop.f32.mrb[0].mxu0
      %v1319 = vadd.f32 %v1187, %v1318
      %v1320 = vpop.f32.mrb[0].mxu0
      %v1321 = vpop.f32.mrb[0].mxu0
      %v1322 = vadd.f32 %v1188, %v1321
      %v1323 = vpop.f32.mrb[0].mxu0
      %1324 = vmatprep.mubr.bf16.mxu0 0
      %1325 = vmatmul.mubr.bf16.gmra.mrb[0].mxu0 %v1230
      %v1326 = vpop.f32.mrb[0].mxu0
      %v1327 = vadd.f32 %v1189, %v1326
      %v1328 = vpop.f32.mrb[0].mxu0
      %v1329 = vpop.f32.mrb[0].mxu0
      %v1330 = vadd.f32 %v1190, %v1329
      %v1331 = vpop.f32.mrb[0].mxu0
      %1332 = vdwg.mxu0
      %v1333 = vsel %vm1040, %v1271, -1e+30
      %v1334 = vsel %vm1041, %v1274, -1e+30
      %v1335 = vsel %vm1042, %v1279, -1e+30
      %v1336 = vsel %vm1043, %v1282, -1e+30
      %v1337 = vsel %vm1044, %v1287, -1e+30
      %v1338 = vsel %vm1045, %v1290, -1e+30
      %v1339 = vsel %vm1046, %v1295, -1e+30
      %v1340 = vsel %vm1047, %v1298, -1e+30
      %v1341 = vsel %vm1048, %v1303, -1e+30
      %v1342 = vsel %vm1049, %v1306, -1e+30
      %v1343 = vsel %vm1050, %v1311, -1e+30
      %v1344 = vsel %vm1051, %v1314, -1e+30
      %v1345 = vsel %vm1052, %v1319, -1e+30
      %v1346 = vsel %vm1053, %v1322, -1e+30
      %v1347 = vsel %vm1054, %v1327, -1e+30
      %v1348 = vsel %vm1055, %v1330, -1e+30
      %1349 = vmax.xlane.f32.xlu0 %v1333
      %v1350 = vpop.xlane.xlu0 %1349
      %1351 = vmax.xlane.f32.xlu0 %v1334
      %v1352 = vpop.xlane.xlu0 %1351
      %1353 = vmax.xlane.f32.xlu0 %v1335
      %v1354 = vpop.xlane.xlu0 %1353
      %1355 = vmax.xlane.f32.xlu0 %v1336
      %v1356 = vpop.xlane.xlu0 %1355
      %1357 = vmax.xlane.f32.xlu0 %v1337
      %v1358 = vpop.xlane.xlu0 %1357
      %1359 = vmax.xlane.f32.xlu0 %v1338
      %v1360 = vpop.xlane.xlu0 %1359
      %1361 = vmax.xlane.f32.xlu0 %v1339
      %v1362 = vpop.xlane.xlu0 %1361
      %1363 = vmax.xlane.f32.xlu0 %v1340
      %v1364 = vpop.xlane.xlu0 %1363
      %1365 = vmax.xlane.f32.xlu0 %v1341
      %v1366 = vpop.xlane.xlu0 %1365
      %1367 = vmax.xlane.f32.xlu0 %v1342
      %v1368 = vpop.xlane.xlu0 %1367
      %1369 = vmax.xlane.f32.xlu0 %v1343
      %v1370 = vpop.xlane.xlu0 %1369
      %1371 = vmax.xlane.f32.xlu0 %v1344
      %v1372 = vpop.xlane.xlu0 %1371
      %1373 = vmax.xlane.f32.xlu0 %v1345
      %v1374 = vpop.xlane.xlu0 %1373
      %1375 = vmax.xlane.f32.xlu0 %v1346
      %v1376 = vpop.xlane.xlu0 %1375
      %1377 = vmax.xlane.f32.xlu0 %v1347
      %v1378 = vpop.xlane.xlu0 %1377
      %1379 = vmax.xlane.f32.xlu0 %v1348
      %v1380 = vpop.xlane.xlu0 %1379
      %v1381 = vsub.f32 %v1333, %v1350
      %v1382 = vsub.f32 %v1334, %v1352
      %v1383 = vsub.f32 %v1335, %v1354
      %v1384 = vsub.f32 %v1336, %v1356
      %v1385 = vsub.f32 %v1337, %v1358
      %v1386 = vsub.f32 %v1338, %v1360
      %v1387 = vsub.f32 %v1339, %v1362
      %v1388 = vsub.f32 %v1340, %v1364
      %v1389 = vsub.f32 %v1341, %v1366
      %v1390 = vsub.f32 %v1342, %v1368
      %v1391 = vsub.f32 %v1343, %v1370
      %v1392 = vsub.f32 %v1344, %v1372
      %v1393 = vsub.f32 %v1345, %v1374
      %v1394 = vsub.f32 %v1346, %v1376
      %v1395 = vsub.f32 %v1347, %v1378
      %v1396 = vsub.f32 %v1348, %v1380
      %v1397 = vmul.f32 %v1381, 1.442695
      %v1398 = vpow.pop %v1397
      %v1399 = vmul.f32 %v1382, 1.442695
      %v1400 = vpow.pop %v1399
      %v1401 = vmul.f32 %v1383, 1.442695
      %v1402 = vpow.pop %v1401
      %v1403 = vmul.f32 %v1384, 1.442695
      %v1404 = vpow.pop %v1403
      %v1405 = vmul.f32 %v1385, 1.442695
      %v1406 = vpow.pop %v1405
      %v1407 = vmul.f32 %v1386, 1.442695
      %v1408 = vpow.pop %v1407
      %v1409 = vmul.f32 %v1387, 1.442695
      %v1410 = vpow.pop %v1409
      %v1411 = vmul.f32 %v1388, 1.442695
      %v1412 = vpow.pop %v1411
      %v1413 = vmul.f32 %v1389, 1.442695
      %v1414 = vpow.pop %v1413
      %v1415 = vmul.f32 %v1390, 1.442695
      %v1416 = vpow.pop %v1415
      %v1417 = vmul.f32 %v1391, 1.442695
      %v1418 = vpow.pop %v1417
      %v1419 = vmul.f32 %v1392, 1.442695
      %v1420 = vpow.pop %v1419
      %v1421 = vmul.f32 %v1393, 1.442695
      %v1422 = vpow.pop %v1421
      %v1423 = vmul.f32 %v1394, 1.442695
      %v1424 = vpow.pop %v1423
      %v1425 = vmul.f32 %v1395, 1.442695
      %v1426 = vpow.pop %v1425
      %v1427 = vmul.f32 %v1396, 1.442695
      %v1428 = vpow.pop %v1427
      %1429 = vadd.xlane.f32.xlu0 %v1398
      %v1430 = vpop.xlane.xlu0 %1429
      %1431 = vadd.xlane.f32.xlu0 %v1400
      %v1432 = vpop.xlane.xlu0 %1431
      %1433 = vadd.xlane.f32.xlu0 %v1402
      %v1434 = vpop.xlane.xlu0 %1433
      %1435 = vadd.xlane.f32.xlu0 %v1404
      %v1436 = vpop.xlane.xlu0 %1435
      %1437 = vadd.xlane.f32.xlu0 %v1406
      %v1438 = vpop.xlane.xlu0 %1437
      %1439 = vadd.xlane.f32.xlu0 %v1408
      %v1440 = vpop.xlane.xlu0 %1439
      %1441 = vadd.xlane.f32.xlu0 %v1410
      %v1442 = vpop.xlane.xlu0 %1441
      %1443 = vadd.xlane.f32.xlu0 %v1412
      %v1444 = vpop.xlane.xlu0 %1443
      %1445 = vadd.xlane.f32.xlu0 %v1414
      %v1446 = vpop.xlane.xlu0 %1445
      %1447 = vadd.xlane.f32.xlu0 %v1416
      %v1448 = vpop.xlane.xlu0 %1447
      %1449 = vadd.xlane.f32.xlu0 %v1418
      %v1450 = vpop.xlane.xlu0 %1449
      %1451 = vadd.xlane.f32.xlu0 %v1420
      %v1452 = vpop.xlane.xlu0 %1451
      %1453 = vadd.xlane.f32.xlu0 %v1422
      %v1454 = vpop.xlane.xlu0 %1453
      %1455 = vadd.xlane.f32.xlu0 %v1424
      %v1456 = vpop.xlane.xlu0 %1455
      %1457 = vadd.xlane.f32.xlu0 %v1426
      %v1458 = vpop.xlane.xlu0 %1457
      %1459 = vadd.xlane.f32.xlu0 %v1428
      %v1460 = vpop.xlane.xlu0 %1459
      %vm1461 = vcmp.lt.s32.totalorder %v907, %v714
      %vm1462 = vcmp.lt.s32.totalorder %v908, %v714
      %vm1463 = vcmp.lt.s32.totalorder %v909, %v714
      %vm1464 = vcmp.lt.s32.totalorder %v910, %v714
      %vm1465 = vcmp.lt.s32.totalorder %v911, %v714
      %vm1466 = vcmp.lt.s32.totalorder %v912, %v714
      %vm1467 = vcmp.lt.s32.totalorder %v913, %v714
      %vm1468 = vcmp.lt.s32.totalorder %v914, %v714
      %vm1469 = vcmp.lt.s32.totalorder %v915, %v714
      %vm1470 = vcmp.lt.s32.totalorder %v916, %v714
      %vm1471 = vcmp.lt.s32.totalorder %v917, %v714
      %vm1472 = vcmp.lt.s32.totalorder %v918, %v714
      %vm1473 = vcmp.lt.s32.totalorder %v919, %v714
      %vm1474 = vcmp.lt.s32.totalorder %v920, %v714
      %vm1475 = vcmp.lt.s32.totalorder %v921, %v714
      %vm1476 = vcmp.lt.s32.totalorder %v922, %v714
      %s1477 = scvt.s32.f32 %s602
      %v1478 = vstv %s1477
      %v1479 = vsel %vm1461, %v1478, 0.0
      %v1480 = vsel %vm1462, %v1478, 0.0
      %v1481 = vsel %vm1463, %v1478, 0.0
      %v1482 = vsel %vm1464, %v1478, 0.0
      %v1483 = vsel %vm1465, %v1478, 0.0
      %v1484 = vsel %vm1466, %v1478, 0.0
      %v1485 = vsel %vm1467, %v1478, 0.0
      %v1486 = vsel %vm1468, %v1478, 0.0
      %v1487 = vsel %vm1469, %v1478, 0.0
      %v1488 = vsel %vm1470, %v1478, 0.0
      %v1489 = vsel %vm1471, %v1478, 0.0
      %v1490 = vsel %vm1472, %v1478, 0.0
      %v1491 = vsel %vm1473, %v1478, 0.0
      %v1492 = vsel %vm1474, %v1478, 0.0
      %v1493 = vsel %vm1475, %v1478, 0.0
      %v1494 = vsel %vm1476, %v1478, 0.0
      %v1495 = vsub.f32 -13.815511, %v1350
      %v1496 = vsub.f32 -13.815511, %v1352
      %v1497 = vsub.f32 -13.815511, %v1354
      %v1498 = vsub.f32 -13.815511, %v1356
      %v1499 = vsub.f32 -13.815511, %v1358
      %v1500 = vsub.f32 -13.815511, %v1360
      %v1501 = vsub.f32 -13.815511, %v1362
      %v1502 = vsub.f32 -13.815511, %v1364
      %v1503 = vsub.f32 -13.815511, %v1366
      %v1504 = vsub.f32 -13.815511, %v1368
      %v1505 = vsub.f32 -13.815511, %v1370
      %v1506 = vsub.f32 -13.815511, %v1372
      %v1507 = vsub.f32 -13.815511, %v1374
      %v1508 = vsub.f32 -13.815511, %v1376
      %v1509 = vsub.f32 -13.815511, %v1378
      %v1510 = vsub.f32 -13.815511, %v1380
      %v1511 = vmul.f32 %v1495, 1.442695
      %v1512 = vpow.pop %v1511
      %v1513 = vmul.f32 %v1496, 1.442695
      %v1514 = vpow.pop %v1513
      %v1515 = vmul.f32 %v1497, 1.442695
      %v1516 = vpow.pop %v1515
      %v1517 = vmul.f32 %v1498, 1.442695
      %v1518 = vpow.pop %v1517
      %v1519 = vmul.f32 %v1499, 1.442695
      %v1520 = vpow.pop %v1519
      %v1521 = vmul.f32 %v1500, 1.442695
      %v1522 = vpow.pop %v1521
      %v1523 = vmul.f32 %v1501, 1.442695
      %v1524 = vpow.pop %v1523
      %v1525 = vmul.f32 %v1502, 1.442695
      %v1526 = vpow.pop %v1525
      %v1527 = vmul.f32 %v1503, 1.442695
      %v1528 = vpow.pop %v1527
      %v1529 = vmul.f32 %v1504, 1.442695
      %v1530 = vpow.pop %v1529
      %v1531 = vmul.f32 %v1505, 1.442695
      %v1532 = vpow.pop %v1531
      %v1533 = vmul.f32 %v1506, 1.442695
      %v1534 = vpow.pop %v1533
      %v1535 = vmul.f32 %v1507, 1.442695
      %v1536 = vpow.pop %v1535
      %v1537 = vmul.f32 %v1508, 1.442695
      %v1538 = vpow.pop %v1537
      %v1539 = vmul.f32 %v1509, 1.442695
      %v1540 = vpow.pop %v1539
      %v1541 = vmul.f32 %v1510, 1.442695
      %v1542 = vpow.pop %v1541
      %v1543 = vmul.f32 %v1479, %v1512
      %v1544 = vmul.f32 %v1480, %v1514
      %v1545 = vmul.f32 %v1481, %v1516
      %v1546 = vmul.f32 %v1482, %v1518
      %v1547 = vmul.f32 %v1483, %v1520
      %v1548 = vmul.f32 %v1484, %v1522
      %v1549 = vmul.f32 %v1485, %v1524
      %v1550 = vmul.f32 %v1486, %v1526
      %v1551 = vmul.f32 %v1487, %v1528
      %v1552 = vmul.f32 %v1488, %v1530
      %v1553 = vmul.f32 %v1489, %v1532
      %v1554 = vmul.f32 %v1490, %v1534
      %v1555 = vmul.f32 %v1491, %v1536
      %v1556 = vmul.f32 %v1492, %v1538
      %v1557 = vmul.f32 %v1493, %v1540
      %v1558 = vmul.f32 %v1494, %v1542
      %v1559 = vadd.f32 %v1430, %v1543
      %v1560 = vadd.f32 %v1432, %v1544
      %v1561 = vadd.f32 %v1434, %v1545
      %v1562 = vadd.f32 %v1436, %v1546
      %v1563 = vadd.f32 %v1438, %v1547
      %v1564 = vadd.f32 %v1440, %v1548
      %v1565 = vadd.f32 %v1442, %v1549
      %v1566 = vadd.f32 %v1444, %v1550
      %v1567 = vadd.f32 %v1446, %v1551
      %v1568 = vadd.f32 %v1448, %v1552
      %v1569 = vadd.f32 %v1450, %v1553
      %v1570 = vadd.f32 %v1452, %v1554
      %v1571 = vadd.f32 %v1454, %v1555
      %v1572 = vadd.f32 %v1456, %v1556
      %v1573 = vadd.f32 %v1458, %v1557
      %v1574 = vadd.f32 %v1460, %v1558
      %v1575 = vrcp.pop %v1559
      %v1576 = vrcp.pop %v1560
      %v1577 = vrcp.pop %v1561
      %v1578 = vrcp.pop %v1562
      %v1579 = vrcp.pop %v1563
      %v1580 = vrcp.pop %v1564
      %v1581 = vrcp.pop %v1565
      %v1582 = vrcp.pop %v1566
      %v1583 = vrcp.pop %v1567
      %v1584 = vrcp.pop %v1568
      %v1585 = vrcp.pop %v1569
      %v1586 = vrcp.pop %v1570
      %v1587 = vrcp.pop %v1571
      %v1588 = vrcp.pop %v1572
      %v1589 = vrcp.pop %v1573
      %v1590 = vrcp.pop %v1574
      %v1591 = vmul.f32 %v1398, %v1575
      %v1592 = vmul.f32 %v1400, %v1576
      %v1593 = vmul.f32 %v1402, %v1577
      %v1594 = vmul.f32 %v1404, %v1578
      %v1595 = vmul.f32 %v1406, %v1579
      %v1596 = vmul.f32 %v1408, %v1580
      %v1597 = vmul.f32 %v1410, %v1581
      %v1598 = vmul.f32 %v1412, %v1582
      %v1599 = vmul.f32 %v1414, %v1583
      %v1600 = vmul.f32 %v1416, %v1584
      %v1601 = vmul.f32 %v1418, %v1585
      %v1602 = vmul.f32 %v1420, %v1586
      %v1603 = vmul.f32 %v1422, %v1587
      %v1604 = vmul.f32 %v1424, %v1588
      %v1605 = vmul.f32 %v1426, %v1589
      %v1606 = vmul.f32 %v1428, %v1590
      %v1607 = vsel %vm1159, 1, 0
      %v1608 = vsel %vm1160, 1, 0
      %v1609 = vsel %vm1161, 1, 0
      %v1610 = vsel %vm1162, 1, 0
      %v1611 = vsel %vm1163, 1, 0
      %v1612 = vsel %vm1164, 1, 0
      %v1613 = vsel %vm1165, 1, 0
      %v1614 = vsel %vm1166, 1, 0
      %v1615 = vsel %vm1167, 1, 0
      %v1616 = vsel %vm1168, 1, 0
      %v1617 = vsel %vm1169, 1, 0
      %v1618 = vsel %vm1170, 1, 0
      %v1619 = vsel %vm1171, 1, 0
      %v1620 = vsel %vm1172, 1, 0
      %v1621 = vsel %vm1173, 1, 0
      %v1622 = vsel %vm1174, 1, 0
      %v1623 = vcvt.s32.f32 %v1607
      %v1624 = vcvt.s32.f32 %v1608
      %v1625 = vcvt.s32.f32 %v1609
      %v1626 = vcvt.s32.f32 %v1610
      %v1627 = vcvt.s32.f32 %v1611
      %v1628 = vcvt.s32.f32 %v1612
      %v1629 = vcvt.s32.f32 %v1613
      %v1630 = vcvt.s32.f32 %v1614
      %v1631 = vcvt.s32.f32 %v1615
      %v1632 = vcvt.s32.f32 %v1616
      %v1633 = vcvt.s32.f32 %v1617
      %v1634 = vcvt.s32.f32 %v1618
      %v1635 = vcvt.s32.f32 %v1619
      %v1636 = vcvt.s32.f32 %v1620
      %v1637 = vcvt.s32.f32 %v1621
      %v1638 = vcvt.s32.f32 %v1622
      %v1639 = vmul.f32 %v1591, %v1623
      %v1640 = vmul.f32 %v1592, %v1624
      %v1641 = vmul.f32 %v1593, %v1625
      %v1642 = vmul.f32 %v1594, %v1626
      %v1643 = vmul.f32 %v1595, %v1627
      %v1644 = vmul.f32 %v1596, %v1628
      %v1645 = vmul.f32 %v1597, %v1629
      %v1646 = vmul.f32 %v1598, %v1630
      %v1647 = vmul.f32 %v1599, %v1631
      %v1648 = vmul.f32 %v1600, %v1632
      %v1649 = vmul.f32 %v1601, %v1633
      %v1650 = vmul.f32 %v1602, %v1634
      %v1651 = vmul.f32 %v1603, %v1635
      %v1652 = vmul.f32 %v1604, %v1636
      %v1653 = vmul.f32 %v1605, %v1637
      %v1654 = vmul.f32 %v1606, %v1638
      %v1655 = vpack.c.bf16 %v905, %v905
      %v1656 = vpack.c.bf16 %v1640, %v1639
      %v1657 = vpack.c.bf16 %v1642, %v1641
      %v1658 = vpack.c.bf16 %v1644, %v1643
      %v1659 = vpack.c.bf16 %v1646, %v1645
      %v1660 = vpack.c.bf16 %v1648, %v1647
      %v1661 = vpack.c.bf16 %v1650, %v1649
      %v1662 = vpack.c.bf16 %v1652, %v1651
      %v1663 = vpack.c.bf16 %v1654, %v1653
      %1664 = vmatprep.subr.bf16.mxu0 0
      %1665 = vmatpush1.bf16.xpose.msra.mxu0 %v1656
      %1666 = vmatprep.subr.bf16.mxu0 0
      %1667 = vmatpush1.bf16.xpose.msra.mxu0 %v1657
      %1668 = vmatprep.subr.bf16.mxu0 0
      %1669 = vmatpush1.bf16.xpose.msra.mxu0 %v1658
      %1670 = vmatprep.subr.bf16.mxu0 0
      %1671 = vmatpush1.bf16.xpose.msra.mxu0 %v1659
      %1672 = vmatprep.subr.bf16.mxu0 0
      %1673 = vmatpush1.bf16.xpose.msra.mxu0 %v1660
      %1674 = vmatprep.subr.bf16.mxu0 0
      %1675 = vmatpush1.bf16.xpose.msra.mxu0 %v1661
      %1676 = vmatprep.subr.bf16.mxu0 0
      %1677 = vmatpush1.bf16.xpose.msra.mxu0 %v1662
      %1678 = vmatprep.subr.bf16.mxu0 0
      %1679 = vmatpush1.bf16.xpose.msra.mxu0 %v1663
      %1680 = vmatprep.subr.bf16.mxu0 0
      %1681 = vmatpush1.bf16.xpose.msra.mxu0 0
      %1682 = vmatprep.subr.bf16.mxu0 0
      %1683 = vmatpush1.bf16.xpose.msra.mxu0 0
      %1684 = vmatprep.subr.bf16.mxu0 0
      %1685 = vmatpush1.bf16.xpose.msra.mxu0 0
      %1686 = vmatprep.subr.bf16.mxu0 0
      %1687 = vmatpush1.bf16.xpose.msra.mxu0 0
      %1688 = vmatprep.subr.bf16.mxu0 0
      %1689 = vmatpush1.bf16.xpose.msra.mxu0 0
      %1690 = vmatprep.subr.bf16.mxu0 0
      %1691 = vmatpush1.bf16.xpose.msra.mxu0 0
      %1692 = vmatprep.subr.bf16.mxu0 0
      %1693 = vmatpush1.bf16.xpose.msra.mxu0 0
      %1694 = vmatprep.subr.bf16.mxu0 0
      %1695 = vmatpush1.bf16.xpose.msra.mxu0 0
      %1696 = vmatprep.mubr.bf16.mxu0 0
      %1697 = vmatmul.mubr.bf16.gmra.mrb[0].mxu0 %v1655
      %v1698 = vpop.f32.mrb[0].mxu0
      %v1699 = vadd.f32 0.0, %v1698
      %v1700 = vpop.f32.mrb[0].mxu0
      %v1701 = vpop.f32.mrb[0].mxu0
      %v1702 = vpop.f32.mrb[0].mxu0
      %1703 = vdwg.mxu0
      %v1704 = vld [vmem:[%s584] sm:$0xf]
      %v1705 = vld [vmem:[%s584 + $0x4] sm:$0xf]
      %v1706 = vmax.f32 %v1699, 0.0
      %v1707 = vpack.c.bf16 %v1706, %v1706
      %v1708 = vld [vmem:[%s589] sm:$0xff]
      %v1709 = vld [vmem:[%s589 + $0x8] sm:$0xff]
      %1711 = vset.pattern.permute.xlu0 0
      %1712 = vperm.xlu0 %1711, %v1708
      %v1713 = vpop.permute.xlu0 %1712
      %1716 = vset.pattern.permute.xlu0 0
      %1717 = vperm.xlu0 %1716, %v1709
      %v1718 = vpop.permute.xlu0 %1717
      %v1722 = vunpack.c.l.b16 %v1704
      %v1723 = vunpack.c.l.b16 %v1705
      %v1724 = vpack.c.b16 %v1723, %v1722
      %v1726 = vsel %vm1207, %v1724, 0
      %v1729 = vsel %vm1232, %v1707, 0
      %1731 = vmatprep.subr.bf16.mxu0 0
      %1732 = vmatpush1.bf16.msra.mxu0 %v1729
      %1733 = vmatprep.subr.bf16.mxu0 0
      %1734 = vmatpush1.bf16.msra.mxu0 0
      %1735 = vmatprep.subr.bf16.mxu0 0
      %1736 = vmatpush1.bf16.msra.mxu0 0
      %1737 = vmatprep.subr.bf16.mxu0 0
      %1738 = vmatpush1.bf16.msra.mxu0 0
      %1739 = vmatprep.subr.bf16.mxu0 0
      %1740 = vmatpush1.bf16.msra.mxu0 0
      %1741 = vmatprep.subr.bf16.mxu0 0
      %1742 = vmatpush1.bf16.msra.mxu0 0
      %1743 = vmatprep.subr.bf16.mxu0 0
      %1744 = vmatpush1.bf16.msra.mxu0 0
      %1745 = vmatprep.subr.bf16.mxu0 0
      %1746 = vmatpush1.bf16.msra.mxu0 0
      %1747 = vmatprep.subr.bf16.mxu0 0
      %1748 = vmatpush1.bf16.msra.mxu0 0
      %1749 = vmatprep.subr.bf16.mxu0 0
      %1750 = vmatpush1.bf16.msra.mxu0 0
      %1751 = vmatprep.subr.bf16.mxu0 0
      %1752 = vmatpush1.bf16.msra.mxu0 0
      %1753 = vmatprep.subr.bf16.mxu0 0
      %1754 = vmatpush1.bf16.msra.mxu0 0
      %1755 = vmatprep.subr.bf16.mxu0 0
      %1756 = vmatpush1.bf16.msra.mxu0 0
      %1757 = vmatprep.subr.bf16.mxu0 0
      %1758 = vmatpush1.bf16.msra.mxu0 0
      %1759 = vmatprep.subr.bf16.mxu0 0
      %1760 = vmatpush1.bf16.msra.mxu0 0
      %1761 = vmatprep.subr.bf16.mxu0 0
      %1762 = vmatpush1.bf16.msra.mxu0 0
      %1763 = vmatprep.mubr.bf16.mxu0 0
      %1764 = vmatmul.mubr.bf16.gmra.mrb[0].mxu0 %v1726
      %v1765 = vpop.f32.mrb[0].mxu0
      %v1766 = vadd.f32 %v1713, %v1765
      %v1767 = vpop.f32.mrb[0].mxu0
      %v1768 = vpop.f32.mrb[0].mxu0
      %v1769 = vadd.f32 %v1718, %v1768
      %v1770 = vpop.f32.mrb[0].mxu0
      %1771 = vdwg.mxu0
      %v1772 = vmul.f32 %v1766, %v850
      %v1773 = vmul.f32 %v1769, %v850
      %v1774 = vadd.f32 %v1772, %v751
      %v1775 = vadd.f32 %v1773, %v752
      %v1776 = vld [vmem:[%s594] sm:$0xf]
      %v1777 = vld [vmem:[%s594 + $0x4] sm:$0xf]
      %v1778 = vpack.c.bf16 %v1775, %v1774
      %v1779 = vld [vmem:[%s599] sm:$0xff]
      %v1780 = vld [vmem:[%s599 + $0x8] sm:$0xff]
      %1782 = vset.pattern.permute.xlu0 0
      %1783 = vperm.xlu0 %1782, %v1779
      %v1784 = vpop.permute.xlu0 %1783
      %1787 = vset.pattern.permute.xlu0 0
      %1788 = vperm.xlu0 %1787, %v1780
      %v1789 = vpop.permute.xlu0 %1788
      %v1793 = vunpack.c.l.b16 %v1776
      %v1794 = vunpack.c.l.b16 %v1777
      %v1795 = vpack.c.b16 %v1794, %v1793
      %v1797 = vsel %vm641, %v1795, 0
      %1799 = vmatprep.subr.bf16.mxu0 0
      %1800 = vmatpush1.bf16.msra.mxu0 %v1778
      %1801 = vmatprep.subr.bf16.mxu0 0
      %1802 = vmatpush1.bf16.msra.mxu0 0
      %1803 = vmatprep.subr.bf16.mxu0 0
      %1804 = vmatpush1.bf16.msra.mxu0 0
      %1805 = vmatprep.subr.bf16.mxu0 0
      %1806 = vmatpush1.bf16.msra.mxu0 0
      %1807 = vmatprep.subr.bf16.mxu0 0
      %1808 = vmatpush1.bf16.msra.mxu0 0
      %1809 = vmatprep.subr.bf16.mxu0 0
      %1810 = vmatpush1.bf16.msra.mxu0 0
      %1811 = vmatprep.subr.bf16.mxu0 0
      %1812 = vmatpush1.bf16.msra.mxu0 0
      %1813 = vmatprep.subr.bf16.mxu0 0
      %1814 = vmatpush1.bf16.msra.mxu0 0
      %1815 = vmatprep.subr.bf16.mxu0 0
      %1816 = vmatpush1.bf16.msra.mxu0 0
      %1817 = vmatprep.subr.bf16.mxu0 0
      %1818 = vmatpush1.bf16.msra.mxu0 0
      %1819 = vmatprep.subr.bf16.mxu0 0
      %1820 = vmatpush1.bf16.msra.mxu0 0
      %1821 = vmatprep.subr.bf16.mxu0 0
      %1822 = vmatpush1.bf16.msra.mxu0 0
      %1823 = vmatprep.subr.bf16.mxu0 0
      %1824 = vmatpush1.bf16.msra.mxu0 0
      %1825 = vmatprep.subr.bf16.mxu0 0
      %1826 = vmatpush1.bf16.msra.mxu0 0
      %1827 = vmatprep.subr.bf16.mxu0 0
      %1828 = vmatpush1.bf16.msra.mxu0 0
      %1829 = vmatprep.subr.bf16.mxu0 0
      %1830 = vmatpush1.bf16.msra.mxu0 0
      %1831 = vmatprep.mubr.bf16.mxu0 0
      %1832 = vmatmul.mubr.bf16.gmra.mrb[0].mxu0 %v1797
      %v1833 = vpop.f32.mrb[0].mxu0
      %v1834 = vadd.f32 %v1784, %v1833
      %v1835 = vpop.f32.mrb[0].mxu0
      %v1836 = vpop.f32.mrb[0].mxu0
      %v1837 = vadd.f32 %v1789, %v1836
      %v1838 = vpop.f32.mrb[0].mxu0
      %1839 = vdwg.mxu0
      %v1840 = vadd.f32 %v611, %v1834
      %v1841 = vadd.f32 %v612, %v1837
      %v1842 = vmul.f32 %v1840, %v850
      %v1843 = vmul.f32 %v1841, %v850
      %1844 = vst [vmem:[#allocation2] sm:$0xff] %v1842
      %1845 = vst [vmem:[#allocation2 + $0x8] sm:$0xff] %v1843
      %p1846 = scmp.eq.s32.totalorder %s24, 2
      // Predicated region
      $region77: #{model_forward.13} parent=71 // pred_check
        %p1847 = pneg %p1846
      $region78: #{model_forward.13} parent=71 // pred_check_branch
        %1849 = sbr.rel (%p1847) target = $region80
      $region79: #{model_forward.13} parent=71 // pred_region
        %1850 = vst [vmem:[%s13] sm:$0xff] %v1842
        %1851 = vst [vmem:[%s13 + $0x8] sm:$0xff] %v1843
      $region80: #{model_forward.13} parent=71 // pred_fallthru
        _
      // Predicated region
      $region81: #{model_forward.13} parent=71 // pred_check
        %p1852 = pneg %p360
      $region82: #{model_forward.13} parent=71 // pred_check_branch
        %1854 = sbr.rel (%p1852) target = $region84
      $region83: #{model_forward.13} parent=71 // pred_region
        _
      $region84: #{model_forward.13} parent=71 // pred_fallthru
        _
      // Predicated region
      $region85: #{model_forward.13} parent=71 // pred_check
        %p1855 = pneg %p360
      $region86: #{model_forward.13} parent=71 // pred_check_branch
        %1857 = sbr.rel (%p1855) target = $region88
      $region87: #{model_forward.13} parent=71 // pred_region
        _
      $region88: #{model_forward.13} parent=71 // pred_fallthru
        _
    $region72: #{model_forward.13} parent=5 // pred_fallthru
      _
    %p1858 = scmp.le.s32.totalorder 2, %s19
    // Predicated region
    $region89: #{model_forward.13} parent=5 // pred_check
      %p1859 = pneg %p1858
    $region90: #{model_forward.13} parent=5 // pred_check_branch
      %1861 = sbr.rel (%p1859) target = $region92
    $region91: #{model_forward.13} parent=5 // pred_region
      %s1862 = ssub.s32 %s19, 2
    $region92: #{model_forward.13} parent=5 // pred_fallthru
      _
  $region6: #{model_forward.13} parent=0 // loop_footer
    %s23 = sadd.s32 1, %s19
  $region7: #{model_forward.13} parent=0 // loop_footer_branch
    %18 = sbr.rel target = $region3
  $region8: #{model_forward.13} parent=0 // loop_exit
    _

// kernel: model_forward.16
$region0: #{model_forward.16}
  #allocation0 [shape = 'u32[]', space=smem, size = 0x4, offset = 0x4, fixed_abs, tag = 'smem constant byte address 0x4 - core index']
  #allocation1 [shape = 'u32[144,128]{1,0:T(1,128)}', space=vmem, size = 0x12000, scoped, tag = 'internal scratch']
  #allocation2 [shape = 'f32[16,128]{1,0:T(8,128)}', space=vmem, size = 0x2000, scoped, tag = 'scratch operand']
  %s0 = inlined_call_operand.vmem [shape: f32[16,128], index: 0, kind: input, shape index: {}]
  %s1 = inlined_call_operand.vmem [shape: f32[16,128], index: 1, kind: input, shape index: {}]
  %s2 = inlined_call_operand.vmem [shape: f32[1,128], index: 2, kind: input, shape index: {}]
  %s3 = inlined_call_operand.vmem [shape: bf16[3,48,16], index: 3, kind: input, shape index: {}]
  %s4 = inlined_call_operand.vmem [shape: f32[3,16,1], index: 4, kind: input, shape index: {}]
  %s5 = inlined_call_operand.vmem [shape: bf16[3,16,16], index: 5, kind: input, shape index: {}]
  %s6 = inlined_call_operand.vmem [shape: f32[3,16,1], index: 6, kind: input, shape index: {}]
  %s7 = inlined_call_operand.vmem [shape: bf16[3,8,16], index: 7, kind: input, shape index: {}]
  %s8 = inlined_call_operand.vmem [shape: f32[3,8,1], index: 8, kind: input, shape index: {}]
  %s9 = inlined_call_operand.vmem [shape: bf16[3,16,8], index: 9, kind: input, shape index: {}]
  %s10 = inlined_call_operand.vmem [shape: f32[3,16,1], index: 10, kind: input, shape index: {}]
  %s11 = inlined_call_operand.vmem [shape: bf16[3,16,16], index: 11, kind: input, shape index: {}]
  %s12 = inlined_call_operand.vmem [shape: f32[3,16,1], index: 12, kind: input, shape index: {}]
  %s13 = inlined_call_operand.vmem [shape: f32[16,128], index: 13, kind: output, shape index: {}]
  %s14 = sld [smem:[#allocation0]]
  $region93: #{model_forward.16} parent=0
    _
  %s16 = ssub.s32 1, %s14
  %s17 = scalar_select 0, %s16, %s14
  loop: start=0, step=1, limit=5
  $region2: #{model_forward.16} parent=0 // loop_pre_header
    _
  $region3: #{model_forward.16} parent=0 // loop_header
    %s19 = sphi 0, %s23
    %p20 = scmp.ge.s32.totalorder %s19, 5
    %s27 = sphi 0, %s27
    %s29 = sphi 0, %s27
    %s30 = sphi 0, %s29
    %s44 = sphi 0, %s30
    %s48 = sphi 0, %s48
    %s50 = sphi 0, %s48
    %s51 = sphi 0, %s50
    %s65 = sphi 0, %s51
    %s69 = sphi 0, %s69
    %s71 = sphi 0, %s69
    %s72 = sphi 0, %s71
    %s86 = sphi 0, %s72
    %s92 = sphi 0, %s94
    %s95 = sphi 0, %s92
    %s96 = sphi 0, %s95
    %s112 = sphi 0, %s96
    %s118 = sphi 0, %s120
    %s121 = sphi 0, %s118
    %s122 = sphi 0, %s121
    %s138 = sphi 0, %s122
    %s144 = sphi 0, %s146
    %s147 = sphi 0, %s144
    %s148 = sphi 0, %s147
    %s164 = sphi 0, %s148
    %s170 = sphi 0, %s172
    %s173 = sphi 0, %s170
    %s174 = sphi 0, %s173
    %s190 = sphi 0, %s174
    %s196 = sphi 0, %s198
    %s199 = sphi 0, %s196
    %s200 = sphi 0, %s199
    %s216 = sphi 0, %s200
    %s222 = sphi 0, %s224
    %s225 = sphi 0, %s222
    %s226 = sphi 0, %s225
    %s242 = sphi 0, %s226
    %s248 = sphi 0, %s250
    %s251 = sphi 0, %s248
    %s252 = sphi 0, %s251
    %s268 = sphi 0, %s252
    %s274 = sphi 0, %s276
    %s277 = sphi 0, %s274
    %s278 = sphi 0, %s277
    %s294 = sphi 0, %s278
    %s300 = sphi 0, %s302
    %s303 = sphi 0, %s300
    %s304 = sphi 0, %s303
    %s320 = sphi 0, %s304
    %s326 = sphi 0, %s328
    %s329 = sphi 0, %s326
    %s330 = sphi 0, %s329
    %s346 = sphi 0, %s330
    %s350 = sphi 0, %s350
    %s352 = sphi 0, %s350
    %s353 = sphi 0, %s352
    %s367 = sphi 0, %s353
  $region4: #{model_forward.16} parent=0 // loop_header_branch
    %22 = sbr.rel (%p20) target = $region8
  $region5: #{model_forward.16} parent=0 // loop_body
    %s24 = ssub.s32 %s19, 1
    %s25 = ssub.s32 %s19, 2
    %s26 = sadd.s32 %s19, 1
    %s28 = sadd.s32 %s27, 1
    %p31 = scmp.eq.s32.totalorder %s19, 2
    %p32 = scmp.ne.s32.totalorder %s27, %s29
    %p33 = scmp.eq.s32.totalorder %s19, 0
    %p34 = por %p32, %p33
    %p35 = scmp.ne.s32.totalorder %s27, %s29
    %p36 = scmp.eq.s32.totalorder %s24, 2
    %p37 = por %p35, %p36
    %p38 = scmp.ne.s32.totalorder %s29, %s30
    %p39 = scmp.eq.s32.totalorder %s24, 0
    %p40 = por %p38, %p39
    %p41 = scmp.ne.s32.totalorder %s29, %s30
    %p42 = scmp.eq.s32.totalorder %s25, 2
    %p43 = por %p41, %p42
    %p45 = scmp.ne.s32.totalorder %s30, %s44
    %p46 = scmp.eq.s32.totalorder %s25, 0
    %p47 = por %p45, %p46
    %s49 = sadd.s32 %s48, 1
    %p52 = scmp.eq.s32.totalorder %s19, 2
    %p53 = scmp.ne.s32.totalorder %s48, %s50
    %p54 = scmp.eq.s32.totalorder %s19, 0
    %p55 = por %p53, %p54
    %p56 = scmp.ne.s32.totalorder %s48, %s50
    %p57 = scmp.eq.s32.totalorder %s24, 2
    %p58 = por %p56, %p57
    %p59 = scmp.ne.s32.totalorder %s50, %s51
    %p60 = scmp.eq.s32.totalorder %s24, 0
    %p61 = por %p59, %p60
    %p62 = scmp.ne.s32.totalorder %s50, %s51
    %p63 = scmp.eq.s32.totalorder %s25, 2
    %p64 = por %p62, %p63
    %p66 = scmp.ne.s32.totalorder %s51, %s65
    %p67 = scmp.eq.s32.totalorder %s25, 0
    %p68 = por %p66, %p67
    %s70 = sadd.s32 %s69, 1
    %p73 = scmp.eq.s32.totalorder %s19, 2
    %p74 = scmp.ne.s32.totalorder %s69, %s71
    %p75 = scmp.eq.s32.totalorder %s19, 0
    %p76 = por %p74, %p75
    %p77 = scmp.ne.s32.totalorder %s69, %s71
    %p78 = scmp.eq.s32.totalorder %s24, 2
    %p79 = por %p77, %p78
    %p80 = scmp.ne.s32.totalorder %s71, %s72
    %p81 = scmp.eq.s32.totalorder %s24, 0
    %p82 = por %p80, %p81
    %p83 = scmp.ne.s32.totalorder %s71, %s72
    %p84 = scmp.eq.s32.totalorder %s25, 2
    %p85 = por %p83, %p84
    %p87 = scmp.ne.s32.totalorder %s72, %s86
    %p88 = scmp.eq.s32.totalorder %s25, 0
    %p89 = por %p87, %p88
    %s90 = ssub.s32 %s19, %s26
    %p91 = scmp.eq.s32.totalorder %s90, 0
    %s93 = sadd.s32 %s92, 1
    %s94 = scalar_select %p91, %s92, %s93
    %p97 = pneg %p91
    %p98 = scmp.eq.s32.totalorder %s19, 2
    %p99 = por %p97, %p98
    %p100 = scmp.ne.s32.totalorder %s92, %s95
    %p101 = scmp.eq.s32.totalorder %s19, 0
    %p102 = por %p100, %p101
    %p103 = scmp.ne.s32.totalorder %s92, %s95
    %p104 = scmp.eq.s32.totalorder %s24, 2
    %p105 = por %p103, %p104
    %p106 = scmp.ne.s32.totalorder %s95, %s96
    %p107 = scmp.eq.s32.totalorder %s24, 0
    %p108 = por %p106, %p107
    %p109 = scmp.ne.s32.totalorder %s95, %s96
    %p110 = scmp.eq.s32.totalorder %s25, 2
    %p111 = por %p109, %p110
    %p113 = scmp.ne.s32.totalorder %s96, %s112
    %p114 = scmp.eq.s32.totalorder %s25, 0
    %p115 = por %p113, %p114
    %s116 = ssub.s32 %s19, %s26
    %p117 = scmp.eq.s32.totalorder %s116, 0
    %s119 = sadd.s32 %s118, 1
    %s120 = scalar_select %p117, %s118, %s119
    %p123 = pneg %p117
    %p124 = scmp.eq.s32.totalorder %s19, 2
    %p125 = por %p123, %p124
    %p126 = scmp.ne.s32.totalorder %s118, %s121
    %p127 = scmp.eq.s32.totalorder %s19, 0
    %p128 = por %p126, %p127
    %p129 = scmp.ne.s32.totalorder %s118, %s121
    %p130 = scmp.eq.s32.totalorder %s24, 2
    %p131 = por %p129, %p130
    %p132 = scmp.ne.s32.totalorder %s121, %s122
    %p133 = scmp.eq.s32.totalorder %s24, 0
    %p134 = por %p132, %p133
    %p135 = scmp.ne.s32.totalorder %s121, %s122
    %p136 = scmp.eq.s32.totalorder %s25, 2
    %p137 = por %p135, %p136
    %p139 = scmp.ne.s32.totalorder %s122, %s138
    %p140 = scmp.eq.s32.totalorder %s25, 0
    %p141 = por %p139, %p140
    %s142 = ssub.s32 %s19, %s26
    %p143 = scmp.eq.s32.totalorder %s142, 0
    %s145 = sadd.s32 %s144, 1
    %s146 = scalar_select %p143, %s144, %s145
    %p149 = pneg %p143
    %p150 = scmp.eq.s32.totalorder %s19, 2
    %p151 = por %p149, %p150
    %p152 = scmp.ne.s32.totalorder %s144, %s147
    %p153 = scmp.eq.s32.totalorder %s19, 0
    %p154 = por %p152, %p153
    %p155 = scmp.ne.s32.totalorder %s144, %s147
    %p156 = scmp.eq.s32.totalorder %s24, 2
    %p157 = por %p155, %p156
    %p158 = scmp.ne.s32.totalorder %s147, %s148
    %p159 = scmp.eq.s32.totalorder %s24, 0
    %p160 = por %p158, %p159
    %p161 = scmp.ne.s32.totalorder %s147, %s148
    %p162 = scmp.eq.s32.totalorder %s25, 2
    %p163 = por %p161, %p162
    %p165 = scmp.ne.s32.totalorder %s148, %s164
    %p166 = scmp.eq.s32.totalorder %s25, 0
    %p167 = por %p165, %p166
    %s168 = ssub.s32 %s19, %s26
    %p169 = scmp.eq.s32.totalorder %s168, 0
    %s171 = sadd.s32 %s170, 1
    %s172 = scalar_select %p169, %s170, %s171
    %p175 = pneg %p169
    %p176 = scmp.eq.s32.totalorder %s19, 2
    %p177 = por %p175, %p176
    %p178 = scmp.ne.s32.totalorder %s170, %s173
    %p179 = scmp.eq.s32.totalorder %s19, 0
    %p180 = por %p178, %p179
    %p181 = scmp.ne.s32.totalorder %s170, %s173
    %p182 = scmp.eq.s32.totalorder %s24, 2
    %p183 = por %p181, %p182
    %p184 = scmp.ne.s32.totalorder %s173, %s174
    %p185 = scmp.eq.s32.totalorder %s24, 0
    %p186 = por %p184, %p185
    %p187 = scmp.ne.s32.totalorder %s173, %s174
    %p188 = scmp.eq.s32.totalorder %s25, 2
    %p189 = por %p187, %p188
    %p191 = scmp.ne.s32.totalorder %s174, %s190
    %p192 = scmp.eq.s32.totalorder %s25, 0
    %p193 = por %p191, %p192
    %s194 = ssub.s32 %s19, %s26
    %p195 = scmp.eq.s32.totalorder %s194, 0
    %s197 = sadd.s32 %s196, 1
    %s198 = scalar_select %p195, %s196, %s197
    %p201 = pneg %p195
    %p202 = scmp.eq.s32.totalorder %s19, 2
    %p203 = por %p201, %p202
    %p204 = scmp.ne.s32.totalorder %s196, %s199
    %p205 = scmp.eq.s32.totalorder %s19, 0
    %p206 = por %p204, %p205
    %p207 = scmp.ne.s32.totalorder %s196, %s199
    %p208 = scmp.eq.s32.totalorder %s24, 2
    %p209 = por %p207, %p208
    %p210 = scmp.ne.s32.totalorder %s199, %s200
    %p211 = scmp.eq.s32.totalorder %s24, 0
    %p212 = por %p210, %p211
    %p213 = scmp.ne.s32.totalorder %s199, %s200
    %p214 = scmp.eq.s32.totalorder %s25, 2
    %p215 = por %p213, %p214
    %p217 = scmp.ne.s32.totalorder %s200, %s216
    %p218 = scmp.eq.s32.totalorder %s25, 0
    %p219 = por %p217, %p218
    %s220 = ssub.s32 %s19, %s26
    %p221 = scmp.eq.s32.totalorder %s220, 0
    %s223 = sadd.s32 %s222, 1
    %s224 = scalar_select %p221, %s222, %s223
    %p227 = pneg %p221
    %p228 = scmp.eq.s32.totalorder %s19, 2
    %p229 = por %p227, %p228
    %p230 = scmp.ne.s32.totalorder %s222, %s225
    %p231 = scmp.eq.s32.totalorder %s19, 0
    %p232 = por %p230, %p231
    %p233 = scmp.ne.s32.totalorder %s222, %s225
    %p234 = scmp.eq.s32.totalorder %s24, 2
    %p235 = por %p233, %p234
    %p236 = scmp.ne.s32.totalorder %s225, %s226
    %p237 = scmp.eq.s32.totalorder %s24, 0
    %p238 = por %p236, %p237
    %p239 = scmp.ne.s32.totalorder %s225, %s226
    %p240 = scmp.eq.s32.totalorder %s25, 2
    %p241 = por %p239, %p240
    %p243 = scmp.ne.s32.totalorder %s226, %s242
    %p244 = scmp.eq.s32.totalorder %s25, 0
    %p245 = por %p243, %p244
    %s246 = ssub.s32 %s19, %s26
    %p247 = scmp.eq.s32.totalorder %s246, 0
    %s249 = sadd.s32 %s248, 1
    %s250 = scalar_select %p247, %s248, %s249
    %p253 = pneg %p247
    %p254 = scmp.eq.s32.totalorder %s19, 2
    %p255 = por %p253, %p254
    %p256 = scmp.ne.s32.totalorder %s248, %s251
    %p257 = scmp.eq.s32.totalorder %s19, 0
    %p258 = por %p256, %p257
    %p259 = scmp.ne.s32.totalorder %s248, %s251
    %p260 = scmp.eq.s32.totalorder %s24, 2
    %p261 = por %p259, %p260
    %p262 = scmp.ne.s32.totalorder %s251, %s252
    %p263 = scmp.eq.s32.totalorder %s24, 0
    %p264 = por %p262, %p263
    %p265 = scmp.ne.s32.totalorder %s251, %s252
    %p266 = scmp.eq.s32.totalorder %s25, 2
    %p267 = por %p265, %p266
    %p269 = scmp.ne.s32.totalorder %s252, %s268
    %p270 = scmp.eq.s32.totalorder %s25, 0
    %p271 = por %p269, %p270
    %s272 = ssub.s32 %s19, %s26
    %p273 = scmp.eq.s32.totalorder %s272, 0
    %s275 = sadd.s32 %s274, 1
    %s276 = scalar_select %p273, %s274, %s275
    %p279 = pneg %p273
    %p280 = scmp.eq.s32.totalorder %s19, 2
    %p281 = por %p279, %p280
    %p282 = scmp.ne.s32.totalorder %s274, %s277
    %p283 = scmp.eq.s32.totalorder %s19, 0
    %p284 = por %p282, %p283
    %p285 = scmp.ne.s32.totalorder %s274, %s277
    %p286 = scmp.eq.s32.totalorder %s24, 2
    %p287 = por %p285, %p286
    %p288 = scmp.ne.s32.totalorder %s277, %s278
    %p289 = scmp.eq.s32.totalorder %s24, 0
    %p290 = por %p288, %p289
    %p291 = scmp.ne.s32.totalorder %s277, %s278
    %p292 = scmp.eq.s32.totalorder %s25, 2
    %p293 = por %p291, %p292
    %p295 = scmp.ne.s32.totalorder %s278, %s294
    %p296 = scmp.eq.s32.totalorder %s25, 0
    %p297 = por %p295, %p296
    %s298 = ssub.s32 %s19, %s26
    %p299 = scmp.eq.s32.totalorder %s298, 0
    %s301 = sadd.s32 %s300, 1
    %s302 = scalar_select %p299, %s300, %s301
    %p305 = pneg %p299
    %p306 = scmp.eq.s32.totalorder %s19, 2
    %p307 = por %p305, %p306
    %p308 = scmp.ne.s32.totalorder %s300, %s303
    %p309 = scmp.eq.s32.totalorder %s19, 0
    %p310 = por %p308, %p309
    %p311 = scmp.ne.s32.totalorder %s300, %s303
    %p312 = scmp.eq.s32.totalorder %s24, 2
    %p313 = por %p311, %p312
    %p314 = scmp.ne.s32.totalorder %s303, %s304
    %p315 = scmp.eq.s32.totalorder %s24, 0
    %p316 = por %p314, %p315
    %p317 = scmp.ne.s32.totalorder %s303, %s304
    %p318 = scmp.eq.s32.totalorder %s25, 2
    %p319 = por %p317, %p318
    %p321 = scmp.ne.s32.totalorder %s304, %s320
    %p322 = scmp.eq.s32.totalorder %s25, 0
    %p323 = por %p321, %p322
    %s324 = ssub.s32 %s19, %s26
    %p325 = scmp.eq.s32.totalorder %s324, 0
    %s327 = sadd.s32 %s326, 1
    %s328 = scalar_select %p325, %s326, %s327
    %p331 = pneg %p325
    %p332 = scmp.eq.s32.totalorder %s19, 2
    %p333 = por %p331, %p332
    %p334 = scmp.ne.s32.totalorder %s326, %s329
    %p335 = scmp.eq.s32.totalorder %s19, 0
    %p336 = por %p334, %p335
    %p337 = scmp.ne.s32.totalorder %s326, %s329
    %p338 = scmp.eq.s32.totalorder %s24, 2
    %p339 = por %p337, %p338
    %p340 = scmp.ne.s32.totalorder %s329, %s330
    %p341 = scmp.eq.s32.totalorder %s24, 0
    %p342 = por %p340, %p341
    %p343 = scmp.ne.s32.totalorder %s329, %s330
    %p344 = scmp.eq.s32.totalorder %s25, 2
    %p345 = por %p343, %p344
    %p347 = scmp.ne.s32.totalorder %s330, %s346
    %p348 = scmp.eq.s32.totalorder %s25, 0
    %p349 = por %p347, %p348
    %s351 = sadd.s32 %s350, 1
    %p354 = scmp.eq.s32.totalorder %s19, 2
    %p355 = scmp.ne.s32.totalorder %s350, %s352
    %p356 = scmp.eq.s32.totalorder %s19, 0
    %p357 = por %p355, %p356
    %p358 = scmp.ne.s32.totalorder %s350, %s352
    %p359 = scmp.eq.s32.totalorder %s24, 2
    %p360 = por %p358, %p359
    %p361 = scmp.ne.s32.totalorder %s352, %s353
    %p362 = scmp.eq.s32.totalorder %s24, 0
    %p363 = por %p361, %p362
    %p364 = scmp.ne.s32.totalorder %s352, %s353
    %p365 = scmp.eq.s32.totalorder %s25, 2
    %p366 = por %p364, %p365
    %p368 = scmp.ne.s32.totalorder %s353, %s367
    %p369 = scmp.eq.s32.totalorder %s25, 0
    %p370 = por %p368, %p369
    %p371 = scmp.le.s32.totalorder 1, %s19
    %p372 = scmp.lt.s32.totalorder %s19, 4
    %p373 = pnand %p371, %p372
    %p374 = pneg %p373
    // Predicated region
    $region9: #{model_forward.16} parent=5 // pred_check
      _
    $region10: #{model_forward.16} parent=5 // pred_check_branch
      %376 = sbr.rel (%p373) target = $region12
    $region11: #{model_forward.16} parent=5 // pred_region
      %s377 = ssub.s32 %s19, 1
      // Predicated region
      $region13: #{model_forward.16} parent=11 // pred_check
        %p378 = pneg %p40
      $region14: #{model_forward.16} parent=11 // pred_check_branch
        %380 = sbr.rel (%p378) target = $region16
      $region15: #{model_forward.16} parent=11 // pred_region
        _
      $region16: #{model_forward.16} parent=11 // pred_fallthru
        _
      // Predicated region
      $region17: #{model_forward.16} parent=11 // pred_check
        %p381 = pneg %p61
      $region18: #{model_forward.16} parent=11 // pred_check_branch
        %383 = sbr.rel (%p381) target = $region20
      $region19: #{model_forward.16} parent=11 // pred_region
        _
      $region20: #{model_forward.16} parent=11 // pred_fallthru
        _
      // Predicated region
      $region21: #{model_forward.16} parent=11 // pred_check
        %p384 = pneg %p82
      $region22: #{model_forward.16} parent=11 // pred_check_branch
        %386 = sbr.rel (%p384) target = $region24
      $region23: #{model_forward.16} parent=11 // pred_region
        _
      $region24: #{model_forward.16} parent=11 // pred_fallthru
        _
    $region12: #{model_forward.16} parent=5 // pred_fallthru
      _
    %p387 = scmp.lt.s32.totalorder %s19, 3
    // Predicated region
    $region25: #{model_forward.16} parent=5 // pred_check
      %p388 = pneg %p387
    $region26: #{model_forward.16} parent=5 // pred_check_branch
      %390 = sbr.rel (%p388) target = $region28
    $region27: #{model_forward.16} parent=5 // pred_region
      // Predicated region
      $region29: #{model_forward.16} parent=27 // pred_check
        %p391 = pneg %p102
      $region30: #{model_forward.16} parent=27 // pred_check_branch
        %393 = sbr.rel (%p391) target = $region32
      $region31: #{model_forward.16} parent=27 // pred_region
        %p394 = scmp.lt.s32.totalorder %s19, 2
        %s395 = scalar_select %p394, %s19, 2
        %s396 = smul.addr %s395, 6
        %s397 = smul.addr %s396, 4
        %s398 = scalar_lea.vmem %s3, %s397
      $region32: #{model_forward.16} parent=27 // pred_fallthru
        _
      // Predicated region
      $region33: #{model_forward.16} parent=27 // pred_check
        %p399 = pneg %p128
      $region34: #{model_forward.16} parent=27 // pred_check_branch
        %401 = sbr.rel (%p399) target = $region36
      $region35: #{model_forward.16} parent=27 // pred_region
        %p402 = scmp.lt.s32.totalorder %s19, 2
        %s403 = scalar_select %p402, %s19, 2
        %s404 = smul.addr %s403, 2
        %s405 = smul.addr %s404, 8
        %s406 = scalar_lea.vmem %s4, %s405
      $region36: #{model_forward.16} parent=27 // pred_fallthru
        _
      // Predicated region
      $region37: #{model_forward.16} parent=27 // pred_check
        %p407 = pneg %p154
      $region38: #{model_forward.16} parent=27 // pred_check_branch
        %409 = sbr.rel (%p407) target = $region40
      $region39: #{model_forward.16} parent=27 // pred_region
        %p410 = scmp.lt.s32.totalorder %s19, 2
        %s411 = scalar_select %p410, %s19, 2
        %s412 = smul.addr %s411, 2
        %s413 = smul.addr %s412, 4
        %s414 = scalar_lea.vmem %s5, %s413
      $region40: #{model_forward.16} parent=27 // pred_fallthru
        _
      // Predicated region
      $region41: #{model_forward.16} parent=27 // pred_check
        %p415 = pneg %p180
      $region42: #{model_forward.16} parent=27 // pred_check_branch
        %417 = sbr.rel (%p415) target = $region44
      $region43: #{model_forward.16} parent=27 // pred_region
        %p418 = scmp.lt.s32.totalorder %s19, 2
        %s419 = scalar_select %p418, %s19, 2
        %s420 = smul.addr %s419, 2
        %s421 = smul.addr %s420, 8
        %s422 = scalar_lea.vmem %s6, %s421
      $region44: #{model_forward.16} parent=27 // pred_fallthru
        _
      // Predicated region
      $region45: #{model_forward.16} parent=27 // pred_check
        %p423 = pneg %p206
      $region46: #{model_forward.16} parent=27 // pred_check_branch
        %425 = sbr.rel (%p423) target = $region48
      $region47: #{model_forward.16} parent=27 // pred_region
        %p426 = scmp.lt.s32.totalorder %s19, 2
        %s427 = scalar_select %p426, %s19, 2
        %s428 = smul.addr %s427, 4
        %s429 = scalar_lea.vmem %s7, %s428
      $region48: #{model_forward.16} parent=27 // pred_fallthru
        _
      // Predicated region
      $region49: #{model_forward.16} parent=27 // pred_check
        %p430 = pneg %p232
      $region50: #{model_forward.16} parent=27 // pred_check_branch
        %432 = sbr.rel (%p430) target = $region52
      $region51: #{model_forward.16} parent=27 // pred_region
        %p433 = scmp.lt.s32.totalorder %s19, 2
        %s434 = scalar_select %p433, %s19, 2
        %s435 = smul.addr %s434, 8
        %s436 = scalar_lea.vmem %s8, %s435
      $region52: #{model_forward.16} parent=27 // pred_fallthru
        _
      // Predicated region
      $region53: #{model_forward.16} parent=27 // pred_check
        %p437 = pneg %p258
      $region54: #{model_forward.16} parent=27 // pred_check_branch
        %439 = sbr.rel (%p437) target = $region56
      $region55: #{model_forward.16} parent=27 // pred_region
        %p440 = scmp.lt.s32.totalorder %s19, 2
        %s441 = scalar_select %p440, %s19, 2
        %s442 = smul.addr %s441, 2
        %s443 = smul.addr %s442, 4
        %s444 = scalar_lea.vmem %s9, %s443
      $region56: #{model_forward.16} parent=27 // pred_fallthru
        _
      // Predicated region
      $region57: #{model_forward.16} parent=27 // pred_check
        %p445 = pneg %p284
      $region58: #{model_forward.16} parent=27 // pred_check_branch
        %447 = sbr.rel (%p445) target = $region60
      $region59: #{model_forward.16} parent=27 // pred_region
        %p448 = scmp.lt.s32.totalorder %s19, 2
        %s449 = scalar_select %p448, %s19, 2
        %s450 = smul.addr %s449, 2
        %s451 = smul.addr %s450, 8
        %s452 = scalar_lea.vmem %s10, %s451
      $region60: #{model_forward.16} parent=27 // pred_fallthru
        _
      // Predicated region
      $region61: #{model_forward.16} parent=27 // pred_check
        %p453 = pneg %p310
      $region62: #{model_forward.16} parent=27 // pred_check_branch
        %455 = sbr.rel (%p453) target = $region64
      $region63: #{model_forward.16} parent=27 // pred_region
        %p456 = scmp.lt.s32.totalorder %s19, 2
        %s457 = scalar_select %p456, %s19, 2
        %s458 = smul.addr %s457, 2
        %s459 = smul.addr %s458, 4
        %s460 = scalar_lea.vmem %s11, %s459
      $region64: #{model_forward.16} parent=27 // pred_fallthru
        _
      // Predicated region
      $region65: #{model_forward.16} parent=27 // pred_check
        %p461 = pneg %p336
      $region66: #{model_forward.16} parent=27 // pred_check_branch
        %463 = sbr.rel (%p461) target = $region68
      $region67: #{model_forward.16} parent=27 // pred_region
        %p464 = scmp.lt.s32.totalorder %s19, 2
        %s465 = scalar_select %p464, %s19, 2
        %s466 = smul.addr %s465, 2
        %s467 = smul.addr %s466, 8
        %s468 = scalar_lea.vmem %s12, %s467
      $region68: #{model_forward.16} parent=27 // pred_fallthru
        _
    $region28: #{model_forward.16} parent=5 // pred_fallthru
      _
    %p469 = scmp.le.s32.totalorder 1, %s19
    %p470 = scmp.lt.s32.totalorder %s19, 4
    %p471 = pnand %p469, %p470
    %p472 = pneg %p471
    // Predicated region
    $region69: #{model_forward.16} parent=5 // pred_check
      _
    $region70: #{model_forward.16} parent=5 // pred_check_branch
      %474 = sbr.rel (%p471) target = $region72
    $region71: #{model_forward.16} parent=5 // pred_region
      %s475 = ssub.s32 %s19, 1
      %p476 = pneg %p40
      %p477 = pneg %p37
      %p478 = pneg %p61
      %p479 = pneg %p58
      %p480 = pneg %p82
      %p481 = pneg %p79
      %p482 = scmp.lt.s32.totalorder %s24, 2
      %s483 = scalar_select %p482, %s24, 2
      %s484 = smul.addr %s483, 6
      %s485 = smul.addr %s484, 4
      %s486 = scalar_lea.vmem %s3, %s485
      %p487 = pneg %p108
      %p488 = pneg %p105
      %p489 = scmp.lt.s32.totalorder %s24, 2
      %s490 = scalar_select %p489, %s24, 2
      %s491 = smul.addr %s490, 2
      %s492 = smul.addr %s491, 8
      %s493 = scalar_lea.vmem %s4, %s492
      %p494 = pneg %p134
      %p495 = pneg %p131
      %p496 = scmp.lt.s32.totalorder %s24, 2
      %s497 = scalar_select %p496, %s24, 2
      %s498 = smul.addr %s497, 2
      %s499 = smul.addr %s498, 4
      %s500 = scalar_lea.vmem %s5, %s499
      %p501 = pneg %p160
      %p502 = pneg %p157
      %p503 = scmp.lt.s32.totalorder %s24, 2
      %s504 = scalar_select %p503, %s24, 2
      %s505 = smul.addr %s504, 2
      %s506 = smul.addr %s505, 8
      %s507 = scalar_lea.vmem %s6, %s506
      %p508 = pneg %p186
      %p509 = pneg %p183
      %p510 = scmp.lt.s32.totalorder %s24, 2
      %s511 = scalar_select %p510, %s24, 2
      %s512 = smul.addr %s511, 4
      %s513 = scalar_lea.vmem %s7, %s512
      %p514 = pneg %p212
      %p515 = pneg %p209
      %p516 = scmp.lt.s32.totalorder %s24, 2
      %s517 = scalar_select %p516, %s24, 2
      %s518 = smul.addr %s517, 8
      %s519 = scalar_lea.vmem %s8, %s518
      %p520 = pneg %p238
      %p521 = pneg %p235
      %p522 = scmp.lt.s32.totalorder %s24, 2
      %s523 = scalar_select %p522, %s24, 2
      %s524 = smul.addr %s523, 2
      %s525 = smul.addr %s524, 4
      %s526 = scalar_lea.vmem %s9, %s525
      %p527 = pneg %p264
      %p528 = pneg %p261
      %p529 = scmp.lt.s32.totalorder %s24, 2
      %s530 = scalar_select %p529, %s24, 2
      %s531 = smul.addr %s530, 2
      %s532 = smul.addr %s531, 8
      %s533 = scalar_lea.vmem %s10, %s532
      %p534 = pneg %p290
      %p535 = pneg %p287
      %p536 = scmp.lt.s32.totalorder %s24, 2
      %s537 = scalar_select %p536, %s24, 2
      %s538 = smul.addr %s537, 2
      %s539 = smul.addr %s538, 4
      %s540 = scalar_lea.vmem %s11, %s539
      %p541 = pneg %p316
      %p542 = pneg %p313
      %p543 = scmp.lt.s32.totalorder %s24, 2
      %s544 = scalar_select %p543, %s24, 2
      %s545 = smul.addr %s544, 2
      %s546 = smul.addr %s545, 8
      %s547 = scalar_lea.vmem %s12, %s546
      %p548 = pneg %p342
      %p549 = pneg %p339
      %p550 = pneg %p363
      %p551 = pneg %p360
      %p552 = scmp.lt.s32.totalorder %s24, 2
      %s553 = scalar_select %p552, %s24, 2
      %s554 = smul.addr %s553, 6
      %s555 = smul.addr %s554, 4
      %s556 = scalar_lea.vmem %s3, %s555
      %p557 = scmp.lt.s32.totalorder %s24, 2
      %s558 = scalar_select %p557, %s24, 2
      %s559 = smul.addr %s558, 2
      %s560 = smul.addr %s559, 8
      %s561 = scalar_lea.vmem %s4, %s560
      %p562 = scmp.lt.s32.totalorder %s24, 2
      %s563 = scalar_select %p562, %s24, 2
      %s564 = smul.addr %s563, 2
      %s565 = smul.addr %s564, 4
      %s566 = scalar_lea.vmem %s5, %s565
      %p567 = scmp.lt.s32.totalorder %s24, 2
      %s568 = scalar_select %p567, %s24, 2
      %s569 = smul.addr %s568, 2
      %s570 = smul.addr %s569, 8
      %s571 = scalar_lea.vmem %s6, %s570
      %p572 = scmp.lt.s32.totalorder %s24, 2
      %s573 = scalar_select %p572, %s24, 2
      %s574 = smul.addr %s573, 4
      %s575 = scalar_lea.vmem %s7, %s574
      %p576 = scmp.lt.s32.totalorder %s24, 2
      %s577 = scalar_select %p576, %s24, 2
      %s578 = smul.addr %s577, 8
      %s579 = scalar_lea.vmem %s8, %s578
      %p580 = scmp.lt.s32.totalorder %s24, 2
      %s581 = scalar_select %p580, %s24, 2
      %s582 = smul.addr %s581, 2
      %s583 = smul.addr %s582, 4
      %s584 = scalar_lea.vmem %s9, %s583
      %p585 = scmp.lt.s32.totalorder %s24, 2
      %s586 = scalar_select %p585, %s24, 2
      %s587 = smul.addr %s586, 2
      %s588 = smul.addr %s587, 8
      %s589 = scalar_lea.vmem %s10, %s588
      %p590 = scmp.lt.s32.totalorder %s24, 2
      %s591 = scalar_select %p590, %s24, 2
      %s592 = smul.addr %s591, 2
      %s593 = smul.addr %s592, 4
      %s594 = scalar_lea.vmem %s11, %s593
      %p595 = scmp.lt.s32.totalorder %s24, 2
      %s596 = scalar_select %p595, %s24, 2
      %s597 = smul.addr %s596, 2
      %s598 = smul.addr %s597, 8
      %s599 = scalar_lea.vmem %s12, %s598
      %s601 = sshll.u32 1, %s24
      %s602 = sshra.s32 %s601, 1
      %p603 = scmp.eq.s32.totalorder %s24, 0
      // Predicated region
      $region73: #{model_forward.16} parent=71 // pred_check
        %p604 = pneg %p603
      $region74: #{model_forward.16} parent=71 // pred_check_branch
        %606 = sbr.rel (%p604) target = $region76
      $region75: #{model_forward.16} parent=71 // pred_region
        %v607 = vld [vmem:[%s0] sm:$0xff]
        %v608 = vld [vmem:[%s0 + $0x8] sm:$0xff]
        %609 = vst [vmem:[#allocation2] sm:$0xff] %v607
        %610 = vst [vmem:[#allocation2 + $0x8] sm:$0xff] %v608
      $region76: #{model_forward.16} parent=71 // pred_fallthru
        _
      %v611 = vld [vmem:[#allocation2] sm:$0xff]
      %v612 = vld [vmem:[#allocation2 + $0x8] sm:$0xff]
      %v613 = vld [vmem:[%s2] sm:$0x1]
      %v614 = vlaneseq
      %v615 = vand.u32 %v614, 127
      %vm616 = vcmp.lt.s32.totalorder %v615, 44
      %v617 = vsel %vm616, 1, 0
      %v618 = vcvt.s32.f32 %v617
      %v619 = vld [vmem:[%s556] sm:$0xf]
      %v620 = vld [vmem:[%s556 + $0x4] sm:$0xf]
      %v621 = vld [vmem:[%s556 + $0x8] sm:$0xf]
      %v622 = vld [vmem:[%s556 + $0xc] sm:$0xf]
      %v623 = vld [vmem:[%s556 + $0x10] sm:$0xf]
      %v624 = vld [vmem:[%s556 + $0x14] sm:$0xf]
      %v625 = vpack.c.bf16 %v612, %v611
      %v632 = vunpack.c.l.b16 %v619
      %v633 = vunpack.c.l.b16 %v620
      %v634 = vunpack.c.l.b16 %v621
      %v635 = vunpack.c.l.b16 %v622
      %v636 = vunpack.c.l.b16 %v623
      %v637 = vunpack.c.l.b16 %v624
      %v638 = vpack.c.b16 %v633, %v632
      %v639 = vpack.c.b16 %v635, %v634
      %v640 = vpack.c.b16 %v637, %v636
      %vm641 = vcmask 130048
      %v643 = vsel %vm641, %v638, 0
      %v646 = vsel %vm641, %v639, 0
      %v649 = vsel %vm641, %v640, 0
      %651 = vmatprep.subr.bf16.mxu0 0
      %652 = vmatpush1.bf16.msra.mxu0 %v625
      %653 = vmatprep.subr.bf16.mxu0 0
      %654 = vmatpush1.bf16.msra.mxu0 0
      %655 = vmatprep.subr.bf16.mxu0 0
      %656 = vmatpush1.bf16.msra.mxu0 0
      %657 = vmatprep.subr.bf16.mxu0 0
      %658 = vmatpush1.bf16.msra.mxu0 0
      %659 = vmatprep.subr.bf16.mxu0 0
      %660 = vmatpush1.bf16.msra.mxu0 0
      %661 = vmatprep.subr.bf16.mxu0 0
      %662 = vmatpush1.bf16.msra.mxu0 0
      %663 = vmatprep.subr.bf16.mxu0 0
      %664 = vmatpush1.bf16.msra.mxu0 0
      %665 = vmatprep.subr.bf16.mxu0 0
      %666 = vmatpush1.bf16.msra.mxu0 0
      %667 = vmatprep.subr.bf16.mxu0 0
      %668 = vmatpush1.bf16.msra.mxu0 0
      %669 = vmatprep.subr.bf16.mxu0 0
      %670 = vmatpush1.bf16.msra.mxu0 0
      %671 = vmatprep.subr.bf16.mxu0 0
      %672 = vmatpush1.bf16.msra.mxu0 0
      %673 = vmatprep.subr.bf16.mxu0 0
      %674 = vmatpush1.bf16.msra.mxu0 0
      %675 = vmatprep.subr.bf16.mxu0 0
      %676 = vmatpush1.bf16.msra.mxu0 0
      %677 = vmatprep.subr.bf16.mxu0 0
      %678 = vmatpush1.bf16.msra.mxu0 0
      %679 = vmatprep.subr.bf16.mxu0 0
      %680 = vmatpush1.bf16.msra.mxu0 0
      %681 = vmatprep.subr.bf16.mxu0 0
      %682 = vmatpush1.bf16.msra.mxu0 0
      %683 = vmatprep.mubr.bf16.mxu0 0
      %684 = vmatmul.mubr.bf16.gmra.mrb[0].mxu0 %v643
      %v685 = vpop.f32.mrb[0].mxu0
      %v686 = vadd.f32 0.0, %v685
      %v687 = vpop.f32.mrb[0].mxu0
      %v688 = vpop.f32.mrb[0].mxu0
      %v689 = vadd.f32 0.0, %v688
      %v690 = vpop.f32.mrb[0].mxu0
      %691 = vmatprep.mubr.bf16.mxu0 0
      %692 = vmatmul.mubr.bf16.gmra.mrb[0].mxu0 %v646
      %v693 = vpop.f32.mrb[0].mxu0
      %v694 = vadd.f32 0.0, %v693
      %v695 = vpop.f32.mrb[0].mxu0
      %v696 = vpop.f32.mrb[0].mxu0
      %v697 = vadd.f32 0.0, %v696
      %v698 = vpop.f32.mrb[0].mxu0
      %699 = vmatprep.mubr.bf16.mxu0 0
      %700 = vmatmul.mubr.bf16.gmra.mrb[0].mxu0 %v649
      %v701 = vpop.f32.mrb[0].mxu0
      %v702 = vadd.f32 0.0, %v701
      %v703 = vpop.f32.mrb[0].mxu0
      %v704 = vpop.f32.mrb[0].mxu0
      %v705 = vadd.f32 0.0, %v704
      %v706 = vpop.f32.mrb[0].mxu0
      %707 = vdwg.mxu0
      %s708 = sand.u32 %s601, 127
      %s709 = sand.u32 %s708, 127
      %710 = vrot.lane.b32.xlu0 %v686, %s709
      %v711 = vpop.permute.xlu0 %710
      %712 = vrot.lane.b32.xlu0 %v689, %s709
      %v713 = vpop.permute.xlu0 %712
      %v714 = vstv %s601
      %vm715 = vcmp.ge.s32.totalorder %v615, %v714
      %v716 = vsel %vm715, 1, 0
      %vm717 = vcmp.eq.s32.totalorder %v716, 1
      %v718 = vsel %vm717, %v711, 0.0
      %v719 = vsel %vm717, %v713, 0.0
      %s720 = ssub.s32 128, %s601
      %s721 = sand.u32 %s720, 127
      %s722 = sand.u32 %s721, 127
      %723 = vrot.lane.b32.xlu0 %v702, %s722
      %v724 = vpop.permute.xlu0 %723
      %725 = vrot.lane.b32.xlu0 %v705, %s722
      %v726 = vpop.permute.xlu0 %725
      %v727 = vstv %s720
      %vm728 = vcmp.lt.s32.totalorder %v615, %v727
      %v729 = vsel %vm728, 1, 0
      %vm730 = vcmp.eq.s32.totalorder %v729, 1
      %v731 = vsel %vm730, %v724, 0.0
      %v732 = vsel %vm730, %v726, 0.0
      %v733 = vadd.f32 %v694, %v718
      %v734 = vadd.f32 %v697, %v719
      %v735 = vadd.f32 %v733, %v731
      %v736 = vadd.f32 %v734, %v732
      %v737 = vld [vmem:[%s561] sm:$0xff]
      %v738 = vld [vmem:[%s561 + $0x8] sm:$0xff]
      %740 = vset.pattern.permute.xlu0 0
      %741 = vperm.xlu0 %740, %v737
      %v742 = vpop.permute.xlu0 %741
      %745 = vset.pattern.permute.xlu0 0
      %746 = vperm.xlu0 %745, %v738
      %v747 = vpop.permute.xlu0 %746
      %v749 = vadd.f32 %v735, %v742
      %v750 = vadd.f32 %v736, %v747
      %v751 = vmax.f32 %v749, 0.0
      %v752 = vmax.f32 %v750, 0.0
      %v753 = vmul.f32 %v751, %v618
      %v754 = vmul.f32 %v752, %v618
      %755 = vadd.xlane.f32.xlu0 %v753
      %v756 = vpop.xlane.xlu0 %755
      %757 = vadd.xlane.f32.xlu0 %v754
      %v758 = vpop.xlane.xlu0 %757
      %v759 = vmul.f32 %v756, 0.022727273
      %v760 = vmul.f32 %v758, 0.022727273
      %v761 = vsub.f32 %v751, %v759
      %v762 = vsub.f32 %v752, %v760
      %v763 = vmul.f32 %v761, %v761
      %v764 = vmul.f32 %v762, %v762
      %v765 = vmul.f32 %v763, %v618
      %v766 = vmul.f32 %v764, %v618
      %767 = vadd.xlane.f32.xlu0 %v765
      %v768 = vpop.xlane.xlu0 %767
      %769 = vadd.xlane.f32.xlu0 %v766
      %v770 = vpop.xlane.xlu0 %769
      %v771 = vmul.f32 %v768, 0.022727273
      %v772 = vmul.f32 %v770, 0.022727273
      %v773 = vadd.f32 %v771, 1e-05
      %v774 = vadd.f32 %v772, 1e-05
      %v775 = vrsqrt.pop %v773
      %v776 = vrsqrt.pop %v774
      %v777 = vmul.f32 %v761, %v775
      %v778 = vmul.f32 %v762, %v776
      %v779 = vpack.c.bf16 %v778, %v777
      %v780 = vld [vmem:[%s566] sm:$0xf]
      %v781 = vld [vmem:[%s566 + $0x4] sm:$0xf]
      %v782 = vld [vmem:[%s571] sm:$0xff]
      %v783 = vld [vmem:[%s571 + $0x8] sm:$0xff]
      %785 = vset.pattern.permute.xlu0 0
      %786 = vperm.xlu0 %785, %v782
      %v787 = vpop.permute.xlu0 %786
      %790 = vset.pattern.permute.xlu0 0
      %791 = vperm.xlu0 %790, %v783
      %v792 = vpop.permute.xlu0 %791
      %v796 = vunpack.c.l.b16 %v780
      %v797 = vunpack.c.l.b16 %v781
      %v798 = vpack.c.b16 %v797, %v796
      %v800 = vsel %vm641, %v798, 0
      %802 = vmatprep.subr.bf16.mxu0 0
      %803 = vmatpush1.bf16.msra.mxu0 %v779
      %804 = vmatprep.subr.bf16.mxu0 0
      %805 = vmatpush1.bf16.msra.mxu0 0
      %806 = vmatprep.subr.bf16.mxu0 0
      %807 = vmatpush1.bf16.msra.mxu0 0
      %808 = vmatprep.subr.bf16.mxu0 0
      %809 = vmatpush1.bf16.msra.mxu0 0
      %810 = vmatprep.subr.bf16.mxu0 0
      %811 = vmatpush1.bf16.msra.mxu0 0
      %812 = vmatprep.subr.bf16.mxu0 0
      %813 = vmatpush1.bf16.msra.mxu0 0
      %814 = vmatprep.subr.bf16.mxu0 0
      %815 = vmatpush1.bf16.msra.mxu0 0
      %816 = vmatprep.subr.bf16.mxu0 0
      %817 = vmatpush1.bf16.msra.mxu0 0
      %818 = vmatprep.subr.bf16.mxu0 0
      %819 = vmatpush1.bf16.msra.mxu0 0
      %820 = vmatprep.subr.bf16.mxu0 0
      %821 = vmatpush1.bf16.msra.mxu0 0
      %822 = vmatprep.subr.bf16.mxu0 0
      %823 = vmatpush1.bf16.msra.mxu0 0
      %824 = vmatprep.subr.bf16.mxu0 0
      %825 = vmatpush1.bf16.msra.mxu0 0
      %826 = vmatprep.subr.bf16.mxu0 0
      %827 = vmatpush1.bf16.msra.mxu0 0
      %828 = vmatprep.subr.bf16.mxu0 0
      %829 = vmatpush1.bf16.msra.mxu0 0
      %830 = vmatprep.subr.bf16.mxu0 0
      %831 = vmatpush1.bf16.msra.mxu0 0
      %832 = vmatprep.subr.bf16.mxu0 0
      %833 = vmatpush1.bf16.msra.mxu0 0
      %834 = vmatprep.mubr.bf16.mxu0 0
      %835 = vmatmul.mubr.bf16.gmra.mrb[0].mxu0 %v800
      %v836 = vpop.f32.mrb[0].mxu0
      %v837 = vadd.f32 %v787, %v836
      %v838 = vpop.f32.mrb[0].mxu0
      %v839 = vpop.f32.mrb[0].mxu0
      %v840 = vadd.f32 %v792, %v839
      %v841 = vpop.f32.mrb[0].mxu0
      %842 = vdwg.mxu0
      %v843 = vmul.f32 %v840, %v618
      %v844 = vld [vmem:[%s1] sm:$0xff]
      %v845 = vld [vmem:[%s1 + $0x8] sm:$0xff]
      %v847 = vlaneseq
      %v848 = vshrl.u32 %v847, 7
      %v849 = vsub.s32 0, %v848
      %v850 = vrot.slane %v613, %v849
      %v852 = vmul.f32 %v844, %v850
      %v853 = vmul.f32 %v845, %v850
      %v854 = vpack.c.bf16 %v853, %v852
      %v855 = vld [vmem:[%s575] sm:$0xf]
      %v856 = vld [vmem:[%s579] sm:$0xff]
      %858 = vset.pattern.permute.xlu0 0
      %859 = vperm.xlu0 %858, %v856
      %v860 = vpop.permute.xlu0 %859
      %v863 = vsel %vm641, %v855, 0
      %865 = vmatprep.subr.bf16.mxu0 0
      %866 = vmatpush1.bf16.msra.mxu0 %v854
      %867 = vmatprep.subr.bf16.mxu0 0
      %868 = vmatpush1.bf16.msra.mxu0 0
      %869 = vmatprep.subr.bf16.mxu0 0
      %870 = vmatpush1.bf16.msra.mxu0 0
      %871 = vmatprep.subr.bf16.mxu0 0
      %872 = vmatpush1.bf16.msra.mxu0 0
      %873 = vmatprep.subr.bf16.mxu0 0
      %874 = vmatpush1.bf16.msra.mxu0 0
      %875 = vmatprep.subr.bf16.mxu0 0
      %876 = vmatpush1.bf16.msra.mxu0 0
      %877 = vmatprep.subr.bf16.mxu0 0
      %878 = vmatpush1.bf16.msra.mxu0 0
      %879 = vmatprep.subr.bf16.mxu0 0
      %880 = vmatpush1.bf16.msra.mxu0 0
      %881 = vmatprep.subr.bf16.mxu0 0
      %882 = vmatpush1.bf16.msra.mxu0 0
      %883 = vmatprep.subr.bf16.mxu0 0
      %884 = vmatpush1.bf16.msra.mxu0 0
      %885 = vmatprep.subr.bf16.mxu0 0
      %886 = vmatpush1.bf16.msra.mxu0 0
      %887 = vmatprep.subr.bf16.mxu0 0
      %888 = vmatpush1.bf16.msra.mxu0 0
      %889 = vmatprep.subr.bf16.mxu0 0
      %890 = vmatpush1.bf16.msra.mxu0 0
      %891 = vmatprep.subr.bf16.mxu0 0
      %892 = vmatpush1.bf16.msra.mxu0 0
      %893 = vmatprep.subr.bf16.mxu0 0
      %894 = vmatpush1.bf16.msra.mxu0 0
      %895 = vmatprep.subr.bf16.mxu0 0
      %896 = vmatpush1.bf16.msra.mxu0 0
      %897 = vmatprep.mubr.bf16.mxu0 0
      %898 = vmatmul.mubr.bf16.gmra.mrb[0].mxu0 %v863
      %v899 = vpop.f32.mrb[0].mxu0
      %v900 = vadd.f32 %v860, %v899
      %v901 = vpop.f32.mrb[0].mxu0
      %v902 = vpop.f32.mrb[0].mxu0
      %v903 = vpop.f32.mrb[0].mxu0
      %904 = vdwg.mxu0
      %v905 = vmul.f32 %v900, %v618
      %v906 = vlaneseq
      %v907 = vshrl.u32 %v906, 7
      %v908 = vadd.s32 %v907, 8
      %v909 = vadd.s32 %v907, 16
      %v910 = vadd.s32 %v907, 24
      %v911 = vadd.s32 %v907, 32
      %v912 = vadd.s32 %v907, 40
      %v913 = vadd.s32 %v907, 48
      %v914 = vadd.s32 %v907, 56
      %v915 = vadd.s32 %v907, 64
      %v916 = vadd.s32 %v907, 72
      %v917 = vadd.s32 %v907, 80
      %v918 = vadd.s32 %v907, 88
      %v919 = vadd.s32 %v907, 96
      %v920 = vadd.s32 %v907, 104
      %v921 = vadd.s32 %v907, 112
      %v922 = vadd.s32 %v907, 120
      %v923 = vpack.c.bf16 %v837, %v837
      %v924 = vpack.c.bf16 %v843, %v843
      %s925 = ssub.s32 %s601, 1
      %v926 = vstv %s925
      %v927 = vand.u32 %v907, %v926
      %v928 = vand.u32 %v908, %v926
      %v929 = vand.u32 %v909, %v926
      %v930 = vand.u32 %v910, %v926
      %v931 = vand.u32 %v911, %v926
      %v932 = vand.u32 %v912, %v926
      %v933 = vand.u32 %v913, %v926
      %v934 = vand.u32 %v914, %v926
      %v935 = vand.u32 %v915, %v926
      %v936 = vand.u32 %v916, %v926
      %v937 = vand.u32 %v917, %v926
      %v938 = vand.u32 %v918, %v926
      %v939 = vand.u32 %v919, %v926
      %v940 = vand.u32 %v920, %v926
      %v941 = vand.u32 %v921, %v926
      %v942 = vand.u32 %v922, %v926
      %v943 = vsub.s32 %v907, %v927
      %v944 = vsub.s32 %v908, %v928
      %v945 = vsub.s32 %v909, %v929
      %v946 = vsub.s32 %v910, %v930
      %v947 = vsub.s32 %v911, %v931
      %v948 = vsub.s32 %v912, %v932
      %v949 = vsub.s32 %v913, %v933
      %v950 = vsub.s32 %v914, %v934
      %v951 = vsub.s32 %v915, %v935
      %v952 = vsub.s32 %v916, %v936
      %v953 = vsub.s32 %v917, %v937
      %v954 = vsub.s32 %v918, %v938
      %v955 = vsub.s32 %v919, %v939
      %v956 = vsub.s32 %v920, %v940
      %v957 = vsub.s32 %v921, %v941
      %v958 = vsub.s32 %v922, %v942
      %v959 = vstv %s602
      %v960 = vsub.s32 %v943, %v959
      %v961 = vsub.s32 %v944, %v959
      %v962 = vsub.s32 %v945, %v959
      %v963 = vsub.s32 %v946, %v959
      %v964 = vsub.s32 %v947, %v959
      %v965 = vsub.s32 %v948, %v959
      %v966 = vsub.s32 %v949, %v959
      %v967 = vsub.s32 %v950, %v959
      %v968 = vsub.s32 %v951, %v959
      %v969 = vsub.s32 %v952, %v959
      %v970 = vsub.s32 %v953, %v959
      %v971 = vsub.s32 %v954, %v959
      %v972 = vsub.s32 %v955, %v959
      %v973 = vsub.s32 %v956, %v959
      %v974 = vsub.s32 %v957, %v959
      %v975 = vsub.s32 %v958, %v959
      %vm976 = vcmp.ge.s32.totalorder %v615, %v960
      %vm977 = vcmp.ge.s32.totalorder %v615, %v961
      %vm978 = vcmp.ge.s32.totalorder %v615, %v962
      %vm979 = vcmp.ge.s32.totalorder %v615, %v963
      %vm980 = vcmp.ge.s32.totalorder %v615, %v964
      %vm981 = vcmp.ge.s32.totalorder %v615, %v965
      %vm982 = vcmp.ge.s32.totalorder %v615, %v966
      %vm983 = vcmp.ge.s32.totalorder %v615, %v967
      %vm984 = vcmp.ge.s32.totalorder %v615, %v968
      %vm985 = vcmp.ge.s32.totalorder %v615, %v969
      %vm986 = vcmp.ge.s32.totalorder %v615, %v970
      %vm987 = vcmp.ge.s32.totalorder %v615, %v971
      %vm988 = vcmp.ge.s32.totalorder %v615, %v972
      %vm989 = vcmp.ge.s32.totalorder %v615, %v973
      %vm990 = vcmp.ge.s32.totalorder %v615, %v974
      %vm991 = vcmp.ge.s32.totalorder %v615, %v975
      %v992 = vadd.s32 %v943, %v714
      %v993 = vadd.s32 %v944, %v714
      %v994 = vadd.s32 %v945, %v714
      %v995 = vadd.s32 %v946, %v714
      %v996 = vadd.s32 %v947, %v714
      %v997 = vadd.s32 %v948, %v714
      %v998 = vadd.s32 %v949, %v714
      %v999 = vadd.s32 %v950, %v714
      %v1000 = vadd.s32 %v951, %v714
      %v1001 = vadd.s32 %v952, %v714
      %v1002 = vadd.s32 %v953, %v714
      %v1003 = vadd.s32 %v954, %v714
      %v1004 = vadd.s32 %v955, %v714
      %v1005 = vadd.s32 %v956, %v714
      %v1006 = vadd.s32 %v957, %v714
      %v1007 = vadd.s32 %v958, %v714
      %v1008 = vadd.s32 %v992, %v959
      %v1009 = vadd.s32 %v993, %v959
      %v1010 = vadd.s32 %v994, %v959
      %v1011 = vadd.s32 %v995, %v959
      %v1012 = vadd.s32 %v996, %v959
      %v1013 = vadd.s32 %v997, %v959
      %v1014 = vadd.s32 %v998, %v959
      %v1015 = vadd.s32 %v999, %v959
      %v1016 = vadd.s32 %v1000, %v959
      %v1017 = vadd.s32 %v1001, %v959
      %v1018 = vadd.s32 %v1002, %v959
      %v1019 = vadd.s32 %v1003, %v959
      %v1020 = vadd.s32 %v1004, %v959
      %v1021 = vadd.s32 %v1005, %v959
      %v1022 = vadd.s32 %v1006, %v959
      %v1023 = vadd.s32 %v1007, %v959
      %vm1024 = vcmp.lt.s32.totalorder %v615, %v1008
      %vm1025 = vcmp.lt.s32.totalorder %v615, %v1009
      %vm1026 = vcmp.lt.s32.totalorder %v615, %v1010
      %vm1027 = vcmp.lt.s32.totalorder %v615, %v1011
      %vm1028 = vcmp.lt.s32.totalorder %v615, %v1012
      %vm1029 = vcmp.lt.s32.totalorder %v615, %v1013
      %vm1030 = vcmp.lt.s32.totalorder %v615, %v1014
      %vm1031 = vcmp.lt.s32.totalorder %v615, %v1015
      %vm1032 = vcmp.lt.s32.totalorder %v615, %v1016
      %vm1033 = vcmp.lt.s32.totalorder %v615, %v1017
      %vm1034 = vcmp.lt.s32.totalorder %v615, %v1018
      %vm1035 = vcmp.lt.s32.totalorder %v615, %v1019
      %vm1036 = vcmp.lt.s32.totalorder %v615, %v1020
      %vm1037 = vcmp.lt.s32.totalorder %v615, %v1021
      %vm1038 = vcmp.lt.s32.totalorder %v615, %v1022
      %vm1039 = vcmp.lt.s32.totalorder %v615, %v1023
      %vm1040 = vmand %vm976, %vm1024
      %vm1041 = vmand %vm977, %vm1025
      %vm1042 = vmand %vm978, %vm1026
      %vm1043 = vmand %vm979, %vm1027
      %vm1044 = vmand %vm980, %vm1028
      %vm1045 = vmand %vm981, %vm1029
      %vm1046 = vmand %vm982, %vm1030
      %vm1047 = vmand %vm983, %vm1031
      %vm1048 = vmand %vm984, %vm1032
      %vm1049 = vmand %vm985, %vm1033
      %vm1050 = vmand %vm986, %vm1034
      %vm1051 = vmand %vm987, %vm1035
      %vm1052 = vmand %vm988, %vm1036
      %vm1053 = vmand %vm989, %vm1037
      %vm1054 = vmand %vm990, %vm1038
      %vm1055 = vmand %vm991, %vm1039
      %v1056 = vsub.s32 %v907, %v959
      %v1057 = vsub.s32 %v908, %v959
      %v1058 = vsub.s32 %v909, %v959
      %v1059 = vsub.s32 %v910, %v959
      %v1060 = vsub.s32 %v911, %v959
      %v1061 = vsub.s32 %v912, %v959
      %v1062 = vsub.s32 %v913, %v959
      %v1063 = vsub.s32 %v914, %v959
      %v1064 = vsub.s32 %v915, %v959
      %v1065 = vsub.s32 %v916, %v959
      %v1066 = vsub.s32 %v917, %v959
      %v1067 = vsub.s32 %v918, %v959
      %v1068 = vsub.s32 %v919, %v959
      %v1069 = vsub.s32 %v920, %v959
      %v1070 = vsub.s32 %v921, %v959
      %v1071 = vsub.s32 %v922, %v959
      %vm1072 = vcmp.ge.s32.totalorder %v615, %v1056
      %vm1073 = vcmp.ge.s32.totalorder %v615, %v1057
      %vm1074 = vcmp.ge.s32.totalorder %v615, %v1058
      %vm1075 = vcmp.ge.s32.totalorder %v615, %v1059
      %vm1076 = vcmp.ge.s32.totalorder %v615, %v1060
      %vm1077 = vcmp.ge.s32.totalorder %v615, %v1061
      %vm1078 = vcmp.ge.s32.totalorder %v615, %v1062
      %vm1079 = vcmp.ge.s32.totalorder %v615, %v1063
      %vm1080 = vcmp.ge.s32.totalorder %v615, %v1064
      %vm1081 = vcmp.ge.s32.totalorder %v615, %v1065
      %vm1082 = vcmp.ge.s32.totalorder %v615, %v1066
      %vm1083 = vcmp.ge.s32.totalorder %v615, %v1067
      %vm1084 = vcmp.ge.s32.totalorder %v615, %v1068
      %vm1085 = vcmp.ge.s32.totalorder %v615, %v1069
      %vm1086 = vcmp.ge.s32.totalorder %v615, %v1070
      %vm1087 = vcmp.ge.s32.totalorder %v615, %v1071
      %v1088 = vadd.s32 %v907, %v714
      %v1089 = vadd.s32 %v908, %v714
      %v1090 = vadd.s32 %v909, %v714
      %v1091 = vadd.s32 %v910, %v714
      %v1092 = vadd.s32 %v911, %v714
      %v1093 = vadd.s32 %v912, %v714
      %v1094 = vadd.s32 %v913, %v714
      %v1095 = vadd.s32 %v914, %v714
      %v1096 = vadd.s32 %v915, %v714
      %v1097 = vadd.s32 %v916, %v714
      %v1098 = vadd.s32 %v917, %v714
      %v1099 = vadd.s32 %v918, %v714
      %v1100 = vadd.s32 %v919, %v714
      %v1101 = vadd.s32 %v920, %v714
      %v1102 = vadd.s32 %v921, %v714
      %v1103 = vadd.s32 %v922, %v714
      %v1104 = vsub.s32 %v1088, %v959
      %v1105 = vsub.s32 %v1089, %v959
      %v1106 = vsub.s32 %v1090, %v959
      %v1107 = vsub.s32 %v1091, %v959
      %v1108 = vsub.s32 %v1092, %v959
      %v1109 = vsub.s32 %v1093, %v959
      %v1110 = vsub.s32 %v1094, %v959
      %v1111 = vsub.s32 %v1095, %v959
      %v1112 = vsub.s32 %v1096, %v959
      %v1113 = vsub.s32 %v1097, %v959
      %v1114 = vsub.s32 %v1098, %v959
      %v1115 = vsub.s32 %v1099, %v959
      %v1116 = vsub.s32 %v1100, %v959
      %v1117 = vsub.s32 %v1101, %v959
      %v1118 = vsub.s32 %v1102, %v959
      %v1119 = vsub.s32 %v1103, %v959
      %vm1120 = vcmp.lt.s32.totalorder %v615, %v1104
      %vm1121 = vcmp.lt.s32.totalorder %v615, %v1105
      %vm1122 = vcmp.lt.s32.totalorder %v615, %v1106
      %vm1123 = vcmp.lt.s32.totalorder %v615, %v1107
      %vm1124 = vcmp.lt.s32.totalorder %v615, %v1108
      %vm1125 = vcmp.lt.s32.totalorder %v615, %v1109
      %vm1126 = vcmp.lt.s32.totalorder %v615, %v1110
      %vm1127 = vcmp.lt.s32.totalorder %v615, %v1111
      %vm1128 = vcmp.lt.s32.totalorder %v615, %v1112
      %vm1129 = vcmp.lt.s32.totalorder %v615, %v1113
      %vm1130 = vcmp.lt.s32.totalorder %v615, %v1114
      %vm1131 = vcmp.lt.s32.totalorder %v615, %v1115
      %vm1132 = vcmp.lt.s32.totalorder %v615, %v1116
      %vm1133 = vcmp.lt.s32.totalorder %v615, %v1117
      %vm1134 = vcmp.lt.s32.totalorder %v615, %v1118
      %vm1135 = vcmp.lt.s32.totalorder %v615, %v1119
      %vm1136 = vmand %vm1072, %vm1120
      %vm1137 = vmand %vm1073, %vm1121
      %vm1138 = vmand %vm1074, %vm1122
      %vm1139 = vmand %vm1075, %vm1123
      %vm1140 = vmand %vm1076, %vm1124
      %vm1141 = vmand %vm1077, %vm1125
      %vm1142 = vmand %vm1078, %vm1126
      %vm1143 = vmand %vm1079, %vm1127
      %vm1144 = vmand %vm1080, %vm1128
      %vm1145 = vmand %vm1081, %vm1129
      %vm1146 = vmand %vm1082, %vm1130
      %vm1147 = vmand %vm1083, %vm1131
      %vm1148 = vmand %vm1084, %vm1132
      %vm1149 = vmand %vm1085, %vm1133
      %vm1150 = vmand %vm1086, %vm1134
      %vm1151 = vmand %vm1087, %vm1135
      %vm1152 = vcmp.gt.f32.partialorder %v613, 0.0
      %v1153 = vsel %vm1152, 1, 0
      %v1154 = vlaneseq
      %v1155 = vshrl.u32 %v1154, 7
      %v1156 = vsub.s32 0, %v1155
      %v1157 = vrot.slane %v1153, %v1156
      %vm1158 = vcmp.eq.s32.totalorder %v1157, 1
      %vm1159 = vmand %vm1136, %vm1158
      %vm1160 = vmand %vm1137, %vm1158
      %vm1161 = vmand %vm1138, %vm1158
      %vm1162 = vmand %vm1139, %vm1158
      %vm1163 = vmand %vm1140, %vm1158
      %vm1164 = vmand %vm1141, %vm1158
      %vm1165 = vmand %vm1142, %vm1158
      %vm1166 = vmand %vm1143, %vm1158
      %vm1167 = vmand %vm1144, %vm1158
      %vm1168 = vmand %vm1145, %vm1158
      %vm1169 = vmand %vm1146, %vm1158
      %vm1170 = vmand %vm1147, %vm1158
      %vm1171 = vmand %vm1148, %vm1158
      %vm1172 = vmand %vm1149, %vm1158
      %vm1173 = vmand %vm1150, %vm1158
      %vm1174 = vmand %vm1151, %vm1158
      %v1175 = vsel %vm1159, 9.999995e-07, -13.815511
      %v1176 = vsel %vm1160, 9.999995e-07, -13.815511
      %v1177 = vsel %vm1161, 9.999995e-07, -13.815511
      %v1178 = vsel %vm1162, 9.999995e-07, -13.815511
      %v1179 = vsel %vm1163, 9.999995e-07, -13.815511
      %v1180 = vsel %vm1164, 9.999995e-07, -13.815511
      %v1181 = vsel %vm1165, 9.999995e-07, -13.815511
      %v1182 = vsel %vm1166, 9.999995e-07, -13.815511
      %v1183 = vsel %vm1167, 9.999995e-07, -13.815511
      %v1184 = vsel %vm1168, 9.999995e-07, -13.815511
      %v1185 = vsel %vm1169, 9.999995e-07, -13.815511
      %v1186 = vsel %vm1170, 9.999995e-07, -13.815511
      %v1187 = vsel %vm1171, 9.999995e-07, -13.815511
      %v1188 = vsel %vm1172, 9.999995e-07, -13.815511
      %v1189 = vsel %vm1173, 9.999995e-07, -13.815511
      %v1190 = vsel %vm1174, 9.999995e-07, -13.815511
      %1191 = vxpose.xlu0.c.b16.start [1/8] %v923, 128
      %1192 = vxpose.xlu0.c.b16.cont [2/8] 0, 128
      %1193 = vxpose.xlu0.c.b16.cont [3/8] 0, 128
      %1194 = vxpose.xlu0.c.b16.cont [4/8] 0, 128
      %1195 = vxpose.xlu0.c.b16.cont [5/8] 0, 128
      %1196 = vxpose.xlu0.c.b16.cont [6/8] 0, 128
      %1197 = vxpose.xlu0.c.b16.cont [7/8] 0, 128
      %1198 = vxpose.xlu0.c.b16.end [8/8] 0, 128
      %v1199 = vpop.trf.xlu0
      %v1200 = vpop.trf.xlu0
      %v1201 = vpop.trf.xlu0
      %v1202 = vpop.trf.xlu0
      %v1203 = vpop.trf.xlu0
      %v1204 = vpop.trf.xlu0
      %v1205 = vpop.trf.xlu0
      %v1206 = vpop.trf.xlu0
      %vm1207 = vcmask 64512
      %v1209 = vsel %vm1207, %v1199, 0
      %v1212 = vsel %vm1207, %v1200, 0
      %v1215 = vsel %vm1207, %v1201, 0
      %v1218 = vsel %vm1207, %v1202, 0
      %v1221 = vsel %vm1207, %v1203, 0
      %v1224 = vsel %vm1207, %v1204, 0
      %v1227 = vsel %vm1207, %v1205, 0
      %v1230 = vsel %vm1207, %v1206, 0
      %vm1232 = vcmask 1043456
      %v1234 = vsel %vm1232, %v924, 0
      %1236 = vmatprep.subr.bf16.mxu0 0
      %1237 = vmatpush1.bf16.msra.mxu0 %v1234
      %1238 = vmatprep.subr.bf16.mxu0 0
      %1239 = vmatpush1.bf16.msra.mxu0 0
      %1240 = vmatprep.subr.bf16.mxu0 0
      %1241 = vmatpush1.bf16.msra.mxu0 0
      %1242 = vmatprep.subr.bf16.mxu0 0
      %1243 = vmatpush1.bf16.msra.mxu0 0
      %1244 = vmatprep.subr.bf16.mxu0 0
      %1245 = vmatpush1.bf16.msra.mxu0 0
      %1246 = vmatprep.subr.bf16.mxu0 0
      %1247 = vmatpush1.bf16.msra.mxu0 0
      %1248 = vmatprep.subr.bf16.mxu0 0
      %1249 = vmatpush1.bf16.msra.mxu0 0
      %1250 = vmatprep.subr.bf16.mxu0 0
      %1251 = vmatpush1.bf16.msra.mxu0 0
      %1252 = vmatprep.subr.bf16.mxu0 0
      %1253 = vmatpush1.bf16.msra.mxu0 0
      %1254 = vmatprep.subr.bf16.mxu0 0
      %1255 = vmatpush1.bf16.msra.mxu0 0
      %1256 = vmatprep.subr.bf16.mxu0 0
      %1257 = vmatpush1.bf16.msra.mxu0 0
      %1258 = vmatprep.subr.bf16.mxu0 0
      %1259 = vmatpush1.bf16.msra.mxu0 0
      %1260 = vmatprep.subr.bf16.mxu0 0
      %1261 = vmatpush1.bf16.msra.mxu0 0
      %1262 = vmatprep.subr.bf16.mxu0 0
      %1263 = vmatpush1.bf16.msra.mxu0 0
      %1264 = vmatprep.subr.bf16.mxu0 0
      %1265 = vmatpush1.bf16.msra.mxu0 0
      %1266 = vmatprep.subr.bf16.mxu0 0
      %1267 = vmatpush1.bf16.msra.mxu0 0
      %1268 = vmatprep.mubr.bf16.mxu0 0
      %1269 = vmatmul.mubr.bf16.gmra.mrb[0].mxu0 %v1209
      %v1270 = vpop.f32.mrb[0].mxu0
      %v1271 = vadd.f32 %v1175, %v1270
      %v1272 = vpop.f32.mrb[0].mxu0
      %v1273 = vpop.f32.mrb[0].mxu0
      %v1274 = vadd.f32 %v1176, %v1273
      %v1275 = vpop.f32.mrb[0].mxu0
      %1276 = vmatprep.mubr.bf16.mxu0 0
      %1277 = vmatmul.mubr.bf16.gmra.mrb[0].mxu0 %v1212
      %v1278 = vpop.f32.mrb[0].mxu0
      %v1279 = vadd.f32 %v1177, %v1278
      %v1280 = vpop.f32.mrb[0].mxu0
      %v1281 = vpop.f32.mrb[0].mxu0
      %v1282 = vadd.f32 %v1178, %v1281
      %v1283 = vpop.f32.mrb[0].mxu0
      %1284 = vmatprep.mubr.bf16.mxu0 0
      %1285 = vmatmul.mubr.bf16.gmra.mrb[0].mxu0 %v1215
      %v1286 = vpop.f32.mrb[0].mxu0
      %v1287 = vadd.f32 %v1179, %v1286
      %v1288 = vpop.f32.mrb[0].mxu0
      %v1289 = vpop.f32.mrb[0].mxu0
      %v1290 = vadd.f32 %v1180, %v1289
      %v1291 = vpop.f32.mrb[0].mxu0
      %1292 = vmatprep.mubr.bf16.mxu0 0
      %1293 = vmatmul.mubr.bf16.gmra.mrb[0].mxu0 %v1218
      %v1294 = vpop.f32.mrb[0].mxu0
      %v1295 = vadd.f32 %v1181, %v1294
      %v1296 = vpop.f32.mrb[0].mxu0
      %v1297 = vpop.f32.mrb[0].mxu0
      %v1298 = vadd.f32 %v1182, %v1297
      %v1299 = vpop.f32.mrb[0].mxu0
      %1300 = vmatprep.mubr.bf16.mxu0 0
      %1301 = vmatmul.mubr.bf16.gmra.mrb[0].mxu0 %v1221
      %v1302 = vpop.f32.mrb[0].mxu0
      %v1303 = vadd.f32 %v1183, %v1302
      %v1304 = vpop.f32.mrb[0].mxu0
      %v1305 = vpop.f32.mrb[0].mxu0
      %v1306 = vadd.f32 %v1184, %v1305
      %v1307 = vpop.f32.mrb[0].mxu0
      %1308 = vmatprep.mubr.bf16.mxu0 0
      %1309 = vmatmul.mubr.bf16.gmra.mrb[0].mxu0 %v1224
      %v1310 = vpop.f32.mrb[0].mxu0
      %v1311 = vadd.f32 %v1185, %v1310
      %v1312 = vpop.f32.mrb[0].mxu0
      %v1313 = vpop.f32.mrb[0].mxu0
      %v1314 = vadd.f32 %v1186, %v1313
      %v1315 = vpop.f32.mrb[0].mxu0
      %1316 = vmatprep.mubr.bf16.mxu0 0
      %1317 = vmatmul.mubr.bf16.gmra.mrb[0].mxu0 %v1227
      %v1318 = vpop.f32.mrb[0].mxu0
      %v1319 = vadd.f32 %v1187, %v1318
      %v1320 = vpop.f32.mrb[0].mxu0
      %v1321 = vpop.f32.mrb[0].mxu0
      %v1322 = vadd.f32 %v1188, %v1321
      %v1323 = vpop.f32.mrb[0].mxu0
      %1324 = vmatprep.mubr.bf16.mxu0 0
      %1325 = vmatmul.mubr.bf16.gmra.mrb[0].mxu0 %v1230
      %v1326 = vpop.f32.mrb[0].mxu0
      %v1327 = vadd.f32 %v1189, %v1326
      %v1328 = vpop.f32.mrb[0].mxu0
      %v1329 = vpop.f32.mrb[0].mxu0
      %v1330 = vadd.f32 %v1190, %v1329
      %v1331 = vpop.f32.mrb[0].mxu0
      %1332 = vdwg.mxu0
      %v1333 = vsel %vm1040, %v1271, -1e+30
      %v1334 = vsel %vm1041, %v1274, -1e+30
      %v1335 = vsel %vm1042, %v1279, -1e+30
      %v1336 = vsel %vm1043, %v1282, -1e+30
      %v1337 = vsel %vm1044, %v1287, -1e+30
      %v1338 = vsel %vm1045, %v1290, -1e+30
      %v1339 = vsel %vm1046, %v1295, -1e+30
      %v1340 = vsel %vm1047, %v1298, -1e+30
      %v1341 = vsel %vm1048, %v1303, -1e+30
      %v1342 = vsel %vm1049, %v1306, -1e+30
      %v1343 = vsel %vm1050, %v1311, -1e+30
      %v1344 = vsel %vm1051, %v1314, -1e+30
      %v1345 = vsel %vm1052, %v1319, -1e+30
      %v1346 = vsel %vm1053, %v1322, -1e+30
      %v1347 = vsel %vm1054, %v1327, -1e+30
      %v1348 = vsel %vm1055, %v1330, -1e+30
      %1349 = vmax.xlane.f32.xlu0 %v1333
      %v1350 = vpop.xlane.xlu0 %1349
      %1351 = vmax.xlane.f32.xlu0 %v1334
      %v1352 = vpop.xlane.xlu0 %1351
      %1353 = vmax.xlane.f32.xlu0 %v1335
      %v1354 = vpop.xlane.xlu0 %1353
      %1355 = vmax.xlane.f32.xlu0 %v1336
      %v1356 = vpop.xlane.xlu0 %1355
      %1357 = vmax.xlane.f32.xlu0 %v1337
      %v1358 = vpop.xlane.xlu0 %1357
      %1359 = vmax.xlane.f32.xlu0 %v1338
      %v1360 = vpop.xlane.xlu0 %1359
      %1361 = vmax.xlane.f32.xlu0 %v1339
      %v1362 = vpop.xlane.xlu0 %1361
      %1363 = vmax.xlane.f32.xlu0 %v1340
      %v1364 = vpop.xlane.xlu0 %1363
      %1365 = vmax.xlane.f32.xlu0 %v1341
      %v1366 = vpop.xlane.xlu0 %1365
      %1367 = vmax.xlane.f32.xlu0 %v1342
      %v1368 = vpop.xlane.xlu0 %1367
      %1369 = vmax.xlane.f32.xlu0 %v1343
      %v1370 = vpop.xlane.xlu0 %1369
      %1371 = vmax.xlane.f32.xlu0 %v1344
      %v1372 = vpop.xlane.xlu0 %1371
      %1373 = vmax.xlane.f32.xlu0 %v1345
      %v1374 = vpop.xlane.xlu0 %1373
      %1375 = vmax.xlane.f32.xlu0 %v1346
      %v1376 = vpop.xlane.xlu0 %1375
      %1377 = vmax.xlane.f32.xlu0 %v1347
      %v1378 = vpop.xlane.xlu0 %1377
      %1379 = vmax.xlane.f32.xlu0 %v1348
      %v1380 = vpop.xlane.xlu0 %1379
      %v1381 = vsub.f32 %v1333, %v1350
      %v1382 = vsub.f32 %v1334, %v1352
      %v1383 = vsub.f32 %v1335, %v1354
      %v1384 = vsub.f32 %v1336, %v1356
      %v1385 = vsub.f32 %v1337, %v1358
      %v1386 = vsub.f32 %v1338, %v1360
      %v1387 = vsub.f32 %v1339, %v1362
      %v1388 = vsub.f32 %v1340, %v1364
      %v1389 = vsub.f32 %v1341, %v1366
      %v1390 = vsub.f32 %v1342, %v1368
      %v1391 = vsub.f32 %v1343, %v1370
      %v1392 = vsub.f32 %v1344, %v1372
      %v1393 = vsub.f32 %v1345, %v1374
      %v1394 = vsub.f32 %v1346, %v1376
      %v1395 = vsub.f32 %v1347, %v1378
      %v1396 = vsub.f32 %v1348, %v1380
      %v1397 = vmul.f32 %v1381, 1.442695
      %v1398 = vpow.pop %v1397
      %v1399 = vmul.f32 %v1382, 1.442695
      %v1400 = vpow.pop %v1399
      %v1401 = vmul.f32 %v1383, 1.442695
      %v1402 = vpow.pop %v1401
      %v1403 = vmul.f32 %v1384, 1.442695
      %v1404 = vpow.pop %v1403
      %v1405 = vmul.f32 %v1385, 1.442695
      %v1406 = vpow.pop %v1405
      %v1407 = vmul.f32 %v1386, 1.442695
      %v1408 = vpow.pop %v1407
      %v1409 = vmul.f32 %v1387, 1.442695
      %v1410 = vpow.pop %v1409
      %v1411 = vmul.f32 %v1388, 1.442695
      %v1412 = vpow.pop %v1411
      %v1413 = vmul.f32 %v1389, 1.442695
      %v1414 = vpow.pop %v1413
      %v1415 = vmul.f32 %v1390, 1.442695
      %v1416 = vpow.pop %v1415
      %v1417 = vmul.f32 %v1391, 1.442695
      %v1418 = vpow.pop %v1417
      %v1419 = vmul.f32 %v1392, 1.442695
      %v1420 = vpow.pop %v1419
      %v1421 = vmul.f32 %v1393, 1.442695
      %v1422 = vpow.pop %v1421
      %v1423 = vmul.f32 %v1394, 1.442695
      %v1424 = vpow.pop %v1423
      %v1425 = vmul.f32 %v1395, 1.442695
      %v1426 = vpow.pop %v1425
      %v1427 = vmul.f32 %v1396, 1.442695
      %v1428 = vpow.pop %v1427
      %1429 = vadd.xlane.f32.xlu0 %v1398
      %v1430 = vpop.xlane.xlu0 %1429
      %1431 = vadd.xlane.f32.xlu0 %v1400
      %v1432 = vpop.xlane.xlu0 %1431
      %1433 = vadd.xlane.f32.xlu0 %v1402
      %v1434 = vpop.xlane.xlu0 %1433
      %1435 = vadd.xlane.f32.xlu0 %v1404
      %v1436 = vpop.xlane.xlu0 %1435
      %1437 = vadd.xlane.f32.xlu0 %v1406
      %v1438 = vpop.xlane.xlu0 %1437
      %1439 = vadd.xlane.f32.xlu0 %v1408
      %v1440 = vpop.xlane.xlu0 %1439
      %1441 = vadd.xlane.f32.xlu0 %v1410
      %v1442 = vpop.xlane.xlu0 %1441
      %1443 = vadd.xlane.f32.xlu0 %v1412
      %v1444 = vpop.xlane.xlu0 %1443
      %1445 = vadd.xlane.f32.xlu0 %v1414
      %v1446 = vpop.xlane.xlu0 %1445
      %1447 = vadd.xlane.f32.xlu0 %v1416
      %v1448 = vpop.xlane.xlu0 %1447
      %1449 = vadd.xlane.f32.xlu0 %v1418
      %v1450 = vpop.xlane.xlu0 %1449
      %1451 = vadd.xlane.f32.xlu0 %v1420
      %v1452 = vpop.xlane.xlu0 %1451
      %1453 = vadd.xlane.f32.xlu0 %v1422
      %v1454 = vpop.xlane.xlu0 %1453
      %1455 = vadd.xlane.f32.xlu0 %v1424
      %v1456 = vpop.xlane.xlu0 %1455
      %1457 = vadd.xlane.f32.xlu0 %v1426
      %v1458 = vpop.xlane.xlu0 %1457
      %1459 = vadd.xlane.f32.xlu0 %v1428
      %v1460 = vpop.xlane.xlu0 %1459
      %vm1461 = vcmp.lt.s32.totalorder %v907, %v714
      %vm1462 = vcmp.lt.s32.totalorder %v908, %v714
      %vm1463 = vcmp.lt.s32.totalorder %v909, %v714
      %vm1464 = vcmp.lt.s32.totalorder %v910, %v714
      %vm1465 = vcmp.lt.s32.totalorder %v911, %v714
      %vm1466 = vcmp.lt.s32.totalorder %v912, %v714
      %vm1467 = vcmp.lt.s32.totalorder %v913, %v714
      %vm1468 = vcmp.lt.s32.totalorder %v914, %v714
      %vm1469 = vcmp.lt.s32.totalorder %v915, %v714
      %vm1470 = vcmp.lt.s32.totalorder %v916, %v714
      %vm1471 = vcmp.lt.s32.totalorder %v917, %v714
      %vm1472 = vcmp.lt.s32.totalorder %v918, %v714
      %vm1473 = vcmp.lt.s32.totalorder %v919, %v714
      %vm1474 = vcmp.lt.s32.totalorder %v920, %v714
      %vm1475 = vcmp.lt.s32.totalorder %v921, %v714
      %vm1476 = vcmp.lt.s32.totalorder %v922, %v714
      %s1477 = scvt.s32.f32 %s602
      %v1478 = vstv %s1477
      %v1479 = vsel %vm1461, %v1478, 0.0
      %v1480 = vsel %vm1462, %v1478, 0.0
      %v1481 = vsel %vm1463, %v1478, 0.0
      %v1482 = vsel %vm1464, %v1478, 0.0
      %v1483 = vsel %vm1465, %v1478, 0.0
      %v1484 = vsel %vm1466, %v1478, 0.0
      %v1485 = vsel %vm1467, %v1478, 0.0
      %v1486 = vsel %vm1468, %v1478, 0.0
      %v1487 = vsel %vm1469, %v1478, 0.0
      %v1488 = vsel %vm1470, %v1478, 0.0
      %v1489 = vsel %vm1471, %v1478, 0.0
      %v1490 = vsel %vm1472, %v1478, 0.0
      %v1491 = vsel %vm1473, %v1478, 0.0
      %v1492 = vsel %vm1474, %v1478, 0.0
      %v1493 = vsel %vm1475, %v1478, 0.0
      %v1494 = vsel %vm1476, %v1478, 0.0
      %v1495 = vsub.f32 -13.815511, %v1350
      %v1496 = vsub.f32 -13.815511, %v1352
      %v1497 = vsub.f32 -13.815511, %v1354
      %v1498 = vsub.f32 -13.815511, %v1356
      %v1499 = vsub.f32 -13.815511, %v1358
      %v1500 = vsub.f32 -13.815511, %v1360
      %v1501 = vsub.f32 -13.815511, %v1362
      %v1502 = vsub.f32 -13.815511, %v1364
      %v1503 = vsub.f32 -13.815511, %v1366
      %v1504 = vsub.f32 -13.815511, %v1368
      %v1505 = vsub.f32 -13.815511, %v1370
      %v1506 = vsub.f32 -13.815511, %v1372
      %v1507 = vsub.f32 -13.815511, %v1374
      %v1508 = vsub.f32 -13.815511, %v1376
      %v1509 = vsub.f32 -13.815511, %v1378
      %v1510 = vsub.f32 -13.815511, %v1380
      %v1511 = vmul.f32 %v1495, 1.442695
      %v1512 = vpow.pop %v1511
      %v1513 = vmul.f32 %v1496, 1.442695
      %v1514 = vpow.pop %v1513
      %v1515 = vmul.f32 %v1497, 1.442695
      %v1516 = vpow.pop %v1515
      %v1517 = vmul.f32 %v1498, 1.442695
      %v1518 = vpow.pop %v1517
      %v1519 = vmul.f32 %v1499, 1.442695
      %v1520 = vpow.pop %v1519
      %v1521 = vmul.f32 %v1500, 1.442695
      %v1522 = vpow.pop %v1521
      %v1523 = vmul.f32 %v1501, 1.442695
      %v1524 = vpow.pop %v1523
      %v1525 = vmul.f32 %v1502, 1.442695
      %v1526 = vpow.pop %v1525
      %v1527 = vmul.f32 %v1503, 1.442695
      %v1528 = vpow.pop %v1527
      %v1529 = vmul.f32 %v1504, 1.442695
      %v1530 = vpow.pop %v1529
      %v1531 = vmul.f32 %v1505, 1.442695
      %v1532 = vpow.pop %v1531
      %v1533 = vmul.f32 %v1506, 1.442695
      %v1534 = vpow.pop %v1533
      %v1535 = vmul.f32 %v1507, 1.442695
      %v1536 = vpow.pop %v1535
      %v1537 = vmul.f32 %v1508, 1.442695
      %v1538 = vpow.pop %v1537
      %v1539 = vmul.f32 %v1509, 1.442695
      %v1540 = vpow.pop %v1539
      %v1541 = vmul.f32 %v1510, 1.442695
      %v1542 = vpow.pop %v1541
      %v1543 = vmul.f32 %v1479, %v1512
      %v1544 = vmul.f32 %v1480, %v1514
      %v1545 = vmul.f32 %v1481, %v1516
      %v1546 = vmul.f32 %v1482, %v1518
      %v1547 = vmul.f32 %v1483, %v1520
      %v1548 = vmul.f32 %v1484, %v1522
      %v1549 = vmul.f32 %v1485, %v1524
      %v1550 = vmul.f32 %v1486, %v1526
      %v1551 = vmul.f32 %v1487, %v1528
      %v1552 = vmul.f32 %v1488, %v1530
      %v1553 = vmul.f32 %v1489, %v1532
      %v1554 = vmul.f32 %v1490, %v1534
      %v1555 = vmul.f32 %v1491, %v1536
      %v1556 = vmul.f32 %v1492, %v1538
      %v1557 = vmul.f32 %v1493, %v1540
      %v1558 = vmul.f32 %v1494, %v1542
      %v1559 = vadd.f32 %v1430, %v1543
      %v1560 = vadd.f32 %v1432, %v1544
      %v1561 = vadd.f32 %v1434, %v1545
      %v1562 = vadd.f32 %v1436, %v1546
      %v1563 = vadd.f32 %v1438, %v1547
      %v1564 = vadd.f32 %v1440, %v1548
      %v1565 = vadd.f32 %v1442, %v1549
      %v1566 = vadd.f32 %v1444, %v1550
      %v1567 = vadd.f32 %v1446, %v1551
      %v1568 = vadd.f32 %v1448, %v1552
      %v1569 = vadd.f32 %v1450, %v1553
      %v1570 = vadd.f32 %v1452, %v1554
      %v1571 = vadd.f32 %v1454, %v1555
      %v1572 = vadd.f32 %v1456, %v1556
      %v1573 = vadd.f32 %v1458, %v1557
      %v1574 = vadd.f32 %v1460, %v1558
      %v1575 = vrcp.pop %v1559
      %v1576 = vrcp.pop %v1560
      %v1577 = vrcp.pop %v1561
      %v1578 = vrcp.pop %v1562
      %v1579 = vrcp.pop %v1563
      %v1580 = vrcp.pop %v1564
      %v1581 = vrcp.pop %v1565
      %v1582 = vrcp.pop %v1566
      %v1583 = vrcp.pop %v1567
      %v1584 = vrcp.pop %v1568
      %v1585 = vrcp.pop %v1569
      %v1586 = vrcp.pop %v1570
      %v1587 = vrcp.pop %v1571
      %v1588 = vrcp.pop %v1572
      %v1589 = vrcp.pop %v1573
      %v1590 = vrcp.pop %v1574
      %v1591 = vmul.f32 %v1398, %v1575
      %v1592 = vmul.f32 %v1400, %v1576
      %v1593 = vmul.f32 %v1402, %v1577
      %v1594 = vmul.f32 %v1404, %v1578
      %v1595 = vmul.f32 %v1406, %v1579
      %v1596 = vmul.f32 %v1408, %v1580
      %v1597 = vmul.f32 %v1410, %v1581
      %v1598 = vmul.f32 %v1412, %v1582
      %v1599 = vmul.f32 %v1414, %v1583
      %v1600 = vmul.f32 %v1416, %v1584
      %v1601 = vmul.f32 %v1418, %v1585
      %v1602 = vmul.f32 %v1420, %v1586
      %v1603 = vmul.f32 %v1422, %v1587
      %v1604 = vmul.f32 %v1424, %v1588
      %v1605 = vmul.f32 %v1426, %v1589
      %v1606 = vmul.f32 %v1428, %v1590
      %v1607 = vsel %vm1159, 1, 0
      %v1608 = vsel %vm1160, 1, 0
      %v1609 = vsel %vm1161, 1, 0
      %v1610 = vsel %vm1162, 1, 0
      %v1611 = vsel %vm1163, 1, 0
      %v1612 = vsel %vm1164, 1, 0
      %v1613 = vsel %vm1165, 1, 0
      %v1614 = vsel %vm1166, 1, 0
      %v1615 = vsel %vm1167, 1, 0
      %v1616 = vsel %vm1168, 1, 0
      %v1617 = vsel %vm1169, 1, 0
      %v1618 = vsel %vm1170, 1, 0
      %v1619 = vsel %vm1171, 1, 0
      %v1620 = vsel %vm1172, 1, 0
      %v1621 = vsel %vm1173, 1, 0
      %v1622 = vsel %vm1174, 1, 0
      %v1623 = vcvt.s32.f32 %v1607
      %v1624 = vcvt.s32.f32 %v1608
      %v1625 = vcvt.s32.f32 %v1609
      %v1626 = vcvt.s32.f32 %v1610
      %v1627 = vcvt.s32.f32 %v1611
      %v1628 = vcvt.s32.f32 %v1612
      %v1629 = vcvt.s32.f32 %v1613
      %v1630 = vcvt.s32.f32 %v1614
      %v1631 = vcvt.s32.f32 %v1615
      %v1632 = vcvt.s32.f32 %v1616
      %v1633 = vcvt.s32.f32 %v1617
      %v1634 = vcvt.s32.f32 %v1618
      %v1635 = vcvt.s32.f32 %v1619
      %v1636 = vcvt.s32.f32 %v1620
      %v1637 = vcvt.s32.f32 %v1621
      %v1638 = vcvt.s32.f32 %v1622
      %v1639 = vmul.f32 %v1591, %v1623
      %v1640 = vmul.f32 %v1592, %v1624
      %v1641 = vmul.f32 %v1593, %v1625
      %v1642 = vmul.f32 %v1594, %v1626
      %v1643 = vmul.f32 %v1595, %v1627
      %v1644 = vmul.f32 %v1596, %v1628
      %v1645 = vmul.f32 %v1597, %v1629
      %v1646 = vmul.f32 %v1598, %v1630
      %v1647 = vmul.f32 %v1599, %v1631
      %v1648 = vmul.f32 %v1600, %v1632
      %v1649 = vmul.f32 %v1601, %v1633
      %v1650 = vmul.f32 %v1602, %v1634
      %v1651 = vmul.f32 %v1603, %v1635
      %v1652 = vmul.f32 %v1604, %v1636
      %v1653 = vmul.f32 %v1605, %v1637
      %v1654 = vmul.f32 %v1606, %v1638
      %v1655 = vpack.c.bf16 %v905, %v905
      %v1656 = vpack.c.bf16 %v1640, %v1639
      %v1657 = vpack.c.bf16 %v1642, %v1641
      %v1658 = vpack.c.bf16 %v1644, %v1643
      %v1659 = vpack.c.bf16 %v1646, %v1645
      %v1660 = vpack.c.bf16 %v1648, %v1647
      %v1661 = vpack.c.bf16 %v1650, %v1649
      %v1662 = vpack.c.bf16 %v1652, %v1651
      %v1663 = vpack.c.bf16 %v1654, %v1653
      %1664 = vmatprep.subr.bf16.mxu0 0
      %1665 = vmatpush1.bf16.xpose.msra.mxu0 %v1656
      %1666 = vmatprep.subr.bf16.mxu0 0
      %1667 = vmatpush1.bf16.xpose.msra.mxu0 %v1657
      %1668 = vmatprep.subr.bf16.mxu0 0
      %1669 = vmatpush1.bf16.xpose.msra.mxu0 %v1658
      %1670 = vmatprep.subr.bf16.mxu0 0
      %1671 = vmatpush1.bf16.xpose.msra.mxu0 %v1659
      %1672 = vmatprep.subr.bf16.mxu0 0
      %1673 = vmatpush1.bf16.xpose.msra.mxu0 %v1660
      %1674 = vmatprep.subr.bf16.mxu0 0
      %1675 = vmatpush1.bf16.xpose.msra.mxu0 %v1661
      %1676 = vmatprep.subr.bf16.mxu0 0
      %1677 = vmatpush1.bf16.xpose.msra.mxu0 %v1662
      %1678 = vmatprep.subr.bf16.mxu0 0
      %1679 = vmatpush1.bf16.xpose.msra.mxu0 %v1663
      %1680 = vmatprep.subr.bf16.mxu0 0
      %1681 = vmatpush1.bf16.xpose.msra.mxu0 0
      %1682 = vmatprep.subr.bf16.mxu0 0
      %1683 = vmatpush1.bf16.xpose.msra.mxu0 0
      %1684 = vmatprep.subr.bf16.mxu0 0
      %1685 = vmatpush1.bf16.xpose.msra.mxu0 0
      %1686 = vmatprep.subr.bf16.mxu0 0
      %1687 = vmatpush1.bf16.xpose.msra.mxu0 0
      %1688 = vmatprep.subr.bf16.mxu0 0
      %1689 = vmatpush1.bf16.xpose.msra.mxu0 0
      %1690 = vmatprep.subr.bf16.mxu0 0
      %1691 = vmatpush1.bf16.xpose.msra.mxu0 0
      %1692 = vmatprep.subr.bf16.mxu0 0
      %1693 = vmatpush1.bf16.xpose.msra.mxu0 0
      %1694 = vmatprep.subr.bf16.mxu0 0
      %1695 = vmatpush1.bf16.xpose.msra.mxu0 0
      %1696 = vmatprep.mubr.bf16.mxu0 0
      %1697 = vmatmul.mubr.bf16.gmra.mrb[0].mxu0 %v1655
      %v1698 = vpop.f32.mrb[0].mxu0
      %v1699 = vadd.f32 0.0, %v1698
      %v1700 = vpop.f32.mrb[0].mxu0
      %v1701 = vpop.f32.mrb[0].mxu0
      %v1702 = vpop.f32.mrb[0].mxu0
      %1703 = vdwg.mxu0
      %v1704 = vld [vmem:[%s584] sm:$0xf]
      %v1705 = vld [vmem:[%s584 + $0x4] sm:$0xf]
      %v1706 = vmax.f32 %v1699, 0.0
      %v1707 = vpack.c.bf16 %v1706, %v1706
      %v1708 = vld [vmem:[%s589] sm:$0xff]
      %v1709 = vld [vmem:[%s589 + $0x8] sm:$0xff]
      %1711 = vset.pattern.permute.xlu0 0
      %1712 = vperm.xlu0 %1711, %v1708
      %v1713 = vpop.permute.xlu0 %1712
      %1716 = vset.pattern.permute.xlu0 0
      %1717 = vperm.xlu0 %1716, %v1709
      %v1718 = vpop.permute.xlu0 %1717
      %v1722 = vunpack.c.l.b16 %v1704
      %v1723 = vunpack.c.l.b16 %v1705
      %v1724 = vpack.c.b16 %v1723, %v1722
      %v1726 = vsel %vm1207, %v1724, 0
      %v1729 = vsel %vm1232, %v1707, 0
      %1731 = vmatprep.subr.bf16.mxu0 0
      %1732 = vmatpush1.bf16.msra.mxu0 %v1729
      %1733 = vmatprep.subr.bf16.mxu0 0
      %1734 = vmatpush1.bf16.msra.mxu0 0
      %1735 = vmatprep.subr.bf16.mxu0 0
      %1736 = vmatpush1.bf16.msra.mxu0 0
      %1737 = vmatprep.subr.bf16.mxu0 0
      %1738 = vmatpush1.bf16.msra.mxu0 0
      %1739 = vmatprep.subr.bf16.mxu0 0
      %1740 = vmatpush1.bf16.msra.mxu0 0
      %1741 = vmatprep.subr.bf16.mxu0 0
      %1742 = vmatpush1.bf16.msra.mxu0 0
      %1743 = vmatprep.subr.bf16.mxu0 0
      %1744 = vmatpush1.bf16.msra.mxu0 0
      %1745 = vmatprep.subr.bf16.mxu0 0
      %1746 = vmatpush1.bf16.msra.mxu0 0
      %1747 = vmatprep.subr.bf16.mxu0 0
      %1748 = vmatpush1.bf16.msra.mxu0 0
      %1749 = vmatprep.subr.bf16.mxu0 0
      %1750 = vmatpush1.bf16.msra.mxu0 0
      %1751 = vmatprep.subr.bf16.mxu0 0
      %1752 = vmatpush1.bf16.msra.mxu0 0
      %1753 = vmatprep.subr.bf16.mxu0 0
      %1754 = vmatpush1.bf16.msra.mxu0 0
      %1755 = vmatprep.subr.bf16.mxu0 0
      %1756 = vmatpush1.bf16.msra.mxu0 0
      %1757 = vmatprep.subr.bf16.mxu0 0
      %1758 = vmatpush1.bf16.msra.mxu0 0
      %1759 = vmatprep.subr.bf16.mxu0 0
      %1760 = vmatpush1.bf16.msra.mxu0 0
      %1761 = vmatprep.subr.bf16.mxu0 0
      %1762 = vmatpush1.bf16.msra.mxu0 0
      %1763 = vmatprep.mubr.bf16.mxu0 0
      %1764 = vmatmul.mubr.bf16.gmra.mrb[0].mxu0 %v1726
      %v1765 = vpop.f32.mrb[0].mxu0
      %v1766 = vadd.f32 %v1713, %v1765
      %v1767 = vpop.f32.mrb[0].mxu0
      %v1768 = vpop.f32.mrb[0].mxu0
      %v1769 = vadd.f32 %v1718, %v1768
      %v1770 = vpop.f32.mrb[0].mxu0
      %1771 = vdwg.mxu0
      %v1772 = vmul.f32 %v1766, %v850
      %v1773 = vmul.f32 %v1769, %v850
      %v1774 = vmul.f32 %v1772, 0.049787067
      %v1775 = vmul.f32 %v1773, 0.049787067
      %v1776 = vadd.f32 %v1774, %v751
      %v1777 = vadd.f32 %v1775, %v752
      %v1778 = vld [vmem:[%s594] sm:$0xf]
      %v1779 = vld [vmem:[%s594 + $0x4] sm:$0xf]
      %v1780 = vpack.c.bf16 %v1777, %v1776
      %v1781 = vld [vmem:[%s599] sm:$0xff]
      %v1782 = vld [vmem:[%s599 + $0x8] sm:$0xff]
      %1784 = vset.pattern.permute.xlu0 0
      %1785 = vperm.xlu0 %1784, %v1781
      %v1786 = vpop.permute.xlu0 %1785
      %1789 = vset.pattern.permute.xlu0 0
      %1790 = vperm.xlu0 %1789, %v1782
      %v1791 = vpop.permute.xlu0 %1790
      %v1795 = vunpack.c.l.b16 %v1778
      %v1796 = vunpack.c.l.b16 %v1779
      %v1797 = vpack.c.b16 %v1796, %v1795
      %v1799 = vsel %vm641, %v1797, 0
      %1801 = vmatprep.subr.bf16.mxu0 0
      %1802 = vmatpush1.bf16.msra.mxu0 %v1780
      %1803 = vmatprep.subr.bf16.mxu0 0
      %1804 = vmatpush1.bf16.msra.mxu0 0
      %1805 = vmatprep.subr.bf16.mxu0 0
      %1806 = vmatpush1.bf16.msra.mxu0 0
      %1807 = vmatprep.subr.bf16.mxu0 0
      %1808 = vmatpush1.bf16.msra.mxu0 0
      %1809 = vmatprep.subr.bf16.mxu0 0
      %1810 = vmatpush1.bf16.msra.mxu0 0
      %1811 = vmatprep.subr.bf16.mxu0 0
      %1812 = vmatpush1.bf16.msra.mxu0 0
      %1813 = vmatprep.subr.bf16.mxu0 0
      %1814 = vmatpush1.bf16.msra.mxu0 0
      %1815 = vmatprep.subr.bf16.mxu0 0
      %1816 = vmatpush1.bf16.msra.mxu0 0
      %1817 = vmatprep.subr.bf16.mxu0 0
      %1818 = vmatpush1.bf16.msra.mxu0 0
      %1819 = vmatprep.subr.bf16.mxu0 0
      %1820 = vmatpush1.bf16.msra.mxu0 0
      %1821 = vmatprep.subr.bf16.mxu0 0
      %1822 = vmatpush1.bf16.msra.mxu0 0
      %1823 = vmatprep.subr.bf16.mxu0 0
      %1824 = vmatpush1.bf16.msra.mxu0 0
      %1825 = vmatprep.subr.bf16.mxu0 0
      %1826 = vmatpush1.bf16.msra.mxu0 0
      %1827 = vmatprep.subr.bf16.mxu0 0
      %1828 = vmatpush1.bf16.msra.mxu0 0
      %1829 = vmatprep.subr.bf16.mxu0 0
      %1830 = vmatpush1.bf16.msra.mxu0 0
      %1831 = vmatprep.subr.bf16.mxu0 0
      %1832 = vmatpush1.bf16.msra.mxu0 0
      %1833 = vmatprep.mubr.bf16.mxu0 0
      %1834 = vmatmul.mubr.bf16.gmra.mrb[0].mxu0 %v1799
      %v1835 = vpop.f32.mrb[0].mxu0
      %v1836 = vadd.f32 %v1786, %v1835
      %v1837 = vpop.f32.mrb[0].mxu0
      %v1838 = vpop.f32.mrb[0].mxu0
      %v1839 = vadd.f32 %v1791, %v1838
      %v1840 = vpop.f32.mrb[0].mxu0
      %1841 = vdwg.mxu0
      %v1842 = vadd.f32 %v611, %v1836
      %v1843 = vadd.f32 %v612, %v1839
      %v1844 = vmul.f32 %v1842, %v850
      %v1845 = vmul.f32 %v1843, %v850
      %1846 = vst [vmem:[#allocation2] sm:$0xff] %v1844
      %1847 = vst [vmem:[#allocation2 + $0x8] sm:$0xff] %v1845
      %p1848 = scmp.eq.s32.totalorder %s24, 2
      // Predicated region
      $region77: #{model_forward.16} parent=71 // pred_check
        %p1849 = pneg %p1848
      $region78: #{model_forward.16} parent=71 // pred_check_branch
        %1851 = sbr.rel (%p1849) target = $region80
      $region79: #{model_forward.16} parent=71 // pred_region
        %1852 = vst [vmem:[%s13] sm:$0xff] %v1844
        %1853 = vst [vmem:[%s13 + $0x8] sm:$0xff] %v1845
      $region80: #{model_forward.16} parent=71 // pred_fallthru
        _
      // Predicated region
      $region81: #{model_forward.16} parent=71 // pred_check
        %p1854 = pneg %p360
      $region82: #{model_forward.16} parent=71 // pred_check_branch
        %1856 = sbr.rel (%p1854) target = $region84
      $region83: #{model_forward.16} parent=71 // pred_region
        _
      $region84: #{model_forward.16} parent=71 // pred_fallthru
        _
      // Predicated region
      $region85: #{model_forward.16} parent=71 // pred_check
        %p1857 = pneg %p360
      $region86: #{model_forward.16} parent=71 // pred_check_branch
        %1859 = sbr.rel (%p1857) target = $region88
      $region87: #{model_forward.16} parent=71 // pred_region
        _
      $region88: #{model_forward.16} parent=71 // pred_fallthru
        _
    $region72: #{model_forward.16} parent=5 // pred_fallthru
      _
    %p1860 = scmp.le.s32.totalorder 2, %s19
    // Predicated region
    $region89: #{model_forward.16} parent=5 // pred_check
      %p1861 = pneg %p1860
    $region90: #{model_forward.16} parent=5 // pred_check_branch
      %1863 = sbr.rel (%p1861) target = $region92
    $region91: #{model_forward.16} parent=5 // pred_region
      %s1864 = ssub.s32 %s19, 2
    $region92: #{model_forward.16} parent=5 // pred_fallthru
      _
  $region6: #{model_forward.16} parent=0 // loop_footer
    %s23 = sadd.s32 1, %s19
  $region7: #{model_forward.16} parent=0 // loop_footer_branch
    %18 = sbr.rel target = $region3
  $region8: #{model_forward.16} parent=0 // loop_exit
    _

</llo_original>
